<compile_context>
chip_gen: v7x
topology: tpu7x:2x2x1
jax: 0.10.0
libtpu: 0.0.40
codegen_flags: <defaults>
</compile_context>

<pallas_src>
import functools

import jax
import jax.numpy as jnp
from jax.experimental import pallas as pl
from jax.experimental.pallas import tpu as pltpu


_VMEM_LIMIT = 32 * 1024 * 1024  # safe on v7x (64 MiB physical), ample elsewhere


# ----------------------------- Pallas kernels ------------------------------

def _conv_gemm_relu_kernel(a_ref, w_ref, b_ref, o_ref):
    """One M-tile of: relu(A @ W + b).  W is bf16, accumulate in f32."""
    a = a_ref[...].astype(jnp.bfloat16)
    acc = jnp.dot(a, w_ref[...], preferred_element_type=jnp.float32)
    acc = jnp.maximum(acc + b_ref[...], 0.0)      # (1, N) bias broadcasts
    o_ref[...] = acc.astype(o_ref.dtype)


def conv_gemm_relu(a, w_bf16, b, *, tm=512):
    """a: (M, K) f32, w_bf16: (K, N) bf16, b: (N,) f32 -> (M, N) f32."""
    M, K = a.shape
    K2, N = w_bf16.shape
    assert K == K2
    TM = min(M, tm)                              # TM==M (full dim) or mult. of 8
    grid = (pl.cdiv(M, TM),)
    return pl.pallas_call(
        _conv_gemm_relu_kernel,
        out_shape=jax.ShapeDtypeStruct((M, N), jnp.float32),
        grid=grid,
        in_specs=[
            pl.BlockSpec((TM, K), lambda i: (i, 0)),   # M-tiled activations
            pl.BlockSpec((K, N), lambda i: (0, 0)),    # full weight, resident
            pl.BlockSpec((1, N), lambda i: (0, 0)),    # bias
        ],
        out_specs=pl.BlockSpec((TM, N), lambda i: (i, 0)),
        compiler_params=pltpu.CompilerParams(
            dimension_semantics=("parallel",),
            vmem_limit_bytes=_VMEM_LIMIT),
    )(a, w_bf16, b.reshape(1, N))


def _fc_fused_kernel(x_ref, w1_ref, b1_ref, w2_ref, b2_ref, o_ref):
    """relu(x @ W1 + b1) @ W2 + b2, then log_softmax; all in one body."""
    x = x_ref[...].astype(jnp.bfloat16)
    h = jnp.dot(x, w1_ref[...], preferred_element_type=jnp.float32)
    h = jnp.maximum(h + b1_ref[...], 0.0)
    z = jnp.dot(h.astype(jnp.bfloat16), w2_ref[...],
                preferred_element_type=jnp.float32)
    z = z + b2_ref[...]
    m = jnp.max(z, axis=-1, keepdims=True)
    lse = jnp.log(jnp.sum(jnp.exp(z - m), axis=-1, keepdims=True))
    o_ref[...] = (z - m - lse).astype(o_ref.dtype)


def fc_fused(x, w1_bf16, b1, w2_bf16, b2, *, tb=256):
    """x: (B, 9216) f32 -> log_softmax(fc2(relu(fc1(x)))) as (B, 10) f32."""
    B, K = x.shape
    _, H = w1_bf16.shape
    _, N = w2_bf16.shape
    TB = min(B, tb)                              # TB==B (full dim) or mult. of 8
    grid = (pl.cdiv(B, TB),)
    return pl.pallas_call(
        _fc_fused_kernel,
        out_shape=jax.ShapeDtypeStruct((B, N), jnp.float32),
        grid=grid,
        in_specs=[
            pl.BlockSpec((TB, K), lambda i: (i, 0)),
            pl.BlockSpec((K, H), lambda i: (0, 0)),
            pl.BlockSpec((1, H), lambda i: (0, 0)),
            pl.BlockSpec((H, N), lambda i: (0, 0)),
            pl.BlockSpec((1, N), lambda i: (0, 0)),
        ],
        out_specs=pl.BlockSpec((TB, N), lambda i: (i, 0)),
        compiler_params=pltpu.CompilerParams(
            dimension_semantics=("parallel",),
            vmem_limit_bytes=_VMEM_LIMIT),
    )(x, w1_bf16, b1.reshape(1, H), w2_bf16, b2.reshape(1, N))


# ------------------------------ JAX glue code -------------------------------

def _im2col(x_nhwc, k):
    """Valid-mode kxk patch extraction. Returns (B*Ho*Wo, k*k*C) and dims."""
    B, H, W, C = x_nhwc.shape
    Ho, Wo = H - k + 1, W - k + 1
    cols = []
    for kh in range(k):
        for kw in range(k):
            cols.append(x_nhwc[:, kh:kh + Ho, kw:kw + Wo, :])
    p = jnp.stack(cols, axis=3)                 # (B, Ho, Wo, k*k, C)
    return p.reshape(B * Ho * Wo, k * k * C), (Ho, Wo)


def _conv_weight_to_gemm(w_torch):
    """torch Conv2d weight (Cout, Cin, kh, kw) -> GEMM matrix (kh*kw*Cin, Cout)."""
    cout, cin, kh, kw = w_torch.shape
    return jnp.transpose(w_torch, (2, 3, 1, 0)).reshape(kh * kw * cin, cout)


def init_params(key):
    """Parameters in PyTorch layouts (as a torch checkpoint would provide)."""
    ks = jax.random.split(key, 8)
    nrm = lambda k, shape, s: jax.random.normal(k, shape, dtype=jnp.float32) * s
    return {
        "w1": nrm(ks[0], (32, 1, 3, 3), 0.30), "b1": nrm(ks[1], (32,), 0.10),
        "w2": nrm(ks[2], (64, 32, 3, 3), 0.05), "b2": nrm(ks[3], (64,), 0.05),
        "wfc1": nrm(ks[4], (9216, 128), 0.01), "bfc1": nrm(ks[5], (128,), 0.05),
        "wfc2": nrm(ks[6], (128, 10), 0.05), "bfc2": nrm(ks[7], (10,), 0.05),
    }


def prepare_params(p):
    """One-time re-layout: GEMM-shaped bf16 weights, fc1 rows permuted to NHWC."""
    # Fold torch.flatten's NCHW (c, h, w) row ordering into fc1's rows so the
    # kernel consumes the NHWC-flattened (h, w, c) activations directly.
    wfc1 = p["wfc1"].reshape(64, 12, 12, 128)          # (c, h, w, out)
    wfc1 = jnp.transpose(wfc1, (1, 2, 0, 3)).reshape(9216, 128)
    return {
        "w1": _conv_weight_to_gemm(p["w1"]).astype(jnp.bfloat16), "b1": p["b1"],
        "w2": _conv_weight_to_gemm(p["w2"]).astype(jnp.bfloat16), "b2": p["b2"],
        "wfc1": wfc1.astype(jnp.bfloat16), "bfc1": p["bfc1"],
        "wfc2": p["wfc2"].astype(jnp.bfloat16), "bfc2": p["bfc2"],
    }


def net_forward(x_nchw, params):
    B = x_nchw.shape[0]
    x = jnp.transpose(x_nchw, (0, 2, 3, 1))                 # NCHW -> NHWC

    # conv1 (1->32, 3x3, valid) + ReLU as M-tiled im2col GEMM.
    p, (h1, w1) = _im2col(x, 3)                             # (B*26*26, 9)
    y = conv_gemm_relu(p, params["w1"], params["b1"]).reshape(B, h1, w1, 32)

    # conv2 (32->64, 3x3, valid) + ReLU.
    p, (h2, w2) = _im2col(y, 3)                             # (B*24*24, 288)
    y = conv_gemm_relu(p, params["w2"], params["b2"]).reshape(B, h2, w2, 64)

    # max_pool2d(2): trivially mem-bound; plain XLA reduce avoids an extra
    # kernel launch and the old 6D re-layout transpose (perf-review item).
    hp, wp = h2 // 2, w2 // 2
    y = jnp.max(y.reshape(B, hp, 2, wp, 2, 64), axis=(2, 4))

    # dropout1/dropout2: eval-mode identity.

    # NHWC flatten; the (C,H,W) permutation is already folded into wfc1 rows.
    y = y.reshape(B, hp * wp * 64)                          # (B, 9216)

    # Fused fc1+ReLU -> fc2 -> log_softmax, single Pallas call.
    return fc_fused(y, params["wfc1"], params["bfc1"],
                    params["wfc2"], params["bfc2"])


if __name__ == "__main__":
    key = jax.random.PRNGKey(0)
    kx, kp = jax.random.split(key)
    # Input must be 28x28 (fc1 expects 9216 = 64 * 12 * 12).
    x = jax.random.normal(kx, (2, 1, 28, 28), dtype=jnp.float32)
    params = prepare_params(init_params(kp))

    out = jax.jit(net_forward)(x, params)
    out = jax.block_until_ready(out)

    assert out.shape == (2, 10) and out.dtype == jnp.float32
    # log_softmax sanity: exp(out) rows sum to 1.
    row_sums = jnp.sum(jnp.exp(out), axis=1)
    assert bool(jnp.all(jnp.abs(row_sums - 1.0) < 1e-4))
    print("KERNEL_OK")
</pallas_src>

<mosaic_0001>
module attributes {stable_mosaic.version = 11 : i64} {
  func.func @_conv_gemm_relu_kernel(%arg0: i32, %arg1: memref<512x9xf32, #tpu.memory_space<vmem>>, %arg2: memref<9x32xbf16, #tpu.memory_space<vmem>>, %arg3: memref<1x32xf32, #tpu.memory_space<vmem>>, %arg4: memref<512x32xf32, #tpu.memory_space<vmem>>) attributes {dimension_semantics = [#tpu.dimension_semantics<parallel>], iteration_bounds = array<i64: 3>, scalar_prefetch = 0 : i64, scratch_operands = 0 : i64, tpu.core_type = #tpu.core_type<tc>, window_params = [{transform_indices = @transform_0, window_bounds = array<i64: 512, 9>}, {pipeline_mode = #tpu.pipeline_mode<synchronous>, transform_indices = @transform_1, window_bounds = array<i64: 9, 32>}, {pipeline_mode = #tpu.pipeline_mode<synchronous>, transform_indices = @transform_2, window_bounds = array<i64: 1, 32>}, {transform_indices = @transform_3, window_bounds = array<i64: 512, 32>}]} {
    %c0 = arith.constant 0 : index
    %c0_0 = arith.constant 0 : index
    %0 = vector.load %arg1[%c0, %c0_0] : memref<512x9xf32, #tpu.memory_space<vmem>>, vector<512x9xf32>
    %1 = arith.truncf %0 : vector<512x9xf32> to vector<512x9xbf16>
    %c0_1 = arith.constant 0 : index
    %c0_2 = arith.constant 0 : index
    %2 = vector.load %arg2[%c0_1, %c0_2] : memref<9x32xbf16, #tpu.memory_space<vmem>>, vector<9x32xbf16>
    %cst = arith.constant dense<0.000000e+00> : vector<512x32xf32>
    %3 = tpu.matmul %1, %2, %cst {dimension_numbers = #tpu.dot_dimension_numbers<[1], [0], [0], [1], [0, 0, 1, 1], [], []>} : vector<512x9xbf16>, vector<9x32xbf16>, vector<512x32xf32> -> vector<512x32xf32>
    %c0_3 = arith.constant 0 : index
    %c0_4 = arith.constant 0 : index
    %4 = vector.load %arg3[%c0_3, %c0_4] : memref<1x32xf32, #tpu.memory_space<vmem>>, vector<1x32xf32>
    %5 = vector.broadcast %4 : vector<1x32xf32> to vector<512x32xf32>
    %6 = arith.addf %3, %5 : vector<512x32xf32>
    %cst_5 = arith.constant 0.000000e+00 : f32
    %7 = vector.broadcast %cst_5 : f32 to vector<512x32xf32>
    %8 = arith.maximumf %6, %7 : vector<512x32xf32>
    %c0_6 = arith.constant 0 : index
    %c0_7 = arith.constant 0 : index
    %9 = vector.load %arg4[%c0_6, %c0_7] : memref<512x32xf32, #tpu.memory_space<vmem>>, vector<512x32xf32>
    tpu.vector_store %arg4[%c0_6, %c0_7], %8 {strides = array<i32>} : memref<512x32xf32, #tpu.memory_space<vmem>>, vector<512x32xf32>,
    return
  }
  func.func @transform_0(%arg0: i32) -> (i32, i32) {
    %c0_i32 = arith.constant 0 : i32
    %c0_i32_0 = arith.constant 0 : i32
    return %arg0, %c0_i32 : i32, i32
  }
  func.func @transform_1(%arg0: i32) -> (i32, i32) {
    %c0_i32 = arith.constant 0 : i32
    %c0_i32_0 = arith.constant 0 : i32
    %c0_i32_1 = arith.constant 0 : i32
    return %c0_i32, %c0_i32_0 : i32, i32
  }
  func.func @transform_2(%arg0: i32) -> (i32, i32) {
    %c0_i32 = arith.constant 0 : i32
    %c0_i32_0 = arith.constant 0 : i32
    %c0_i32_1 = arith.constant 0 : i32
    return %c0_i32, %c0_i32_0 : i32, i32
  }
  func.func @transform_3(%arg0: i32) -> (i32, i32) {
    %c0_i32 = arith.constant 0 : i32
    %c0_i32_0 = arith.constant 0 : i32
    return %arg0, %c0_i32 : i32, i32
  }
}

module attributes {stable_mosaic.version = 11 : i64} {
  func.func @_conv_gemm_relu_kernel(%arg0: i32, %arg1: memref<512x288xf32, #tpu.memory_space<vmem>>, %arg2: memref<288x64xbf16, #tpu.memory_space<vmem>>, %arg3: memref<1x64xf32, #tpu.memory_space<vmem>>, %arg4: memref<512x64xf32, #tpu.memory_space<vmem>>) attributes {dimension_semantics = [#tpu.dimension_semantics<parallel>], iteration_bounds = array<i64: 3>, scalar_prefetch = 0 : i64, scratch_operands = 0 : i64, tpu.core_type = #tpu.core_type<tc>, window_params = [{transform_indices = @transform_0, window_bounds = array<i64: 512, 288>}, {pipeline_mode = #tpu.pipeline_mode<synchronous>, transform_indices = @transform_1, window_bounds = array<i64: 288, 64>}, {pipeline_mode = #tpu.pipeline_mode<synchronous>, transform_indices = @transform_2, window_bounds = array<i64: 1, 64>}, {transform_indices = @transform_3, window_bounds = array<i64: 512, 64>}]} {
    %c0 = arith.constant 0 : index
    %c0_0 = arith.constant 0 : index
    %0 = vector.load %arg1[%c0, %c0_0] : memref<512x288xf32, #tpu.memory_space<vmem>>, vector<512x288xf32>
    %1 = arith.truncf %0 : vector<512x288xf32> to vector<512x288xbf16>
    %c0_1 = arith.constant 0 : index
    %c0_2 = arith.constant 0 : index
    %2 = vector.load %arg2[%c0_1, %c0_2] : memref<288x64xbf16, #tpu.memory_space<vmem>>, vector<288x64xbf16>
    %cst = arith.constant dense<0.000000e+00> : vector<512x64xf32>
    %3 = tpu.matmul %1, %2, %cst {dimension_numbers = #tpu.dot_dimension_numbers<[1], [0], [0], [1], [0, 0, 1, 1], [], []>} : vector<512x288xbf16>, vector<288x64xbf16>, vector<512x64xf32> -> vector<512x64xf32>
    %c0_3 = arith.constant 0 : index
    %c0_4 = arith.constant 0 : index
    %4 = vector.load %arg3[%c0_3, %c0_4] : memref<1x64xf32, #tpu.memory_space<vmem>>, vector<1x64xf32>
    %5 = vector.broadcast %4 : vector<1x64xf32> to vector<512x64xf32>
    %6 = arith.addf %3, %5 : vector<512x64xf32>
    %cst_5 = arith.constant 0.000000e+00 : f32
    %7 = vector.broadcast %cst_5 : f32 to vector<512x64xf32>
    %8 = arith.maximumf %6, %7 : vector<512x64xf32>
    %c0_6 = arith.constant 0 : index
    %c0_7 = arith.constant 0 : index
    %9 = vector.load %arg4[%c0_6, %c0_7] : memref<512x64xf32, #tpu.memory_space<vmem>>, vector<512x64xf32>
    tpu.vector_store %arg4[%c0_6, %c0_7], %8 {strides = array<i32>} : memref<512x64xf32, #tpu.memory_space<vmem>>, vector<512x64xf32>,
    return
  }
  func.func @transform_0(%arg0: i32) -> (i32, i32) {
    %c0_i32 = arith.constant 0 : i32
    %c0_i32_0 = arith.constant 0 : i32
    return %arg0, %c0_i32 : i32, i32
  }
  func.func @transform_1(%arg0: i32) -> (i32, i32) {
    %c0_i32 = arith.constant 0 : i32
    %c0_i32_0 = arith.constant 0 : i32
    %c0_i32_1 = arith.constant 0 : i32
    return %c0_i32, %c0_i32_0 : i32, i32
  }
  func.func @transform_2(%arg0: i32) -> (i32, i32) {
    %c0_i32 = arith.constant 0 : i32
    %c0_i32_0 = arith.constant 0 : i32
    %c0_i32_1 = arith.constant 0 : i32
    return %c0_i32, %c0_i32_0 : i32, i32
  }
  func.func @transform_3(%arg0: i32) -> (i32, i32) {
    %c0_i32 = arith.constant 0 : i32
    %c0_i32_0 = arith.constant 0 : i32
    return %arg0, %c0_i32 : i32, i32
  }
}

module attributes {stable_mosaic.version = 11 : i64} {
  func.func @_fc_fused_kernel(%arg0: i32, %arg1: memref<2x9216xf32, #tpu.memory_space<vmem>>, %arg2: memref<9216x128xbf16, #tpu.memory_space<vmem>>, %arg3: memref<1x128xf32, #tpu.memory_space<vmem>>, %arg4: memref<128x10xbf16, #tpu.memory_space<vmem>>, %arg5: memref<1x10xf32, #tpu.memory_space<vmem>>, %arg6: memref<2x10xf32, #tpu.memory_space<vmem>>) attributes {dimension_semantics = [#tpu.dimension_semantics<parallel>], iteration_bounds = array<i64: 1>, scalar_prefetch = 0 : i64, scratch_operands = 0 : i64, tpu.core_type = #tpu.core_type<tc>, window_params = [{transform_indices = @transform_0, window_bounds = array<i64: 2, 9216>}, {pipeline_mode = #tpu.pipeline_mode<synchronous>, transform_indices = @transform_1, window_bounds = array<i64: 9216, 128>}, {pipeline_mode = #tpu.pipeline_mode<synchronous>, transform_indices = @transform_2, window_bounds = array<i64: 1, 128>}, {pipeline_mode = #tpu.pipeline_mode<synchronous>, transform_indices = @transform_3, window_bounds = array<i64: 128, 10>}, {pipeline_mode = #tpu.pipeline_mode<synchronous>, transform_indices = @transform_4, window_bounds = array<i64: 1, 10>}, {transform_indices = @transform_5, window_bounds = array<i64: 2, 10>}]} {
    %c0 = arith.constant 0 : index
    %c0_0 = arith.constant 0 : index
    %0 = vector.load %arg1[%c0, %c0_0] : memref<2x9216xf32, #tpu.memory_space<vmem>>, vector<2x9216xf32>
    %1 = arith.truncf %0 : vector<2x9216xf32> to vector<2x9216xbf16>
    %c0_1 = arith.constant 0 : index
    %c0_2 = arith.constant 0 : index
    %2 = vector.load %arg2[%c0_1, %c0_2] : memref<9216x128xbf16, #tpu.memory_space<vmem>>, vector<9216x128xbf16>
    %cst = arith.constant dense<0.000000e+00> : vector<2x128xf32>
    %3 = tpu.matmul %1, %2, %cst {dimension_numbers = #tpu.dot_dimension_numbers<[1], [0], [0], [1], [0, 0, 1, 1], [], []>} : vector<2x9216xbf16>, vector<9216x128xbf16>, vector<2x128xf32> -> vector<2x128xf32>
    %c0_3 = arith.constant 0 : index
    %c0_4 = arith.constant 0 : index
    %4 = vector.load %arg3[%c0_3, %c0_4] : memref<1x128xf32, #tpu.memory_space<vmem>>, vector<1x128xf32>
    %5 = vector.broadcast %4 : vector<1x128xf32> to vector<2x128xf32>
    %6 = arith.addf %3, %5 : vector<2x128xf32>
    %cst_5 = arith.constant 0.000000e+00 : f32
    %7 = vector.broadcast %cst_5 : f32 to vector<2x128xf32>
    %8 = arith.maximumf %6, %7 : vector<2x128xf32>
    %9 = arith.truncf %8 : vector<2x128xf32> to vector<2x128xbf16>
    %c0_6 = arith.constant 0 : index
    %c0_7 = arith.constant 0 : index
    %10 = vector.load %arg4[%c0_6, %c0_7] : memref<128x10xbf16, #tpu.memory_space<vmem>>, vector<128x10xbf16>
    %cst_8 = arith.constant dense<0.000000e+00> : vector<2x10xf32>
    %11 = tpu.matmul %9, %10, %cst_8 {dimension_numbers = #tpu.dot_dimension_numbers<[1], [0], [0], [1], [0, 0, 1, 1], [], []>} : vector<2x128xbf16>, vector<128x10xbf16>, vector<2x10xf32> -> vector<2x10xf32>
    %c0_9 = arith.constant 0 : index
    %c0_10 = arith.constant 0 : index
    %12 = vector.load %arg5[%c0_9, %c0_10] : memref<1x10xf32, #tpu.memory_space<vmem>>, vector<1x10xf32>
    %13 = vector.broadcast %12 : vector<1x10xf32> to vector<2x10xf32>
    %14 = arith.addf %11, %13 : vector<2x10xf32>
    %cst_11 = arith.constant dense<0xFF800000> : vector<2xf32>
    %15 = vector.multi_reduction <maximumf>, %14, %cst_11 [1] : vector<2x10xf32> to vector<2xf32>
    %16 = vector.shape_cast %15 : vector<2xf32> to vector<2x1xf32>
    %17 = vector.broadcast %16 : vector<2x1xf32> to vector<2x10xf32>
    %18 = arith.subf %14, %17 : vector<2x10xf32>
    %19 = math.exp %18 : vector<2x10xf32>
    %cst_12 = arith.constant dense<0.000000e+00> : vector<2xf32>
    %20 = vector.multi_reduction <add>, %19, %cst_12 [1] : vector<2x10xf32> to vector<2xf32>
    %21 = vector.shape_cast %20 : vector<2xf32> to vector<2x1xf32>
    %22 = math.log %21 : vector<2x1xf32>
    %23 = vector.broadcast %16 : vector<2x1xf32> to vector<2x10xf32>
    %24 = arith.subf %14, %23 : vector<2x10xf32>
    %25 = vector.broadcast %22 : vector<2x1xf32> to vector<2x10xf32>
    %26 = arith.subf %24, %25 : vector<2x10xf32>
    %c0_13 = arith.constant 0 : index
    %c0_14 = arith.constant 0 : index
    %27 = vector.load %arg6[%c0_13, %c0_14] : memref<2x10xf32, #tpu.memory_space<vmem>>, vector<2x10xf32>
    tpu.vector_store %arg6[%c0_13, %c0_14], %26 {strides = array<i32>} : memref<2x10xf32, #tpu.memory_space<vmem>>, vector<2x10xf32>,
    return
  }
  func.func @transform_0(%arg0: i32) -> (i32, i32) {
    %c0_i32 = arith.constant 0 : i32
    %c0_i32_0 = arith.constant 0 : i32
    return %arg0, %c0_i32 : i32, i32
  }
  func.func @transform_1(%arg0: i32) -> (i32, i32) {
    %c0_i32 = arith.constant 0 : i32
    %c0_i32_0 = arith.constant 0 : i32
    %c0_i32_1 = arith.constant 0 : i32
    return %c0_i32, %c0_i32_0 : i32, i32
  }
  func.func @transform_2(%arg0: i32) -> (i32, i32) {
    %c0_i32 = arith.constant 0 : i32
    %c0_i32_0 = arith.constant 0 : i32
    %c0_i32_1 = arith.constant 0 : i32
    return %c0_i32, %c0_i32_0 : i32, i32
  }
  func.func @transform_3(%arg0: i32) -> (i32, i32) {
    %c0_i32 = arith.constant 0 : i32
    %c0_i32_0 = arith.constant 0 : i32
    %c0_i32_1 = arith.constant 0 : i32
    return %c0_i32, %c0_i32_0 : i32, i32
  }
  func.func @transform_4(%arg0: i32) -> (i32, i32) {
    %c0_i32 = arith.constant 0 : i32
    %c0_i32_0 = arith.constant 0 : i32
    %c0_i32_1 = arith.constant 0 : i32
    return %c0_i32, %c0_i32_0 : i32, i32
  }
  func.func @transform_5(%arg0: i32) -> (i32, i32) {
    %c0_i32 = arith.constant 0 : i32
    %c0_i32_0 = arith.constant 0 : i32
    return %arg0, %c0_i32 : i32, i32
  }
}

</mosaic_0001>

<llo_original>
// kernel: net_forward.3
$region0: #{net_forward.3}
  #allocation0 [shape = 'u32[]', space=smem, size = 0x4, offset = 0x4, fixed_abs, tag = 'smem constant byte address 0x4 - core index']
  #allocation1 [shape = 'u32[144,128]{1,0:T(1,128)}', space=vmem, size = 0x12000, scoped, tag = 'internal scratch']
  %s0 = inlined_call_operand.vmem [shape: f32[1352,9], index: 0, kind: input, shape index: {}]
  %s1 = inlined_call_operand.hbm [shape: bf16[9,32], index: 1, kind: input, shape index: {}]
  %s2 = inlined_call_operand.hbm [shape: f32[1,32], index: 2, kind: input, shape index: {}]
  %s3 = inlined_call_operand.vmem [shape: f32[1352,32], index: 3, kind: output, shape index: {}]
  %s4 = sld [smem:[#allocation0]]
  $region101: #{net_forward.3} parent=0
    _
  %s6 = ssub.s32 1, %s4
  %s7 = scalar_select 0, %s6, %s4
  $region1: #{net_forward.3} parent=0
    #allocation2 [shape = 'u8[4096]{0}', space=vmem, size = 0x1000, scoped, tag = 'input window, operand 1, single buffered']
    #allocation3 [shape = 's32[2]{0}', space=sflag, size = 0x8, scoped, tag = 'scoped memory for net_forward.3']
    #allocation4 [shape = 'u8[512]{0}', space=vmem, size = 0x400, scoped, tag = 'input window, operand 2, single buffered']
    #allocation5 [shape = 's32[1]{0}', space=sflag, size = 0x4, scoped, tag = 'scoped memory for net_forward.3']
    #allocation6 [shape = 'u8[524288]{0}', space=vmem, size = 0x80000, scoped, tag = 'output window, operand 0']
    %8 = vsyncpa [#allocation3], 0
    %9 = vsyncpa [#allocation5], 0
    loop: start=0, step=1, limit=5
    $region2: #{net_forward.3} parent=1 // loop_pre_header
      _
    $region3: #{net_forward.3} parent=1 // loop_header
      %s11 = sphi 0, %s15
      %p12 = scmp.ge.s32.totalorder %s11, 5
      %s21 = sphi 0, %s23
      %s24 = sphi 0, %s21
      %s25 = sphi 0, %s24
      %s41 = sphi 0, %s25
      %s45 = sphi 0, %s45
      %s47 = sphi 0, %s45
      %s48 = sphi 0, %s47
      %s62 = sphi 0, %s48
      %s66 = sphi 0, %s66
      %s68 = sphi 0, %s66
      %s69 = sphi 0, %s68
      %s83 = sphi 0, %s69
      %s89 = sphi 0, %s91
      %s92 = sphi 0, %s89
      %s93 = sphi 0, %s92
      %s109 = sphi 0, %s93
    $region4: #{net_forward.3} parent=1 // loop_header_branch
      %14 = sbr.rel (%p12) target = $region8
    $region5: #{net_forward.3} parent=1 // loop_body
      %s16 = ssub.s32 %s11, 1
      %s17 = ssub.s32 %s11, 2
      %s18 = sadd.s32 %s11, 1
      %s19 = ssub.s32 %s11, %s18
      %p20 = scmp.eq.s32.totalorder %s19, 0
      %s22 = sadd.s32 %s21, 1
      %s23 = scalar_select %p20, %s21, %s22
      %p26 = pneg %p20
      %p27 = scmp.eq.s32.totalorder %s11, 2
      %p28 = por %p26, %p27
      %p29 = scmp.ne.s32.totalorder %s21, %s24
      %p30 = scmp.eq.s32.totalorder %s11, 0
      %p31 = por %p29, %p30
      %p32 = scmp.ne.s32.totalorder %s21, %s24
      %p33 = scmp.eq.s32.totalorder %s16, 2
      %p34 = por %p32, %p33
      %p35 = scmp.ne.s32.totalorder %s24, %s25
      %p36 = scmp.eq.s32.totalorder %s16, 0
      %p37 = por %p35, %p36
      %p38 = scmp.ne.s32.totalorder %s24, %s25
      %p39 = scmp.eq.s32.totalorder %s17, 2
      %p40 = por %p38, %p39
      %p42 = scmp.ne.s32.totalorder %s25, %s41
      %p43 = scmp.eq.s32.totalorder %s17, 0
      %p44 = por %p42, %p43
      %s46 = sadd.s32 %s45, 1
      %p49 = scmp.eq.s32.totalorder %s11, 2
      %p50 = scmp.ne.s32.totalorder %s45, %s47
      %p51 = scmp.eq.s32.totalorder %s11, 0
      %p52 = por %p50, %p51
      %p53 = scmp.ne.s32.totalorder %s45, %s47
      %p54 = scmp.eq.s32.totalorder %s16, 2
      %p55 = por %p53, %p54
      %p56 = scmp.ne.s32.totalorder %s47, %s48
      %p57 = scmp.eq.s32.totalorder %s16, 0
      %p58 = por %p56, %p57
      %p59 = scmp.ne.s32.totalorder %s47, %s48
      %p60 = scmp.eq.s32.totalorder %s17, 2
      %p61 = por %p59, %p60
      %p63 = scmp.ne.s32.totalorder %s48, %s62
      %p64 = scmp.eq.s32.totalorder %s17, 0
      %p65 = por %p63, %p64
      %s67 = sadd.s32 %s66, 1
      %p70 = scmp.eq.s32.totalorder %s11, 2
      %p71 = scmp.ne.s32.totalorder %s66, %s68
      %p72 = scmp.eq.s32.totalorder %s11, 0
      %p73 = por %p71, %p72
      %p74 = scmp.ne.s32.totalorder %s66, %s68
      %p75 = scmp.eq.s32.totalorder %s16, 2
      %p76 = por %p74, %p75
      %p77 = scmp.ne.s32.totalorder %s68, %s69
      %p78 = scmp.eq.s32.totalorder %s16, 0
      %p79 = por %p77, %p78
      %p80 = scmp.ne.s32.totalorder %s68, %s69
      %p81 = scmp.eq.s32.totalorder %s17, 2
      %p82 = por %p80, %p81
      %p84 = scmp.ne.s32.totalorder %s69, %s83
      %p85 = scmp.eq.s32.totalorder %s17, 0
      %p86 = por %p84, %p85
      %s87 = ssub.s32 %s11, %s18
      %p88 = scmp.eq.s32.totalorder %s87, 0
      %s90 = sadd.s32 %s89, 1
      %s91 = scalar_select %p88, %s89, %s90
      %p94 = pneg %p88
      %p95 = scmp.eq.s32.totalorder %s11, 2
      %p96 = por %p94, %p95
      %p97 = scmp.ne.s32.totalorder %s89, %s92
      %p98 = scmp.eq.s32.totalorder %s11, 0
      %p99 = por %p97, %p98
      %p100 = scmp.ne.s32.totalorder %s89, %s92
      %p101 = scmp.eq.s32.totalorder %s16, 2
      %p102 = por %p100, %p101
      %p103 = scmp.ne.s32.totalorder %s92, %s93
      %p104 = scmp.eq.s32.totalorder %s16, 0
      %p105 = por %p103, %p104
      %p106 = scmp.ne.s32.totalorder %s92, %s93
      %p107 = scmp.eq.s32.totalorder %s17, 2
      %p108 = por %p106, %p107
      %p110 = scmp.ne.s32.totalorder %s93, %s109
      %p111 = scmp.eq.s32.totalorder %s17, 0
      %p112 = por %p110, %p111
      %p113 = scmp.le.s32.totalorder 1, %s11
      %p114 = scmp.lt.s32.totalorder %s11, 4
      %p115 = pnand %p113, %p114
      %p116 = pneg %p115
      // Predicated region
      $region9: #{net_forward.3} parent=5 // pred_check
        _
      $region10: #{net_forward.3} parent=5 // pred_check_branch
        %118 = sbr.rel (%p115) target = $region12
      $region11: #{net_forward.3} parent=5 // pred_region
        %s119 = ssub.s32 %s11, 1
        // Predicated region
        $region13: #{net_forward.3} parent=11 // pred_check
          %p120 = pneg %p58
        $region14: #{net_forward.3} parent=11 // pred_check_branch
          %122 = sbr.rel (%p120) target = $region16
        $region15: #{net_forward.3} parent=11 // pred_region
          %s124 = ssub.s32 128, 128
          %125 = vsyncadd [#allocation3], %s124
          %s126 = sshll.u32 [#allocation2], 4
          %s127 = int_to_ptr.vmem [resolvable:$true] %s126
          %132 = dma.hbm_to_vmem [thread:$0]  %s1, 128, %s127, [#allocation3], 64, 64, 4
        $region16: #{net_forward.3} parent=11 // pred_fallthru
          _
        // Predicated region
        $region17: #{net_forward.3} parent=11 // pred_check
          %p133 = pneg %p79
        $region18: #{net_forward.3} parent=11 // pred_check_branch
          %135 = sbr.rel (%p133) target = $region20
        $region19: #{net_forward.3} parent=11 // pred_region
          %s137 = ssub.s32 16, 16
          %138 = vsyncadd [#allocation5], %s137
          %s140 = sshll.u32 [#allocation4], 4
          %s141 = int_to_ptr.vmem [resolvable:$true] %s140
          %143 = dma.hbm_to_vmem [thread:$0]  %s2, 16, %s141, [#allocation5]
        $region20: #{net_forward.3} parent=11 // pred_fallthru
          _
      $region12: #{net_forward.3} parent=5 // pred_fallthru
        _
      %p144 = scmp.lt.s32.totalorder %s11, 3
      // Predicated region
      $region21: #{net_forward.3} parent=5 // pred_check
        %p145 = pneg %p144
      $region22: #{net_forward.3} parent=5 // pred_check_branch
        %147 = sbr.rel (%p145) target = $region24
      $region23: #{net_forward.3} parent=5 // pred_region
        // Predicated region
        $region25: #{net_forward.3} parent=23 // pred_check
          %p148 = pneg %p31
        $region26: #{net_forward.3} parent=23 // pred_check_branch
          %150 = sbr.rel (%p148) target = $region28
        $region27: #{net_forward.3} parent=23 // pred_region
          %s151 = smul.u32 64, %s11
          %s152 = ssub.s32 169, %s151
          %p153 = scmp.lt.s32.totalorder %s152, 64
          %s154 = scalar_select %p153, %s152, 64
          %s155 = smul.u32 128, %s154
          %p156 = scmp.lt.s32.totalorder %s151, 168
          %s157 = scalar_select %p156, %s151, 168
          %s158 = smul.addr %s157, 8
          %s159 = scalar_lea.vmem %s0, %s158
          %s160 = smul.u32 64, %s11
          %s161 = ssub.s32 169, %s160
          %p162 = scmp.lt.s32.totalorder %s161, 64
          %s163 = scalar_select %p162, %s161, 64
          %s164 = smul.u32 128, %s163
        $region28: #{net_forward.3} parent=23 // pred_fallthru
          _
      $region24: #{net_forward.3} parent=5 // pred_fallthru
        _
      %p165 = scmp.le.s32.totalorder 1, %s11
      %p166 = scmp.lt.s32.totalorder %s11, 4
      %p167 = pnand %p165, %p166
      %p168 = pneg %p167
      // Predicated region
      $region29: #{net_forward.3} parent=5 // pred_check
        _
      $region30: #{net_forward.3} parent=5 // pred_check_branch
        %170 = sbr.rel (%p167) target = $region32
      $region31: #{net_forward.3} parent=5 // pred_region
        %s171 = ssub.s32 %s11, 1
        // Predicated region
        $region33: #{net_forward.3} parent=31 // pred_check
          %p172 = pneg %p58
        $region34: #{net_forward.3} parent=31 // pred_check_branch
          %174 = sbr.rel (%p172) target = $region36
        $region35: #{net_forward.3} parent=31 // pred_region
          %175 = dma.done [#allocation3], 128
        $region36: #{net_forward.3} parent=31 // pred_fallthru
          _
        // Predicated region
        $region37: #{net_forward.3} parent=31 // pred_check
          %p176 = pneg %p79
        $region38: #{net_forward.3} parent=31 // pred_check_branch
          %178 = sbr.rel (%p176) target = $region40
        $region39: #{net_forward.3} parent=31 // pred_region
          %179 = dma.done [#allocation5], 16
        $region40: #{net_forward.3} parent=31 // pred_fallthru
          _
        %s180 = smul.u32 64, %s16
        %s181 = ssub.s32 169, %s180
        %p182 = scmp.lt.s32.totalorder %s181, 64
        %s183 = scalar_select %p182, %s181, 64
        %s184 = smul.u32 128, %s183
        %p185 = scmp.lt.s32.totalorder %s180, 168
        %s186 = scalar_select %p185, %s180, 168
        %s187 = smul.addr %s186, 8
        %s188 = scalar_lea.vmem %s0, %s187
        %p189 = pneg %p37
        %p190 = pneg %p34
        %p191 = pneg %p58
        %p192 = pneg %p55
        %p193 = pneg %p79
        %p194 = pneg %p76
        %p195 = pneg %p105
        %p196 = pneg %p102
        %s197 = sand.u32 %s92, 1
        %s198 = sand.u32 %s92, 1
        %s199 = smul.addr %s198, 512
        %s200 = scalar_lea.vmem [#allocation6], %s199
        %s201 = smul.u32 64, %s16
        %s202 = ssub.s32 169, %s201
        %p203 = scmp.lt.s32.totalorder %s202, 64
        %s204 = scalar_select %p203, %s202, 64
        %s205 = smul.u32 128, %s204
        %p206 = scmp.lt.s32.totalorder %s201, 168
        %s207 = scalar_select %p206, %s201, 168
        %s208 = smul.addr %s207, 8
        %s209 = scalar_lea.vmem %s0, %s208
        %s210 = smul.u32 64, %s16
        %s211 = ssub.s32 169, %s210
        %p212 = scmp.lt.s32.totalorder %s211, 64
        %s213 = scalar_select %p212, %s211, 64
        %s214 = smul.u32 128, %s213
        %s215 = smul.u32 64, %s16
        %s216 = ssub.s32 169, %s215
        %p217 = scmp.lt.s32.totalorder %s216, 64
        %s218 = scalar_select %p217, %s216, 64
        %s219 = smul.u32 128, %s218
        %v221 = vld [vmem:[%s209] sm:$0xff]
        %v222 = vld [vmem:[%s209 + $0x8] sm:$0xff]
        %v223 = vld [vmem:[%s209 + $0x10] sm:$0xff]
        %v224 = vld [vmem:[%s209 + $0x18] sm:$0xff]
        %v225 = vld [vmem:[%s209 + $0x20] sm:$0xff]
        %v226 = vld [vmem:[%s209 + $0x28] sm:$0xff]
        %v227 = vld [vmem:[%s209 + $0x30] sm:$0xff]
        %v228 = vld [vmem:[%s209 + $0x38] sm:$0xff]
        %v229 = vld [vmem:[%s209 + $0x40] sm:$0xff]
        %v230 = vld [vmem:[%s209 + $0x48] sm:$0xff]
        %v231 = vld [vmem:[%s209 + $0x50] sm:$0xff]
        %v232 = vld [vmem:[%s209 + $0x58] sm:$0xff]
        %v233 = vld [vmem:[%s209 + $0x60] sm:$0xff]
        %v234 = vld [vmem:[%s209 + $0x68] sm:$0xff]
        %v235 = vld [vmem:[%s209 + $0x70] sm:$0xff]
        %v236 = vld [vmem:[%s209 + $0x78] sm:$0xff]
        %v237 = vld [vmem:[%s209 + $0x80] sm:$0xff]
        %v238 = vld [vmem:[%s209 + $0x88] sm:$0xff]
        %v239 = vld [vmem:[%s209 + $0x90] sm:$0xff]
        %v240 = vld [vmem:[%s209 + $0x98] sm:$0xff]
        %v241 = vld [vmem:[%s209 + $0xa0] sm:$0xff]
        %v242 = vld [vmem:[%s209 + $0xa8] sm:$0xff]
        %v243 = vld [vmem:[%s209 + $0xb0] sm:$0xff]
        %v244 = vld [vmem:[%s209 + $0xb8] sm:$0xff]
        %v245 = vld [vmem:[%s209 + $0xc0] sm:$0xff]
        %v246 = vld [vmem:[%s209 + $0xc8] sm:$0xff]
        %v247 = vld [vmem:[%s209 + $0xd0] sm:$0xff]
        %v248 = vld [vmem:[%s209 + $0xd8] sm:$0xff]
        %v249 = vld [vmem:[%s209 + $0xe0] sm:$0xff]
        %v250 = vld [vmem:[%s209 + $0xe8] sm:$0xff]
        %v251 = vld [vmem:[%s209 + $0xf0] sm:$0xff]
        %v252 = vld [vmem:[%s209 + $0xf8] sm:$0xff]
        %v253 = vld [vmem:[%s209 + $0x100] sm:$0xff]
        %v254 = vld [vmem:[%s209 + $0x108] sm:$0xff]
        %v255 = vld [vmem:[%s209 + $0x110] sm:$0xff]
        %v256 = vld [vmem:[%s209 + $0x118] sm:$0xff]
        %v257 = vld [vmem:[%s209 + $0x120] sm:$0xff]
        %v258 = vld [vmem:[%s209 + $0x128] sm:$0xff]
        %v259 = vld [vmem:[%s209 + $0x130] sm:$0xff]
        %v260 = vld [vmem:[%s209 + $0x138] sm:$0xff]
        %v261 = vld [vmem:[%s209 + $0x140] sm:$0xff]
        %v262 = vld [vmem:[%s209 + $0x148] sm:$0xff]
        %v263 = vld [vmem:[%s209 + $0x150] sm:$0xff]
        %v264 = vld [vmem:[%s209 + $0x158] sm:$0xff]
        %v265 = vld [vmem:[%s209 + $0x160] sm:$0xff]
        %v266 = vld [vmem:[%s209 + $0x168] sm:$0xff]
        %v267 = vld [vmem:[%s209 + $0x170] sm:$0xff]
        %v268 = vld [vmem:[%s209 + $0x178] sm:$0xff]
        %v269 = vld [vmem:[%s209 + $0x180] sm:$0xff]
        %v270 = vld [vmem:[%s209 + $0x188] sm:$0xff]
        %v271 = vld [vmem:[%s209 + $0x190] sm:$0xff]
        %v272 = vld [vmem:[%s209 + $0x198] sm:$0xff]
        %v273 = vld [vmem:[%s209 + $0x1a0] sm:$0xff]
        %v274 = vld [vmem:[%s209 + $0x1a8] sm:$0xff]
        %v275 = vld [vmem:[%s209 + $0x1b0] sm:$0xff]
        %v276 = vld [vmem:[%s209 + $0x1b8] sm:$0xff]
        %v277 = vld [vmem:[%s209 + $0x1c0] sm:$0xff]
        %v278 = vld [vmem:[%s209 + $0x1c8] sm:$0xff]
        %v279 = vld [vmem:[%s209 + $0x1d0] sm:$0xff]
        %v280 = vld [vmem:[%s209 + $0x1d8] sm:$0xff]
        %v281 = vld [vmem:[%s209 + $0x1e0] sm:$0xff]
        %v282 = vld [vmem:[%s209 + $0x1e8] sm:$0xff]
        %v283 = vld [vmem:[%s209 + $0x1f0] sm:$0xff]
        %v284 = vld [vmem:[%s209 + $0x1f8] sm:$0xff]
        %v285 = vpack.c.bf16 %v222, %v221
        %v286 = vpack.c.bf16 %v224, %v223
        %v287 = vpack.c.bf16 %v226, %v225
        %v288 = vpack.c.bf16 %v228, %v227
        %v289 = vpack.c.bf16 %v230, %v229
        %v290 = vpack.c.bf16 %v232, %v231
        %v291 = vpack.c.bf16 %v234, %v233
        %v292 = vpack.c.bf16 %v236, %v235
        %v293 = vpack.c.bf16 %v238, %v237
        %v294 = vpack.c.bf16 %v240, %v239
        %v295 = vpack.c.bf16 %v242, %v241
        %v296 = vpack.c.bf16 %v244, %v243
        %v297 = vpack.c.bf16 %v246, %v245
        %v298 = vpack.c.bf16 %v248, %v247
        %v299 = vpack.c.bf16 %v250, %v249
        %v300 = vpack.c.bf16 %v252, %v251
        %v301 = vpack.c.bf16 %v254, %v253
        %v302 = vpack.c.bf16 %v256, %v255
        %v303 = vpack.c.bf16 %v258, %v257
        %v304 = vpack.c.bf16 %v260, %v259
        %v305 = vpack.c.bf16 %v262, %v261
        %v306 = vpack.c.bf16 %v264, %v263
        %v307 = vpack.c.bf16 %v266, %v265
        %v308 = vpack.c.bf16 %v268, %v267
        %v309 = vpack.c.bf16 %v270, %v269
        %v310 = vpack.c.bf16 %v272, %v271
        %v311 = vpack.c.bf16 %v274, %v273
        %v312 = vpack.c.bf16 %v276, %v275
        %v313 = vpack.c.bf16 %v278, %v277
        %v314 = vpack.c.bf16 %v280, %v279
        %v315 = vpack.c.bf16 %v282, %v281
        %v316 = vpack.c.bf16 %v284, %v283
        %v317 = vld [vmem:[#allocation2] sm:$0xf]
        %v318 = vld [vmem:[#allocation2 + $0x4] sm:$0x1]
        %v319 = vld [vmem:[#allocation4] sm:$0x1]
        %v321 = vlaneseq
        %v322 = vshrl.u32 %v321, 7
        %v323 = vsub.s32 0, %v322
        %v324 = vrot.slane %v319, %v323
        %v328 = vunpack.c.l.b16 %v317
        %v329 = vunpack.c.l.b16 %v318
        %v330 = vpack.c.b16 %v329, %v328
        %vm331 = vcmask 72704
        %v333 = vsel %vm331, %v285, 0
        %v336 = vsel %vm331, %v286, 0
        %v339 = vsel %vm331, %v287, 0
        %v342 = vsel %vm331, %v288, 0
        %v345 = vsel %vm331, %v289, 0
        %v348 = vsel %vm331, %v290, 0
        %v351 = vsel %vm331, %v291, 0
        %v354 = vsel %vm331, %v292, 0
        %v357 = vsel %vm331, %v293, 0
        %v360 = vsel %vm331, %v294, 0
        %v363 = vsel %vm331, %v295, 0
        %v366 = vsel %vm331, %v296, 0
        %v369 = vsel %vm331, %v297, 0
        %v372 = vsel %vm331, %v298, 0
        %v375 = vsel %vm331, %v299, 0
        %v378 = vsel %vm331, %v300, 0
        %v381 = vsel %vm331, %v301, 0
        %v384 = vsel %vm331, %v302, 0
        %v387 = vsel %vm331, %v303, 0
        %v390 = vsel %vm331, %v304, 0
        %v393 = vsel %vm331, %v305, 0
        %v396 = vsel %vm331, %v306, 0
        %v399 = vsel %vm331, %v307, 0
        %v402 = vsel %vm331, %v308, 0
        %v405 = vsel %vm331, %v309, 0
        %v408 = vsel %vm331, %v310, 0
        %v411 = vsel %vm331, %v311, 0
        %v414 = vsel %vm331, %v312, 0
        %v417 = vsel %vm331, %v313, 0
        %v420 = vsel %vm331, %v314, 0
        %v423 = vsel %vm331, %v315, 0
        %v426 = vsel %vm331, %v316, 0
        %vm428 = vcmask 1043456
        %vm429 = vcmask 1044480
        %v430 = vsel %vm428, 4294967295, 65535
        %v431 = vsel %vm429, %v430, 0
        %v433 = vand.u32 %v330, %v431
        %435 = vmatprep.subr.bf16.mxu0 0
        %436 = vmatpush1.bf16.msra.mxu0 %v433
        %437 = vmatprep.subr.bf16.mxu0 0
        %438 = vmatpush1.bf16.msra.mxu0 0
        %439 = vmatprep.subr.bf16.mxu0 0
        %440 = vmatpush1.bf16.msra.mxu0 0
        %441 = vmatprep.subr.bf16.mxu0 0
        %442 = vmatpush1.bf16.msra.mxu0 0
        %443 = vmatprep.subr.bf16.mxu0 0
        %444 = vmatpush1.bf16.msra.mxu0 0
        %445 = vmatprep.subr.bf16.mxu0 0
        %446 = vmatpush1.bf16.msra.mxu0 0
        %447 = vmatprep.subr.bf16.mxu0 0
        %448 = vmatpush1.bf16.msra.mxu0 0
        %449 = vmatprep.subr.bf16.mxu0 0
        %450 = vmatpush1.bf16.msra.mxu0 0
        %451 = vmatprep.subr.bf16.mxu0 0
        %452 = vmatpush1.bf16.msra.mxu0 0
        %453 = vmatprep.subr.bf16.mxu0 0
        %454 = vmatpush1.bf16.msra.mxu0 0
        %455 = vmatprep.subr.bf16.mxu0 0
        %456 = vmatpush1.bf16.msra.mxu0 0
        %457 = vmatprep.subr.bf16.mxu0 0
        %458 = vmatpush1.bf16.msra.mxu0 0
        %459 = vmatprep.subr.bf16.mxu0 0
        %460 = vmatpush1.bf16.msra.mxu0 0
        %461 = vmatprep.subr.bf16.mxu0 0
        %462 = vmatpush1.bf16.msra.mxu0 0
        %463 = vmatprep.subr.bf16.mxu0 0
        %464 = vmatpush1.bf16.msra.mxu0 0
        %465 = vmatprep.subr.bf16.mxu0 0
        %466 = vmatpush1.bf16.msra.mxu0 0
        %467 = vmatprep.mubr.bf16.mxu0 0
        %468 = vmatmul.mubr.bf16.gmra.mrb[0].mxu0 %v333
        %v469 = vpop.f32.mrb[0].mxu0
        %v470 = vadd.f32 %v324, %v469
        %v471 = vpop.f32.mrb[0].mxu0
        %v472 = vpop.f32.mrb[0].mxu0
        %v473 = vadd.f32 %v324, %v472
        %v474 = vpop.f32.mrb[0].mxu0
        %475 = vmatprep.mubr.bf16.mxu0 0
        %476 = vmatmul.mubr.bf16.gmra.mrb[0].mxu0 %v336
        %v477 = vpop.f32.mrb[0].mxu0
        %v478 = vadd.f32 %v324, %v477
        %v479 = vpop.f32.mrb[0].mxu0
        %v480 = vpop.f32.mrb[0].mxu0
        %v481 = vadd.f32 %v324, %v480
        %v482 = vpop.f32.mrb[0].mxu0
        %483 = vmatprep.mubr.bf16.mxu0 0
        %484 = vmatmul.mubr.bf16.gmra.mrb[0].mxu0 %v339
        %v485 = vpop.f32.mrb[0].mxu0
        %v486 = vadd.f32 %v324, %v485
        %v487 = vpop.f32.mrb[0].mxu0
        %v488 = vpop.f32.mrb[0].mxu0
        %v489 = vadd.f32 %v324, %v488
        %v490 = vpop.f32.mrb[0].mxu0
        %491 = vmatprep.mubr.bf16.mxu0 0
        %492 = vmatmul.mubr.bf16.gmra.mrb[0].mxu0 %v342
        %v493 = vpop.f32.mrb[0].mxu0
        %v494 = vadd.f32 %v324, %v493
        %v495 = vpop.f32.mrb[0].mxu0
        %v496 = vpop.f32.mrb[0].mxu0
        %v497 = vadd.f32 %v324, %v496
        %v498 = vpop.f32.mrb[0].mxu0
        %499 = vmatprep.mubr.bf16.mxu0 0
        %500 = vmatmul.mubr.bf16.gmra.mrb[0].mxu0 %v345
        %v501 = vpop.f32.mrb[0].mxu0
        %v502 = vadd.f32 %v324, %v501
        %v503 = vpop.f32.mrb[0].mxu0
        %v504 = vpop.f32.mrb[0].mxu0
        %v505 = vadd.f32 %v324, %v504
        %v506 = vpop.f32.mrb[0].mxu0
        %507 = vmatprep.mubr.bf16.mxu0 0
        %508 = vmatmul.mubr.bf16.gmra.mrb[0].mxu0 %v348
        %v509 = vpop.f32.mrb[0].mxu0
        %v510 = vadd.f32 %v324, %v509
        %v511 = vpop.f32.mrb[0].mxu0
        %v512 = vpop.f32.mrb[0].mxu0
        %v513 = vadd.f32 %v324, %v512
        %v514 = vpop.f32.mrb[0].mxu0
        %515 = vmatprep.mubr.bf16.mxu0 0
        %516 = vmatmul.mubr.bf16.gmra.mrb[0].mxu0 %v351
        %v517 = vpop.f32.mrb[0].mxu0
        %v518 = vadd.f32 %v324, %v517
        %v519 = vpop.f32.mrb[0].mxu0
        %v520 = vpop.f32.mrb[0].mxu0
        %v521 = vadd.f32 %v324, %v520
        %v522 = vpop.f32.mrb[0].mxu0
        %523 = vmatprep.mubr.bf16.mxu0 0
        %524 = vmatmul.mubr.bf16.gmra.mrb[0].mxu0 %v354
        %v525 = vpop.f32.mrb[0].mxu0
        %v526 = vadd.f32 %v324, %v525
        %v527 = vpop.f32.mrb[0].mxu0
        %v528 = vpop.f32.mrb[0].mxu0
        %v529 = vadd.f32 %v324, %v528
        %v530 = vpop.f32.mrb[0].mxu0
        %531 = vmatprep.mubr.bf16.mxu0 0
        %532 = vmatmul.mubr.bf16.gmra.mrb[0].mxu0 %v357
        %v533 = vpop.f32.mrb[0].mxu0
        %v534 = vadd.f32 %v324, %v533
        %v535 = vpop.f32.mrb[0].mxu0
        %v536 = vpop.f32.mrb[0].mxu0
        %v537 = vadd.f32 %v324, %v536
        %v538 = vpop.f32.mrb[0].mxu0
        %539 = vmatprep.mubr.bf16.mxu0 0
        %540 = vmatmul.mubr.bf16.gmra.mrb[0].mxu0 %v360
        %v541 = vpop.f32.mrb[0].mxu0
        %v542 = vadd.f32 %v324, %v541
        %v543 = vpop.f32.mrb[0].mxu0
        %v544 = vpop.f32.mrb[0].mxu0
        %v545 = vadd.f32 %v324, %v544
        %v546 = vpop.f32.mrb[0].mxu0
        %547 = vmatprep.mubr.bf16.mxu0 0
        %548 = vmatmul.mubr.bf16.gmra.mrb[0].mxu0 %v363
        %v549 = vpop.f32.mrb[0].mxu0
        %v550 = vadd.f32 %v324, %v549
        %v551 = vpop.f32.mrb[0].mxu0
        %v552 = vpop.f32.mrb[0].mxu0
        %v553 = vadd.f32 %v324, %v552
        %v554 = vpop.f32.mrb[0].mxu0
        %555 = vmatprep.mubr.bf16.mxu0 0
        %556 = vmatmul.mubr.bf16.gmra.mrb[0].mxu0 %v366
        %v557 = vpop.f32.mrb[0].mxu0
        %v558 = vadd.f32 %v324, %v557
        %v559 = vpop.f32.mrb[0].mxu0
        %v560 = vpop.f32.mrb[0].mxu0
        %v561 = vadd.f32 %v324, %v560
        %v562 = vpop.f32.mrb[0].mxu0
        %563 = vmatprep.mubr.bf16.mxu0 0
        %564 = vmatmul.mubr.bf16.gmra.mrb[0].mxu0 %v369
        %v565 = vpop.f32.mrb[0].mxu0
        %v566 = vadd.f32 %v324, %v565
        %v567 = vpop.f32.mrb[0].mxu0
        %v568 = vpop.f32.mrb[0].mxu0
        %v569 = vadd.f32 %v324, %v568
        %v570 = vpop.f32.mrb[0].mxu0
        %571 = vmatprep.mubr.bf16.mxu0 0
        %572 = vmatmul.mubr.bf16.gmra.mrb[0].mxu0 %v372
        %v573 = vpop.f32.mrb[0].mxu0
        %v574 = vadd.f32 %v324, %v573
        %v575 = vpop.f32.mrb[0].mxu0
        %v576 = vpop.f32.mrb[0].mxu0
        %v577 = vadd.f32 %v324, %v576
        %v578 = vpop.f32.mrb[0].mxu0
        %579 = vmatprep.mubr.bf16.mxu0 0
        %580 = vmatmul.mubr.bf16.gmra.mrb[0].mxu0 %v375
        %v581 = vpop.f32.mrb[0].mxu0
        %v582 = vadd.f32 %v324, %v581
        %v583 = vpop.f32.mrb[0].mxu0
        %v584 = vpop.f32.mrb[0].mxu0
        %v585 = vadd.f32 %v324, %v584
        %v586 = vpop.f32.mrb[0].mxu0
        %587 = vmatprep.mubr.bf16.mxu0 0
        %588 = vmatmul.mubr.bf16.gmra.mrb[0].mxu0 %v378
        %v589 = vpop.f32.mrb[0].mxu0
        %v590 = vadd.f32 %v324, %v589
        %v591 = vpop.f32.mrb[0].mxu0
        %v592 = vpop.f32.mrb[0].mxu0
        %v593 = vadd.f32 %v324, %v592
        %v594 = vpop.f32.mrb[0].mxu0
        %595 = vmatprep.mubr.bf16.mxu0 0
        %596 = vmatmul.mubr.bf16.gmra.mrb[0].mxu0 %v381
        %v597 = vpop.f32.mrb[0].mxu0
        %v598 = vadd.f32 %v324, %v597
        %v599 = vpop.f32.mrb[0].mxu0
        %v600 = vpop.f32.mrb[0].mxu0
        %v601 = vadd.f32 %v324, %v600
        %v602 = vpop.f32.mrb[0].mxu0
        %603 = vmatprep.mubr.bf16.mxu0 0
        %604 = vmatmul.mubr.bf16.gmra.mrb[0].mxu0 %v384
        %v605 = vpop.f32.mrb[0].mxu0
        %v606 = vadd.f32 %v324, %v605
        %v607 = vpop.f32.mrb[0].mxu0
        %v608 = vpop.f32.mrb[0].mxu0
        %v609 = vadd.f32 %v324, %v608
        %v610 = vpop.f32.mrb[0].mxu0
        %611 = vmatprep.mubr.bf16.mxu0 0
        %612 = vmatmul.mubr.bf16.gmra.mrb[0].mxu0 %v387
        %v613 = vpop.f32.mrb[0].mxu0
        %v614 = vadd.f32 %v324, %v613
        %v615 = vpop.f32.mrb[0].mxu0
        %v616 = vpop.f32.mrb[0].mxu0
        %v617 = vadd.f32 %v324, %v616
        %v618 = vpop.f32.mrb[0].mxu0
        %619 = vmatprep.mubr.bf16.mxu0 0
        %620 = vmatmul.mubr.bf16.gmra.mrb[0].mxu0 %v390
        %v621 = vpop.f32.mrb[0].mxu0
        %v622 = vadd.f32 %v324, %v621
        %v623 = vpop.f32.mrb[0].mxu0
        %v624 = vpop.f32.mrb[0].mxu0
        %v625 = vadd.f32 %v324, %v624
        %v626 = vpop.f32.mrb[0].mxu0
        %627 = vmatprep.mubr.bf16.mxu0 0
        %628 = vmatmul.mubr.bf16.gmra.mrb[0].mxu0 %v393
        %v629 = vpop.f32.mrb[0].mxu0
        %v630 = vadd.f32 %v324, %v629
        %v631 = vpop.f32.mrb[0].mxu0
        %v632 = vpop.f32.mrb[0].mxu0
        %v633 = vadd.f32 %v324, %v632
        %v634 = vpop.f32.mrb[0].mxu0
        %635 = vmatprep.mubr.bf16.mxu0 0
        %636 = vmatmul.mubr.bf16.gmra.mrb[0].mxu0 %v396
        %v637 = vpop.f32.mrb[0].mxu0
        %v638 = vadd.f32 %v324, %v637
        %v639 = vpop.f32.mrb[0].mxu0
        %v640 = vpop.f32.mrb[0].mxu0
        %v641 = vadd.f32 %v324, %v640
        %v642 = vpop.f32.mrb[0].mxu0
        %643 = vmatprep.mubr.bf16.mxu0 0
        %644 = vmatmul.mubr.bf16.gmra.mrb[0].mxu0 %v399
        %v645 = vpop.f32.mrb[0].mxu0
        %v646 = vadd.f32 %v324, %v645
        %v647 = vpop.f32.mrb[0].mxu0
        %v648 = vpop.f32.mrb[0].mxu0
        %v649 = vadd.f32 %v324, %v648
        %v650 = vpop.f32.mrb[0].mxu0
        %651 = vmatprep.mubr.bf16.mxu0 0
        %652 = vmatmul.mubr.bf16.gmra.mrb[0].mxu0 %v402
        %v653 = vpop.f32.mrb[0].mxu0
        %v654 = vadd.f32 %v324, %v653
        %v655 = vpop.f32.mrb[0].mxu0
        %v656 = vpop.f32.mrb[0].mxu0
        %v657 = vadd.f32 %v324, %v656
        %v658 = vpop.f32.mrb[0].mxu0
        %659 = vmatprep.mubr.bf16.mxu0 0
        %660 = vmatmul.mubr.bf16.gmra.mrb[0].mxu0 %v405
        %v661 = vpop.f32.mrb[0].mxu0
        %v662 = vadd.f32 %v324, %v661
        %v663 = vpop.f32.mrb[0].mxu0
        %v664 = vpop.f32.mrb[0].mxu0
        %v665 = vadd.f32 %v324, %v664
        %v666 = vpop.f32.mrb[0].mxu0
        %667 = vmatprep.mubr.bf16.mxu0 0
        %668 = vmatmul.mubr.bf16.gmra.mrb[0].mxu0 %v408
        %v669 = vpop.f32.mrb[0].mxu0
        %v670 = vadd.f32 %v324, %v669
        %v671 = vpop.f32.mrb[0].mxu0
        %v672 = vpop.f32.mrb[0].mxu0
        %v673 = vadd.f32 %v324, %v672
        %v674 = vpop.f32.mrb[0].mxu0
        %675 = vmatprep.mubr.bf16.mxu0 0
        %676 = vmatmul.mubr.bf16.gmra.mrb[0].mxu0 %v411
        %v677 = vpop.f32.mrb[0].mxu0
        %v678 = vadd.f32 %v324, %v677
        %v679 = vpop.f32.mrb[0].mxu0
        %v680 = vpop.f32.mrb[0].mxu0
        %v681 = vadd.f32 %v324, %v680
        %v682 = vpop.f32.mrb[0].mxu0
        %683 = vmatprep.mubr.bf16.mxu0 0
        %684 = vmatmul.mubr.bf16.gmra.mrb[0].mxu0 %v414
        %v685 = vpop.f32.mrb[0].mxu0
        %v686 = vadd.f32 %v324, %v685
        %v687 = vpop.f32.mrb[0].mxu0
        %v688 = vpop.f32.mrb[0].mxu0
        %v689 = vadd.f32 %v324, %v688
        %v690 = vpop.f32.mrb[0].mxu0
        %691 = vmatprep.mubr.bf16.mxu0 0
        %692 = vmatmul.mubr.bf16.gmra.mrb[0].mxu0 %v417
        %v693 = vpop.f32.mrb[0].mxu0
        %v694 = vadd.f32 %v324, %v693
        %v695 = vpop.f32.mrb[0].mxu0
        %v696 = vpop.f32.mrb[0].mxu0
        %v697 = vadd.f32 %v324, %v696
        %v698 = vpop.f32.mrb[0].mxu0
        %699 = vmatprep.mubr.bf16.mxu0 0
        %700 = vmatmul.mubr.bf16.gmra.mrb[0].mxu0 %v420
        %v701 = vpop.f32.mrb[0].mxu0
        %v702 = vadd.f32 %v324, %v701
        %v703 = vpop.f32.mrb[0].mxu0
        %v704 = vpop.f32.mrb[0].mxu0
        %v705 = vadd.f32 %v324, %v704
        %v706 = vpop.f32.mrb[0].mxu0
        %707 = vmatprep.mubr.bf16.mxu0 0
        %708 = vmatmul.mubr.bf16.gmra.mrb[0].mxu0 %v423
        %v709 = vpop.f32.mrb[0].mxu0
        %v710 = vadd.f32 %v324, %v709
        %v711 = vpop.f32.mrb[0].mxu0
        %v712 = vpop.f32.mrb[0].mxu0
        %v713 = vadd.f32 %v324, %v712
        %v714 = vpop.f32.mrb[0].mxu0
        %715 = vmatprep.mubr.bf16.mxu0 0
        %716 = vmatmul.mubr.bf16.gmra.mrb[0].mxu0 %v426
        %v717 = vpop.f32.mrb[0].mxu0
        %v718 = vadd.f32 %v324, %v717
        %v719 = vpop.f32.mrb[0].mxu0
        %v720 = vpop.f32.mrb[0].mxu0
        %v721 = vadd.f32 %v324, %v720
        %v722 = vpop.f32.mrb[0].mxu0
        %723 = vdwg.mxu0
        %v724 = vmax.f32 %v470, 0.0
        %v725 = vmax.f32 %v473, 0.0
        %v726 = vmax.f32 %v478, 0.0
        %v727 = vmax.f32 %v481, 0.0
        %v728 = vmax.f32 %v486, 0.0
        %v729 = vmax.f32 %v489, 0.0
        %v730 = vmax.f32 %v494, 0.0
        %v731 = vmax.f32 %v497, 0.0
        %v732 = vmax.f32 %v502, 0.0
        %v733 = vmax.f32 %v505, 0.0
        %v734 = vmax.f32 %v510, 0.0
        %v735 = vmax.f32 %v513, 0.0
        %v736 = vmax.f32 %v518, 0.0
        %v737 = vmax.f32 %v521, 0.0
        %v738 = vmax.f32 %v526, 0.0
        %v739 = vmax.f32 %v529, 0.0
        %v740 = vmax.f32 %v534, 0.0
        %v741 = vmax.f32 %v537, 0.0
        %v742 = vmax.f32 %v542, 0.0
        %v743 = vmax.f32 %v545, 0.0
        %v744 = vmax.f32 %v550, 0.0
        %v745 = vmax.f32 %v553, 0.0
        %v746 = vmax.f32 %v558, 0.0
        %v747 = vmax.f32 %v561, 0.0
        %v748 = vmax.f32 %v566, 0.0
        %v749 = vmax.f32 %v569, 0.0
        %v750 = vmax.f32 %v574, 0.0
        %v751 = vmax.f32 %v577, 0.0
        %v752 = vmax.f32 %v582, 0.0
        %v753 = vmax.f32 %v585, 0.0
        %v754 = vmax.f32 %v590, 0.0
        %v755 = vmax.f32 %v593, 0.0
        %v756 = vmax.f32 %v598, 0.0
        %v757 = vmax.f32 %v601, 0.0
        %v758 = vmax.f32 %v606, 0.0
        %v759 = vmax.f32 %v609, 0.0
        %v760 = vmax.f32 %v614, 0.0
        %v761 = vmax.f32 %v617, 0.0
        %v762 = vmax.f32 %v622, 0.0
        %v763 = vmax.f32 %v625, 0.0
        %v764 = vmax.f32 %v630, 0.0
        %v765 = vmax.f32 %v633, 0.0
        %v766 = vmax.f32 %v638, 0.0
        %v767 = vmax.f32 %v641, 0.0
        %v768 = vmax.f32 %v646, 0.0
        %v769 = vmax.f32 %v649, 0.0
        %v770 = vmax.f32 %v654, 0.0
        %v771 = vmax.f32 %v657, 0.0
        %v772 = vmax.f32 %v662, 0.0
        %v773 = vmax.f32 %v665, 0.0
        %v774 = vmax.f32 %v670, 0.0
        %v775 = vmax.f32 %v673, 0.0
        %v776 = vmax.f32 %v678, 0.0
        %v777 = vmax.f32 %v681, 0.0
        %v778 = vmax.f32 %v686, 0.0
        %v779 = vmax.f32 %v689, 0.0
        %v780 = vmax.f32 %v694, 0.0
        %v781 = vmax.f32 %v697, 0.0
        %v782 = vmax.f32 %v702, 0.0
        %v783 = vmax.f32 %v705, 0.0
        %v784 = vmax.f32 %v710, 0.0
        %v785 = vmax.f32 %v713, 0.0
        %v786 = vmax.f32 %v718, 0.0
        %v787 = vmax.f32 %v721, 0.0
        %vm788 = vcmask 261120
        %789 = vst.msk [vmem:[%s200] sm:$0xff] %vm788, %v724
        %790 = vst.msk [vmem:[%s200 + $0x8] sm:$0xff] %vm788, %v725
        %791 = vst.msk [vmem:[%s200 + $0x10] sm:$0xff] %vm788, %v726
        %792 = vst.msk [vmem:[%s200 + $0x18] sm:$0xff] %vm788, %v727
        %793 = vst.msk [vmem:[%s200 + $0x20] sm:$0xff] %vm788, %v728
        %794 = vst.msk [vmem:[%s200 + $0x28] sm:$0xff] %vm788, %v729
        %795 = vst.msk [vmem:[%s200 + $0x30] sm:$0xff] %vm788, %v730
        %796 = vst.msk [vmem:[%s200 + $0x38] sm:$0xff] %vm788, %v731
        %797 = vst.msk [vmem:[%s200 + $0x40] sm:$0xff] %vm788, %v732
        %798 = vst.msk [vmem:[%s200 + $0x48] sm:$0xff] %vm788, %v733
        %799 = vst.msk [vmem:[%s200 + $0x50] sm:$0xff] %vm788, %v734
        %800 = vst.msk [vmem:[%s200 + $0x58] sm:$0xff] %vm788, %v735
        %801 = vst.msk [vmem:[%s200 + $0x60] sm:$0xff] %vm788, %v736
        %802 = vst.msk [vmem:[%s200 + $0x68] sm:$0xff] %vm788, %v737
        %803 = vst.msk [vmem:[%s200 + $0x70] sm:$0xff] %vm788, %v738
        %804 = vst.msk [vmem:[%s200 + $0x78] sm:$0xff] %vm788, %v739
        %805 = vst.msk [vmem:[%s200 + $0x80] sm:$0xff] %vm788, %v740
        %806 = vst.msk [vmem:[%s200 + $0x88] sm:$0xff] %vm788, %v741
        %807 = vst.msk [vmem:[%s200 + $0x90] sm:$0xff] %vm788, %v742
        %808 = vst.msk [vmem:[%s200 + $0x98] sm:$0xff] %vm788, %v743
        %809 = vst.msk [vmem:[%s200 + $0xa0] sm:$0xff] %vm788, %v744
        %810 = vst.msk [vmem:[%s200 + $0xa8] sm:$0xff] %vm788, %v745
        %811 = vst.msk [vmem:[%s200 + $0xb0] sm:$0xff] %vm788, %v746
        %812 = vst.msk [vmem:[%s200 + $0xb8] sm:$0xff] %vm788, %v747
        %813 = vst.msk [vmem:[%s200 + $0xc0] sm:$0xff] %vm788, %v748
        %814 = vst.msk [vmem:[%s200 + $0xc8] sm:$0xff] %vm788, %v749
        %815 = vst.msk [vmem:[%s200 + $0xd0] sm:$0xff] %vm788, %v750
        %816 = vst.msk [vmem:[%s200 + $0xd8] sm:$0xff] %vm788, %v751
        %817 = vst.msk [vmem:[%s200 + $0xe0] sm:$0xff] %vm788, %v752
        %818 = vst.msk [vmem:[%s200 + $0xe8] sm:$0xff] %vm788, %v753
        %819 = vst.msk [vmem:[%s200 + $0xf0] sm:$0xff] %vm788, %v754
        %820 = vst.msk [vmem:[%s200 + $0xf8] sm:$0xff] %vm788, %v755
        %821 = vst.msk [vmem:[%s200 + $0x100] sm:$0xff] %vm788, %v756
        %822 = vst.msk [vmem:[%s200 + $0x108] sm:$0xff] %vm788, %v757
        %823 = vst.msk [vmem:[%s200 + $0x110] sm:$0xff] %vm788, %v758
        %824 = vst.msk [vmem:[%s200 + $0x118] sm:$0xff] %vm788, %v759
        %825 = vst.msk [vmem:[%s200 + $0x120] sm:$0xff] %vm788, %v760
        %826 = vst.msk [vmem:[%s200 + $0x128] sm:$0xff] %vm788, %v761
        %827 = vst.msk [vmem:[%s200 + $0x130] sm:$0xff] %vm788, %v762
        %828 = vst.msk [vmem:[%s200 + $0x138] sm:$0xff] %vm788, %v763
        %829 = vst.msk [vmem:[%s200 + $0x140] sm:$0xff] %vm788, %v764
        %830 = vst.msk [vmem:[%s200 + $0x148] sm:$0xff] %vm788, %v765
        %831 = vst.msk [vmem:[%s200 + $0x150] sm:$0xff] %vm788, %v766
        %832 = vst.msk [vmem:[%s200 + $0x158] sm:$0xff] %vm788, %v767
        %833 = vst.msk [vmem:[%s200 + $0x160] sm:$0xff] %vm788, %v768
        %834 = vst.msk [vmem:[%s200 + $0x168] sm:$0xff] %vm788, %v769
        %835 = vst.msk [vmem:[%s200 + $0x170] sm:$0xff] %vm788, %v770
        %836 = vst.msk [vmem:[%s200 + $0x178] sm:$0xff] %vm788, %v771
        %837 = vst.msk [vmem:[%s200 + $0x180] sm:$0xff] %vm788, %v772
        %838 = vst.msk [vmem:[%s200 + $0x188] sm:$0xff] %vm788, %v773
        %839 = vst.msk [vmem:[%s200 + $0x190] sm:$0xff] %vm788, %v774
        %840 = vst.msk [vmem:[%s200 + $0x198] sm:$0xff] %vm788, %v775
        %841 = vst.msk [vmem:[%s200 + $0x1a0] sm:$0xff] %vm788, %v776
        %842 = vst.msk [vmem:[%s200 + $0x1a8] sm:$0xff] %vm788, %v777
        %843 = vst.msk [vmem:[%s200 + $0x1b0] sm:$0xff] %vm788, %v778
        %844 = vst.msk [vmem:[%s200 + $0x1b8] sm:$0xff] %vm788, %v779
        %845 = vst.msk [vmem:[%s200 + $0x1c0] sm:$0xff] %vm788, %v780
        %846 = vst.msk [vmem:[%s200 + $0x1c8] sm:$0xff] %vm788, %v781
        %847 = vst.msk [vmem:[%s200 + $0x1d0] sm:$0xff] %vm788, %v782
        %848 = vst.msk [vmem:[%s200 + $0x1d8] sm:$0xff] %vm788, %v783
        %849 = vst.msk [vmem:[%s200 + $0x1e0] sm:$0xff] %vm788, %v784
        %850 = vst.msk [vmem:[%s200 + $0x1e8] sm:$0xff] %vm788, %v785
        %851 = vst.msk [vmem:[%s200 + $0x1f0] sm:$0xff] %vm788, %v786
        %852 = vst.msk [vmem:[%s200 + $0x1f8] sm:$0xff] %vm788, %v787
        %s853 = sand.u32 %s92, 1
        %s854 = sand.u32 %s92, 1
        %s855 = smul.addr %s854, 512
        %s856 = scalar_lea.vmem [#allocation6], %s855
        // Predicated region
        $region41: #{net_forward.3} parent=31 // pred_check
          %p857 = pneg %p102
        $region42: #{net_forward.3} parent=31 // pred_check_branch
          %859 = sbr.rel (%p857) target = $region44
        $region43: #{net_forward.3} parent=31 // pred_region
          %s860 = smul.u32 64, %s16
          %s861 = ssub.s32 169, %s860
          %p862 = scmp.lt.s32.totalorder %s861, 64
          %s863 = scalar_select %p862, %s861, 64
          %s864 = smul.u32 128, %s863
          %p865 = scmp.ne.s32.totalorder 0, %s864
          %s866 = smul.addr %s860, 8
          %s867 = scalar_lea.vmem %s3, %s866
          // Predicated region
          $region45: #{net_forward.3} parent=43 // pred_check
            %p868 = pneg %p865
          $region46: #{net_forward.3} parent=43 // pred_check_branch
            %870 = sbr.rel (%p868) target = $region48
          $region47: #{net_forward.3} parent=43 // pred_region
            // Predicated region
            $region49: #{net_forward.3} parent=47 // pred_check
              _
            $region50: #{net_forward.3} parent=47 // pred_check_branch
              %872 = sbr.rel (0) target = $region52
            $region51: #{net_forward.3} parent=47 // pred_region
              // Predicated region
              $region71: #{net_forward.3} parent=51 // pred_check
                _
              $region72: #{net_forward.3} parent=51 // pred_check_branch
                %1047 = sbr.rel (0) target = $region74
              $region73: #{net_forward.3} parent=51 // pred_region
                %s1048 = sshrl.u32 %s863, 6
                // While loop
                $region75: #{net_forward.3} parent=73 // loop_pre_header
                  _
                $region76: #{net_forward.3} parent=73 // loop_header
                  %s1050 = sphi 0, %s1052
                  %p1051 = scmp.ge.s32.totalorder %s1050, %s1048
                  %s1055 = sphi 0, %s1188
                  %s1056 = sphi %s856, %s1191
                  %s1057 = sphi %s867, %s1192
                $region77: #{net_forward.3} parent=73 // loop_header_branch
                  %1054 = sbr.rel (%p1051) target = $region81
                $region78: #{net_forward.3} parent=73 // loop_body
                  %v1058 = vld [vmem:[%s1056] sm:$0xff]
                  %1059 = vst [vmem:[%s1057] sm:$0xff] %v1058
                  %v1060 = vld [vmem:[%s1056 + $0x8] sm:$0xff]
                  %1061 = vst [vmem:[%s1057 + $0x8] sm:$0xff] %v1060
                  %v1062 = vld [vmem:[%s1056 + $0x10] sm:$0xff]
                  %1063 = vst [vmem:[%s1057 + $0x10] sm:$0xff] %v1062
                  %v1064 = vld [vmem:[%s1056 + $0x18] sm:$0xff]
                  %1065 = vst [vmem:[%s1057 + $0x18] sm:$0xff] %v1064
                  %v1066 = vld [vmem:[%s1056 + $0x20] sm:$0xff]
                  %1067 = vst [vmem:[%s1057 + $0x20] sm:$0xff] %v1066
                  %v1068 = vld [vmem:[%s1056 + $0x28] sm:$0xff]
                  %1069 = vst [vmem:[%s1057 + $0x28] sm:$0xff] %v1068
                  %v1070 = vld [vmem:[%s1056 + $0x30] sm:$0xff]
                  %1071 = vst [vmem:[%s1057 + $0x30] sm:$0xff] %v1070
                  %v1072 = vld [vmem:[%s1056 + $0x38] sm:$0xff]
                  %1073 = vst [vmem:[%s1057 + $0x38] sm:$0xff] %v1072
                  %v1074 = vld [vmem:[%s1056 + $0x40] sm:$0xff]
                  %1075 = vst [vmem:[%s1057 + $0x40] sm:$0xff] %v1074
                  %v1076 = vld [vmem:[%s1056 + $0x48] sm:$0xff]
                  %1077 = vst [vmem:[%s1057 + $0x48] sm:$0xff] %v1076
                  %v1078 = vld [vmem:[%s1056 + $0x50] sm:$0xff]
                  %1079 = vst [vmem:[%s1057 + $0x50] sm:$0xff] %v1078
                  %v1080 = vld [vmem:[%s1056 + $0x58] sm:$0xff]
                  %1081 = vst [vmem:[%s1057 + $0x58] sm:$0xff] %v1080
                  %v1082 = vld [vmem:[%s1056 + $0x60] sm:$0xff]
                  %1083 = vst [vmem:[%s1057 + $0x60] sm:$0xff] %v1082
                  %v1084 = vld [vmem:[%s1056 + $0x68] sm:$0xff]
                  %1085 = vst [vmem:[%s1057 + $0x68] sm:$0xff] %v1084
                  %v1086 = vld [vmem:[%s1056 + $0x70] sm:$0xff]
                  %1087 = vst [vmem:[%s1057 + $0x70] sm:$0xff] %v1086
                  %v1088 = vld [vmem:[%s1056 + $0x78] sm:$0xff]
                  %1089 = vst [vmem:[%s1057 + $0x78] sm:$0xff] %v1088
                  %v1090 = vld [vmem:[%s1056 + $0x80] sm:$0xff]
                  %1091 = vst [vmem:[%s1057 + $0x80] sm:$0xff] %v1090
                  %v1092 = vld [vmem:[%s1056 + $0x88] sm:$0xff]
                  %1093 = vst [vmem:[%s1057 + $0x88] sm:$0xff] %v1092
                  %v1094 = vld [vmem:[%s1056 + $0x90] sm:$0xff]
                  %1095 = vst [vmem:[%s1057 + $0x90] sm:$0xff] %v1094
                  %v1096 = vld [vmem:[%s1056 + $0x98] sm:$0xff]
                  %1097 = vst [vmem:[%s1057 + $0x98] sm:$0xff] %v1096
                  %v1098 = vld [vmem:[%s1056 + $0xa0] sm:$0xff]
                  %1099 = vst [vmem:[%s1057 + $0xa0] sm:$0xff] %v1098
                  %v1100 = vld [vmem:[%s1056 + $0xa8] sm:$0xff]
                  %1101 = vst [vmem:[%s1057 + $0xa8] sm:$0xff] %v1100
                  %v1102 = vld [vmem:[%s1056 + $0xb0] sm:$0xff]
                  %1103 = vst [vmem:[%s1057 + $0xb0] sm:$0xff] %v1102
                  %v1104 = vld [vmem:[%s1056 + $0xb8] sm:$0xff]
                  %1105 = vst [vmem:[%s1057 + $0xb8] sm:$0xff] %v1104
                  %v1106 = vld [vmem:[%s1056 + $0xc0] sm:$0xff]
                  %1107 = vst [vmem:[%s1057 + $0xc0] sm:$0xff] %v1106
                  %v1108 = vld [vmem:[%s1056 + $0xc8] sm:$0xff]
                  %1109 = vst [vmem:[%s1057 + $0xc8] sm:$0xff] %v1108
                  %v1110 = vld [vmem:[%s1056 + $0xd0] sm:$0xff]
                  %1111 = vst [vmem:[%s1057 + $0xd0] sm:$0xff] %v1110
                  %v1112 = vld [vmem:[%s1056 + $0xd8] sm:$0xff]
                  %1113 = vst [vmem:[%s1057 + $0xd8] sm:$0xff] %v1112
                  %v1114 = vld [vmem:[%s1056 + $0xe0] sm:$0xff]
                  %1115 = vst [vmem:[%s1057 + $0xe0] sm:$0xff] %v1114
                  %v1116 = vld [vmem:[%s1056 + $0xe8] sm:$0xff]
                  %1117 = vst [vmem:[%s1057 + $0xe8] sm:$0xff] %v1116
                  %v1118 = vld [vmem:[%s1056 + $0xf0] sm:$0xff]
                  %1119 = vst [vmem:[%s1057 + $0xf0] sm:$0xff] %v1118
                  %v1120 = vld [vmem:[%s1056 + $0xf8] sm:$0xff]
                  %1121 = vst [vmem:[%s1057 + $0xf8] sm:$0xff] %v1120
                  %v1122 = vld [vmem:[%s1056 + $0x100] sm:$0xff]
                  %1123 = vst [vmem:[%s1057 + $0x100] sm:$0xff] %v1122
                  %v1124 = vld [vmem:[%s1056 + $0x108] sm:$0xff]
                  %1125 = vst [vmem:[%s1057 + $0x108] sm:$0xff] %v1124
                  %v1126 = vld [vmem:[%s1056 + $0x110] sm:$0xff]
                  %1127 = vst [vmem:[%s1057 + $0x110] sm:$0xff] %v1126
                  %v1128 = vld [vmem:[%s1056 + $0x118] sm:$0xff]
                  %1129 = vst [vmem:[%s1057 + $0x118] sm:$0xff] %v1128
                  %v1130 = vld [vmem:[%s1056 + $0x120] sm:$0xff]
                  %1131 = vst [vmem:[%s1057 + $0x120] sm:$0xff] %v1130
                  %v1132 = vld [vmem:[%s1056 + $0x128] sm:$0xff]
                  %1133 = vst [vmem:[%s1057 + $0x128] sm:$0xff] %v1132
                  %v1134 = vld [vmem:[%s1056 + $0x130] sm:$0xff]
                  %1135 = vst [vmem:[%s1057 + $0x130] sm:$0xff] %v1134
                  %v1136 = vld [vmem:[%s1056 + $0x138] sm:$0xff]
                  %1137 = vst [vmem:[%s1057 + $0x138] sm:$0xff] %v1136
                  %v1138 = vld [vmem:[%s1056 + $0x140] sm:$0xff]
                  %1139 = vst [vmem:[%s1057 + $0x140] sm:$0xff] %v1138
                  %v1140 = vld [vmem:[%s1056 + $0x148] sm:$0xff]
                  %1141 = vst [vmem:[%s1057 + $0x148] sm:$0xff] %v1140
                  %v1142 = vld [vmem:[%s1056 + $0x150] sm:$0xff]
                  %1143 = vst [vmem:[%s1057 + $0x150] sm:$0xff] %v1142
                  %v1144 = vld [vmem:[%s1056 + $0x158] sm:$0xff]
                  %1145 = vst [vmem:[%s1057 + $0x158] sm:$0xff] %v1144
                  %v1146 = vld [vmem:[%s1056 + $0x160] sm:$0xff]
                  %1147 = vst [vmem:[%s1057 + $0x160] sm:$0xff] %v1146
                  %v1148 = vld [vmem:[%s1056 + $0x168] sm:$0xff]
                  %1149 = vst [vmem:[%s1057 + $0x168] sm:$0xff] %v1148
                  %v1150 = vld [vmem:[%s1056 + $0x170] sm:$0xff]
                  %1151 = vst [vmem:[%s1057 + $0x170] sm:$0xff] %v1150
                  %v1152 = vld [vmem:[%s1056 + $0x178] sm:$0xff]
                  %1153 = vst [vmem:[%s1057 + $0x178] sm:$0xff] %v1152
                  %v1154 = vld [vmem:[%s1056 + $0x180] sm:$0xff]
                  %1155 = vst [vmem:[%s1057 + $0x180] sm:$0xff] %v1154
                  %v1156 = vld [vmem:[%s1056 + $0x188] sm:$0xff]
                  %1157 = vst [vmem:[%s1057 + $0x188] sm:$0xff] %v1156
                  %v1158 = vld [vmem:[%s1056 + $0x190] sm:$0xff]
                  %1159 = vst [vmem:[%s1057 + $0x190] sm:$0xff] %v1158
                  %v1160 = vld [vmem:[%s1056 + $0x198] sm:$0xff]
                  %1161 = vst [vmem:[%s1057 + $0x198] sm:$0xff] %v1160
                  %v1162 = vld [vmem:[%s1056 + $0x1a0] sm:$0xff]
                  %1163 = vst [vmem:[%s1057 + $0x1a0] sm:$0xff] %v1162
                  %v1164 = vld [vmem:[%s1056 + $0x1a8] sm:$0xff]
                  %1165 = vst [vmem:[%s1057 + $0x1a8] sm:$0xff] %v1164
                  %v1166 = vld [vmem:[%s1056 + $0x1b0] sm:$0xff]
                  %1167 = vst [vmem:[%s1057 + $0x1b0] sm:$0xff] %v1166
                  %v1168 = vld [vmem:[%s1056 + $0x1b8] sm:$0xff]
                  %1169 = vst [vmem:[%s1057 + $0x1b8] sm:$0xff] %v1168
                  %v1170 = vld [vmem:[%s1056 + $0x1c0] sm:$0xff]
                  %1171 = vst [vmem:[%s1057 + $0x1c0] sm:$0xff] %v1170
                  %v1172 = vld [vmem:[%s1056 + $0x1c8] sm:$0xff]
                  %1173 = vst [vmem:[%s1057 + $0x1c8] sm:$0xff] %v1172
                  %v1174 = vld [vmem:[%s1056 + $0x1d0] sm:$0xff]
                  %1175 = vst [vmem:[%s1057 + $0x1d0] sm:$0xff] %v1174
                  %v1176 = vld [vmem:[%s1056 + $0x1d8] sm:$0xff]
                  %1177 = vst [vmem:[%s1057 + $0x1d8] sm:$0xff] %v1176
                  %v1178 = vld [vmem:[%s1056 + $0x1e0] sm:$0xff]
                  %1179 = vst [vmem:[%s1057 + $0x1e0] sm:$0xff] %v1178
                  %v1180 = vld [vmem:[%s1056 + $0x1e8] sm:$0xff]
                  %1181 = vst [vmem:[%s1057 + $0x1e8] sm:$0xff] %v1180
                  %v1182 = vld [vmem:[%s1056 + $0x1f0] sm:$0xff]
                  %1183 = vst [vmem:[%s1057 + $0x1f0] sm:$0xff] %v1182
                  %v1184 = vld [vmem:[%s1056 + $0x1f8] sm:$0xff]
                  %1185 = vst [vmem:[%s1057 + $0x1f8] sm:$0xff] %v1184
                  %s1186 = sadd.s32 1, %s1055
                  %p1187 = scmp.ge.s32.totalorder %s1186, %s1048
                  %s1188 = scalar_select %p1187, 0, %s1186
                  %s1189 = smul.u32 %s1188, 512
                  %s1190 = smul.u32 %s1188, 512
                  %s1191 = scalar_lea.vmem %s856, %s1189 [#allocation6]
                  %s1192 = scalar_lea.vmem %s867, %s1190
                $region79: #{net_forward.3} parent=73 // loop_footer
                  %s1052 = sadd.s32 %s1050, 1
                $region80: #{net_forward.3} parent=73 // loop_footer_branch
                  %1049 = sbr.rel target = $region76
                $region81: #{net_forward.3} parent=73 // loop_exit
                  _
                %s1193 = sshrl.u32 %s863, 6
                %s1194 = sand.u32 %s863, 63
                %s1195 = smul.u32 %s1193, 64
                %s1196 = smul.u32 8, %s1195
                %s1197 = scalar_lea.vmem %s856, %s1196 [#allocation6]
                %s1198 = smul.u32 8, %s1195
                %s1199 = scalar_lea.vmem %s867, %s1198
                // While loop
                $region82: #{net_forward.3} parent=73 // loop_pre_header
                  _
                $region83: #{net_forward.3} parent=73 // loop_header
                  %s1201 = sphi 0, %s1203
                  %p1202 = scmp.ge.s32.totalorder %s1201, %s1194
                  %s1206 = sphi 0, %s1213
                  %s1207 = sphi %s1197, %s1216
                  %s1208 = sphi %s1199, %s1217
                $region84: #{net_forward.3} parent=73 // loop_header_branch
                  %1205 = sbr.rel (%p1202) target = $region88
                $region85: #{net_forward.3} parent=73 // loop_body
                  %v1209 = vld [vmem:[%s1207] sm:$0xff]
                  %1210 = vst [vmem:[%s1208] sm:$0xff] %v1209
                  %s1211 = sadd.s32 1, %s1206
                  %p1212 = scmp.ge.s32.totalorder %s1211, %s1194
                  %s1213 = scalar_select %p1212, 0, %s1211
                  %s1214 = smul.u32 %s1213, 8
                  %s1215 = smul.u32 %s1213, 8
                  %s1216 = scalar_lea.vmem %s1197, %s1214 [#allocation6]
                  %s1217 = scalar_lea.vmem %s1199, %s1215
                $region86: #{net_forward.3} parent=73 // loop_footer
                  %s1203 = sadd.s32 %s1201, 1
                $region87: #{net_forward.3} parent=73 // loop_footer_branch
                  %1200 = sbr.rel target = $region83
                $region88: #{net_forward.3} parent=73 // loop_exit
                  _
              $region74: #{net_forward.3} parent=51 // pred_fallthru
                _
              // Predicated region
              $region89: #{net_forward.3} parent=51 // pred_check
                _
              $region90: #{net_forward.3} parent=51 // pred_check_branch
                %1219 = sbr.rel target = $region92
              $region91: #{net_forward.3} parent=51 // pred_region
                _
              $region92: #{net_forward.3} parent=51 // pred_fallthru
                _
            $region52: #{net_forward.3} parent=47 // pred_fallthru
              _
            // Predicated region
            $region53: #{net_forward.3} parent=47 // pred_check
              _
            $region54: #{net_forward.3} parent=47 // pred_check_branch
              %874 = sbr.rel target = $region56
            $region55: #{net_forward.3} parent=47 // pred_region
              %s876 = sshrl.u32 %s863, 6
              // While loop
              $region57: #{net_forward.3} parent=55 // loop_pre_header
                _
              $region58: #{net_forward.3} parent=55 // loop_header
                %s878 = sphi 0, %s880
                %p879 = scmp.ge.s32.totalorder %s878, %s876
                %s883 = sphi 0, %s1016
                %s884 = sphi %s856, %s1019
                %s885 = sphi %s867, %s1020
              $region59: #{net_forward.3} parent=55 // loop_header_branch
                %882 = sbr.rel (%p879) target = $region63
              $region60: #{net_forward.3} parent=55 // loop_body
                %v886 = vld [vmem:[%s884] sm:$0xff]
                %887 = vst [vmem:[%s885] sm:$0xff] %v886
                %v888 = vld [vmem:[%s884 + $0x8] sm:$0xff]
                %889 = vst [vmem:[%s885 + $0x8] sm:$0xff] %v888
                %v890 = vld [vmem:[%s884 + $0x10] sm:$0xff]
                %891 = vst [vmem:[%s885 + $0x10] sm:$0xff] %v890
                %v892 = vld [vmem:[%s884 + $0x18] sm:$0xff]
                %893 = vst [vmem:[%s885 + $0x18] sm:$0xff] %v892
                %v894 = vld [vmem:[%s884 + $0x20] sm:$0xff]
                %895 = vst [vmem:[%s885 + $0x20] sm:$0xff] %v894
                %v896 = vld [vmem:[%s884 + $0x28] sm:$0xff]
                %897 = vst [vmem:[%s885 + $0x28] sm:$0xff] %v896
                %v898 = vld [vmem:[%s884 + $0x30] sm:$0xff]
                %899 = vst [vmem:[%s885 + $0x30] sm:$0xff] %v898
                %v900 = vld [vmem:[%s884 + $0x38] sm:$0xff]
                %901 = vst [vmem:[%s885 + $0x38] sm:$0xff] %v900
                %v902 = vld [vmem:[%s884 + $0x40] sm:$0xff]
                %903 = vst [vmem:[%s885 + $0x40] sm:$0xff] %v902
                %v904 = vld [vmem:[%s884 + $0x48] sm:$0xff]
                %905 = vst [vmem:[%s885 + $0x48] sm:$0xff] %v904
                %v906 = vld [vmem:[%s884 + $0x50] sm:$0xff]
                %907 = vst [vmem:[%s885 + $0x50] sm:$0xff] %v906
                %v908 = vld [vmem:[%s884 + $0x58] sm:$0xff]
                %909 = vst [vmem:[%s885 + $0x58] sm:$0xff] %v908
                %v910 = vld [vmem:[%s884 + $0x60] sm:$0xff]
                %911 = vst [vmem:[%s885 + $0x60] sm:$0xff] %v910
                %v912 = vld [vmem:[%s884 + $0x68] sm:$0xff]
                %913 = vst [vmem:[%s885 + $0x68] sm:$0xff] %v912
                %v914 = vld [vmem:[%s884 + $0x70] sm:$0xff]
                %915 = vst [vmem:[%s885 + $0x70] sm:$0xff] %v914
                %v916 = vld [vmem:[%s884 + $0x78] sm:$0xff]
                %917 = vst [vmem:[%s885 + $0x78] sm:$0xff] %v916
                %v918 = vld [vmem:[%s884 + $0x80] sm:$0xff]
                %919 = vst [vmem:[%s885 + $0x80] sm:$0xff] %v918
                %v920 = vld [vmem:[%s884 + $0x88] sm:$0xff]
                %921 = vst [vmem:[%s885 + $0x88] sm:$0xff] %v920
                %v922 = vld [vmem:[%s884 + $0x90] sm:$0xff]
                %923 = vst [vmem:[%s885 + $0x90] sm:$0xff] %v922
                %v924 = vld [vmem:[%s884 + $0x98] sm:$0xff]
                %925 = vst [vmem:[%s885 + $0x98] sm:$0xff] %v924
                %v926 = vld [vmem:[%s884 + $0xa0] sm:$0xff]
                %927 = vst [vmem:[%s885 + $0xa0] sm:$0xff] %v926
                %v928 = vld [vmem:[%s884 + $0xa8] sm:$0xff]
                %929 = vst [vmem:[%s885 + $0xa8] sm:$0xff] %v928
                %v930 = vld [vmem:[%s884 + $0xb0] sm:$0xff]
                %931 = vst [vmem:[%s885 + $0xb0] sm:$0xff] %v930
                %v932 = vld [vmem:[%s884 + $0xb8] sm:$0xff]
                %933 = vst [vmem:[%s885 + $0xb8] sm:$0xff] %v932
                %v934 = vld [vmem:[%s884 + $0xc0] sm:$0xff]
                %935 = vst [vmem:[%s885 + $0xc0] sm:$0xff] %v934
                %v936 = vld [vmem:[%s884 + $0xc8] sm:$0xff]
                %937 = vst [vmem:[%s885 + $0xc8] sm:$0xff] %v936
                %v938 = vld [vmem:[%s884 + $0xd0] sm:$0xff]
                %939 = vst [vmem:[%s885 + $0xd0] sm:$0xff] %v938
                %v940 = vld [vmem:[%s884 + $0xd8] sm:$0xff]
                %941 = vst [vmem:[%s885 + $0xd8] sm:$0xff] %v940
                %v942 = vld [vmem:[%s884 + $0xe0] sm:$0xff]
                %943 = vst [vmem:[%s885 + $0xe0] sm:$0xff] %v942
                %v944 = vld [vmem:[%s884 + $0xe8] sm:$0xff]
                %945 = vst [vmem:[%s885 + $0xe8] sm:$0xff] %v944
                %v946 = vld [vmem:[%s884 + $0xf0] sm:$0xff]
                %947 = vst [vmem:[%s885 + $0xf0] sm:$0xff] %v946
                %v948 = vld [vmem:[%s884 + $0xf8] sm:$0xff]
                %949 = vst [vmem:[%s885 + $0xf8] sm:$0xff] %v948
                %v950 = vld [vmem:[%s884 + $0x100] sm:$0xff]
                %951 = vst [vmem:[%s885 + $0x100] sm:$0xff] %v950
                %v952 = vld [vmem:[%s884 + $0x108] sm:$0xff]
                %953 = vst [vmem:[%s885 + $0x108] sm:$0xff] %v952
                %v954 = vld [vmem:[%s884 + $0x110] sm:$0xff]
                %955 = vst [vmem:[%s885 + $0x110] sm:$0xff] %v954
                %v956 = vld [vmem:[%s884 + $0x118] sm:$0xff]
                %957 = vst [vmem:[%s885 + $0x118] sm:$0xff] %v956
                %v958 = vld [vmem:[%s884 + $0x120] sm:$0xff]
                %959 = vst [vmem:[%s885 + $0x120] sm:$0xff] %v958
                %v960 = vld [vmem:[%s884 + $0x128] sm:$0xff]
                %961 = vst [vmem:[%s885 + $0x128] sm:$0xff] %v960
                %v962 = vld [vmem:[%s884 + $0x130] sm:$0xff]
                %963 = vst [vmem:[%s885 + $0x130] sm:$0xff] %v962
                %v964 = vld [vmem:[%s884 + $0x138] sm:$0xff]
                %965 = vst [vmem:[%s885 + $0x138] sm:$0xff] %v964
                %v966 = vld [vmem:[%s884 + $0x140] sm:$0xff]
                %967 = vst [vmem:[%s885 + $0x140] sm:$0xff] %v966
                %v968 = vld [vmem:[%s884 + $0x148] sm:$0xff]
                %969 = vst [vmem:[%s885 + $0x148] sm:$0xff] %v968
                %v970 = vld [vmem:[%s884 + $0x150] sm:$0xff]
                %971 = vst [vmem:[%s885 + $0x150] sm:$0xff] %v970
                %v972 = vld [vmem:[%s884 + $0x158] sm:$0xff]
                %973 = vst [vmem:[%s885 + $0x158] sm:$0xff] %v972
                %v974 = vld [vmem:[%s884 + $0x160] sm:$0xff]
                %975 = vst [vmem:[%s885 + $0x160] sm:$0xff] %v974
                %v976 = vld [vmem:[%s884 + $0x168] sm:$0xff]
                %977 = vst [vmem:[%s885 + $0x168] sm:$0xff] %v976
                %v978 = vld [vmem:[%s884 + $0x170] sm:$0xff]
                %979 = vst [vmem:[%s885 + $0x170] sm:$0xff] %v978
                %v980 = vld [vmem:[%s884 + $0x178] sm:$0xff]
                %981 = vst [vmem:[%s885 + $0x178] sm:$0xff] %v980
                %v982 = vld [vmem:[%s884 + $0x180] sm:$0xff]
                %983 = vst [vmem:[%s885 + $0x180] sm:$0xff] %v982
                %v984 = vld [vmem:[%s884 + $0x188] sm:$0xff]
                %985 = vst [vmem:[%s885 + $0x188] sm:$0xff] %v984
                %v986 = vld [vmem:[%s884 + $0x190] sm:$0xff]
                %987 = vst [vmem:[%s885 + $0x190] sm:$0xff] %v986
                %v988 = vld [vmem:[%s884 + $0x198] sm:$0xff]
                %989 = vst [vmem:[%s885 + $0x198] sm:$0xff] %v988
                %v990 = vld [vmem:[%s884 + $0x1a0] sm:$0xff]
                %991 = vst [vmem:[%s885 + $0x1a0] sm:$0xff] %v990
                %v992 = vld [vmem:[%s884 + $0x1a8] sm:$0xff]
                %993 = vst [vmem:[%s885 + $0x1a8] sm:$0xff] %v992
                %v994 = vld [vmem:[%s884 + $0x1b0] sm:$0xff]
                %995 = vst [vmem:[%s885 + $0x1b0] sm:$0xff] %v994
                %v996 = vld [vmem:[%s884 + $0x1b8] sm:$0xff]
                %997 = vst [vmem:[%s885 + $0x1b8] sm:$0xff] %v996
                %v998 = vld [vmem:[%s884 + $0x1c0] sm:$0xff]
                %999 = vst [vmem:[%s885 + $0x1c0] sm:$0xff] %v998
                %v1000 = vld [vmem:[%s884 + $0x1c8] sm:$0xff]
                %1001 = vst [vmem:[%s885 + $0x1c8] sm:$0xff] %v1000
                %v1002 = vld [vmem:[%s884 + $0x1d0] sm:$0xff]
                %1003 = vst [vmem:[%s885 + $0x1d0] sm:$0xff] %v1002
                %v1004 = vld [vmem:[%s884 + $0x1d8] sm:$0xff]
                %1005 = vst [vmem:[%s885 + $0x1d8] sm:$0xff] %v1004
                %v1006 = vld [vmem:[%s884 + $0x1e0] sm:$0xff]
                %1007 = vst [vmem:[%s885 + $0x1e0] sm:$0xff] %v1006
                %v1008 = vld [vmem:[%s884 + $0x1e8] sm:$0xff]
                %1009 = vst [vmem:[%s885 + $0x1e8] sm:$0xff] %v1008
                %v1010 = vld [vmem:[%s884 + $0x1f0] sm:$0xff]
                %1011 = vst [vmem:[%s885 + $0x1f0] sm:$0xff] %v1010
                %v1012 = vld [vmem:[%s884 + $0x1f8] sm:$0xff]
                %1013 = vst [vmem:[%s885 + $0x1f8] sm:$0xff] %v1012
                %s1014 = sadd.s32 1, %s883
                %p1015 = scmp.ge.s32.totalorder %s1014, %s876
                %s1016 = scalar_select %p1015, 0, %s1014
                %s1017 = smul.u32 %s1016, 512
                %s1018 = smul.u32 %s1016, 512
                %s1019 = scalar_lea.vmem %s856, %s1017 [#allocation6]
                %s1020 = scalar_lea.vmem %s867, %s1018
              $region61: #{net_forward.3} parent=55 // loop_footer
                %s880 = sadd.s32 %s878, 1
              $region62: #{net_forward.3} parent=55 // loop_footer_branch
                %877 = sbr.rel target = $region58
              $region63: #{net_forward.3} parent=55 // loop_exit
                _
              %s1021 = sshrl.u32 %s863, 6
              %s1022 = sand.u32 %s863, 63
              %s1023 = smul.u32 %s1021, 64
              %s1024 = smul.u32 8, %s1023
              %s1025 = scalar_lea.vmem %s856, %s1024 [#allocation6]
              %s1026 = smul.u32 8, %s1023
              %s1027 = scalar_lea.vmem %s867, %s1026
              // While loop
              $region64: #{net_forward.3} parent=55 // loop_pre_header
                _
              $region65: #{net_forward.3} parent=55 // loop_header
                %s1029 = sphi 0, %s1031
                %p1030 = scmp.ge.s32.totalorder %s1029, %s1022
                %s1034 = sphi 0, %s1041
                %s1035 = sphi %s1025, %s1044
                %s1036 = sphi %s1027, %s1045
              $region66: #{net_forward.3} parent=55 // loop_header_branch
                %1033 = sbr.rel (%p1030) target = $region70
              $region67: #{net_forward.3} parent=55 // loop_body
                %v1037 = vld [vmem:[%s1035] sm:$0xff]
                %1038 = vst [vmem:[%s1036] sm:$0xff] %v1037
                %s1039 = sadd.s32 1, %s1034
                %p1040 = scmp.ge.s32.totalorder %s1039, %s1022
                %s1041 = scalar_select %p1040, 0, %s1039
                %s1042 = smul.u32 %s1041, 8
                %s1043 = smul.u32 %s1041, 8
                %s1044 = scalar_lea.vmem %s1025, %s1042 [#allocation6]
                %s1045 = scalar_lea.vmem %s1027, %s1043
              $region68: #{net_forward.3} parent=55 // loop_footer
                %s1031 = sadd.s32 %s1029, 1
              $region69: #{net_forward.3} parent=55 // loop_footer_branch
                %1028 = sbr.rel target = $region65
              $region70: #{net_forward.3} parent=55 // loop_exit
                _
            $region56: #{net_forward.3} parent=47 // pred_fallthru
              _
          $region48: #{net_forward.3} parent=43 // pred_fallthru
            _
          %1220 = vnop
        $region44: #{net_forward.3} parent=31 // pred_fallthru
          _
      $region32: #{net_forward.3} parent=5 // pred_fallthru
        _
      %p1221 = scmp.le.s32.totalorder 2, %s11
      // Predicated region
      $region93: #{net_forward.3} parent=5 // pred_check
        %p1222 = pneg %p1221
      $region94: #{net_forward.3} parent=5 // pred_check_branch
        %1224 = sbr.rel (%p1222) target = $region96
      $region95: #{net_forward.3} parent=5 // pred_region
        %s1225 = ssub.s32 %s11, 2
        // Predicated region
        $region97: #{net_forward.3} parent=95 // pred_check
          %p1226 = pneg %p108
        $region98: #{net_forward.3} parent=95 // pred_check_branch
          %1228 = sbr.rel (%p1226) target = $region100
        $region99: #{net_forward.3} parent=95 // pred_region
          %s1229 = sand.u32 %s93, 1
          %s1230 = sand.u32 %s93, 1
          %s1231 = smul.addr %s1230, 512
          %s1232 = scalar_lea.vmem [#allocation6], %s1231
        $region100: #{net_forward.3} parent=95 // pred_fallthru
          _
      $region96: #{net_forward.3} parent=5 // pred_fallthru
        _
    $region6: #{net_forward.3} parent=1 // loop_footer
      %s15 = sadd.s32 1, %s11
    $region7: #{net_forward.3} parent=1 // loop_footer_branch
      %10 = sbr.rel target = $region3
    $region8: #{net_forward.3} parent=1 // loop_exit
      _
    %1233 = vsyncpa [#allocation3], 1
    %s1234 = scalar_lea.sflag [#allocation3], 1
    %1235 = vsyncpa %s1234, 1
    %1236 = vsyncpa [#allocation5], 1

// kernel: net_forward.4
$region0: #{net_forward.4}
  #allocation0 [shape = 'u32[]', space=smem, size = 0x4, offset = 0x4, fixed_abs, tag = 'smem constant byte address 0x4 - core index']
  #allocation1 [shape = 'u32[144,128]{1,0:T(1,128)}', space=vmem, size = 0x12000, scoped, tag = 'internal scratch']
  %s0 = inlined_call_operand.vmem [shape: f32[1152,288], index: 0, kind: input, shape index: {}]
  %s1 = inlined_call_operand.vmem [shape: bf16[288,64], index: 1, kind: input, shape index: {}]
  %s2 = inlined_call_operand.vmem [shape: f32[1,64], index: 2, kind: input, shape index: {}]
  %s3 = inlined_call_operand.vmem [shape: f32[1152,64], index: 3, kind: output, shape index: {}]
  %s4 = sld [smem:[#allocation0]]
  $region93: #{net_forward.4} parent=0
    _
  %s6 = ssub.s32 1, %s4
  %s7 = scalar_select 0, %s6, %s4
  $region1: #{net_forward.4} parent=0
    #allocation2 [shape = 'u8[524288]{0}', space=vmem, size = 0x80000, scoped, tag = 'output window, operand 0']
    loop: start=0, step=1, limit=5
    $region2: #{net_forward.4} parent=1 // loop_pre_header
      _
    $region3: #{net_forward.4} parent=1 // loop_header
      %s9 = sphi 0, %s13
      %p10 = scmp.ge.s32.totalorder %s9, 5
      %s19 = sphi 0, %s21
      %s22 = sphi 0, %s19
      %s23 = sphi 0, %s22
      %s39 = sphi 0, %s23
      %s43 = sphi 0, %s43
      %s45 = sphi 0, %s43
      %s46 = sphi 0, %s45
      %s60 = sphi 0, %s46
      %s64 = sphi 0, %s64
      %s66 = sphi 0, %s64
      %s67 = sphi 0, %s66
      %s81 = sphi 0, %s67
      %s87 = sphi 0, %s89
      %s90 = sphi 0, %s87
      %s91 = sphi 0, %s90
      %s107 = sphi 0, %s91
    $region4: #{net_forward.4} parent=1 // loop_header_branch
      %12 = sbr.rel (%p10) target = $region8
    $region5: #{net_forward.4} parent=1 // loop_body
      %s14 = ssub.s32 %s9, 1
      %s15 = ssub.s32 %s9, 2
      %s16 = sadd.s32 %s9, 1
      %s17 = ssub.s32 %s9, %s16
      %p18 = scmp.eq.s32.totalorder %s17, 0
      %s20 = sadd.s32 %s19, 1
      %s21 = scalar_select %p18, %s19, %s20
      %p24 = pneg %p18
      %p25 = scmp.eq.s32.totalorder %s9, 2
      %p26 = por %p24, %p25
      %p27 = scmp.ne.s32.totalorder %s19, %s22
      %p28 = scmp.eq.s32.totalorder %s9, 0
      %p29 = por %p27, %p28
      %p30 = scmp.ne.s32.totalorder %s19, %s22
      %p31 = scmp.eq.s32.totalorder %s14, 2
      %p32 = por %p30, %p31
      %p33 = scmp.ne.s32.totalorder %s22, %s23
      %p34 = scmp.eq.s32.totalorder %s14, 0
      %p35 = por %p33, %p34
      %p36 = scmp.ne.s32.totalorder %s22, %s23
      %p37 = scmp.eq.s32.totalorder %s15, 2
      %p38 = por %p36, %p37
      %p40 = scmp.ne.s32.totalorder %s23, %s39
      %p41 = scmp.eq.s32.totalorder %s15, 0
      %p42 = por %p40, %p41
      %s44 = sadd.s32 %s43, 1
      %p47 = scmp.eq.s32.totalorder %s9, 2
      %p48 = scmp.ne.s32.totalorder %s43, %s45
      %p49 = scmp.eq.s32.totalorder %s9, 0
      %p50 = por %p48, %p49
      %p51 = scmp.ne.s32.totalorder %s43, %s45
      %p52 = scmp.eq.s32.totalorder %s14, 2
      %p53 = por %p51, %p52
      %p54 = scmp.ne.s32.totalorder %s45, %s46
      %p55 = scmp.eq.s32.totalorder %s14, 0
      %p56 = por %p54, %p55
      %p57 = scmp.ne.s32.totalorder %s45, %s46
      %p58 = scmp.eq.s32.totalorder %s15, 2
      %p59 = por %p57, %p58
      %p61 = scmp.ne.s32.totalorder %s46, %s60
      %p62 = scmp.eq.s32.totalorder %s15, 0
      %p63 = por %p61, %p62
      %s65 = sadd.s32 %s64, 1
      %p68 = scmp.eq.s32.totalorder %s9, 2
      %p69 = scmp.ne.s32.totalorder %s64, %s66
      %p70 = scmp.eq.s32.totalorder %s9, 0
      %p71 = por %p69, %p70
      %p72 = scmp.ne.s32.totalorder %s64, %s66
      %p73 = scmp.eq.s32.totalorder %s14, 2
      %p74 = por %p72, %p73
      %p75 = scmp.ne.s32.totalorder %s66, %s67
      %p76 = scmp.eq.s32.totalorder %s14, 0
      %p77 = por %p75, %p76
      %p78 = scmp.ne.s32.totalorder %s66, %s67
      %p79 = scmp.eq.s32.totalorder %s15, 2
      %p80 = por %p78, %p79
      %p82 = scmp.ne.s32.totalorder %s67, %s81
      %p83 = scmp.eq.s32.totalorder %s15, 0
      %p84 = por %p82, %p83
      %s85 = ssub.s32 %s9, %s16
      %p86 = scmp.eq.s32.totalorder %s85, 0
      %s88 = sadd.s32 %s87, 1
      %s89 = scalar_select %p86, %s87, %s88
      %p92 = pneg %p86
      %p93 = scmp.eq.s32.totalorder %s9, 2
      %p94 = por %p92, %p93
      %p95 = scmp.ne.s32.totalorder %s87, %s90
      %p96 = scmp.eq.s32.totalorder %s9, 0
      %p97 = por %p95, %p96
      %p98 = scmp.ne.s32.totalorder %s87, %s90
      %p99 = scmp.eq.s32.totalorder %s14, 2
      %p100 = por %p98, %p99
      %p101 = scmp.ne.s32.totalorder %s90, %s91
      %p102 = scmp.eq.s32.totalorder %s14, 0
      %p103 = por %p101, %p102
      %p104 = scmp.ne.s32.totalorder %s90, %s91
      %p105 = scmp.eq.s32.totalorder %s15, 2
      %p106 = por %p104, %p105
      %p108 = scmp.ne.s32.totalorder %s91, %s107
      %p109 = scmp.eq.s32.totalorder %s15, 0
      %p110 = por %p108, %p109
      %p111 = scmp.le.s32.totalorder 1, %s9
      %p112 = scmp.lt.s32.totalorder %s9, 4
      %p113 = pnand %p111, %p112
      %p114 = pneg %p113
      // Predicated region
      $region9: #{net_forward.4} parent=5 // pred_check
        _
      $region10: #{net_forward.4} parent=5 // pred_check_branch
        %116 = sbr.rel (%p113) target = $region12
      $region11: #{net_forward.4} parent=5 // pred_region
        %s117 = ssub.s32 %s9, 1
        // Predicated region
        $region13: #{net_forward.4} parent=11 // pred_check
          %p118 = pneg %p56
        $region14: #{net_forward.4} parent=11 // pred_check_branch
          %120 = sbr.rel (%p118) target = $region16
        $region15: #{net_forward.4} parent=11 // pred_region
          _
        $region16: #{net_forward.4} parent=11 // pred_fallthru
          _
        // Predicated region
        $region17: #{net_forward.4} parent=11 // pred_check
          %p121 = pneg %p77
        $region18: #{net_forward.4} parent=11 // pred_check_branch
          %123 = sbr.rel (%p121) target = $region20
        $region19: #{net_forward.4} parent=11 // pred_region
          _
        $region20: #{net_forward.4} parent=11 // pred_fallthru
          _
      $region12: #{net_forward.4} parent=5 // pred_fallthru
        _
      %p124 = scmp.lt.s32.totalorder %s9, 3
      // Predicated region
      $region21: #{net_forward.4} parent=5 // pred_check
        %p125 = pneg %p124
      $region22: #{net_forward.4} parent=5 // pred_check_branch
        %127 = sbr.rel (%p125) target = $region24
      $region23: #{net_forward.4} parent=5 // pred_region
        // Predicated region
        $region25: #{net_forward.4} parent=23 // pred_check
          %p128 = pneg %p29
        $region26: #{net_forward.4} parent=23 // pred_check_branch
          %130 = sbr.rel (%p128) target = $region28
        $region27: #{net_forward.4} parent=23 // pred_region
          %s131 = smul.u32 64, %s9
          %s132 = ssub.s32 144, %s131
          %p133 = scmp.lt.s32.totalorder %s132, 64
          %s134 = scalar_select %p133, %s132, 64
          %s135 = smul.u32 128, %s134
          %s136 = smul.u32 %s135, 3
          %p137 = scmp.lt.s32.totalorder %s131, 143
          %s138 = scalar_select %p137, %s131, 143
          %s139 = smul.addr %s138, 3
          %s140 = smul.addr %s139, 8
          %s141 = scalar_lea.vmem %s0, %s140
          %s142 = smul.u32 64, %s9
          %s143 = ssub.s32 144, %s142
          %p144 = scmp.lt.s32.totalorder %s143, 64
          %s145 = scalar_select %p144, %s143, 64
          %s146 = smul.u32 128, %s145
          %s147 = smul.u32 %s146, 3
        $region28: #{net_forward.4} parent=23 // pred_fallthru
          _
      $region24: #{net_forward.4} parent=5 // pred_fallthru
        _
      %p148 = scmp.le.s32.totalorder 1, %s9
      %p149 = scmp.lt.s32.totalorder %s9, 4
      %p150 = pnand %p148, %p149
      %p151 = pneg %p150
      // Predicated region
      $region29: #{net_forward.4} parent=5 // pred_check
        _
      $region30: #{net_forward.4} parent=5 // pred_check_branch
        %153 = sbr.rel (%p150) target = $region32
      $region31: #{net_forward.4} parent=5 // pred_region
        %s154 = ssub.s32 %s9, 1
        %s155 = smul.u32 64, %s14
        %s156 = ssub.s32 144, %s155
        %p157 = scmp.lt.s32.totalorder %s156, 64
        %s158 = scalar_select %p157, %s156, 64
        %s159 = smul.u32 128, %s158
        %s160 = smul.u32 %s159, 3
        %p161 = scmp.lt.s32.totalorder %s155, 143
        %s162 = scalar_select %p161, %s155, 143
        %s163 = smul.addr %s162, 3
        %s164 = smul.addr %s163, 8
        %s165 = scalar_lea.vmem %s0, %s164
        %p166 = pneg %p35
        %p167 = pneg %p32
        %p168 = pneg %p56
        %p169 = pneg %p53
        %p170 = pneg %p77
        %p171 = pneg %p74
        %p172 = pneg %p103
        %p173 = pneg %p100
        %s174 = sand.u32 %s90, 1
        %s175 = sand.u32 %s90, 1
        %s176 = smul.addr %s175, 512
        %s177 = scalar_lea.vmem [#allocation2], %s176
        %s178 = smul.u32 64, %s14
        %s179 = ssub.s32 144, %s178
        %p180 = scmp.lt.s32.totalorder %s179, 64
        %s181 = scalar_select %p180, %s179, 64
        %s182 = smul.u32 128, %s181
        %s183 = smul.u32 %s182, 3
        %p184 = scmp.lt.s32.totalorder %s178, 143
        %s185 = scalar_select %p184, %s178, 143
        %s186 = smul.addr %s185, 3
        %s187 = smul.addr %s186, 8
        %s188 = scalar_lea.vmem %s0, %s187
        %s189 = smul.u32 64, %s14
        %s190 = ssub.s32 144, %s189
        %p191 = scmp.lt.s32.totalorder %s190, 64
        %s192 = scalar_select %p191, %s190, 64
        %s193 = smul.u32 128, %s192
        %s194 = smul.u32 %s193, 3
        %s195 = smul.u32 64, %s14
        %s196 = ssub.s32 144, %s195
        %p197 = scmp.lt.s32.totalorder %s196, 64
        %s198 = scalar_select %p197, %s196, 64
        %s199 = smul.u32 128, %s198
        %v201 = vld [vmem:[%s188] sm:$0xff]
        %v202 = vld [vmem:[%s188 + $0x8] sm:$0xff]
        %v203 = vld [vmem:[%s188 + $0x10] sm:$0xff]
        %v204 = vld [vmem:[%s188 + $0x18] sm:$0xff]
        %v205 = vld [vmem:[%s188 + $0x20] sm:$0xff]
        %v206 = vld [vmem:[%s188 + $0x28] sm:$0xff]
        %v207 = vld [vmem:[%s188 + $0x30] sm:$0xff]
        %v208 = vld [vmem:[%s188 + $0x38] sm:$0xff]
        %v209 = vld [vmem:[%s188 + $0x40] sm:$0xff]
        %v210 = vld [vmem:[%s188 + $0x48] sm:$0xff]
        %v211 = vld [vmem:[%s188 + $0x50] sm:$0xff]
        %v212 = vld [vmem:[%s188 + $0x58] sm:$0xff]
        %v213 = vld [vmem:[%s188 + $0x60] sm:$0xff]
        %v214 = vld [vmem:[%s188 + $0x68] sm:$0xff]
        %v215 = vld [vmem:[%s188 + $0x70] sm:$0xff]
        %v216 = vld [vmem:[%s188 + $0x78] sm:$0xff]
        %v217 = vld [vmem:[%s188 + $0x80] sm:$0xff]
        %v218 = vld [vmem:[%s188 + $0x88] sm:$0xff]
        %v219 = vld [vmem:[%s188 + $0x90] sm:$0xff]
        %v220 = vld [vmem:[%s188 + $0x98] sm:$0xff]
        %v221 = vld [vmem:[%s188 + $0xa0] sm:$0xff]
        %v222 = vld [vmem:[%s188 + $0xa8] sm:$0xff]
        %v223 = vld [vmem:[%s188 + $0xb0] sm:$0xff]
        %v224 = vld [vmem:[%s188 + $0xb8] sm:$0xff]
        %v225 = vld [vmem:[%s188 + $0xc0] sm:$0xff]
        %v226 = vld [vmem:[%s188 + $0xc8] sm:$0xff]
        %v227 = vld [vmem:[%s188 + $0xd0] sm:$0xff]
        %v228 = vld [vmem:[%s188 + $0xd8] sm:$0xff]
        %v229 = vld [vmem:[%s188 + $0xe0] sm:$0xff]
        %v230 = vld [vmem:[%s188 + $0xe8] sm:$0xff]
        %v231 = vld [vmem:[%s188 + $0xf0] sm:$0xff]
        %v232 = vld [vmem:[%s188 + $0xf8] sm:$0xff]
        %v233 = vld [vmem:[%s188 + $0x100] sm:$0xff]
        %v234 = vld [vmem:[%s188 + $0x108] sm:$0xff]
        %v235 = vld [vmem:[%s188 + $0x110] sm:$0xff]
        %v236 = vld [vmem:[%s188 + $0x118] sm:$0xff]
        %v237 = vld [vmem:[%s188 + $0x120] sm:$0xff]
        %v238 = vld [vmem:[%s188 + $0x128] sm:$0xff]
        %v239 = vld [vmem:[%s188 + $0x130] sm:$0xff]
        %v240 = vld [vmem:[%s188 + $0x138] sm:$0xff]
        %v241 = vld [vmem:[%s188 + $0x140] sm:$0xff]
        %v242 = vld [vmem:[%s188 + $0x148] sm:$0xff]
        %v243 = vld [vmem:[%s188 + $0x150] sm:$0xff]
        %v244 = vld [vmem:[%s188 + $0x158] sm:$0xff]
        %v245 = vld [vmem:[%s188 + $0x160] sm:$0xff]
        %v246 = vld [vmem:[%s188 + $0x168] sm:$0xff]
        %v247 = vld [vmem:[%s188 + $0x170] sm:$0xff]
        %v248 = vld [vmem:[%s188 + $0x178] sm:$0xff]
        %v249 = vld [vmem:[%s188 + $0x180] sm:$0xff]
        %v250 = vld [vmem:[%s188 + $0x188] sm:$0xff]
        %v251 = vld [vmem:[%s188 + $0x190] sm:$0xff]
        %v252 = vld [vmem:[%s188 + $0x198] sm:$0xff]
        %v253 = vld [vmem:[%s188 + $0x1a0] sm:$0xff]
        %v254 = vld [vmem:[%s188 + $0x1a8] sm:$0xff]
        %v255 = vld [vmem:[%s188 + $0x1b0] sm:$0xff]
        %v256 = vld [vmem:[%s188 + $0x1b8] sm:$0xff]
        %v257 = vld [vmem:[%s188 + $0x1c0] sm:$0xff]
        %v258 = vld [vmem:[%s188 + $0x1c8] sm:$0xff]
        %v259 = vld [vmem:[%s188 + $0x1d0] sm:$0xff]
        %v260 = vld [vmem:[%s188 + $0x1d8] sm:$0xff]
        %v261 = vld [vmem:[%s188 + $0x1e0] sm:$0xff]
        %v262 = vld [vmem:[%s188 + $0x1e8] sm:$0xff]
        %v263 = vld [vmem:[%s188 + $0x1f0] sm:$0xff]
        %v264 = vld [vmem:[%s188 + $0x1f8] sm:$0xff]
        %v265 = vld [vmem:[%s188 + $0x200] sm:$0xff]
        %v266 = vld [vmem:[%s188 + $0x208] sm:$0xff]
        %v267 = vld [vmem:[%s188 + $0x210] sm:$0xff]
        %v268 = vld [vmem:[%s188 + $0x218] sm:$0xff]
        %v269 = vld [vmem:[%s188 + $0x220] sm:$0xff]
        %v270 = vld [vmem:[%s188 + $0x228] sm:$0xff]
        %v271 = vld [vmem:[%s188 + $0x230] sm:$0xff]
        %v272 = vld [vmem:[%s188 + $0x238] sm:$0xff]
        %v273 = vld [vmem:[%s188 + $0x240] sm:$0xff]
        %v274 = vld [vmem:[%s188 + $0x248] sm:$0xff]
        %v275 = vld [vmem:[%s188 + $0x250] sm:$0xff]
        %v276 = vld [vmem:[%s188 + $0x258] sm:$0xff]
        %v277 = vld [vmem:[%s188 + $0x260] sm:$0xff]
        %v278 = vld [vmem:[%s188 + $0x268] sm:$0xff]
        %v279 = vld [vmem:[%s188 + $0x270] sm:$0xff]
        %v280 = vld [vmem:[%s188 + $0x278] sm:$0xff]
        %v281 = vld [vmem:[%s188 + $0x280] sm:$0xff]
        %v282 = vld [vmem:[%s188 + $0x288] sm:$0xff]
        %v283 = vld [vmem:[%s188 + $0x290] sm:$0xff]
        %v284 = vld [vmem:[%s188 + $0x298] sm:$0xff]
        %v285 = vld [vmem:[%s188 + $0x2a0] sm:$0xff]
        %v286 = vld [vmem:[%s188 + $0x2a8] sm:$0xff]
        %v287 = vld [vmem:[%s188 + $0x2b0] sm:$0xff]
        %v288 = vld [vmem:[%s188 + $0x2b8] sm:$0xff]
        %v289 = vld [vmem:[%s188 + $0x2c0] sm:$0xff]
        %v290 = vld [vmem:[%s188 + $0x2c8] sm:$0xff]
        %v291 = vld [vmem:[%s188 + $0x2d0] sm:$0xff]
        %v292 = vld [vmem:[%s188 + $0x2d8] sm:$0xff]
        %v293 = vld [vmem:[%s188 + $0x2e0] sm:$0xff]
        %v294 = vld [vmem:[%s188 + $0x2e8] sm:$0xff]
        %v295 = vld [vmem:[%s188 + $0x2f0] sm:$0xff]
        %v296 = vld [vmem:[%s188 + $0x2f8] sm:$0xff]
        %v297 = vld [vmem:[%s188 + $0x300] sm:$0xff]
        %v298 = vld [vmem:[%s188 + $0x308] sm:$0xff]
        %v299 = vld [vmem:[%s188 + $0x310] sm:$0xff]
        %v300 = vld [vmem:[%s188 + $0x318] sm:$0xff]
        %v301 = vld [vmem:[%s188 + $0x320] sm:$0xff]
        %v302 = vld [vmem:[%s188 + $0x328] sm:$0xff]
        %v303 = vld [vmem:[%s188 + $0x330] sm:$0xff]
        %v304 = vld [vmem:[%s188 + $0x338] sm:$0xff]
        %v305 = vld [vmem:[%s188 + $0x340] sm:$0xff]
        %v306 = vld [vmem:[%s188 + $0x348] sm:$0xff]
        %v307 = vld [vmem:[%s188 + $0x350] sm:$0xff]
        %v308 = vld [vmem:[%s188 + $0x358] sm:$0xff]
        %v309 = vld [vmem:[%s188 + $0x360] sm:$0xff]
        %v310 = vld [vmem:[%s188 + $0x368] sm:$0xff]
        %v311 = vld [vmem:[%s188 + $0x370] sm:$0xff]
        %v312 = vld [vmem:[%s188 + $0x378] sm:$0xff]
        %v313 = vld [vmem:[%s188 + $0x380] sm:$0xff]
        %v314 = vld [vmem:[%s188 + $0x388] sm:$0xff]
        %v315 = vld [vmem:[%s188 + $0x390] sm:$0xff]
        %v316 = vld [vmem:[%s188 + $0x398] sm:$0xff]
        %v317 = vld [vmem:[%s188 + $0x3a0] sm:$0xff]
        %v318 = vld [vmem:[%s188 + $0x3a8] sm:$0xff]
        %v319 = vld [vmem:[%s188 + $0x3b0] sm:$0xff]
        %v320 = vld [vmem:[%s188 + $0x3b8] sm:$0xff]
        %v321 = vld [vmem:[%s188 + $0x3c0] sm:$0xff]
        %v322 = vld [vmem:[%s188 + $0x3c8] sm:$0xff]
        %v323 = vld [vmem:[%s188 + $0x3d0] sm:$0xff]
        %v324 = vld [vmem:[%s188 + $0x3d8] sm:$0xff]
        %v325 = vld [vmem:[%s188 + $0x3e0] sm:$0xff]
        %v326 = vld [vmem:[%s188 + $0x3e8] sm:$0xff]
        %v327 = vld [vmem:[%s188 + $0x3f0] sm:$0xff]
        %v328 = vld [vmem:[%s188 + $0x3f8] sm:$0xff]
        %v329 = vld [vmem:[%s188 + $0x400] sm:$0xff]
        %v330 = vld [vmem:[%s188 + $0x408] sm:$0xff]
        %v331 = vld [vmem:[%s188 + $0x410] sm:$0xff]
        %v332 = vld [vmem:[%s188 + $0x418] sm:$0xff]
        %v333 = vld [vmem:[%s188 + $0x420] sm:$0xff]
        %v334 = vld [vmem:[%s188 + $0x428] sm:$0xff]
        %v335 = vld [vmem:[%s188 + $0x430] sm:$0xff]
        %v336 = vld [vmem:[%s188 + $0x438] sm:$0xff]
        %v337 = vld [vmem:[%s188 + $0x440] sm:$0xff]
        %v338 = vld [vmem:[%s188 + $0x448] sm:$0xff]
        %v339 = vld [vmem:[%s188 + $0x450] sm:$0xff]
        %v340 = vld [vmem:[%s188 + $0x458] sm:$0xff]
        %v341 = vld [vmem:[%s188 + $0x460] sm:$0xff]
        %v342 = vld [vmem:[%s188 + $0x468] sm:$0xff]
        %v343 = vld [vmem:[%s188 + $0x470] sm:$0xff]
        %v344 = vld [vmem:[%s188 + $0x478] sm:$0xff]
        %v345 = vld [vmem:[%s188 + $0x480] sm:$0xff]
        %v346 = vld [vmem:[%s188 + $0x488] sm:$0xff]
        %v347 = vld [vmem:[%s188 + $0x490] sm:$0xff]
        %v348 = vld [vmem:[%s188 + $0x498] sm:$0xff]
        %v349 = vld [vmem:[%s188 + $0x4a0] sm:$0xff]
        %v350 = vld [vmem:[%s188 + $0x4a8] sm:$0xff]
        %v351 = vld [vmem:[%s188 + $0x4b0] sm:$0xff]
        %v352 = vld [vmem:[%s188 + $0x4b8] sm:$0xff]
        %v353 = vld [vmem:[%s188 + $0x4c0] sm:$0xff]
        %v354 = vld [vmem:[%s188 + $0x4c8] sm:$0xff]
        %v355 = vld [vmem:[%s188 + $0x4d0] sm:$0xff]
        %v356 = vld [vmem:[%s188 + $0x4d8] sm:$0xff]
        %v357 = vld [vmem:[%s188 + $0x4e0] sm:$0xff]
        %v358 = vld [vmem:[%s188 + $0x4e8] sm:$0xff]
        %v359 = vld [vmem:[%s188 + $0x4f0] sm:$0xff]
        %v360 = vld [vmem:[%s188 + $0x4f8] sm:$0xff]
        %v361 = vld [vmem:[%s188 + $0x500] sm:$0xff]
        %v362 = vld [vmem:[%s188 + $0x508] sm:$0xff]
        %v363 = vld [vmem:[%s188 + $0x510] sm:$0xff]
        %v364 = vld [vmem:[%s188 + $0x518] sm:$0xff]
        %v365 = vld [vmem:[%s188 + $0x520] sm:$0xff]
        %v366 = vld [vmem:[%s188 + $0x528] sm:$0xff]
        %v367 = vld [vmem:[%s188 + $0x530] sm:$0xff]
        %v368 = vld [vmem:[%s188 + $0x538] sm:$0xff]
        %v369 = vld [vmem:[%s188 + $0x540] sm:$0xff]
        %v370 = vld [vmem:[%s188 + $0x548] sm:$0xff]
        %v371 = vld [vmem:[%s188 + $0x550] sm:$0xff]
        %v372 = vld [vmem:[%s188 + $0x558] sm:$0xff]
        %v373 = vld [vmem:[%s188 + $0x560] sm:$0xff]
        %v374 = vld [vmem:[%s188 + $0x568] sm:$0xff]
        %v375 = vld [vmem:[%s188 + $0x570] sm:$0xff]
        %v376 = vld [vmem:[%s188 + $0x578] sm:$0xff]
        %v377 = vld [vmem:[%s188 + $0x580] sm:$0xff]
        %v378 = vld [vmem:[%s188 + $0x588] sm:$0xff]
        %v379 = vld [vmem:[%s188 + $0x590] sm:$0xff]
        %v380 = vld [vmem:[%s188 + $0x598] sm:$0xff]
        %v381 = vld [vmem:[%s188 + $0x5a0] sm:$0xff]
        %v382 = vld [vmem:[%s188 + $0x5a8] sm:$0xff]
        %v383 = vld [vmem:[%s188 + $0x5b0] sm:$0xff]
        %v384 = vld [vmem:[%s188 + $0x5b8] sm:$0xff]
        %v385 = vld [vmem:[%s188 + $0x5c0] sm:$0xff]
        %v386 = vld [vmem:[%s188 + $0x5c8] sm:$0xff]
        %v387 = vld [vmem:[%s188 + $0x5d0] sm:$0xff]
        %v388 = vld [vmem:[%s188 + $0x5d8] sm:$0xff]
        %v389 = vld [vmem:[%s188 + $0x5e0] sm:$0xff]
        %v390 = vld [vmem:[%s188 + $0x5e8] sm:$0xff]
        %v391 = vld [vmem:[%s188 + $0x5f0] sm:$0xff]
        %v392 = vld [vmem:[%s188 + $0x5f8] sm:$0xff]
        %v393 = vpack.c.bf16 %v204, %v201
        %v394 = vpack.c.bf16 %v205, %v202
        %v395 = vpack.c.bf16 %v206, %v203
        %v396 = vpack.c.bf16 %v210, %v207
        %v397 = vpack.c.bf16 %v211, %v208
        %v398 = vpack.c.bf16 %v212, %v209
        %v399 = vpack.c.bf16 %v216, %v213
        %v400 = vpack.c.bf16 %v217, %v214
        %v401 = vpack.c.bf16 %v218, %v215
        %v402 = vpack.c.bf16 %v222, %v219
        %v403 = vpack.c.bf16 %v223, %v220
        %v404 = vpack.c.bf16 %v224, %v221
        %v405 = vpack.c.bf16 %v228, %v225
        %v406 = vpack.c.bf16 %v229, %v226
        %v407 = vpack.c.bf16 %v230, %v227
        %v408 = vpack.c.bf16 %v234, %v231
        %v409 = vpack.c.bf16 %v235, %v232
        %v410 = vpack.c.bf16 %v236, %v233
        %v411 = vpack.c.bf16 %v240, %v237
        %v412 = vpack.c.bf16 %v241, %v238
        %v413 = vpack.c.bf16 %v242, %v239
        %v414 = vpack.c.bf16 %v246, %v243
        %v415 = vpack.c.bf16 %v247, %v244
        %v416 = vpack.c.bf16 %v248, %v245
        %v417 = vpack.c.bf16 %v252, %v249
        %v418 = vpack.c.bf16 %v253, %v250
        %v419 = vpack.c.bf16 %v254, %v251
        %v420 = vpack.c.bf16 %v258, %v255
        %v421 = vpack.c.bf16 %v259, %v256
        %v422 = vpack.c.bf16 %v260, %v257
        %v423 = vpack.c.bf16 %v264, %v261
        %v424 = vpack.c.bf16 %v265, %v262
        %v425 = vpack.c.bf16 %v266, %v263
        %v426 = vpack.c.bf16 %v270, %v267
        %v427 = vpack.c.bf16 %v271, %v268
        %v428 = vpack.c.bf16 %v272, %v269
        %v429 = vpack.c.bf16 %v276, %v273
        %v430 = vpack.c.bf16 %v277, %v274
        %v431 = vpack.c.bf16 %v278, %v275
        %v432 = vpack.c.bf16 %v282, %v279
        %v433 = vpack.c.bf16 %v283, %v280
        %v434 = vpack.c.bf16 %v284, %v281
        %v435 = vpack.c.bf16 %v288, %v285
        %v436 = vpack.c.bf16 %v289, %v286
        %v437 = vpack.c.bf16 %v290, %v287
        %v438 = vpack.c.bf16 %v294, %v291
        %v439 = vpack.c.bf16 %v295, %v292
        %v440 = vpack.c.bf16 %v296, %v293
        %v441 = vpack.c.bf16 %v300, %v297
        %v442 = vpack.c.bf16 %v301, %v298
        %v443 = vpack.c.bf16 %v302, %v299
        %v444 = vpack.c.bf16 %v306, %v303
        %v445 = vpack.c.bf16 %v307, %v304
        %v446 = vpack.c.bf16 %v308, %v305
        %v447 = vpack.c.bf16 %v312, %v309
        %v448 = vpack.c.bf16 %v313, %v310
        %v449 = vpack.c.bf16 %v314, %v311
        %v450 = vpack.c.bf16 %v318, %v315
        %v451 = vpack.c.bf16 %v319, %v316
        %v452 = vpack.c.bf16 %v320, %v317
        %v453 = vpack.c.bf16 %v324, %v321
        %v454 = vpack.c.bf16 %v325, %v322
        %v455 = vpack.c.bf16 %v326, %v323
        %v456 = vpack.c.bf16 %v330, %v327
        %v457 = vpack.c.bf16 %v331, %v328
        %v458 = vpack.c.bf16 %v332, %v329
        %v459 = vpack.c.bf16 %v336, %v333
        %v460 = vpack.c.bf16 %v337, %v334
        %v461 = vpack.c.bf16 %v338, %v335
        %v462 = vpack.c.bf16 %v342, %v339
        %v463 = vpack.c.bf16 %v343, %v340
        %v464 = vpack.c.bf16 %v344, %v341
        %v465 = vpack.c.bf16 %v348, %v345
        %v466 = vpack.c.bf16 %v349, %v346
        %v467 = vpack.c.bf16 %v350, %v347
        %v468 = vpack.c.bf16 %v354, %v351
        %v469 = vpack.c.bf16 %v355, %v352
        %v470 = vpack.c.bf16 %v356, %v353
        %v471 = vpack.c.bf16 %v360, %v357
        %v472 = vpack.c.bf16 %v361, %v358
        %v473 = vpack.c.bf16 %v362, %v359
        %v474 = vpack.c.bf16 %v366, %v363
        %v475 = vpack.c.bf16 %v367, %v364
        %v476 = vpack.c.bf16 %v368, %v365
        %v477 = vpack.c.bf16 %v372, %v369
        %v478 = vpack.c.bf16 %v373, %v370
        %v479 = vpack.c.bf16 %v374, %v371
        %v480 = vpack.c.bf16 %v378, %v375
        %v481 = vpack.c.bf16 %v379, %v376
        %v482 = vpack.c.bf16 %v380, %v377
        %v483 = vpack.c.bf16 %v384, %v381
        %v484 = vpack.c.bf16 %v385, %v382
        %v485 = vpack.c.bf16 %v386, %v383
        %v486 = vpack.c.bf16 %v390, %v387
        %v487 = vpack.c.bf16 %v391, %v388
        %v488 = vpack.c.bf16 %v392, %v389
        %v489 = vld [vmem:[%s1] sm:$0xf]
        %v490 = vld [vmem:[%s1 + $0x4] sm:$0xf]
        %v491 = vld [vmem:[%s1 + $0x8] sm:$0xf]
        %v492 = vld [vmem:[%s1 + $0xc] sm:$0xf]
        %v493 = vld [vmem:[%s1 + $0x10] sm:$0xf]
        %v494 = vld [vmem:[%s1 + $0x14] sm:$0xf]
        %v495 = vld [vmem:[%s1 + $0x18] sm:$0xf]
        %v496 = vld [vmem:[%s1 + $0x1c] sm:$0xf]
        %v497 = vld [vmem:[%s1 + $0x20] sm:$0xf]
        %v498 = vld [vmem:[%s1 + $0x24] sm:$0xf]
        %v499 = vld [vmem:[%s1 + $0x28] sm:$0xf]
        %v500 = vld [vmem:[%s1 + $0x2c] sm:$0xf]
        %v501 = vld [vmem:[%s1 + $0x30] sm:$0xf]
        %v502 = vld [vmem:[%s1 + $0x34] sm:$0xf]
        %v503 = vld [vmem:[%s1 + $0x38] sm:$0xf]
        %v504 = vld [vmem:[%s1 + $0x3c] sm:$0xf]
        %v505 = vld [vmem:[%s1 + $0x40] sm:$0xf]
        %v506 = vld [vmem:[%s1 + $0x44] sm:$0xf]
        %v507 = vld [vmem:[%s1 + $0x48] sm:$0xf]
        %v508 = vld [vmem:[%s1 + $0x4c] sm:$0xf]
        %v509 = vld [vmem:[%s1 + $0x50] sm:$0xf]
        %v510 = vld [vmem:[%s1 + $0x54] sm:$0xf]
        %v511 = vld [vmem:[%s1 + $0x58] sm:$0xf]
        %v512 = vld [vmem:[%s1 + $0x5c] sm:$0xf]
        %v513 = vld [vmem:[%s1 + $0x60] sm:$0xf]
        %v514 = vld [vmem:[%s1 + $0x64] sm:$0xf]
        %v515 = vld [vmem:[%s1 + $0x68] sm:$0xf]
        %v516 = vld [vmem:[%s1 + $0x6c] sm:$0xf]
        %v517 = vld [vmem:[%s1 + $0x70] sm:$0xf]
        %v518 = vld [vmem:[%s1 + $0x74] sm:$0xf]
        %v519 = vld [vmem:[%s1 + $0x78] sm:$0xf]
        %v520 = vld [vmem:[%s1 + $0x7c] sm:$0xf]
        %v521 = vld [vmem:[%s1 + $0x80] sm:$0xf]
        %v522 = vld [vmem:[%s1 + $0x84] sm:$0xf]
        %v523 = vld [vmem:[%s1 + $0x88] sm:$0xf]
        %v524 = vld [vmem:[%s1 + $0x8c] sm:$0xf]
        %v525 = vld [vmem:[%s2] sm:$0x1]
        %v527 = vlaneseq
        %v528 = vshrl.u32 %v527, 7
        %v529 = vsub.s32 0, %v528
        %v530 = vrot.slane %v525, %v529
        %v568 = vunpack.c.l.b16 %v489
        %v569 = vunpack.c.l.b16 %v490
        %v570 = vunpack.c.l.b16 %v491
        %v571 = vunpack.c.l.b16 %v492
        %v572 = vunpack.c.l.b16 %v493
        %v573 = vunpack.c.l.b16 %v494
        %v574 = vunpack.c.l.b16 %v495
        %v575 = vunpack.c.l.b16 %v496
        %v576 = vunpack.c.l.b16 %v497
        %v577 = vunpack.c.l.b16 %v498
        %v578 = vunpack.c.l.b16 %v499
        %v579 = vunpack.c.l.b16 %v500
        %v580 = vunpack.c.l.b16 %v501
        %v581 = vunpack.c.l.b16 %v502
        %v582 = vunpack.c.l.b16 %v503
        %v583 = vunpack.c.l.b16 %v504
        %v584 = vunpack.c.l.b16 %v505
        %v585 = vunpack.c.l.b16 %v506
        %v586 = vunpack.c.l.b16 %v507
        %v587 = vunpack.c.l.b16 %v508
        %v588 = vunpack.c.l.b16 %v509
        %v589 = vunpack.c.l.b16 %v510
        %v590 = vunpack.c.l.b16 %v511
        %v591 = vunpack.c.l.b16 %v512
        %v592 = vunpack.c.l.b16 %v513
        %v593 = vunpack.c.l.b16 %v514
        %v594 = vunpack.c.l.b16 %v515
        %v595 = vunpack.c.l.b16 %v516
        %v596 = vunpack.c.l.b16 %v517
        %v597 = vunpack.c.l.b16 %v518
        %v598 = vunpack.c.l.b16 %v519
        %v599 = vunpack.c.l.b16 %v520
        %v600 = vunpack.c.l.b16 %v521
        %v601 = vunpack.c.l.b16 %v522
        %v602 = vunpack.c.l.b16 %v523
        %v603 = vunpack.c.l.b16 %v524
        %v604 = vpack.c.b16 %v569, %v568
        %v605 = vpack.c.b16 %v571, %v570
        %v606 = vpack.c.b16 %v573, %v572
        %v607 = vpack.c.b16 %v575, %v574
        %v608 = vpack.c.b16 %v577, %v576
        %v609 = vpack.c.b16 %v579, %v578
        %v610 = vpack.c.b16 %v581, %v580
        %v611 = vpack.c.b16 %v583, %v582
        %v612 = vpack.c.b16 %v585, %v584
        %v613 = vpack.c.b16 %v587, %v586
        %v614 = vpack.c.b16 %v589, %v588
        %v615 = vpack.c.b16 %v591, %v590
        %v616 = vpack.c.b16 %v593, %v592
        %v617 = vpack.c.b16 %v595, %v594
        %v618 = vpack.c.b16 %v597, %v596
        %v619 = vpack.c.b16 %v599, %v598
        %v620 = vpack.c.b16 %v601, %v600
        %v621 = vpack.c.b16 %v603, %v602
        %vm640 = vcmask 261120
        %v642 = vsel %vm640, %v395, 0
        %v645 = vsel %vm640, %v398, 0
        %v648 = vsel %vm640, %v401, 0
        %v651 = vsel %vm640, %v404, 0
        %v654 = vsel %vm640, %v407, 0
        %v657 = vsel %vm640, %v410, 0
        %v660 = vsel %vm640, %v413, 0
        %v663 = vsel %vm640, %v416, 0
        %v666 = vsel %vm640, %v419, 0
        %v669 = vsel %vm640, %v422, 0
        %v672 = vsel %vm640, %v425, 0
        %v675 = vsel %vm640, %v428, 0
        %v678 = vsel %vm640, %v431, 0
        %v681 = vsel %vm640, %v434, 0
        %v684 = vsel %vm640, %v437, 0
        %v687 = vsel %vm640, %v440, 0
        %v690 = vsel %vm640, %v443, 0
        %v693 = vsel %vm640, %v446, 0
        %v696 = vsel %vm640, %v449, 0
        %v699 = vsel %vm640, %v452, 0
        %v702 = vsel %vm640, %v455, 0
        %v705 = vsel %vm640, %v458, 0
        %v708 = vsel %vm640, %v461, 0
        %v711 = vsel %vm640, %v464, 0
        %v714 = vsel %vm640, %v467, 0
        %v717 = vsel %vm640, %v470, 0
        %v720 = vsel %vm640, %v473, 0
        %v723 = vsel %vm640, %v476, 0
        %v726 = vsel %vm640, %v479, 0
        %v729 = vsel %vm640, %v482, 0
        %v732 = vsel %vm640, %v485, 0
        %v735 = vsel %vm640, %v488, 0
        %737 = vmatprep.subr.bf16.mxu0 0
        %738 = vmatpush1.bf16.msra.mxu0 %v604
        %739 = vmatprep.subr.bf16.mxu0 0
        %740 = vmatpush1.bf16.msra.mxu0 %v605
        %741 = vmatprep.subr.bf16.mxu0 0
        %742 = vmatpush1.bf16.msra.mxu0 %v606
        %743 = vmatprep.subr.bf16.mxu0 0
        %744 = vmatpush1.bf16.msra.mxu0 %v607
        %745 = vmatprep.subr.bf16.mxu0 0
        %746 = vmatpush1.bf16.msra.mxu0 %v608
        %747 = vmatprep.subr.bf16.mxu0 0
        %748 = vmatpush1.bf16.msra.mxu0 %v609
        %749 = vmatprep.subr.bf16.mxu0 0
        %750 = vmatpush1.bf16.msra.mxu0 %v610
        %751 = vmatprep.subr.bf16.mxu0 0
        %752 = vmatpush1.bf16.msra.mxu0 %v611
        %753 = vmatprep.subr.bf16.mxu0 0
        %754 = vmatpush1.bf16.msra.mxu0 %v612
        %755 = vmatprep.subr.bf16.mxu0 0
        %756 = vmatpush1.bf16.msra.mxu0 %v613
        %757 = vmatprep.subr.bf16.mxu0 0
        %758 = vmatpush1.bf16.msra.mxu0 %v614
        %759 = vmatprep.subr.bf16.mxu0 0
        %760 = vmatpush1.bf16.msra.mxu0 %v615
        %761 = vmatprep.subr.bf16.mxu0 0
        %762 = vmatpush1.bf16.msra.mxu0 %v616
        %763 = vmatprep.subr.bf16.mxu0 0
        %764 = vmatpush1.bf16.msra.mxu0 %v617
        %765 = vmatprep.subr.bf16.mxu0 0
        %766 = vmatpush1.bf16.msra.mxu0 %v618
        %767 = vmatprep.subr.bf16.mxu0 0
        %768 = vmatpush1.bf16.msra.mxu0 %v619
        %769 = vmatprep.mubr.bf16.mxu0 %v394
        %770 = vmatmul.mubr.bf16.gmra.mrb[0].mxu0 %v393
        %v771 = vpop.f32.mrb[0].mxu0
        %v772 = vadd.f32 %v530, %v771
        %v773 = vpop.f32.mrb[0].mxu0
        %v774 = vpop.f32.mrb[0].mxu0
        %v775 = vadd.f32 %v530, %v774
        %v776 = vpop.f32.mrb[0].mxu0
        %777 = vmatprep.mubr.bf16.mxu0 %v397
        %778 = vmatmul.mubr.bf16.gmra.mrb[0].mxu0 %v396
        %v779 = vpop.f32.mrb[0].mxu0
        %v780 = vadd.f32 %v530, %v779
        %v781 = vpop.f32.mrb[0].mxu0
        %v782 = vpop.f32.mrb[0].mxu0
        %v783 = vadd.f32 %v530, %v782
        %v784 = vpop.f32.mrb[0].mxu0
        %785 = vmatprep.mubr.bf16.mxu0 %v400
        %786 = vmatmul.mubr.bf16.gmra.mrb[0].mxu0 %v399
        %v787 = vpop.f32.mrb[0].mxu0
        %v788 = vadd.f32 %v530, %v787
        %v789 = vpop.f32.mrb[0].mxu0
        %v790 = vpop.f32.mrb[0].mxu0
        %v791 = vadd.f32 %v530, %v790
        %v792 = vpop.f32.mrb[0].mxu0
        %793 = vmatprep.mubr.bf16.mxu0 %v403
        %794 = vmatmul.mubr.bf16.gmra.mrb[0].mxu0 %v402
        %v795 = vpop.f32.mrb[0].mxu0
        %v796 = vadd.f32 %v530, %v795
        %v797 = vpop.f32.mrb[0].mxu0
        %v798 = vpop.f32.mrb[0].mxu0
        %v799 = vadd.f32 %v530, %v798
        %v800 = vpop.f32.mrb[0].mxu0
        %801 = vmatprep.mubr.bf16.mxu0 %v406
        %802 = vmatmul.mubr.bf16.gmra.mrb[0].mxu0 %v405
        %v803 = vpop.f32.mrb[0].mxu0
        %v804 = vadd.f32 %v530, %v803
        %v805 = vpop.f32.mrb[0].mxu0
        %v806 = vpop.f32.mrb[0].mxu0
        %v807 = vadd.f32 %v530, %v806
        %v808 = vpop.f32.mrb[0].mxu0
        %809 = vmatprep.mubr.bf16.mxu0 %v409
        %810 = vmatmul.mubr.bf16.gmra.mrb[0].mxu0 %v408
        %v811 = vpop.f32.mrb[0].mxu0
        %v812 = vadd.f32 %v530, %v811
        %v813 = vpop.f32.mrb[0].mxu0
        %v814 = vpop.f32.mrb[0].mxu0
        %v815 = vadd.f32 %v530, %v814
        %v816 = vpop.f32.mrb[0].mxu0
        %817 = vmatprep.mubr.bf16.mxu0 %v412
        %818 = vmatmul.mubr.bf16.gmra.mrb[0].mxu0 %v411
        %v819 = vpop.f32.mrb[0].mxu0
        %v820 = vadd.f32 %v530, %v819
        %v821 = vpop.f32.mrb[0].mxu0
        %v822 = vpop.f32.mrb[0].mxu0
        %v823 = vadd.f32 %v530, %v822
        %v824 = vpop.f32.mrb[0].mxu0
        %825 = vmatprep.mubr.bf16.mxu0 %v415
        %826 = vmatmul.mubr.bf16.gmra.mrb[0].mxu0 %v414
        %v827 = vpop.f32.mrb[0].mxu0
        %v828 = vadd.f32 %v530, %v827
        %v829 = vpop.f32.mrb[0].mxu0
        %v830 = vpop.f32.mrb[0].mxu0
        %v831 = vadd.f32 %v530, %v830
        %v832 = vpop.f32.mrb[0].mxu0
        %833 = vmatprep.mubr.bf16.mxu0 %v418
        %834 = vmatmul.mubr.bf16.gmra.mrb[0].mxu0 %v417
        %v835 = vpop.f32.mrb[0].mxu0
        %v836 = vadd.f32 %v530, %v835
        %v837 = vpop.f32.mrb[0].mxu0
        %v838 = vpop.f32.mrb[0].mxu0
        %v839 = vadd.f32 %v530, %v838
        %v840 = vpop.f32.mrb[0].mxu0
        %841 = vmatprep.mubr.bf16.mxu0 %v421
        %842 = vmatmul.mubr.bf16.gmra.mrb[0].mxu0 %v420
        %v843 = vpop.f32.mrb[0].mxu0
        %v844 = vadd.f32 %v530, %v843
        %v845 = vpop.f32.mrb[0].mxu0
        %v846 = vpop.f32.mrb[0].mxu0
        %v847 = vadd.f32 %v530, %v846
        %v848 = vpop.f32.mrb[0].mxu0
        %849 = vmatprep.mubr.bf16.mxu0 %v424
        %850 = vmatmul.mubr.bf16.gmra.mrb[0].mxu0 %v423
        %v851 = vpop.f32.mrb[0].mxu0
        %v852 = vadd.f32 %v530, %v851
        %v853 = vpop.f32.mrb[0].mxu0
        %v854 = vpop.f32.mrb[0].mxu0
        %v855 = vadd.f32 %v530, %v854
        %v856 = vpop.f32.mrb[0].mxu0
        %857 = vmatprep.mubr.bf16.mxu0 %v427
        %858 = vmatmul.mubr.bf16.gmra.mrb[0].mxu0 %v426
        %v859 = vpop.f32.mrb[0].mxu0
        %v860 = vadd.f32 %v530, %v859
        %v861 = vpop.f32.mrb[0].mxu0
        %v862 = vpop.f32.mrb[0].mxu0
        %v863 = vadd.f32 %v530, %v862
        %v864 = vpop.f32.mrb[0].mxu0
        %865 = vmatprep.mubr.bf16.mxu0 %v430
        %866 = vmatmul.mubr.bf16.gmra.mrb[0].mxu0 %v429
        %v867 = vpop.f32.mrb[0].mxu0
        %v868 = vadd.f32 %v530, %v867
        %v869 = vpop.f32.mrb[0].mxu0
        %v870 = vpop.f32.mrb[0].mxu0
        %v871 = vadd.f32 %v530, %v870
        %v872 = vpop.f32.mrb[0].mxu0
        %873 = vmatprep.mubr.bf16.mxu0 %v433
        %874 = vmatmul.mubr.bf16.gmra.mrb[0].mxu0 %v432
        %v875 = vpop.f32.mrb[0].mxu0
        %v876 = vadd.f32 %v530, %v875
        %v877 = vpop.f32.mrb[0].mxu0
        %v878 = vpop.f32.mrb[0].mxu0
        %v879 = vadd.f32 %v530, %v878
        %v880 = vpop.f32.mrb[0].mxu0
        %881 = vmatprep.mubr.bf16.mxu0 %v436
        %882 = vmatmul.mubr.bf16.gmra.mrb[0].mxu0 %v435
        %v883 = vpop.f32.mrb[0].mxu0
        %v884 = vadd.f32 %v530, %v883
        %v885 = vpop.f32.mrb[0].mxu0
        %v886 = vpop.f32.mrb[0].mxu0
        %v887 = vadd.f32 %v530, %v886
        %v888 = vpop.f32.mrb[0].mxu0
        %889 = vmatprep.mubr.bf16.mxu0 %v439
        %890 = vmatmul.mubr.bf16.gmra.mrb[0].mxu0 %v438
        %v891 = vpop.f32.mrb[0].mxu0
        %v892 = vadd.f32 %v530, %v891
        %v893 = vpop.f32.mrb[0].mxu0
        %v894 = vpop.f32.mrb[0].mxu0
        %v895 = vadd.f32 %v530, %v894
        %v896 = vpop.f32.mrb[0].mxu0
        %897 = vmatprep.mubr.bf16.mxu0 %v442
        %898 = vmatmul.mubr.bf16.gmra.mrb[0].mxu0 %v441
        %v899 = vpop.f32.mrb[0].mxu0
        %v900 = vadd.f32 %v530, %v899
        %v901 = vpop.f32.mrb[0].mxu0
        %v902 = vpop.f32.mrb[0].mxu0
        %v903 = vadd.f32 %v530, %v902
        %v904 = vpop.f32.mrb[0].mxu0
        %905 = vmatprep.mubr.bf16.mxu0 %v445
        %906 = vmatmul.mubr.bf16.gmra.mrb[0].mxu0 %v444
        %v907 = vpop.f32.mrb[0].mxu0
        %v908 = vadd.f32 %v530, %v907
        %v909 = vpop.f32.mrb[0].mxu0
        %v910 = vpop.f32.mrb[0].mxu0
        %v911 = vadd.f32 %v530, %v910
        %v912 = vpop.f32.mrb[0].mxu0
        %913 = vmatprep.mubr.bf16.mxu0 %v448
        %914 = vmatmul.mubr.bf16.gmra.mrb[0].mxu0 %v447
        %v915 = vpop.f32.mrb[0].mxu0
        %v916 = vadd.f32 %v530, %v915
        %v917 = vpop.f32.mrb[0].mxu0
        %v918 = vpop.f32.mrb[0].mxu0
        %v919 = vadd.f32 %v530, %v918
        %v920 = vpop.f32.mrb[0].mxu0
        %921 = vmatprep.mubr.bf16.mxu0 %v451
        %922 = vmatmul.mubr.bf16.gmra.mrb[0].mxu0 %v450
        %v923 = vpop.f32.mrb[0].mxu0
        %v924 = vadd.f32 %v530, %v923
        %v925 = vpop.f32.mrb[0].mxu0
        %v926 = vpop.f32.mrb[0].mxu0
        %v927 = vadd.f32 %v530, %v926
        %v928 = vpop.f32.mrb[0].mxu0
        %929 = vmatprep.mubr.bf16.mxu0 %v454
        %930 = vmatmul.mubr.bf16.gmra.mrb[0].mxu0 %v453
        %v931 = vpop.f32.mrb[0].mxu0
        %v932 = vadd.f32 %v530, %v931
        %v933 = vpop.f32.mrb[0].mxu0
        %v934 = vpop.f32.mrb[0].mxu0
        %v935 = vadd.f32 %v530, %v934
        %v936 = vpop.f32.mrb[0].mxu0
        %937 = vmatprep.mubr.bf16.mxu0 %v457
        %938 = vmatmul.mubr.bf16.gmra.mrb[0].mxu0 %v456
        %v939 = vpop.f32.mrb[0].mxu0
        %v940 = vadd.f32 %v530, %v939
        %v941 = vpop.f32.mrb[0].mxu0
        %v942 = vpop.f32.mrb[0].mxu0
        %v943 = vadd.f32 %v530, %v942
        %v944 = vpop.f32.mrb[0].mxu0
        %945 = vmatprep.mubr.bf16.mxu0 %v460
        %946 = vmatmul.mubr.bf16.gmra.mrb[0].mxu0 %v459
        %v947 = vpop.f32.mrb[0].mxu0
        %v948 = vadd.f32 %v530, %v947
        %v949 = vpop.f32.mrb[0].mxu0
        %v950 = vpop.f32.mrb[0].mxu0
        %v951 = vadd.f32 %v530, %v950
        %v952 = vpop.f32.mrb[0].mxu0
        %953 = vmatprep.mubr.bf16.mxu0 %v463
        %954 = vmatmul.mubr.bf16.gmra.mrb[0].mxu0 %v462
        %v955 = vpop.f32.mrb[0].mxu0
        %v956 = vadd.f32 %v530, %v955
        %v957 = vpop.f32.mrb[0].mxu0
        %v958 = vpop.f32.mrb[0].mxu0
        %v959 = vadd.f32 %v530, %v958
        %v960 = vpop.f32.mrb[0].mxu0
        %961 = vmatprep.mubr.bf16.mxu0 %v466
        %962 = vmatmul.mubr.bf16.gmra.mrb[0].mxu0 %v465
        %v963 = vpop.f32.mrb[0].mxu0
        %v964 = vadd.f32 %v530, %v963
        %v965 = vpop.f32.mrb[0].mxu0
        %v966 = vpop.f32.mrb[0].mxu0
        %v967 = vadd.f32 %v530, %v966
        %v968 = vpop.f32.mrb[0].mxu0
        %969 = vmatprep.mubr.bf16.mxu0 %v469
        %970 = vmatmul.mubr.bf16.gmra.mrb[0].mxu0 %v468
        %v971 = vpop.f32.mrb[0].mxu0
        %v972 = vadd.f32 %v530, %v971
        %v973 = vpop.f32.mrb[0].mxu0
        %v974 = vpop.f32.mrb[0].mxu0
        %v975 = vadd.f32 %v530, %v974
        %v976 = vpop.f32.mrb[0].mxu0
        %977 = vmatprep.mubr.bf16.mxu0 %v472
        %978 = vmatmul.mubr.bf16.gmra.mrb[0].mxu0 %v471
        %v979 = vpop.f32.mrb[0].mxu0
        %v980 = vadd.f32 %v530, %v979
        %v981 = vpop.f32.mrb[0].mxu0
        %v982 = vpop.f32.mrb[0].mxu0
        %v983 = vadd.f32 %v530, %v982
        %v984 = vpop.f32.mrb[0].mxu0
        %985 = vmatprep.mubr.bf16.mxu0 %v475
        %986 = vmatmul.mubr.bf16.gmra.mrb[0].mxu0 %v474
        %v987 = vpop.f32.mrb[0].mxu0
        %v988 = vadd.f32 %v530, %v987
        %v989 = vpop.f32.mrb[0].mxu0
        %v990 = vpop.f32.mrb[0].mxu0
        %v991 = vadd.f32 %v530, %v990
        %v992 = vpop.f32.mrb[0].mxu0
        %993 = vmatprep.mubr.bf16.mxu0 %v478
        %994 = vmatmul.mubr.bf16.gmra.mrb[0].mxu0 %v477
        %v995 = vpop.f32.mrb[0].mxu0
        %v996 = vadd.f32 %v530, %v995
        %v997 = vpop.f32.mrb[0].mxu0
        %v998 = vpop.f32.mrb[0].mxu0
        %v999 = vadd.f32 %v530, %v998
        %v1000 = vpop.f32.mrb[0].mxu0
        %1001 = vmatprep.mubr.bf16.mxu0 %v481
        %1002 = vmatmul.mubr.bf16.gmra.mrb[0].mxu0 %v480
        %v1003 = vpop.f32.mrb[0].mxu0
        %v1004 = vadd.f32 %v530, %v1003
        %v1005 = vpop.f32.mrb[0].mxu0
        %v1006 = vpop.f32.mrb[0].mxu0
        %v1007 = vadd.f32 %v530, %v1006
        %v1008 = vpop.f32.mrb[0].mxu0
        %1009 = vmatprep.mubr.bf16.mxu0 %v484
        %1010 = vmatmul.mubr.bf16.gmra.mrb[0].mxu0 %v483
        %v1011 = vpop.f32.mrb[0].mxu0
        %v1012 = vadd.f32 %v530, %v1011
        %v1013 = vpop.f32.mrb[0].mxu0
        %v1014 = vpop.f32.mrb[0].mxu0
        %v1015 = vadd.f32 %v530, %v1014
        %v1016 = vpop.f32.mrb[0].mxu0
        %1017 = vmatprep.mubr.bf16.mxu0 %v487
        %1018 = vmatmul.mubr.bf16.gmra.mrb[0].mxu0 %v486
        %v1019 = vpop.f32.mrb[0].mxu0
        %v1020 = vadd.f32 %v530, %v1019
        %v1021 = vpop.f32.mrb[0].mxu0
        %v1022 = vpop.f32.mrb[0].mxu0
        %v1023 = vadd.f32 %v530, %v1022
        %v1024 = vpop.f32.mrb[0].mxu0
        %1025 = vdwg.mxu0
        %1026 = vmatprep.subr.bf16.mxu0 0
        %1027 = vmatpush1.bf16.msra.mxu0 %v620
        %1028 = vmatprep.subr.bf16.mxu0 0
        %1029 = vmatpush1.bf16.msra.mxu0 %v621
        %1030 = vmatprep.subr.bf16.mxu0 0
        %1031 = vmatpush1.bf16.msra.mxu0 0
        %1032 = vmatprep.subr.bf16.mxu0 0
        %1033 = vmatpush1.bf16.msra.mxu0 0
        %1034 = vmatprep.subr.bf16.mxu0 0
        %1035 = vmatpush1.bf16.msra.mxu0 0
        %1036 = vmatprep.subr.bf16.mxu0 0
        %1037 = vmatpush1.bf16.msra.mxu0 0
        %1038 = vmatprep.subr.bf16.mxu0 0
        %1039 = vmatpush1.bf16.msra.mxu0 0
        %1040 = vmatprep.subr.bf16.mxu0 0
        %1041 = vmatpush1.bf16.msra.mxu0 0
        %1042 = vmatprep.subr.bf16.mxu0 0
        %1043 = vmatpush1.bf16.msra.mxu0 0
        %1044 = vmatprep.subr.bf16.mxu0 0
        %1045 = vmatpush1.bf16.msra.mxu0 0
        %1046 = vmatprep.subr.bf16.mxu0 0
        %1047 = vmatpush1.bf16.msra.mxu0 0
        %1048 = vmatprep.subr.bf16.mxu0 0
        %1049 = vmatpush1.bf16.msra.mxu0 0
        %1050 = vmatprep.subr.bf16.mxu0 0
        %1051 = vmatpush1.bf16.msra.mxu0 0
        %1052 = vmatprep.subr.bf16.mxu0 0
        %1053 = vmatpush1.bf16.msra.mxu0 0
        %1054 = vmatprep.subr.bf16.mxu0 0
        %1055 = vmatpush1.bf16.msra.mxu0 0
        %1056 = vmatprep.subr.bf16.mxu0 0
        %1057 = vmatpush1.bf16.msra.mxu0 0
        %1058 = vmatprep.mubr.bf16.mxu0 0
        %1059 = vmatmul.mubr.bf16.gmra.mrb[0].mxu0 %v642
        %v1060 = vpop.f32.mrb[0].mxu0
        %v1061 = vadd.f32 %v772, %v1060
        %v1062 = vpop.f32.mrb[0].mxu0
        %v1063 = vpop.f32.mrb[0].mxu0
        %v1064 = vadd.f32 %v775, %v1063
        %v1065 = vpop.f32.mrb[0].mxu0
        %1066 = vmatprep.mubr.bf16.mxu0 0
        %1067 = vmatmul.mubr.bf16.gmra.mrb[0].mxu0 %v645
        %v1068 = vpop.f32.mrb[0].mxu0
        %v1069 = vadd.f32 %v780, %v1068
        %v1070 = vpop.f32.mrb[0].mxu0
        %v1071 = vpop.f32.mrb[0].mxu0
        %v1072 = vadd.f32 %v783, %v1071
        %v1073 = vpop.f32.mrb[0].mxu0
        %1074 = vmatprep.mubr.bf16.mxu0 0
        %1075 = vmatmul.mubr.bf16.gmra.mrb[0].mxu0 %v648
        %v1076 = vpop.f32.mrb[0].mxu0
        %v1077 = vadd.f32 %v788, %v1076
        %v1078 = vpop.f32.mrb[0].mxu0
        %v1079 = vpop.f32.mrb[0].mxu0
        %v1080 = vadd.f32 %v791, %v1079
        %v1081 = vpop.f32.mrb[0].mxu0
        %1082 = vmatprep.mubr.bf16.mxu0 0
        %1083 = vmatmul.mubr.bf16.gmra.mrb[0].mxu0 %v651
        %v1084 = vpop.f32.mrb[0].mxu0
        %v1085 = vadd.f32 %v796, %v1084
        %v1086 = vpop.f32.mrb[0].mxu0
        %v1087 = vpop.f32.mrb[0].mxu0
        %v1088 = vadd.f32 %v799, %v1087
        %v1089 = vpop.f32.mrb[0].mxu0
        %1090 = vmatprep.mubr.bf16.mxu0 0
        %1091 = vmatmul.mubr.bf16.gmra.mrb[0].mxu0 %v654
        %v1092 = vpop.f32.mrb[0].mxu0
        %v1093 = vadd.f32 %v804, %v1092
        %v1094 = vpop.f32.mrb[0].mxu0
        %v1095 = vpop.f32.mrb[0].mxu0
        %v1096 = vadd.f32 %v807, %v1095
        %v1097 = vpop.f32.mrb[0].mxu0
        %1098 = vmatprep.mubr.bf16.mxu0 0
        %1099 = vmatmul.mubr.bf16.gmra.mrb[0].mxu0 %v657
        %v1100 = vpop.f32.mrb[0].mxu0
        %v1101 = vadd.f32 %v812, %v1100
        %v1102 = vpop.f32.mrb[0].mxu0
        %v1103 = vpop.f32.mrb[0].mxu0
        %v1104 = vadd.f32 %v815, %v1103
        %v1105 = vpop.f32.mrb[0].mxu0
        %1106 = vmatprep.mubr.bf16.mxu0 0
        %1107 = vmatmul.mubr.bf16.gmra.mrb[0].mxu0 %v660
        %v1108 = vpop.f32.mrb[0].mxu0
        %v1109 = vadd.f32 %v820, %v1108
        %v1110 = vpop.f32.mrb[0].mxu0
        %v1111 = vpop.f32.mrb[0].mxu0
        %v1112 = vadd.f32 %v823, %v1111
        %v1113 = vpop.f32.mrb[0].mxu0
        %1114 = vmatprep.mubr.bf16.mxu0 0
        %1115 = vmatmul.mubr.bf16.gmra.mrb[0].mxu0 %v663
        %v1116 = vpop.f32.mrb[0].mxu0
        %v1117 = vadd.f32 %v828, %v1116
        %v1118 = vpop.f32.mrb[0].mxu0
        %v1119 = vpop.f32.mrb[0].mxu0
        %v1120 = vadd.f32 %v831, %v1119
        %v1121 = vpop.f32.mrb[0].mxu0
        %1122 = vmatprep.mubr.bf16.mxu0 0
        %1123 = vmatmul.mubr.bf16.gmra.mrb[0].mxu0 %v666
        %v1124 = vpop.f32.mrb[0].mxu0
        %v1125 = vadd.f32 %v836, %v1124
        %v1126 = vpop.f32.mrb[0].mxu0
        %v1127 = vpop.f32.mrb[0].mxu0
        %v1128 = vadd.f32 %v839, %v1127
        %v1129 = vpop.f32.mrb[0].mxu0
        %1130 = vmatprep.mubr.bf16.mxu0 0
        %1131 = vmatmul.mubr.bf16.gmra.mrb[0].mxu0 %v669
        %v1132 = vpop.f32.mrb[0].mxu0
        %v1133 = vadd.f32 %v844, %v1132
        %v1134 = vpop.f32.mrb[0].mxu0
        %v1135 = vpop.f32.mrb[0].mxu0
        %v1136 = vadd.f32 %v847, %v1135
        %v1137 = vpop.f32.mrb[0].mxu0
        %1138 = vmatprep.mubr.bf16.mxu0 0
        %1139 = vmatmul.mubr.bf16.gmra.mrb[0].mxu0 %v672
        %v1140 = vpop.f32.mrb[0].mxu0
        %v1141 = vadd.f32 %v852, %v1140
        %v1142 = vpop.f32.mrb[0].mxu0
        %v1143 = vpop.f32.mrb[0].mxu0
        %v1144 = vadd.f32 %v855, %v1143
        %v1145 = vpop.f32.mrb[0].mxu0
        %1146 = vmatprep.mubr.bf16.mxu0 0
        %1147 = vmatmul.mubr.bf16.gmra.mrb[0].mxu0 %v675
        %v1148 = vpop.f32.mrb[0].mxu0
        %v1149 = vadd.f32 %v860, %v1148
        %v1150 = vpop.f32.mrb[0].mxu0
        %v1151 = vpop.f32.mrb[0].mxu0
        %v1152 = vadd.f32 %v863, %v1151
        %v1153 = vpop.f32.mrb[0].mxu0
        %1154 = vmatprep.mubr.bf16.mxu0 0
        %1155 = vmatmul.mubr.bf16.gmra.mrb[0].mxu0 %v678
        %v1156 = vpop.f32.mrb[0].mxu0
        %v1157 = vadd.f32 %v868, %v1156
        %v1158 = vpop.f32.mrb[0].mxu0
        %v1159 = vpop.f32.mrb[0].mxu0
        %v1160 = vadd.f32 %v871, %v1159
        %v1161 = vpop.f32.mrb[0].mxu0
        %1162 = vmatprep.mubr.bf16.mxu0 0
        %1163 = vmatmul.mubr.bf16.gmra.mrb[0].mxu0 %v681
        %v1164 = vpop.f32.mrb[0].mxu0
        %v1165 = vadd.f32 %v876, %v1164
        %v1166 = vpop.f32.mrb[0].mxu0
        %v1167 = vpop.f32.mrb[0].mxu0
        %v1168 = vadd.f32 %v879, %v1167
        %v1169 = vpop.f32.mrb[0].mxu0
        %1170 = vmatprep.mubr.bf16.mxu0 0
        %1171 = vmatmul.mubr.bf16.gmra.mrb[0].mxu0 %v684
        %v1172 = vpop.f32.mrb[0].mxu0
        %v1173 = vadd.f32 %v884, %v1172
        %v1174 = vpop.f32.mrb[0].mxu0
        %v1175 = vpop.f32.mrb[0].mxu0
        %v1176 = vadd.f32 %v887, %v1175
        %v1177 = vpop.f32.mrb[0].mxu0
        %1178 = vmatprep.mubr.bf16.mxu0 0
        %1179 = vmatmul.mubr.bf16.gmra.mrb[0].mxu0 %v687
        %v1180 = vpop.f32.mrb[0].mxu0
        %v1181 = vadd.f32 %v892, %v1180
        %v1182 = vpop.f32.mrb[0].mxu0
        %v1183 = vpop.f32.mrb[0].mxu0
        %v1184 = vadd.f32 %v895, %v1183
        %v1185 = vpop.f32.mrb[0].mxu0
        %1186 = vmatprep.mubr.bf16.mxu0 0
        %1187 = vmatmul.mubr.bf16.gmra.mrb[0].mxu0 %v690
        %v1188 = vpop.f32.mrb[0].mxu0
        %v1189 = vadd.f32 %v900, %v1188
        %v1190 = vpop.f32.mrb[0].mxu0
        %v1191 = vpop.f32.mrb[0].mxu0
        %v1192 = vadd.f32 %v903, %v1191
        %v1193 = vpop.f32.mrb[0].mxu0
        %1194 = vmatprep.mubr.bf16.mxu0 0
        %1195 = vmatmul.mubr.bf16.gmra.mrb[0].mxu0 %v693
        %v1196 = vpop.f32.mrb[0].mxu0
        %v1197 = vadd.f32 %v908, %v1196
        %v1198 = vpop.f32.mrb[0].mxu0
        %v1199 = vpop.f32.mrb[0].mxu0
        %v1200 = vadd.f32 %v911, %v1199
        %v1201 = vpop.f32.mrb[0].mxu0
        %1202 = vmatprep.mubr.bf16.mxu0 0
        %1203 = vmatmul.mubr.bf16.gmra.mrb[0].mxu0 %v696
        %v1204 = vpop.f32.mrb[0].mxu0
        %v1205 = vadd.f32 %v916, %v1204
        %v1206 = vpop.f32.mrb[0].mxu0
        %v1207 = vpop.f32.mrb[0].mxu0
        %v1208 = vadd.f32 %v919, %v1207
        %v1209 = vpop.f32.mrb[0].mxu0
        %1210 = vmatprep.mubr.bf16.mxu0 0
        %1211 = vmatmul.mubr.bf16.gmra.mrb[0].mxu0 %v699
        %v1212 = vpop.f32.mrb[0].mxu0
        %v1213 = vadd.f32 %v924, %v1212
        %v1214 = vpop.f32.mrb[0].mxu0
        %v1215 = vpop.f32.mrb[0].mxu0
        %v1216 = vadd.f32 %v927, %v1215
        %v1217 = vpop.f32.mrb[0].mxu0
        %1218 = vmatprep.mubr.bf16.mxu0 0
        %1219 = vmatmul.mubr.bf16.gmra.mrb[0].mxu0 %v702
        %v1220 = vpop.f32.mrb[0].mxu0
        %v1221 = vadd.f32 %v932, %v1220
        %v1222 = vpop.f32.mrb[0].mxu0
        %v1223 = vpop.f32.mrb[0].mxu0
        %v1224 = vadd.f32 %v935, %v1223
        %v1225 = vpop.f32.mrb[0].mxu0
        %1226 = vmatprep.mubr.bf16.mxu0 0
        %1227 = vmatmul.mubr.bf16.gmra.mrb[0].mxu0 %v705
        %v1228 = vpop.f32.mrb[0].mxu0
        %v1229 = vadd.f32 %v940, %v1228
        %v1230 = vpop.f32.mrb[0].mxu0
        %v1231 = vpop.f32.mrb[0].mxu0
        %v1232 = vadd.f32 %v943, %v1231
        %v1233 = vpop.f32.mrb[0].mxu0
        %1234 = vmatprep.mubr.bf16.mxu0 0
        %1235 = vmatmul.mubr.bf16.gmra.mrb[0].mxu0 %v708
        %v1236 = vpop.f32.mrb[0].mxu0
        %v1237 = vadd.f32 %v948, %v1236
        %v1238 = vpop.f32.mrb[0].mxu0
        %v1239 = vpop.f32.mrb[0].mxu0
        %v1240 = vadd.f32 %v951, %v1239
        %v1241 = vpop.f32.mrb[0].mxu0
        %1242 = vmatprep.mubr.bf16.mxu0 0
        %1243 = vmatmul.mubr.bf16.gmra.mrb[0].mxu0 %v711
        %v1244 = vpop.f32.mrb[0].mxu0
        %v1245 = vadd.f32 %v956, %v1244
        %v1246 = vpop.f32.mrb[0].mxu0
        %v1247 = vpop.f32.mrb[0].mxu0
        %v1248 = vadd.f32 %v959, %v1247
        %v1249 = vpop.f32.mrb[0].mxu0
        %1250 = vmatprep.mubr.bf16.mxu0 0
        %1251 = vmatmul.mubr.bf16.gmra.mrb[0].mxu0 %v714
        %v1252 = vpop.f32.mrb[0].mxu0
        %v1253 = vadd.f32 %v964, %v1252
        %v1254 = vpop.f32.mrb[0].mxu0
        %v1255 = vpop.f32.mrb[0].mxu0
        %v1256 = vadd.f32 %v967, %v1255
        %v1257 = vpop.f32.mrb[0].mxu0
        %1258 = vmatprep.mubr.bf16.mxu0 0
        %1259 = vmatmul.mubr.bf16.gmra.mrb[0].mxu0 %v717
        %v1260 = vpop.f32.mrb[0].mxu0
        %v1261 = vadd.f32 %v972, %v1260
        %v1262 = vpop.f32.mrb[0].mxu0
        %v1263 = vpop.f32.mrb[0].mxu0
        %v1264 = vadd.f32 %v975, %v1263
        %v1265 = vpop.f32.mrb[0].mxu0
        %1266 = vmatprep.mubr.bf16.mxu0 0
        %1267 = vmatmul.mubr.bf16.gmra.mrb[0].mxu0 %v720
        %v1268 = vpop.f32.mrb[0].mxu0
        %v1269 = vadd.f32 %v980, %v1268
        %v1270 = vpop.f32.mrb[0].mxu0
        %v1271 = vpop.f32.mrb[0].mxu0
        %v1272 = vadd.f32 %v983, %v1271
        %v1273 = vpop.f32.mrb[0].mxu0
        %1274 = vmatprep.mubr.bf16.mxu0 0
        %1275 = vmatmul.mubr.bf16.gmra.mrb[0].mxu0 %v723
        %v1276 = vpop.f32.mrb[0].mxu0
        %v1277 = vadd.f32 %v988, %v1276
        %v1278 = vpop.f32.mrb[0].mxu0
        %v1279 = vpop.f32.mrb[0].mxu0
        %v1280 = vadd.f32 %v991, %v1279
        %v1281 = vpop.f32.mrb[0].mxu0
        %1282 = vmatprep.mubr.bf16.mxu0 0
        %1283 = vmatmul.mubr.bf16.gmra.mrb[0].mxu0 %v726
        %v1284 = vpop.f32.mrb[0].mxu0
        %v1285 = vadd.f32 %v996, %v1284
        %v1286 = vpop.f32.mrb[0].mxu0
        %v1287 = vpop.f32.mrb[0].mxu0
        %v1288 = vadd.f32 %v999, %v1287
        %v1289 = vpop.f32.mrb[0].mxu0
        %1290 = vmatprep.mubr.bf16.mxu0 0
        %1291 = vmatmul.mubr.bf16.gmra.mrb[0].mxu0 %v729
        %v1292 = vpop.f32.mrb[0].mxu0
        %v1293 = vadd.f32 %v1004, %v1292
        %v1294 = vpop.f32.mrb[0].mxu0
        %v1295 = vpop.f32.mrb[0].mxu0
        %v1296 = vadd.f32 %v1007, %v1295
        %v1297 = vpop.f32.mrb[0].mxu0
        %1298 = vmatprep.mubr.bf16.mxu0 0
        %1299 = vmatmul.mubr.bf16.gmra.mrb[0].mxu0 %v732
        %v1300 = vpop.f32.mrb[0].mxu0
        %v1301 = vadd.f32 %v1012, %v1300
        %v1302 = vpop.f32.mrb[0].mxu0
        %v1303 = vpop.f32.mrb[0].mxu0
        %v1304 = vadd.f32 %v1015, %v1303
        %v1305 = vpop.f32.mrb[0].mxu0
        %1306 = vmatprep.mubr.bf16.mxu0 0
        %1307 = vmatmul.mubr.bf16.gmra.mrb[0].mxu0 %v735
        %v1308 = vpop.f32.mrb[0].mxu0
        %v1309 = vadd.f32 %v1020, %v1308
        %v1310 = vpop.f32.mrb[0].mxu0
        %v1311 = vpop.f32.mrb[0].mxu0
        %v1312 = vadd.f32 %v1023, %v1311
        %v1313 = vpop.f32.mrb[0].mxu0
        %1314 = vdwg.mxu0
        %v1315 = vmax.f32 %v1061, 0.0
        %v1316 = vmax.f32 %v1064, 0.0
        %v1317 = vmax.f32 %v1069, 0.0
        %v1318 = vmax.f32 %v1072, 0.0
        %v1319 = vmax.f32 %v1077, 0.0
        %v1320 = vmax.f32 %v1080, 0.0
        %v1321 = vmax.f32 %v1085, 0.0
        %v1322 = vmax.f32 %v1088, 0.0
        %v1323 = vmax.f32 %v1093, 0.0
        %v1324 = vmax.f32 %v1096, 0.0
        %v1325 = vmax.f32 %v1101, 0.0
        %v1326 = vmax.f32 %v1104, 0.0
        %v1327 = vmax.f32 %v1109, 0.0
        %v1328 = vmax.f32 %v1112, 0.0
        %v1329 = vmax.f32 %v1117, 0.0
        %v1330 = vmax.f32 %v1120, 0.0
        %v1331 = vmax.f32 %v1125, 0.0
        %v1332 = vmax.f32 %v1128, 0.0
        %v1333 = vmax.f32 %v1133, 0.0
        %v1334 = vmax.f32 %v1136, 0.0
        %v1335 = vmax.f32 %v1141, 0.0
        %v1336 = vmax.f32 %v1144, 0.0
        %v1337 = vmax.f32 %v1149, 0.0
        %v1338 = vmax.f32 %v1152, 0.0
        %v1339 = vmax.f32 %v1157, 0.0
        %v1340 = vmax.f32 %v1160, 0.0
        %v1341 = vmax.f32 %v1165, 0.0
        %v1342 = vmax.f32 %v1168, 0.0
        %v1343 = vmax.f32 %v1173, 0.0
        %v1344 = vmax.f32 %v1176, 0.0
        %v1345 = vmax.f32 %v1181, 0.0
        %v1346 = vmax.f32 %v1184, 0.0
        %v1347 = vmax.f32 %v1189, 0.0
        %v1348 = vmax.f32 %v1192, 0.0
        %v1349 = vmax.f32 %v1197, 0.0
        %v1350 = vmax.f32 %v1200, 0.0
        %v1351 = vmax.f32 %v1205, 0.0
        %v1352 = vmax.f32 %v1208, 0.0
        %v1353 = vmax.f32 %v1213, 0.0
        %v1354 = vmax.f32 %v1216, 0.0
        %v1355 = vmax.f32 %v1221, 0.0
        %v1356 = vmax.f32 %v1224, 0.0
        %v1357 = vmax.f32 %v1229, 0.0
        %v1358 = vmax.f32 %v1232, 0.0
        %v1359 = vmax.f32 %v1237, 0.0
        %v1360 = vmax.f32 %v1240, 0.0
        %v1361 = vmax.f32 %v1245, 0.0
        %v1362 = vmax.f32 %v1248, 0.0
        %v1363 = vmax.f32 %v1253, 0.0
        %v1364 = vmax.f32 %v1256, 0.0
        %v1365 = vmax.f32 %v1261, 0.0
        %v1366 = vmax.f32 %v1264, 0.0
        %v1367 = vmax.f32 %v1269, 0.0
        %v1368 = vmax.f32 %v1272, 0.0
        %v1369 = vmax.f32 %v1277, 0.0
        %v1370 = vmax.f32 %v1280, 0.0
        %v1371 = vmax.f32 %v1285, 0.0
        %v1372 = vmax.f32 %v1288, 0.0
        %v1373 = vmax.f32 %v1293, 0.0
        %v1374 = vmax.f32 %v1296, 0.0
        %v1375 = vmax.f32 %v1301, 0.0
        %v1376 = vmax.f32 %v1304, 0.0
        %v1377 = vmax.f32 %v1309, 0.0
        %v1378 = vmax.f32 %v1312, 0.0
        %vm1379 = vcmask 523264
        %1380 = vst.msk [vmem:[%s177] sm:$0xff] %vm1379, %v1315
        %1381 = vst.msk [vmem:[%s177 + $0x8] sm:$0xff] %vm1379, %v1316
        %1382 = vst.msk [vmem:[%s177 + $0x10] sm:$0xff] %vm1379, %v1317
        %1383 = vst.msk [vmem:[%s177 + $0x18] sm:$0xff] %vm1379, %v1318
        %1384 = vst.msk [vmem:[%s177 + $0x20] sm:$0xff] %vm1379, %v1319
        %1385 = vst.msk [vmem:[%s177 + $0x28] sm:$0xff] %vm1379, %v1320
        %1386 = vst.msk [vmem:[%s177 + $0x30] sm:$0xff] %vm1379, %v1321
        %1387 = vst.msk [vmem:[%s177 + $0x38] sm:$0xff] %vm1379, %v1322
        %1388 = vst.msk [vmem:[%s177 + $0x40] sm:$0xff] %vm1379, %v1323
        %1389 = vst.msk [vmem:[%s177 + $0x48] sm:$0xff] %vm1379, %v1324
        %1390 = vst.msk [vmem:[%s177 + $0x50] sm:$0xff] %vm1379, %v1325
        %1391 = vst.msk [vmem:[%s177 + $0x58] sm:$0xff] %vm1379, %v1326
        %1392 = vst.msk [vmem:[%s177 + $0x60] sm:$0xff] %vm1379, %v1327
        %1393 = vst.msk [vmem:[%s177 + $0x68] sm:$0xff] %vm1379, %v1328
        %1394 = vst.msk [vmem:[%s177 + $0x70] sm:$0xff] %vm1379, %v1329
        %1395 = vst.msk [vmem:[%s177 + $0x78] sm:$0xff] %vm1379, %v1330
        %1396 = vst.msk [vmem:[%s177 + $0x80] sm:$0xff] %vm1379, %v1331
        %1397 = vst.msk [vmem:[%s177 + $0x88] sm:$0xff] %vm1379, %v1332
        %1398 = vst.msk [vmem:[%s177 + $0x90] sm:$0xff] %vm1379, %v1333
        %1399 = vst.msk [vmem:[%s177 + $0x98] sm:$0xff] %vm1379, %v1334
        %1400 = vst.msk [vmem:[%s177 + $0xa0] sm:$0xff] %vm1379, %v1335
        %1401 = vst.msk [vmem:[%s177 + $0xa8] sm:$0xff] %vm1379, %v1336
        %1402 = vst.msk [vmem:[%s177 + $0xb0] sm:$0xff] %vm1379, %v1337
        %1403 = vst.msk [vmem:[%s177 + $0xb8] sm:$0xff] %vm1379, %v1338
        %1404 = vst.msk [vmem:[%s177 + $0xc0] sm:$0xff] %vm1379, %v1339
        %1405 = vst.msk [vmem:[%s177 + $0xc8] sm:$0xff] %vm1379, %v1340
        %1406 = vst.msk [vmem:[%s177 + $0xd0] sm:$0xff] %vm1379, %v1341
        %1407 = vst.msk [vmem:[%s177 + $0xd8] sm:$0xff] %vm1379, %v1342
        %1408 = vst.msk [vmem:[%s177 + $0xe0] sm:$0xff] %vm1379, %v1343
        %1409 = vst.msk [vmem:[%s177 + $0xe8] sm:$0xff] %vm1379, %v1344
        %1410 = vst.msk [vmem:[%s177 + $0xf0] sm:$0xff] %vm1379, %v1345
        %1411 = vst.msk [vmem:[%s177 + $0xf8] sm:$0xff] %vm1379, %v1346
        %1412 = vst.msk [vmem:[%s177 + $0x100] sm:$0xff] %vm1379, %v1347
        %1413 = vst.msk [vmem:[%s177 + $0x108] sm:$0xff] %vm1379, %v1348
        %1414 = vst.msk [vmem:[%s177 + $0x110] sm:$0xff] %vm1379, %v1349
        %1415 = vst.msk [vmem:[%s177 + $0x118] sm:$0xff] %vm1379, %v1350
        %1416 = vst.msk [vmem:[%s177 + $0x120] sm:$0xff] %vm1379, %v1351
        %1417 = vst.msk [vmem:[%s177 + $0x128] sm:$0xff] %vm1379, %v1352
        %1418 = vst.msk [vmem:[%s177 + $0x130] sm:$0xff] %vm1379, %v1353
        %1419 = vst.msk [vmem:[%s177 + $0x138] sm:$0xff] %vm1379, %v1354
        %1420 = vst.msk [vmem:[%s177 + $0x140] sm:$0xff] %vm1379, %v1355
        %1421 = vst.msk [vmem:[%s177 + $0x148] sm:$0xff] %vm1379, %v1356
        %1422 = vst.msk [vmem:[%s177 + $0x150] sm:$0xff] %vm1379, %v1357
        %1423 = vst.msk [vmem:[%s177 + $0x158] sm:$0xff] %vm1379, %v1358
        %1424 = vst.msk [vmem:[%s177 + $0x160] sm:$0xff] %vm1379, %v1359
        %1425 = vst.msk [vmem:[%s177 + $0x168] sm:$0xff] %vm1379, %v1360
        %1426 = vst.msk [vmem:[%s177 + $0x170] sm:$0xff] %vm1379, %v1361
        %1427 = vst.msk [vmem:[%s177 + $0x178] sm:$0xff] %vm1379, %v1362
        %1428 = vst.msk [vmem:[%s177 + $0x180] sm:$0xff] %vm1379, %v1363
        %1429 = vst.msk [vmem:[%s177 + $0x188] sm:$0xff] %vm1379, %v1364
        %1430 = vst.msk [vmem:[%s177 + $0x190] sm:$0xff] %vm1379, %v1365
        %1431 = vst.msk [vmem:[%s177 + $0x198] sm:$0xff] %vm1379, %v1366
        %1432 = vst.msk [vmem:[%s177 + $0x1a0] sm:$0xff] %vm1379, %v1367
        %1433 = vst.msk [vmem:[%s177 + $0x1a8] sm:$0xff] %vm1379, %v1368
        %1434 = vst.msk [vmem:[%s177 + $0x1b0] sm:$0xff] %vm1379, %v1369
        %1435 = vst.msk [vmem:[%s177 + $0x1b8] sm:$0xff] %vm1379, %v1370
        %1436 = vst.msk [vmem:[%s177 + $0x1c0] sm:$0xff] %vm1379, %v1371
        %1437 = vst.msk [vmem:[%s177 + $0x1c8] sm:$0xff] %vm1379, %v1372
        %1438 = vst.msk [vmem:[%s177 + $0x1d0] sm:$0xff] %vm1379, %v1373
        %1439 = vst.msk [vmem:[%s177 + $0x1d8] sm:$0xff] %vm1379, %v1374
        %1440 = vst.msk [vmem:[%s177 + $0x1e0] sm:$0xff] %vm1379, %v1375
        %1441 = vst.msk [vmem:[%s177 + $0x1e8] sm:$0xff] %vm1379, %v1376
        %1442 = vst.msk [vmem:[%s177 + $0x1f0] sm:$0xff] %vm1379, %v1377
        %1443 = vst.msk [vmem:[%s177 + $0x1f8] sm:$0xff] %vm1379, %v1378
        %s1444 = sand.u32 %s90, 1
        %s1445 = sand.u32 %s90, 1
        %s1446 = smul.addr %s1445, 512
        %s1447 = scalar_lea.vmem [#allocation2], %s1446
        // Predicated region
        $region33: #{net_forward.4} parent=31 // pred_check
          %p1448 = pneg %p100
        $region34: #{net_forward.4} parent=31 // pred_check_branch
          %1450 = sbr.rel (%p1448) target = $region36
        $region35: #{net_forward.4} parent=31 // pred_region
          %s1451 = smul.u32 64, %s14
          %s1452 = ssub.s32 144, %s1451
          %p1453 = scmp.lt.s32.totalorder %s1452, 64
          %s1454 = scalar_select %p1453, %s1452, 64
          %s1455 = smul.u32 128, %s1454
          %p1456 = scmp.ne.s32.totalorder 0, %s1455
          %s1457 = smul.addr %s1451, 8
          %s1458 = scalar_lea.vmem %s3, %s1457
          // Predicated region
          $region37: #{net_forward.4} parent=35 // pred_check
            %p1459 = pneg %p1456
          $region38: #{net_forward.4} parent=35 // pred_check_branch
            %1461 = sbr.rel (%p1459) target = $region40
          $region39: #{net_forward.4} parent=35 // pred_region
            // Predicated region
            $region41: #{net_forward.4} parent=39 // pred_check
              _
            $region42: #{net_forward.4} parent=39 // pred_check_branch
              %1463 = sbr.rel (0) target = $region44
            $region43: #{net_forward.4} parent=39 // pred_region
              // Predicated region
              $region63: #{net_forward.4} parent=43 // pred_check
                _
              $region64: #{net_forward.4} parent=43 // pred_check_branch
                %1638 = sbr.rel (0) target = $region66
              $region65: #{net_forward.4} parent=43 // pred_region
                %s1639 = sshrl.u32 %s1454, 6
                // While loop
                $region67: #{net_forward.4} parent=65 // loop_pre_header
                  _
                $region68: #{net_forward.4} parent=65 // loop_header
                  %s1641 = sphi 0, %s1643
                  %p1642 = scmp.ge.s32.totalorder %s1641, %s1639
                  %s1646 = sphi 0, %s1779
                  %s1647 = sphi %s1447, %s1782
                  %s1648 = sphi %s1458, %s1783
                $region69: #{net_forward.4} parent=65 // loop_header_branch
                  %1645 = sbr.rel (%p1642) target = $region73
                $region70: #{net_forward.4} parent=65 // loop_body
                  %v1649 = vld [vmem:[%s1647] sm:$0xff]
                  %1650 = vst [vmem:[%s1648] sm:$0xff] %v1649
                  %v1651 = vld [vmem:[%s1647 + $0x8] sm:$0xff]
                  %1652 = vst [vmem:[%s1648 + $0x8] sm:$0xff] %v1651
                  %v1653 = vld [vmem:[%s1647 + $0x10] sm:$0xff]
                  %1654 = vst [vmem:[%s1648 + $0x10] sm:$0xff] %v1653
                  %v1655 = vld [vmem:[%s1647 + $0x18] sm:$0xff]
                  %1656 = vst [vmem:[%s1648 + $0x18] sm:$0xff] %v1655
                  %v1657 = vld [vmem:[%s1647 + $0x20] sm:$0xff]
                  %1658 = vst [vmem:[%s1648 + $0x20] sm:$0xff] %v1657
                  %v1659 = vld [vmem:[%s1647 + $0x28] sm:$0xff]
                  %1660 = vst [vmem:[%s1648 + $0x28] sm:$0xff] %v1659
                  %v1661 = vld [vmem:[%s1647 + $0x30] sm:$0xff]
                  %1662 = vst [vmem:[%s1648 + $0x30] sm:$0xff] %v1661
                  %v1663 = vld [vmem:[%s1647 + $0x38] sm:$0xff]
                  %1664 = vst [vmem:[%s1648 + $0x38] sm:$0xff] %v1663
                  %v1665 = vld [vmem:[%s1647 + $0x40] sm:$0xff]
                  %1666 = vst [vmem:[%s1648 + $0x40] sm:$0xff] %v1665
                  %v1667 = vld [vmem:[%s1647 + $0x48] sm:$0xff]
                  %1668 = vst [vmem:[%s1648 + $0x48] sm:$0xff] %v1667
                  %v1669 = vld [vmem:[%s1647 + $0x50] sm:$0xff]
                  %1670 = vst [vmem:[%s1648 + $0x50] sm:$0xff] %v1669
                  %v1671 = vld [vmem:[%s1647 + $0x58] sm:$0xff]
                  %1672 = vst [vmem:[%s1648 + $0x58] sm:$0xff] %v1671
                  %v1673 = vld [vmem:[%s1647 + $0x60] sm:$0xff]
                  %1674 = vst [vmem:[%s1648 + $0x60] sm:$0xff] %v1673
                  %v1675 = vld [vmem:[%s1647 + $0x68] sm:$0xff]
                  %1676 = vst [vmem:[%s1648 + $0x68] sm:$0xff] %v1675
                  %v1677 = vld [vmem:[%s1647 + $0x70] sm:$0xff]
                  %1678 = vst [vmem:[%s1648 + $0x70] sm:$0xff] %v1677
                  %v1679 = vld [vmem:[%s1647 + $0x78] sm:$0xff]
                  %1680 = vst [vmem:[%s1648 + $0x78] sm:$0xff] %v1679
                  %v1681 = vld [vmem:[%s1647 + $0x80] sm:$0xff]
                  %1682 = vst [vmem:[%s1648 + $0x80] sm:$0xff] %v1681
                  %v1683 = vld [vmem:[%s1647 + $0x88] sm:$0xff]
                  %1684 = vst [vmem:[%s1648 + $0x88] sm:$0xff] %v1683
                  %v1685 = vld [vmem:[%s1647 + $0x90] sm:$0xff]
                  %1686 = vst [vmem:[%s1648 + $0x90] sm:$0xff] %v1685
                  %v1687 = vld [vmem:[%s1647 + $0x98] sm:$0xff]
                  %1688 = vst [vmem:[%s1648 + $0x98] sm:$0xff] %v1687
                  %v1689 = vld [vmem:[%s1647 + $0xa0] sm:$0xff]
                  %1690 = vst [vmem:[%s1648 + $0xa0] sm:$0xff] %v1689
                  %v1691 = vld [vmem:[%s1647 + $0xa8] sm:$0xff]
                  %1692 = vst [vmem:[%s1648 + $0xa8] sm:$0xff] %v1691
                  %v1693 = vld [vmem:[%s1647 + $0xb0] sm:$0xff]
                  %1694 = vst [vmem:[%s1648 + $0xb0] sm:$0xff] %v1693
                  %v1695 = vld [vmem:[%s1647 + $0xb8] sm:$0xff]
                  %1696 = vst [vmem:[%s1648 + $0xb8] sm:$0xff] %v1695
                  %v1697 = vld [vmem:[%s1647 + $0xc0] sm:$0xff]
                  %1698 = vst [vmem:[%s1648 + $0xc0] sm:$0xff] %v1697
                  %v1699 = vld [vmem:[%s1647 + $0xc8] sm:$0xff]
                  %1700 = vst [vmem:[%s1648 + $0xc8] sm:$0xff] %v1699
                  %v1701 = vld [vmem:[%s1647 + $0xd0] sm:$0xff]
                  %1702 = vst [vmem:[%s1648 + $0xd0] sm:$0xff] %v1701
                  %v1703 = vld [vmem:[%s1647 + $0xd8] sm:$0xff]
                  %1704 = vst [vmem:[%s1648 + $0xd8] sm:$0xff] %v1703
                  %v1705 = vld [vmem:[%s1647 + $0xe0] sm:$0xff]
                  %1706 = vst [vmem:[%s1648 + $0xe0] sm:$0xff] %v1705
                  %v1707 = vld [vmem:[%s1647 + $0xe8] sm:$0xff]
                  %1708 = vst [vmem:[%s1648 + $0xe8] sm:$0xff] %v1707
                  %v1709 = vld [vmem:[%s1647 + $0xf0] sm:$0xff]
                  %1710 = vst [vmem:[%s1648 + $0xf0] sm:$0xff] %v1709
                  %v1711 = vld [vmem:[%s1647 + $0xf8] sm:$0xff]
                  %1712 = vst [vmem:[%s1648 + $0xf8] sm:$0xff] %v1711
                  %v1713 = vld [vmem:[%s1647 + $0x100] sm:$0xff]
                  %1714 = vst [vmem:[%s1648 + $0x100] sm:$0xff] %v1713
                  %v1715 = vld [vmem:[%s1647 + $0x108] sm:$0xff]
                  %1716 = vst [vmem:[%s1648 + $0x108] sm:$0xff] %v1715
                  %v1717 = vld [vmem:[%s1647 + $0x110] sm:$0xff]
                  %1718 = vst [vmem:[%s1648 + $0x110] sm:$0xff] %v1717
                  %v1719 = vld [vmem:[%s1647 + $0x118] sm:$0xff]
                  %1720 = vst [vmem:[%s1648 + $0x118] sm:$0xff] %v1719
                  %v1721 = vld [vmem:[%s1647 + $0x120] sm:$0xff]
                  %1722 = vst [vmem:[%s1648 + $0x120] sm:$0xff] %v1721
                  %v1723 = vld [vmem:[%s1647 + $0x128] sm:$0xff]
                  %1724 = vst [vmem:[%s1648 + $0x128] sm:$0xff] %v1723
                  %v1725 = vld [vmem:[%s1647 + $0x130] sm:$0xff]
                  %1726 = vst [vmem:[%s1648 + $0x130] sm:$0xff] %v1725
                  %v1727 = vld [vmem:[%s1647 + $0x138] sm:$0xff]
                  %1728 = vst [vmem:[%s1648 + $0x138] sm:$0xff] %v1727
                  %v1729 = vld [vmem:[%s1647 + $0x140] sm:$0xff]
                  %1730 = vst [vmem:[%s1648 + $0x140] sm:$0xff] %v1729
                  %v1731 = vld [vmem:[%s1647 + $0x148] sm:$0xff]
                  %1732 = vst [vmem:[%s1648 + $0x148] sm:$0xff] %v1731
                  %v1733 = vld [vmem:[%s1647 + $0x150] sm:$0xff]
                  %1734 = vst [vmem:[%s1648 + $0x150] sm:$0xff] %v1733
                  %v1735 = vld [vmem:[%s1647 + $0x158] sm:$0xff]
                  %1736 = vst [vmem:[%s1648 + $0x158] sm:$0xff] %v1735
                  %v1737 = vld [vmem:[%s1647 + $0x160] sm:$0xff]
                  %1738 = vst [vmem:[%s1648 + $0x160] sm:$0xff] %v1737
                  %v1739 = vld [vmem:[%s1647 + $0x168] sm:$0xff]
                  %1740 = vst [vmem:[%s1648 + $0x168] sm:$0xff] %v1739
                  %v1741 = vld [vmem:[%s1647 + $0x170] sm:$0xff]
                  %1742 = vst [vmem:[%s1648 + $0x170] sm:$0xff] %v1741
                  %v1743 = vld [vmem:[%s1647 + $0x178] sm:$0xff]
                  %1744 = vst [vmem:[%s1648 + $0x178] sm:$0xff] %v1743
                  %v1745 = vld [vmem:[%s1647 + $0x180] sm:$0xff]
                  %1746 = vst [vmem:[%s1648 + $0x180] sm:$0xff] %v1745
                  %v1747 = vld [vmem:[%s1647 + $0x188] sm:$0xff]
                  %1748 = vst [vmem:[%s1648 + $0x188] sm:$0xff] %v1747
                  %v1749 = vld [vmem:[%s1647 + $0x190] sm:$0xff]
                  %1750 = vst [vmem:[%s1648 + $0x190] sm:$0xff] %v1749
                  %v1751 = vld [vmem:[%s1647 + $0x198] sm:$0xff]
                  %1752 = vst [vmem:[%s1648 + $0x198] sm:$0xff] %v1751
                  %v1753 = vld [vmem:[%s1647 + $0x1a0] sm:$0xff]
                  %1754 = vst [vmem:[%s1648 + $0x1a0] sm:$0xff] %v1753
                  %v1755 = vld [vmem:[%s1647 + $0x1a8] sm:$0xff]
                  %1756 = vst [vmem:[%s1648 + $0x1a8] sm:$0xff] %v1755
                  %v1757 = vld [vmem:[%s1647 + $0x1b0] sm:$0xff]
                  %1758 = vst [vmem:[%s1648 + $0x1b0] sm:$0xff] %v1757
                  %v1759 = vld [vmem:[%s1647 + $0x1b8] sm:$0xff]
                  %1760 = vst [vmem:[%s1648 + $0x1b8] sm:$0xff] %v1759
                  %v1761 = vld [vmem:[%s1647 + $0x1c0] sm:$0xff]
                  %1762 = vst [vmem:[%s1648 + $0x1c0] sm:$0xff] %v1761
                  %v1763 = vld [vmem:[%s1647 + $0x1c8] sm:$0xff]
                  %1764 = vst [vmem:[%s1648 + $0x1c8] sm:$0xff] %v1763
                  %v1765 = vld [vmem:[%s1647 + $0x1d0] sm:$0xff]
                  %1766 = vst [vmem:[%s1648 + $0x1d0] sm:$0xff] %v1765
                  %v1767 = vld [vmem:[%s1647 + $0x1d8] sm:$0xff]
                  %1768 = vst [vmem:[%s1648 + $0x1d8] sm:$0xff] %v1767
                  %v1769 = vld [vmem:[%s1647 + $0x1e0] sm:$0xff]
                  %1770 = vst [vmem:[%s1648 + $0x1e0] sm:$0xff] %v1769
                  %v1771 = vld [vmem:[%s1647 + $0x1e8] sm:$0xff]
                  %1772 = vst [vmem:[%s1648 + $0x1e8] sm:$0xff] %v1771
                  %v1773 = vld [vmem:[%s1647 + $0x1f0] sm:$0xff]
                  %1774 = vst [vmem:[%s1648 + $0x1f0] sm:$0xff] %v1773
                  %v1775 = vld [vmem:[%s1647 + $0x1f8] sm:$0xff]
                  %1776 = vst [vmem:[%s1648 + $0x1f8] sm:$0xff] %v1775
                  %s1777 = sadd.s32 1, %s1646
                  %p1778 = scmp.ge.s32.totalorder %s1777, %s1639
                  %s1779 = scalar_select %p1778, 0, %s1777
                  %s1780 = smul.u32 %s1779, 512
                  %s1781 = smul.u32 %s1779, 512
                  %s1782 = scalar_lea.vmem %s1447, %s1780 [#allocation2]
                  %s1783 = scalar_lea.vmem %s1458, %s1781
                $region71: #{net_forward.4} parent=65 // loop_footer
                  %s1643 = sadd.s32 %s1641, 1
                $region72: #{net_forward.4} parent=65 // loop_footer_branch
                  %1640 = sbr.rel target = $region68
                $region73: #{net_forward.4} parent=65 // loop_exit
                  _
                %s1784 = sshrl.u32 %s1454, 6
                %s1785 = sand.u32 %s1454, 63
                %s1786 = smul.u32 %s1784, 64
                %s1787 = smul.u32 8, %s1786
                %s1788 = scalar_lea.vmem %s1447, %s1787 [#allocation2]
                %s1789 = smul.u32 8, %s1786
                %s1790 = scalar_lea.vmem %s1458, %s1789
                // While loop
                $region74: #{net_forward.4} parent=65 // loop_pre_header
                  _
                $region75: #{net_forward.4} parent=65 // loop_header
                  %s1792 = sphi 0, %s1794
                  %p1793 = scmp.ge.s32.totalorder %s1792, %s1785
                  %s1797 = sphi 0, %s1804
                  %s1798 = sphi %s1788, %s1807
                  %s1799 = sphi %s1790, %s1808
                $region76: #{net_forward.4} parent=65 // loop_header_branch
                  %1796 = sbr.rel (%p1793) target = $region80
                $region77: #{net_forward.4} parent=65 // loop_body
                  %v1800 = vld [vmem:[%s1798] sm:$0xff]
                  %1801 = vst [vmem:[%s1799] sm:$0xff] %v1800
                  %s1802 = sadd.s32 1, %s1797
                  %p1803 = scmp.ge.s32.totalorder %s1802, %s1785
                  %s1804 = scalar_select %p1803, 0, %s1802
                  %s1805 = smul.u32 %s1804, 8
                  %s1806 = smul.u32 %s1804, 8
                  %s1807 = scalar_lea.vmem %s1788, %s1805 [#allocation2]
                  %s1808 = scalar_lea.vmem %s1790, %s1806
                $region78: #{net_forward.4} parent=65 // loop_footer
                  %s1794 = sadd.s32 %s1792, 1
                $region79: #{net_forward.4} parent=65 // loop_footer_branch
                  %1791 = sbr.rel target = $region75
                $region80: #{net_forward.4} parent=65 // loop_exit
                  _
              $region66: #{net_forward.4} parent=43 // pred_fallthru
                _
              // Predicated region
              $region81: #{net_forward.4} parent=43 // pred_check
                _
              $region82: #{net_forward.4} parent=43 // pred_check_branch
                %1810 = sbr.rel target = $region84
              $region83: #{net_forward.4} parent=43 // pred_region
                _
              $region84: #{net_forward.4} parent=43 // pred_fallthru
                _
            $region44: #{net_forward.4} parent=39 // pred_fallthru
              _
            // Predicated region
            $region45: #{net_forward.4} parent=39 // pred_check
              _
            $region46: #{net_forward.4} parent=39 // pred_check_branch
              %1465 = sbr.rel target = $region48
            $region47: #{net_forward.4} parent=39 // pred_region
              %s1467 = sshrl.u32 %s1454, 6
              // While loop
              $region49: #{net_forward.4} parent=47 // loop_pre_header
                _
              $region50: #{net_forward.4} parent=47 // loop_header
                %s1469 = sphi 0, %s1471
                %p1470 = scmp.ge.s32.totalorder %s1469, %s1467
                %s1474 = sphi 0, %s1607
                %s1475 = sphi %s1447, %s1610
                %s1476 = sphi %s1458, %s1611
              $region51: #{net_forward.4} parent=47 // loop_header_branch
                %1473 = sbr.rel (%p1470) target = $region55
              $region52: #{net_forward.4} parent=47 // loop_body
                %v1477 = vld [vmem:[%s1475] sm:$0xff]
                %1478 = vst [vmem:[%s1476] sm:$0xff] %v1477
                %v1479 = vld [vmem:[%s1475 + $0x8] sm:$0xff]
                %1480 = vst [vmem:[%s1476 + $0x8] sm:$0xff] %v1479
                %v1481 = vld [vmem:[%s1475 + $0x10] sm:$0xff]
                %1482 = vst [vmem:[%s1476 + $0x10] sm:$0xff] %v1481
                %v1483 = vld [vmem:[%s1475 + $0x18] sm:$0xff]
                %1484 = vst [vmem:[%s1476 + $0x18] sm:$0xff] %v1483
                %v1485 = vld [vmem:[%s1475 + $0x20] sm:$0xff]
                %1486 = vst [vmem:[%s1476 + $0x20] sm:$0xff] %v1485
                %v1487 = vld [vmem:[%s1475 + $0x28] sm:$0xff]
                %1488 = vst [vmem:[%s1476 + $0x28] sm:$0xff] %v1487
                %v1489 = vld [vmem:[%s1475 + $0x30] sm:$0xff]
                %1490 = vst [vmem:[%s1476 + $0x30] sm:$0xff] %v1489
                %v1491 = vld [vmem:[%s1475 + $0x38] sm:$0xff]
                %1492 = vst [vmem:[%s1476 + $0x38] sm:$0xff] %v1491
                %v1493 = vld [vmem:[%s1475 + $0x40] sm:$0xff]
                %1494 = vst [vmem:[%s1476 + $0x40] sm:$0xff] %v1493
                %v1495 = vld [vmem:[%s1475 + $0x48] sm:$0xff]
                %1496 = vst [vmem:[%s1476 + $0x48] sm:$0xff] %v1495
                %v1497 = vld [vmem:[%s1475 + $0x50] sm:$0xff]
                %1498 = vst [vmem:[%s1476 + $0x50] sm:$0xff] %v1497
                %v1499 = vld [vmem:[%s1475 + $0x58] sm:$0xff]
                %1500 = vst [vmem:[%s1476 + $0x58] sm:$0xff] %v1499
                %v1501 = vld [vmem:[%s1475 + $0x60] sm:$0xff]
                %1502 = vst [vmem:[%s1476 + $0x60] sm:$0xff] %v1501
                %v1503 = vld [vmem:[%s1475 + $0x68] sm:$0xff]
                %1504 = vst [vmem:[%s1476 + $0x68] sm:$0xff] %v1503
                %v1505 = vld [vmem:[%s1475 + $0x70] sm:$0xff]
                %1506 = vst [vmem:[%s1476 + $0x70] sm:$0xff] %v1505
                %v1507 = vld [vmem:[%s1475 + $0x78] sm:$0xff]
                %1508 = vst [vmem:[%s1476 + $0x78] sm:$0xff] %v1507
                %v1509 = vld [vmem:[%s1475 + $0x80] sm:$0xff]
                %1510 = vst [vmem:[%s1476 + $0x80] sm:$0xff] %v1509
                %v1511 = vld [vmem:[%s1475 + $0x88] sm:$0xff]
                %1512 = vst [vmem:[%s1476 + $0x88] sm:$0xff] %v1511
                %v1513 = vld [vmem:[%s1475 + $0x90] sm:$0xff]
                %1514 = vst [vmem:[%s1476 + $0x90] sm:$0xff] %v1513
                %v1515 = vld [vmem:[%s1475 + $0x98] sm:$0xff]
                %1516 = vst [vmem:[%s1476 + $0x98] sm:$0xff] %v1515
                %v1517 = vld [vmem:[%s1475 + $0xa0] sm:$0xff]
                %1518 = vst [vmem:[%s1476 + $0xa0] sm:$0xff] %v1517
                %v1519 = vld [vmem:[%s1475 + $0xa8] sm:$0xff]
                %1520 = vst [vmem:[%s1476 + $0xa8] sm:$0xff] %v1519
                %v1521 = vld [vmem:[%s1475 + $0xb0] sm:$0xff]
                %1522 = vst [vmem:[%s1476 + $0xb0] sm:$0xff] %v1521
                %v1523 = vld [vmem:[%s1475 + $0xb8] sm:$0xff]
                %1524 = vst [vmem:[%s1476 + $0xb8] sm:$0xff] %v1523
                %v1525 = vld [vmem:[%s1475 + $0xc0] sm:$0xff]
                %1526 = vst [vmem:[%s1476 + $0xc0] sm:$0xff] %v1525
                %v1527 = vld [vmem:[%s1475 + $0xc8] sm:$0xff]
                %1528 = vst [vmem:[%s1476 + $0xc8] sm:$0xff] %v1527
                %v1529 = vld [vmem:[%s1475 + $0xd0] sm:$0xff]
                %1530 = vst [vmem:[%s1476 + $0xd0] sm:$0xff] %v1529
                %v1531 = vld [vmem:[%s1475 + $0xd8] sm:$0xff]
                %1532 = vst [vmem:[%s1476 + $0xd8] sm:$0xff] %v1531
                %v1533 = vld [vmem:[%s1475 + $0xe0] sm:$0xff]
                %1534 = vst [vmem:[%s1476 + $0xe0] sm:$0xff] %v1533
                %v1535 = vld [vmem:[%s1475 + $0xe8] sm:$0xff]
                %1536 = vst [vmem:[%s1476 + $0xe8] sm:$0xff] %v1535
                %v1537 = vld [vmem:[%s1475 + $0xf0] sm:$0xff]
                %1538 = vst [vmem:[%s1476 + $0xf0] sm:$0xff] %v1537
                %v1539 = vld [vmem:[%s1475 + $0xf8] sm:$0xff]
                %1540 = vst [vmem:[%s1476 + $0xf8] sm:$0xff] %v1539
                %v1541 = vld [vmem:[%s1475 + $0x100] sm:$0xff]
                %1542 = vst [vmem:[%s1476 + $0x100] sm:$0xff] %v1541
                %v1543 = vld [vmem:[%s1475 + $0x108] sm:$0xff]
                %1544 = vst [vmem:[%s1476 + $0x108] sm:$0xff] %v1543
                %v1545 = vld [vmem:[%s1475 + $0x110] sm:$0xff]
                %1546 = vst [vmem:[%s1476 + $0x110] sm:$0xff] %v1545
                %v1547 = vld [vmem:[%s1475 + $0x118] sm:$0xff]
                %1548 = vst [vmem:[%s1476 + $0x118] sm:$0xff] %v1547
                %v1549 = vld [vmem:[%s1475 + $0x120] sm:$0xff]
                %1550 = vst [vmem:[%s1476 + $0x120] sm:$0xff] %v1549
                %v1551 = vld [vmem:[%s1475 + $0x128] sm:$0xff]
                %1552 = vst [vmem:[%s1476 + $0x128] sm:$0xff] %v1551
                %v1553 = vld [vmem:[%s1475 + $0x130] sm:$0xff]
                %1554 = vst [vmem:[%s1476 + $0x130] sm:$0xff] %v1553
                %v1555 = vld [vmem:[%s1475 + $0x138] sm:$0xff]
                %1556 = vst [vmem:[%s1476 + $0x138] sm:$0xff] %v1555
                %v1557 = vld [vmem:[%s1475 + $0x140] sm:$0xff]
                %1558 = vst [vmem:[%s1476 + $0x140] sm:$0xff] %v1557
                %v1559 = vld [vmem:[%s1475 + $0x148] sm:$0xff]
                %1560 = vst [vmem:[%s1476 + $0x148] sm:$0xff] %v1559
                %v1561 = vld [vmem:[%s1475 + $0x150] sm:$0xff]
                %1562 = vst [vmem:[%s1476 + $0x150] sm:$0xff] %v1561
                %v1563 = vld [vmem:[%s1475 + $0x158] sm:$0xff]
                %1564 = vst [vmem:[%s1476 + $0x158] sm:$0xff] %v1563
                %v1565 = vld [vmem:[%s1475 + $0x160] sm:$0xff]
                %1566 = vst [vmem:[%s1476 + $0x160] sm:$0xff] %v1565
                %v1567 = vld [vmem:[%s1475 + $0x168] sm:$0xff]
                %1568 = vst [vmem:[%s1476 + $0x168] sm:$0xff] %v1567
                %v1569 = vld [vmem:[%s1475 + $0x170] sm:$0xff]
                %1570 = vst [vmem:[%s1476 + $0x170] sm:$0xff] %v1569
                %v1571 = vld [vmem:[%s1475 + $0x178] sm:$0xff]
                %1572 = vst [vmem:[%s1476 + $0x178] sm:$0xff] %v1571
                %v1573 = vld [vmem:[%s1475 + $0x180] sm:$0xff]
                %1574 = vst [vmem:[%s1476 + $0x180] sm:$0xff] %v1573
                %v1575 = vld [vmem:[%s1475 + $0x188] sm:$0xff]
                %1576 = vst [vmem:[%s1476 + $0x188] sm:$0xff] %v1575
                %v1577 = vld [vmem:[%s1475 + $0x190] sm:$0xff]
                %1578 = vst [vmem:[%s1476 + $0x190] sm:$0xff] %v1577
                %v1579 = vld [vmem:[%s1475 + $0x198] sm:$0xff]
                %1580 = vst [vmem:[%s1476 + $0x198] sm:$0xff] %v1579
                %v1581 = vld [vmem:[%s1475 + $0x1a0] sm:$0xff]
                %1582 = vst [vmem:[%s1476 + $0x1a0] sm:$0xff] %v1581
                %v1583 = vld [vmem:[%s1475 + $0x1a8] sm:$0xff]
                %1584 = vst [vmem:[%s1476 + $0x1a8] sm:$0xff] %v1583
                %v1585 = vld [vmem:[%s1475 + $0x1b0] sm:$0xff]
                %1586 = vst [vmem:[%s1476 + $0x1b0] sm:$0xff] %v1585
                %v1587 = vld [vmem:[%s1475 + $0x1b8] sm:$0xff]
                %1588 = vst [vmem:[%s1476 + $0x1b8] sm:$0xff] %v1587
                %v1589 = vld [vmem:[%s1475 + $0x1c0] sm:$0xff]
                %1590 = vst [vmem:[%s1476 + $0x1c0] sm:$0xff] %v1589
                %v1591 = vld [vmem:[%s1475 + $0x1c8] sm:$0xff]
                %1592 = vst [vmem:[%s1476 + $0x1c8] sm:$0xff] %v1591
                %v1593 = vld [vmem:[%s1475 + $0x1d0] sm:$0xff]
                %1594 = vst [vmem:[%s1476 + $0x1d0] sm:$0xff] %v1593
                %v1595 = vld [vmem:[%s1475 + $0x1d8] sm:$0xff]
                %1596 = vst [vmem:[%s1476 + $0x1d8] sm:$0xff] %v1595
                %v1597 = vld [vmem:[%s1475 + $0x1e0] sm:$0xff]
                %1598 = vst [vmem:[%s1476 + $0x1e0] sm:$0xff] %v1597
                %v1599 = vld [vmem:[%s1475 + $0x1e8] sm:$0xff]
                %1600 = vst [vmem:[%s1476 + $0x1e8] sm:$0xff] %v1599
                %v1601 = vld [vmem:[%s1475 + $0x1f0] sm:$0xff]
                %1602 = vst [vmem:[%s1476 + $0x1f0] sm:$0xff] %v1601
                %v1603 = vld [vmem:[%s1475 + $0x1f8] sm:$0xff]
                %1604 = vst [vmem:[%s1476 + $0x1f8] sm:$0xff] %v1603
                %s1605 = sadd.s32 1, %s1474
                %p1606 = scmp.ge.s32.totalorder %s1605, %s1467
                %s1607 = scalar_select %p1606, 0, %s1605
                %s1608 = smul.u32 %s1607, 512
                %s1609 = smul.u32 %s1607, 512
                %s1610 = scalar_lea.vmem %s1447, %s1608 [#allocation2]
                %s1611 = scalar_lea.vmem %s1458, %s1609
              $region53: #{net_forward.4} parent=47 // loop_footer
                %s1471 = sadd.s32 %s1469, 1
              $region54: #{net_forward.4} parent=47 // loop_footer_branch
                %1468 = sbr.rel target = $region50
              $region55: #{net_forward.4} parent=47 // loop_exit
                _
              %s1612 = sshrl.u32 %s1454, 6
              %s1613 = sand.u32 %s1454, 63
              %s1614 = smul.u32 %s1612, 64
              %s1615 = smul.u32 8, %s1614
              %s1616 = scalar_lea.vmem %s1447, %s1615 [#allocation2]
              %s1617 = smul.u32 8, %s1614
              %s1618 = scalar_lea.vmem %s1458, %s1617
              // While loop
              $region56: #{net_forward.4} parent=47 // loop_pre_header
                _
              $region57: #{net_forward.4} parent=47 // loop_header
                %s1620 = sphi 0, %s1622
                %p1621 = scmp.ge.s32.totalorder %s1620, %s1613
                %s1625 = sphi 0, %s1632
                %s1626 = sphi %s1616, %s1635
                %s1627 = sphi %s1618, %s1636
              $region58: #{net_forward.4} parent=47 // loop_header_branch
                %1624 = sbr.rel (%p1621) target = $region62
              $region59: #{net_forward.4} parent=47 // loop_body
                %v1628 = vld [vmem:[%s1626] sm:$0xff]
                %1629 = vst [vmem:[%s1627] sm:$0xff] %v1628
                %s1630 = sadd.s32 1, %s1625
                %p1631 = scmp.ge.s32.totalorder %s1630, %s1613
                %s1632 = scalar_select %p1631, 0, %s1630
                %s1633 = smul.u32 %s1632, 8
                %s1634 = smul.u32 %s1632, 8
                %s1635 = scalar_lea.vmem %s1616, %s1633 [#allocation2]
                %s1636 = scalar_lea.vmem %s1618, %s1634
              $region60: #{net_forward.4} parent=47 // loop_footer
                %s1622 = sadd.s32 %s1620, 1
              $region61: #{net_forward.4} parent=47 // loop_footer_branch
                %1619 = sbr.rel target = $region57
              $region62: #{net_forward.4} parent=47 // loop_exit
                _
            $region48: #{net_forward.4} parent=39 // pred_fallthru
              _
          $region40: #{net_forward.4} parent=35 // pred_fallthru
            _
          %1811 = vnop
        $region36: #{net_forward.4} parent=31 // pred_fallthru
          _
      $region32: #{net_forward.4} parent=5 // pred_fallthru
        _
      %p1812 = scmp.le.s32.totalorder 2, %s9
      // Predicated region
      $region85: #{net_forward.4} parent=5 // pred_check
        %p1813 = pneg %p1812
      $region86: #{net_forward.4} parent=5 // pred_check_branch
        %1815 = sbr.rel (%p1813) target = $region88
      $region87: #{net_forward.4} parent=5 // pred_region
        %s1816 = ssub.s32 %s9, 2
        // Predicated region
        $region89: #{net_forward.4} parent=87 // pred_check
          %p1817 = pneg %p106
        $region90: #{net_forward.4} parent=87 // pred_check_branch
          %1819 = sbr.rel (%p1817) target = $region92
        $region91: #{net_forward.4} parent=87 // pred_region
          %s1820 = sand.u32 %s91, 1
          %s1821 = sand.u32 %s91, 1
          %s1822 = smul.addr %s1821, 512
          %s1823 = scalar_lea.vmem [#allocation2], %s1822
        $region92: #{net_forward.4} parent=87 // pred_fallthru
          _
      $region88: #{net_forward.4} parent=5 // pred_fallthru
        _
    $region6: #{net_forward.4} parent=1 // loop_footer
      %s13 = sadd.s32 1, %s9
    $region7: #{net_forward.4} parent=1 // loop_footer_branch
      %8 = sbr.rel target = $region3
    $region8: #{net_forward.4} parent=1 // loop_exit
      _

// kernel: net_forward.5
$region0: #{net_forward.5}
  #allocation0 [shape = 'u32[]', space=smem, size = 0x4, offset = 0x4, fixed_abs, tag = 'smem constant byte address 0x4 - core index']
  #allocation1 [shape = 'u32[144,128]{1,0:T(1,128)}', space=vmem, size = 0x12000, scoped, tag = 'internal scratch']
  %s0 = inlined_call_operand.vmem [shape: f32[2,9216], index: 0, kind: input, shape index: {}]
  %s1 = inlined_call_operand.vmem [shape: bf16[9216,128], index: 1, kind: input, shape index: {}]
  %s2 = inlined_call_operand.vmem [shape: f32[1,128], index: 2, kind: input, shape index: {}]
  %s3 = inlined_call_operand.vmem [shape: bf16[128,10], index: 3, kind: input, shape index: {}]
  %s4 = inlined_call_operand.vmem [shape: f32[1,10], index: 4, kind: input, shape index: {}]
  %s5 = inlined_call_operand.hbm [shape: f32[2,10], index: 5, kind: output, shape index: {}]
  %s6 = sld [smem:[#allocation0]]
  $region30: #{net_forward.5} parent=0
    _
  %s8 = ssub.s32 1, %s6
  %s9 = scalar_select 0, %s8, %s6
  $region1: #{net_forward.5} parent=0
    #allocation2 [shape = 'u8[1024]{0}', space=vmem, size = 0x400, scoped, tag = 'output window, operand 0, single buffered']
    #allocation3 [shape = 's32[1]{0}', space=sflag, size = 0x4, scoped, tag = 'scoped memory for net_forward.5']
    %10 = vsyncpa [#allocation3], 0
    // Predicated region
    $region2: #{net_forward.5} parent=1 // pred_check
      _
    $region3: #{net_forward.5} parent=1 // pred_check_branch
      %12 = sbr.rel (0) target = $region5
    $region4: #{net_forward.5} parent=1 // pred_region
      _
    $region5: #{net_forward.5} parent=1 // pred_fallthru
      _
    // Predicated region
    $region6: #{net_forward.5} parent=1 // pred_check
      _
    $region7: #{net_forward.5} parent=1 // pred_check_branch
      %14 = sbr.rel (0) target = $region9
    $region8: #{net_forward.5} parent=1 // pred_region
      _
    $region9: #{net_forward.5} parent=1 // pred_fallthru
      _
    // Predicated region
    $region10: #{net_forward.5} parent=1 // pred_check
      _
    $region11: #{net_forward.5} parent=1 // pred_check_branch
      %16 = sbr.rel (0) target = $region13
    $region12: #{net_forward.5} parent=1 // pred_region
      _
    $region13: #{net_forward.5} parent=1 // pred_fallthru
      _
    // Predicated region
    $region14: #{net_forward.5} parent=1 // pred_check
      _
    $region15: #{net_forward.5} parent=1 // pred_check_branch
      %18 = sbr.rel (0) target = $region17
    $region16: #{net_forward.5} parent=1 // pred_region
      _
    $region17: #{net_forward.5} parent=1 // pred_fallthru
      _
    // Predicated region
    $region18: #{net_forward.5} parent=1 // pred_check
      _
    $region19: #{net_forward.5} parent=1 // pred_check_branch
      %20 = sbr.rel (0) target = $region21
    $region20: #{net_forward.5} parent=1 // pred_region
      _
    $region21: #{net_forward.5} parent=1 // pred_fallthru
      _
    %v22 = vld [vmem:[%s0] sm:$0xff]
    %v23 = vld [vmem:[%s0 + $0x8] sm:$0xff]
    %v24 = vld [vmem:[%s0 + $0x10] sm:$0xff]
    %v25 = vld [vmem:[%s0 + $0x18] sm:$0xff]
    %v26 = vld [vmem:[%s0 + $0x20] sm:$0xff]
    %v27 = vld [vmem:[%s0 + $0x28] sm:$0xff]
    %v28 = vld [vmem:[%s0 + $0x30] sm:$0xff]
    %v29 = vld [vmem:[%s0 + $0x38] sm:$0xff]
    %v30 = vld [vmem:[%s0 + $0x40] sm:$0xff]
    %v31 = vld [vmem:[%s0 + $0x48] sm:$0xff]
    %v32 = vld [vmem:[%s0 + $0x50] sm:$0xff]
    %v33 = vld [vmem:[%s0 + $0x58] sm:$0xff]
    %v34 = vld [vmem:[%s0 + $0x60] sm:$0xff]
    %v35 = vld [vmem:[%s0 + $0x68] sm:$0xff]
    %v36 = vld [vmem:[%s0 + $0x70] sm:$0xff]
    %v37 = vld [vmem:[%s0 + $0x78] sm:$0xff]
    %v38 = vld [vmem:[%s0 + $0x80] sm:$0xff]
    %v39 = vld [vmem:[%s0 + $0x88] sm:$0xff]
    %v58 = vcombine.high %v22, %v22
    %v60 = vunpack.c.l.s4 1983009808
    %v61 = vunpack.c.0.s8 %v60
    %v62 = vlaneseq
    %v63 = vshrl.u32 %v62, 7
    %v64 = vsub.s32 %v61, %v63
    %v65 = vrot.slane %v22, %v64
    %v67 = vunpack.c.l.s4 1983009808
    %v68 = vunpack.c.0.s8 %v67
    %v69 = vlaneseq
    %v70 = vshrl.u32 %v69, 7
    %v71 = vsub.s32 %v68, %v70
    %v72 = vrot.slane %v58, %v71
    %v73 = vcombine.high %v65, %v65
    %v74 = vcombine.high %v72, %v72
    %v75 = vcombine.high %v23, %v23
    %v77 = vunpack.c.l.s4 1983009808
    %v78 = vunpack.c.0.s8 %v77
    %v79 = vlaneseq
    %v80 = vshrl.u32 %v79, 7
    %v81 = vsub.s32 %v78, %v80
    %v82 = vrot.slane %v23, %v81
    %v84 = vunpack.c.l.s4 1983009808
    %v85 = vunpack.c.0.s8 %v84
    %v86 = vlaneseq
    %v87 = vshrl.u32 %v86, 7
    %v88 = vsub.s32 %v85, %v87
    %v89 = vrot.slane %v75, %v88
    %v90 = vcombine.high %v82, %v82
    %v91 = vcombine.high %v89, %v89
    %v92 = vcombine.high %v24, %v24
    %v94 = vunpack.c.l.s4 1983009808
    %v95 = vunpack.c.0.s8 %v94
    %v96 = vlaneseq
    %v97 = vshrl.u32 %v96, 7
    %v98 = vsub.s32 %v95, %v97
    %v99 = vrot.slane %v24, %v98
    %v101 = vunpack.c.l.s4 1983009808
    %v102 = vunpack.c.0.s8 %v101
    %v103 = vlaneseq
    %v104 = vshrl.u32 %v103, 7
    %v105 = vsub.s32 %v102, %v104
    %v106 = vrot.slane %v92, %v105
    %v107 = vcombine.high %v99, %v99
    %v108 = vcombine.high %v106, %v106
    %v109 = vcombine.high %v25, %v25
    %v111 = vunpack.c.l.s4 1983009808
    %v112 = vunpack.c.0.s8 %v111
    %v113 = vlaneseq
    %v114 = vshrl.u32 %v113, 7
    %v115 = vsub.s32 %v112, %v114
    %v116 = vrot.slane %v25, %v115
    %v118 = vunpack.c.l.s4 1983009808
    %v119 = vunpack.c.0.s8 %v118
    %v120 = vlaneseq
    %v121 = vshrl.u32 %v120, 7
    %v122 = vsub.s32 %v119, %v121
    %v123 = vrot.slane %v109, %v122
    %v124 = vcombine.high %v116, %v116
    %v125 = vcombine.high %v123, %v123
    %v126 = vcombine.high %v26, %v26
    %v128 = vunpack.c.l.s4 1983009808
    %v129 = vunpack.c.0.s8 %v128
    %v130 = vlaneseq
    %v131 = vshrl.u32 %v130, 7
    %v132 = vsub.s32 %v129, %v131
    %v133 = vrot.slane %v26, %v132
    %v135 = vunpack.c.l.s4 1983009808
    %v136 = vunpack.c.0.s8 %v135
    %v137 = vlaneseq
    %v138 = vshrl.u32 %v137, 7
    %v139 = vsub.s32 %v136, %v138
    %v140 = vrot.slane %v126, %v139
    %v141 = vcombine.high %v133, %v133
    %v142 = vcombine.high %v140, %v140
    %v143 = vcombine.high %v27, %v27
    %v145 = vunpack.c.l.s4 1983009808
    %v146 = vunpack.c.0.s8 %v145
    %v147 = vlaneseq
    %v148 = vshrl.u32 %v147, 7
    %v149 = vsub.s32 %v146, %v148
    %v150 = vrot.slane %v27, %v149
    %v152 = vunpack.c.l.s4 1983009808
    %v153 = vunpack.c.0.s8 %v152
    %v154 = vlaneseq
    %v155 = vshrl.u32 %v154, 7
    %v156 = vsub.s32 %v153, %v155
    %v157 = vrot.slane %v143, %v156
    %v158 = vcombine.high %v150, %v150
    %v159 = vcombine.high %v157, %v157
    %v160 = vcombine.high %v28, %v28
    %v162 = vunpack.c.l.s4 1983009808
    %v163 = vunpack.c.0.s8 %v162
    %v164 = vlaneseq
    %v165 = vshrl.u32 %v164, 7
    %v166 = vsub.s32 %v163, %v165
    %v167 = vrot.slane %v28, %v166
    %v169 = vunpack.c.l.s4 1983009808
    %v170 = vunpack.c.0.s8 %v169
    %v171 = vlaneseq
    %v172 = vshrl.u32 %v171, 7
    %v173 = vsub.s32 %v170, %v172
    %v174 = vrot.slane %v160, %v173
    %v175 = vcombine.high %v167, %v167
    %v176 = vcombine.high %v174, %v174
    %v177 = vcombine.high %v29, %v29
    %v179 = vunpack.c.l.s4 1983009808
    %v180 = vunpack.c.0.s8 %v179
    %v181 = vlaneseq
    %v182 = vshrl.u32 %v181, 7
    %v183 = vsub.s32 %v180, %v182
    %v184 = vrot.slane %v29, %v183
    %v186 = vunpack.c.l.s4 1983009808
    %v187 = vunpack.c.0.s8 %v186
    %v188 = vlaneseq
    %v189 = vshrl.u32 %v188, 7
    %v190 = vsub.s32 %v187, %v189
    %v191 = vrot.slane %v177, %v190
    %v192 = vcombine.high %v184, %v184
    %v193 = vcombine.high %v191, %v191
    %v194 = vcombine.high %v30, %v30
    %v196 = vunpack.c.l.s4 1983009808
    %v197 = vunpack.c.0.s8 %v196
    %v198 = vlaneseq
    %v199 = vshrl.u32 %v198, 7
    %v200 = vsub.s32 %v197, %v199
    %v201 = vrot.slane %v30, %v200
    %v203 = vunpack.c.l.s4 1983009808
    %v204 = vunpack.c.0.s8 %v203
    %v205 = vlaneseq
    %v206 = vshrl.u32 %v205, 7
    %v207 = vsub.s32 %v204, %v206
    %v208 = vrot.slane %v194, %v207
    %v209 = vcombine.high %v201, %v201
    %v210 = vcombine.high %v208, %v208
    %v211 = vcombine.high %v31, %v31
    %v213 = vunpack.c.l.s4 1983009808
    %v214 = vunpack.c.0.s8 %v213
    %v215 = vlaneseq
    %v216 = vshrl.u32 %v215, 7
    %v217 = vsub.s32 %v214, %v216
    %v218 = vrot.slane %v31, %v217
    %v220 = vunpack.c.l.s4 1983009808
    %v221 = vunpack.c.0.s8 %v220
    %v222 = vlaneseq
    %v223 = vshrl.u32 %v222, 7
    %v224 = vsub.s32 %v221, %v223
    %v225 = vrot.slane %v211, %v224
    %v226 = vcombine.high %v218, %v218
    %v227 = vcombine.high %v225, %v225
    %v228 = vcombine.high %v32, %v32
    %v230 = vunpack.c.l.s4 1983009808
    %v231 = vunpack.c.0.s8 %v230
    %v232 = vlaneseq
    %v233 = vshrl.u32 %v232, 7
    %v234 = vsub.s32 %v231, %v233
    %v235 = vrot.slane %v32, %v234
    %v237 = vunpack.c.l.s4 1983009808
    %v238 = vunpack.c.0.s8 %v237
    %v239 = vlaneseq
    %v240 = vshrl.u32 %v239, 7
    %v241 = vsub.s32 %v238, %v240
    %v242 = vrot.slane %v228, %v241
    %v243 = vcombine.high %v235, %v235
    %v244 = vcombine.high %v242, %v242
    %v245 = vcombine.high %v33, %v33
    %v247 = vunpack.c.l.s4 1983009808
    %v248 = vunpack.c.0.s8 %v247
    %v249 = vlaneseq
    %v250 = vshrl.u32 %v249, 7
    %v251 = vsub.s32 %v248, %v250
    %v252 = vrot.slane %v33, %v251
    %v254 = vunpack.c.l.s4 1983009808
    %v255 = vunpack.c.0.s8 %v254
    %v256 = vlaneseq
    %v257 = vshrl.u32 %v256, 7
    %v258 = vsub.s32 %v255, %v257
    %v259 = vrot.slane %v245, %v258
    %v260 = vcombine.high %v252, %v252
    %v261 = vcombine.high %v259, %v259
    %v262 = vcombine.high %v34, %v34
    %v264 = vunpack.c.l.s4 1983009808
    %v265 = vunpack.c.0.s8 %v264
    %v266 = vlaneseq
    %v267 = vshrl.u32 %v266, 7
    %v268 = vsub.s32 %v265, %v267
    %v269 = vrot.slane %v34, %v268
    %v271 = vunpack.c.l.s4 1983009808
    %v272 = vunpack.c.0.s8 %v271
    %v273 = vlaneseq
    %v274 = vshrl.u32 %v273, 7
    %v275 = vsub.s32 %v272, %v274
    %v276 = vrot.slane %v262, %v275
    %v277 = vcombine.high %v269, %v269
    %v278 = vcombine.high %v276, %v276
    %v279 = vcombine.high %v35, %v35
    %v281 = vunpack.c.l.s4 1983009808
    %v282 = vunpack.c.0.s8 %v281
    %v283 = vlaneseq
    %v284 = vshrl.u32 %v283, 7
    %v285 = vsub.s32 %v282, %v284
    %v286 = vrot.slane %v35, %v285
    %v288 = vunpack.c.l.s4 1983009808
    %v289 = vunpack.c.0.s8 %v288
    %v290 = vlaneseq
    %v291 = vshrl.u32 %v290, 7
    %v292 = vsub.s32 %v289, %v291
    %v293 = vrot.slane %v279, %v292
    %v294 = vcombine.high %v286, %v286
    %v295 = vcombine.high %v293, %v293
    %v296 = vcombine.high %v36, %v36
    %v298 = vunpack.c.l.s4 1983009808
    %v299 = vunpack.c.0.s8 %v298
    %v300 = vlaneseq
    %v301 = vshrl.u32 %v300, 7
    %v302 = vsub.s32 %v299, %v301
    %v303 = vrot.slane %v36, %v302
    %v305 = vunpack.c.l.s4 1983009808
    %v306 = vunpack.c.0.s8 %v305
    %v307 = vlaneseq
    %v308 = vshrl.u32 %v307, 7
    %v309 = vsub.s32 %v306, %v308
    %v310 = vrot.slane %v296, %v309
    %v311 = vcombine.high %v303, %v303
    %v312 = vcombine.high %v310, %v310
    %v313 = vcombine.high %v37, %v37
    %v315 = vunpack.c.l.s4 1983009808
    %v316 = vunpack.c.0.s8 %v315
    %v317 = vlaneseq
    %v318 = vshrl.u32 %v317, 7
    %v319 = vsub.s32 %v316, %v318
    %v320 = vrot.slane %v37, %v319
    %v322 = vunpack.c.l.s4 1983009808
    %v323 = vunpack.c.0.s8 %v322
    %v324 = vlaneseq
    %v325 = vshrl.u32 %v324, 7
    %v326 = vsub.s32 %v323, %v325
    %v327 = vrot.slane %v313, %v326
    %v328 = vcombine.high %v320, %v320
    %v329 = vcombine.high %v327, %v327
    %v330 = vcombine.high %v38, %v38
    %v332 = vunpack.c.l.s4 1983009808
    %v333 = vunpack.c.0.s8 %v332
    %v334 = vlaneseq
    %v335 = vshrl.u32 %v334, 7
    %v336 = vsub.s32 %v333, %v335
    %v337 = vrot.slane %v38, %v336
    %v339 = vunpack.c.l.s4 1983009808
    %v340 = vunpack.c.0.s8 %v339
    %v341 = vlaneseq
    %v342 = vshrl.u32 %v341, 7
    %v343 = vsub.s32 %v340, %v342
    %v344 = vrot.slane %v330, %v343
    %v345 = vcombine.high %v337, %v337
    %v346 = vcombine.high %v344, %v344
    %v347 = vcombine.high %v39, %v39
    %v349 = vunpack.c.l.s4 1983009808
    %v350 = vunpack.c.0.s8 %v349
    %v351 = vlaneseq
    %v352 = vshrl.u32 %v351, 7
    %v353 = vsub.s32 %v350, %v352
    %v354 = vrot.slane %v39, %v353
    %v356 = vunpack.c.l.s4 1983009808
    %v357 = vunpack.c.0.s8 %v356
    %v358 = vlaneseq
    %v359 = vshrl.u32 %v358, 7
    %v360 = vsub.s32 %v357, %v359
    %v361 = vrot.slane %v347, %v360
    %v362 = vcombine.high %v354, %v354
    %v363 = vcombine.high %v361, %v361
    %v436 = vpack.c.bf16 %v65, %v65
    %v437 = vpack.c.bf16 %v73, %v73
    %v438 = vpack.c.bf16 %v72, %v72
    %v439 = vpack.c.bf16 %v74, %v74
    %v440 = vpack.c.bf16 %v82, %v82
    %v441 = vpack.c.bf16 %v90, %v90
    %v442 = vpack.c.bf16 %v89, %v89
    %v443 = vpack.c.bf16 %v91, %v91
    %v444 = vpack.c.bf16 %v99, %v99
    %v445 = vpack.c.bf16 %v107, %v107
    %v446 = vpack.c.bf16 %v106, %v106
    %v447 = vpack.c.bf16 %v108, %v108
    %v448 = vpack.c.bf16 %v116, %v116
    %v449 = vpack.c.bf16 %v124, %v124
    %v450 = vpack.c.bf16 %v123, %v123
    %v451 = vpack.c.bf16 %v125, %v125
    %v452 = vpack.c.bf16 %v133, %v133
    %v453 = vpack.c.bf16 %v141, %v141
    %v454 = vpack.c.bf16 %v140, %v140
    %v455 = vpack.c.bf16 %v142, %v142
    %v456 = vpack.c.bf16 %v150, %v150
    %v457 = vpack.c.bf16 %v158, %v158
    %v458 = vpack.c.bf16 %v157, %v157
    %v459 = vpack.c.bf16 %v159, %v159
    %v460 = vpack.c.bf16 %v167, %v167
    %v461 = vpack.c.bf16 %v175, %v175
    %v462 = vpack.c.bf16 %v174, %v174
    %v463 = vpack.c.bf16 %v176, %v176
    %v464 = vpack.c.bf16 %v184, %v184
    %v465 = vpack.c.bf16 %v192, %v192
    %v466 = vpack.c.bf16 %v191, %v191
    %v467 = vpack.c.bf16 %v193, %v193
    %v468 = vpack.c.bf16 %v201, %v201
    %v469 = vpack.c.bf16 %v209, %v209
    %v470 = vpack.c.bf16 %v208, %v208
    %v471 = vpack.c.bf16 %v210, %v210
    %v472 = vpack.c.bf16 %v218, %v218
    %v473 = vpack.c.bf16 %v226, %v226
    %v474 = vpack.c.bf16 %v225, %v225
    %v475 = vpack.c.bf16 %v227, %v227
    %v476 = vpack.c.bf16 %v235, %v235
    %v477 = vpack.c.bf16 %v243, %v243
    %v478 = vpack.c.bf16 %v242, %v242
    %v479 = vpack.c.bf16 %v244, %v244
    %v480 = vpack.c.bf16 %v252, %v252
    %v481 = vpack.c.bf16 %v260, %v260
    %v482 = vpack.c.bf16 %v259, %v259
    %v483 = vpack.c.bf16 %v261, %v261
    %v484 = vpack.c.bf16 %v269, %v269
    %v485 = vpack.c.bf16 %v277, %v277
    %v486 = vpack.c.bf16 %v276, %v276
    %v487 = vpack.c.bf16 %v278, %v278
    %v488 = vpack.c.bf16 %v286, %v286
    %v489 = vpack.c.bf16 %v294, %v294
    %v490 = vpack.c.bf16 %v293, %v293
    %v491 = vpack.c.bf16 %v295, %v295
    %v492 = vpack.c.bf16 %v303, %v303
    %v493 = vpack.c.bf16 %v311, %v311
    %v494 = vpack.c.bf16 %v310, %v310
    %v495 = vpack.c.bf16 %v312, %v312
    %v496 = vpack.c.bf16 %v320, %v320
    %v497 = vpack.c.bf16 %v328, %v328
    %v498 = vpack.c.bf16 %v327, %v327
    %v499 = vpack.c.bf16 %v329, %v329
    %v500 = vpack.c.bf16 %v337, %v337
    %v501 = vpack.c.bf16 %v345, %v345
    %v502 = vpack.c.bf16 %v344, %v344
    %v503 = vpack.c.bf16 %v346, %v346
    %v504 = vpack.c.bf16 %v354, %v354
    %v505 = vpack.c.bf16 %v362, %v362
    %v506 = vpack.c.bf16 %v361, %v361
    %v507 = vpack.c.bf16 %v363, %v363
    %v508 = vld [vmem:[%s1] sm:$0xf]
    %v509 = vld [vmem:[%s1 + $0x4] sm:$0xf]
    %v510 = vld [vmem:[%s1 + $0x8] sm:$0xf]
    %v511 = vld [vmem:[%s1 + $0xc] sm:$0xf]
    %v512 = vld [vmem:[%s1 + $0x10] sm:$0xf]
    %v513 = vld [vmem:[%s1 + $0x14] sm:$0xf]
    %v514 = vld [vmem:[%s1 + $0x18] sm:$0xf]
    %v515 = vld [vmem:[%s1 + $0x1c] sm:$0xf]
    %v516 = vld [vmem:[%s1 + $0x20] sm:$0xf]
    %v517 = vld [vmem:[%s1 + $0x24] sm:$0xf]
    %v518 = vld [vmem:[%s1 + $0x28] sm:$0xf]
    %v519 = vld [vmem:[%s1 + $0x2c] sm:$0xf]
    %v520 = vld [vmem:[%s1 + $0x30] sm:$0xf]
    %v521 = vld [vmem:[%s1 + $0x34] sm:$0xf]
    %v522 = vld [vmem:[%s1 + $0x38] sm:$0xf]
    %v523 = vld [vmem:[%s1 + $0x3c] sm:$0xf]
    %v524 = vld [vmem:[%s1 + $0x40] sm:$0xf]
    %v525 = vld [vmem:[%s1 + $0x44] sm:$0xf]
    %v526 = vld [vmem:[%s1 + $0x48] sm:$0xf]
    %v527 = vld [vmem:[%s1 + $0x4c] sm:$0xf]
    %v528 = vld [vmem:[%s1 + $0x50] sm:$0xf]
    %v529 = vld [vmem:[%s1 + $0x54] sm:$0xf]
    %v530 = vld [vmem:[%s1 + $0x58] sm:$0xf]
    %v531 = vld [vmem:[%s1 + $0x5c] sm:$0xf]
    %v532 = vld [vmem:[%s1 + $0x60] sm:$0xf]
    %v533 = vld [vmem:[%s1 + $0x64] sm:$0xf]
    %v534 = vld [vmem:[%s1 + $0x68] sm:$0xf]
    %v535 = vld [vmem:[%s1 + $0x6c] sm:$0xf]
    %v536 = vld [vmem:[%s1 + $0x70] sm:$0xf]
    %v537 = vld [vmem:[%s1 + $0x74] sm:$0xf]
    %v538 = vld [vmem:[%s1 + $0x78] sm:$0xf]
    %v539 = vld [vmem:[%s1 + $0x7c] sm:$0xf]
    %v540 = vld [vmem:[%s1 + $0x80] sm:$0xf]
    %v541 = vld [vmem:[%s1 + $0x84] sm:$0xf]
    %v542 = vld [vmem:[%s1 + $0x88] sm:$0xf]
    %v543 = vld [vmem:[%s1 + $0x8c] sm:$0xf]
    %v544 = vld [vmem:[%s1 + $0x90] sm:$0xf]
    %v545 = vld [vmem:[%s1 + $0x94] sm:$0xf]
    %v546 = vld [vmem:[%s1 + $0x98] sm:$0xf]
    %v547 = vld [vmem:[%s1 + $0x9c] sm:$0xf]
    %v548 = vld [vmem:[%s1 + $0xa0] sm:$0xf]
    %v549 = vld [vmem:[%s1 + $0xa4] sm:$0xf]
    %v550 = vld [vmem:[%s1 + $0xa8] sm:$0xf]
    %v551 = vld [vmem:[%s1 + $0xac] sm:$0xf]
    %v552 = vld [vmem:[%s1 + $0xb0] sm:$0xf]
    %v553 = vld [vmem:[%s1 + $0xb4] sm:$0xf]
    %v554 = vld [vmem:[%s1 + $0xb8] sm:$0xf]
    %v555 = vld [vmem:[%s1 + $0xbc] sm:$0xf]
    %v556 = vld [vmem:[%s1 + $0xc0] sm:$0xf]
    %v557 = vld [vmem:[%s1 + $0xc4] sm:$0xf]
    %v558 = vld [vmem:[%s1 + $0xc8] sm:$0xf]
    %v559 = vld [vmem:[%s1 + $0xcc] sm:$0xf]
    %v560 = vld [vmem:[%s1 + $0xd0] sm:$0xf]
    %v561 = vld [vmem:[%s1 + $0xd4] sm:$0xf]
    %v562 = vld [vmem:[%s1 + $0xd8] sm:$0xf]
    %v563 = vld [vmem:[%s1 + $0xdc] sm:$0xf]
    %v564 = vld [vmem:[%s1 + $0xe0] sm:$0xf]
    %v565 = vld [vmem:[%s1 + $0xe4] sm:$0xf]
    %v566 = vld [vmem:[%s1 + $0xe8] sm:$0xf]
    %v567 = vld [vmem:[%s1 + $0xec] sm:$0xf]
    %v568 = vld [vmem:[%s1 + $0xf0] sm:$0xf]
    %v569 = vld [vmem:[%s1 + $0xf4] sm:$0xf]
    %v570 = vld [vmem:[%s1 + $0xf8] sm:$0xf]
    %v571 = vld [vmem:[%s1 + $0xfc] sm:$0xf]
    %v572 = vld [vmem:[%s1 + $0x100] sm:$0xf]
    %v573 = vld [vmem:[%s1 + $0x104] sm:$0xf]
    %v574 = vld [vmem:[%s1 + $0x108] sm:$0xf]
    %v575 = vld [vmem:[%s1 + $0x10c] sm:$0xf]
    %v576 = vld [vmem:[%s1 + $0x110] sm:$0xf]
    %v577 = vld [vmem:[%s1 + $0x114] sm:$0xf]
    %v578 = vld [vmem:[%s1 + $0x118] sm:$0xf]
    %v579 = vld [vmem:[%s1 + $0x11c] sm:$0xf]
    %v580 = vld [vmem:[%s1 + $0x120] sm:$0xf]
    %v581 = vld [vmem:[%s1 + $0x124] sm:$0xf]
    %v582 = vld [vmem:[%s1 + $0x128] sm:$0xf]
    %v583 = vld [vmem:[%s1 + $0x12c] sm:$0xf]
    %v584 = vld [vmem:[%s1 + $0x130] sm:$0xf]
    %v585 = vld [vmem:[%s1 + $0x134] sm:$0xf]
    %v586 = vld [vmem:[%s1 + $0x138] sm:$0xf]
    %v587 = vld [vmem:[%s1 + $0x13c] sm:$0xf]
    %v588 = vld [vmem:[%s1 + $0x140] sm:$0xf]
    %v589 = vld [vmem:[%s1 + $0x144] sm:$0xf]
    %v590 = vld [vmem:[%s1 + $0x148] sm:$0xf]
    %v591 = vld [vmem:[%s1 + $0x14c] sm:$0xf]
    %v592 = vld [vmem:[%s1 + $0x150] sm:$0xf]
    %v593 = vld [vmem:[%s1 + $0x154] sm:$0xf]
    %v594 = vld [vmem:[%s1 + $0x158] sm:$0xf]
    %v595 = vld [vmem:[%s1 + $0x15c] sm:$0xf]
    %v596 = vld [vmem:[%s1 + $0x160] sm:$0xf]
    %v597 = vld [vmem:[%s1 + $0x164] sm:$0xf]
    %v598 = vld [vmem:[%s1 + $0x168] sm:$0xf]
    %v599 = vld [vmem:[%s1 + $0x16c] sm:$0xf]
    %v600 = vld [vmem:[%s1 + $0x170] sm:$0xf]
    %v601 = vld [vmem:[%s1 + $0x174] sm:$0xf]
    %v602 = vld [vmem:[%s1 + $0x178] sm:$0xf]
    %v603 = vld [vmem:[%s1 + $0x17c] sm:$0xf]
    %v604 = vld [vmem:[%s1 + $0x180] sm:$0xf]
    %v605 = vld [vmem:[%s1 + $0x184] sm:$0xf]
    %v606 = vld [vmem:[%s1 + $0x188] sm:$0xf]
    %v607 = vld [vmem:[%s1 + $0x18c] sm:$0xf]
    %v608 = vld [vmem:[%s1 + $0x190] sm:$0xf]
    %v609 = vld [vmem:[%s1 + $0x194] sm:$0xf]
    %v610 = vld [vmem:[%s1 + $0x198] sm:$0xf]
    %v611 = vld [vmem:[%s1 + $0x19c] sm:$0xf]
    %v612 = vld [vmem:[%s1 + $0x1a0] sm:$0xf]
    %v613 = vld [vmem:[%s1 + $0x1a4] sm:$0xf]
    %v614 = vld [vmem:[%s1 + $0x1a8] sm:$0xf]
    %v615 = vld [vmem:[%s1 + $0x1ac] sm:$0xf]
    %v616 = vld [vmem:[%s1 + $0x1b0] sm:$0xf]
    %v617 = vld [vmem:[%s1 + $0x1b4] sm:$0xf]
    %v618 = vld [vmem:[%s1 + $0x1b8] sm:$0xf]
    %v619 = vld [vmem:[%s1 + $0x1bc] sm:$0xf]
    %v620 = vld [vmem:[%s1 + $0x1c0] sm:$0xf]
    %v621 = vld [vmem:[%s1 + $0x1c4] sm:$0xf]
    %v622 = vld [vmem:[%s1 + $0x1c8] sm:$0xf]
    %v623 = vld [vmem:[%s1 + $0x1cc] sm:$0xf]
    %v624 = vld [vmem:[%s1 + $0x1d0] sm:$0xf]
    %v625 = vld [vmem:[%s1 + $0x1d4] sm:$0xf]
    %v626 = vld [vmem:[%s1 + $0x1d8] sm:$0xf]
    %v627 = vld [vmem:[%s1 + $0x1dc] sm:$0xf]
    %v628 = vld [vmem:[%s1 + $0x1e0] sm:$0xf]
    %v629 = vld [vmem:[%s1 + $0x1e4] sm:$0xf]
    %v630 = vld [vmem:[%s1 + $0x1e8] sm:$0xf]
    %v631 = vld [vmem:[%s1 + $0x1ec] sm:$0xf]
    %v632 = vld [vmem:[%s1 + $0x1f0] sm:$0xf]
    %v633 = vld [vmem:[%s1 + $0x1f4] sm:$0xf]
    %v634 = vld [vmem:[%s1 + $0x1f8] sm:$0xf]
    %v635 = vld [vmem:[%s1 + $0x1fc] sm:$0xf]
    %v636 = vld [vmem:[%s1 + $0x200] sm:$0xf]
    %v637 = vld [vmem:[%s1 + $0x204] sm:$0xf]
    %v638 = vld [vmem:[%s1 + $0x208] sm:$0xf]
    %v639 = vld [vmem:[%s1 + $0x20c] sm:$0xf]
    %v640 = vld [vmem:[%s1 + $0x210] sm:$0xf]
    %v641 = vld [vmem:[%s1 + $0x214] sm:$0xf]
    %v642 = vld [vmem:[%s1 + $0x218] sm:$0xf]
    %v643 = vld [vmem:[%s1 + $0x21c] sm:$0xf]
    %v644 = vld [vmem:[%s1 + $0x220] sm:$0xf]
    %v645 = vld [vmem:[%s1 + $0x224] sm:$0xf]
    %v646 = vld [vmem:[%s1 + $0x228] sm:$0xf]
    %v647 = vld [vmem:[%s1 + $0x22c] sm:$0xf]
    %v648 = vld [vmem:[%s1 + $0x230] sm:$0xf]
    %v649 = vld [vmem:[%s1 + $0x234] sm:$0xf]
    %v650 = vld [vmem:[%s1 + $0x238] sm:$0xf]
    %v651 = vld [vmem:[%s1 + $0x23c] sm:$0xf]
    %v652 = vld [vmem:[%s1 + $0x240] sm:$0xf]
    %v653 = vld [vmem:[%s1 + $0x244] sm:$0xf]
    %v654 = vld [vmem:[%s1 + $0x248] sm:$0xf]
    %v655 = vld [vmem:[%s1 + $0x24c] sm:$0xf]
    %v656 = vld [vmem:[%s1 + $0x250] sm:$0xf]
    %v657 = vld [vmem:[%s1 + $0x254] sm:$0xf]
    %v658 = vld [vmem:[%s1 + $0x258] sm:$0xf]
    %v659 = vld [vmem:[%s1 + $0x25c] sm:$0xf]
    %v660 = vld [vmem:[%s1 + $0x260] sm:$0xf]
    %v661 = vld [vmem:[%s1 + $0x264] sm:$0xf]
    %v662 = vld [vmem:[%s1 + $0x268] sm:$0xf]
    %v663 = vld [vmem:[%s1 + $0x26c] sm:$0xf]
    %v664 = vld [vmem:[%s1 + $0x270] sm:$0xf]
    %v665 = vld [vmem:[%s1 + $0x274] sm:$0xf]
    %v666 = vld [vmem:[%s1 + $0x278] sm:$0xf]
    %v667 = vld [vmem:[%s1 + $0x27c] sm:$0xf]
    %v668 = vld [vmem:[%s1 + $0x280] sm:$0xf]
    %v669 = vld [vmem:[%s1 + $0x284] sm:$0xf]
    %v670 = vld [vmem:[%s1 + $0x288] sm:$0xf]
    %v671 = vld [vmem:[%s1 + $0x28c] sm:$0xf]
    %v672 = vld [vmem:[%s1 + $0x290] sm:$0xf]
    %v673 = vld [vmem:[%s1 + $0x294] sm:$0xf]
    %v674 = vld [vmem:[%s1 + $0x298] sm:$0xf]
    %v675 = vld [vmem:[%s1 + $0x29c] sm:$0xf]
    %v676 = vld [vmem:[%s1 + $0x2a0] sm:$0xf]
    %v677 = vld [vmem:[%s1 + $0x2a4] sm:$0xf]
    %v678 = vld [vmem:[%s1 + $0x2a8] sm:$0xf]
    %v679 = vld [vmem:[%s1 + $0x2ac] sm:$0xf]
    %v680 = vld [vmem:[%s1 + $0x2b0] sm:$0xf]
    %v681 = vld [vmem:[%s1 + $0x2b4] sm:$0xf]
    %v682 = vld [vmem:[%s1 + $0x2b8] sm:$0xf]
    %v683 = vld [vmem:[%s1 + $0x2bc] sm:$0xf]
    %v684 = vld [vmem:[%s1 + $0x2c0] sm:$0xf]
    %v685 = vld [vmem:[%s1 + $0x2c4] sm:$0xf]
    %v686 = vld [vmem:[%s1 + $0x2c8] sm:$0xf]
    %v687 = vld [vmem:[%s1 + $0x2cc] sm:$0xf]
    %v688 = vld [vmem:[%s1 + $0x2d0] sm:$0xf]
    %v689 = vld [vmem:[%s1 + $0x2d4] sm:$0xf]
    %v690 = vld [vmem:[%s1 + $0x2d8] sm:$0xf]
    %v691 = vld [vmem:[%s1 + $0x2dc] sm:$0xf]
    %v692 = vld [vmem:[%s1 + $0x2e0] sm:$0xf]
    %v693 = vld [vmem:[%s1 + $0x2e4] sm:$0xf]
    %v694 = vld [vmem:[%s1 + $0x2e8] sm:$0xf]
    %v695 = vld [vmem:[%s1 + $0x2ec] sm:$0xf]
    %v696 = vld [vmem:[%s1 + $0x2f0] sm:$0xf]
    %v697 = vld [vmem:[%s1 + $0x2f4] sm:$0xf]
    %v698 = vld [vmem:[%s1 + $0x2f8] sm:$0xf]
    %v699 = vld [vmem:[%s1 + $0x2fc] sm:$0xf]
    %v700 = vld [vmem:[%s1 + $0x300] sm:$0xf]
    %v701 = vld [vmem:[%s1 + $0x304] sm:$0xf]
    %v702 = vld [vmem:[%s1 + $0x308] sm:$0xf]
    %v703 = vld [vmem:[%s1 + $0x30c] sm:$0xf]
    %v704 = vld [vmem:[%s1 + $0x310] sm:$0xf]
    %v705 = vld [vmem:[%s1 + $0x314] sm:$0xf]
    %v706 = vld [vmem:[%s1 + $0x318] sm:$0xf]
    %v707 = vld [vmem:[%s1 + $0x31c] sm:$0xf]
    %v708 = vld [vmem:[%s1 + $0x320] sm:$0xf]
    %v709 = vld [vmem:[%s1 + $0x324] sm:$0xf]
    %v710 = vld [vmem:[%s1 + $0x328] sm:$0xf]
    %v711 = vld [vmem:[%s1 + $0x32c] sm:$0xf]
    %v712 = vld [vmem:[%s1 + $0x330] sm:$0xf]
    %v713 = vld [vmem:[%s1 + $0x334] sm:$0xf]
    %v714 = vld [vmem:[%s1 + $0x338] sm:$0xf]
    %v715 = vld [vmem:[%s1 + $0x33c] sm:$0xf]
    %v716 = vld [vmem:[%s1 + $0x340] sm:$0xf]
    %v717 = vld [vmem:[%s1 + $0x344] sm:$0xf]
    %v718 = vld [vmem:[%s1 + $0x348] sm:$0xf]
    %v719 = vld [vmem:[%s1 + $0x34c] sm:$0xf]
    %v720 = vld [vmem:[%s1 + $0x350] sm:$0xf]
    %v721 = vld [vmem:[%s1 + $0x354] sm:$0xf]
    %v722 = vld [vmem:[%s1 + $0x358] sm:$0xf]
    %v723 = vld [vmem:[%s1 + $0x35c] sm:$0xf]
    %v724 = vld [vmem:[%s1 + $0x360] sm:$0xf]
    %v725 = vld [vmem:[%s1 + $0x364] sm:$0xf]
    %v726 = vld [vmem:[%s1 + $0x368] sm:$0xf]
    %v727 = vld [vmem:[%s1 + $0x36c] sm:$0xf]
    %v728 = vld [vmem:[%s1 + $0x370] sm:$0xf]
    %v729 = vld [vmem:[%s1 + $0x374] sm:$0xf]
    %v730 = vld [vmem:[%s1 + $0x378] sm:$0xf]
    %v731 = vld [vmem:[%s1 + $0x37c] sm:$0xf]
    %v732 = vld [vmem:[%s1 + $0x380] sm:$0xf]
    %v733 = vld [vmem:[%s1 + $0x384] sm:$0xf]
    %v734 = vld [vmem:[%s1 + $0x388] sm:$0xf]
    %v735 = vld [vmem:[%s1 + $0x38c] sm:$0xf]
    %v736 = vld [vmem:[%s1 + $0x390] sm:$0xf]
    %v737 = vld [vmem:[%s1 + $0x394] sm:$0xf]
    %v738 = vld [vmem:[%s1 + $0x398] sm:$0xf]
    %v739 = vld [vmem:[%s1 + $0x39c] sm:$0xf]
    %v740 = vld [vmem:[%s1 + $0x3a0] sm:$0xf]
    %v741 = vld [vmem:[%s1 + $0x3a4] sm:$0xf]
    %v742 = vld [vmem:[%s1 + $0x3a8] sm:$0xf]
    %v743 = vld [vmem:[%s1 + $0x3ac] sm:$0xf]
    %v744 = vld [vmem:[%s1 + $0x3b0] sm:$0xf]
    %v745 = vld [vmem:[%s1 + $0x3b4] sm:$0xf]
    %v746 = vld [vmem:[%s1 + $0x3b8] sm:$0xf]
    %v747 = vld [vmem:[%s1 + $0x3bc] sm:$0xf]
    %v748 = vld [vmem:[%s1 + $0x3c0] sm:$0xf]
    %v749 = vld [vmem:[%s1 + $0x3c4] sm:$0xf]
    %v750 = vld [vmem:[%s1 + $0x3c8] sm:$0xf]
    %v751 = vld [vmem:[%s1 + $0x3cc] sm:$0xf]
    %v752 = vld [vmem:[%s1 + $0x3d0] sm:$0xf]
    %v753 = vld [vmem:[%s1 + $0x3d4] sm:$0xf]
    %v754 = vld [vmem:[%s1 + $0x3d8] sm:$0xf]
    %v755 = vld [vmem:[%s1 + $0x3dc] sm:$0xf]
    %v756 = vld [vmem:[%s1 + $0x3e0] sm:$0xf]
    %v757 = vld [vmem:[%s1 + $0x3e4] sm:$0xf]
    %v758 = vld [vmem:[%s1 + $0x3e8] sm:$0xf]
    %v759 = vld [vmem:[%s1 + $0x3ec] sm:$0xf]
    %v760 = vld [vmem:[%s1 + $0x3f0] sm:$0xf]
    %v761 = vld [vmem:[%s1 + $0x3f4] sm:$0xf]
    %v762 = vld [vmem:[%s1 + $0x3f8] sm:$0xf]
    %v763 = vld [vmem:[%s1 + $0x3fc] sm:$0xf]
    %v764 = vld [vmem:[%s1 + $0x400] sm:$0xf]
    %v765 = vld [vmem:[%s1 + $0x404] sm:$0xf]
    %v766 = vld [vmem:[%s1 + $0x408] sm:$0xf]
    %v767 = vld [vmem:[%s1 + $0x40c] sm:$0xf]
    %v768 = vld [vmem:[%s1 + $0x410] sm:$0xf]
    %v769 = vld [vmem:[%s1 + $0x414] sm:$0xf]
    %v770 = vld [vmem:[%s1 + $0x418] sm:$0xf]
    %v771 = vld [vmem:[%s1 + $0x41c] sm:$0xf]
    %v772 = vld [vmem:[%s1 + $0x420] sm:$0xf]
    %v773 = vld [vmem:[%s1 + $0x424] sm:$0xf]
    %v774 = vld [vmem:[%s1 + $0x428] sm:$0xf]
    %v775 = vld [vmem:[%s1 + $0x42c] sm:$0xf]
    %v776 = vld [vmem:[%s1 + $0x430] sm:$0xf]
    %v777 = vld [vmem:[%s1 + $0x434] sm:$0xf]
    %v778 = vld [vmem:[%s1 + $0x438] sm:$0xf]
    %v779 = vld [vmem:[%s1 + $0x43c] sm:$0xf]
    %v780 = vld [vmem:[%s1 + $0x440] sm:$0xf]
    %v781 = vld [vmem:[%s1 + $0x444] sm:$0xf]
    %v782 = vld [vmem:[%s1 + $0x448] sm:$0xf]
    %v783 = vld [vmem:[%s1 + $0x44c] sm:$0xf]
    %v784 = vld [vmem:[%s1 + $0x450] sm:$0xf]
    %v785 = vld [vmem:[%s1 + $0x454] sm:$0xf]
    %v786 = vld [vmem:[%s1 + $0x458] sm:$0xf]
    %v787 = vld [vmem:[%s1 + $0x45c] sm:$0xf]
    %v788 = vld [vmem:[%s1 + $0x460] sm:$0xf]
    %v789 = vld [vmem:[%s1 + $0x464] sm:$0xf]
    %v790 = vld [vmem:[%s1 + $0x468] sm:$0xf]
    %v791 = vld [vmem:[%s1 + $0x46c] sm:$0xf]
    %v792 = vld [vmem:[%s1 + $0x470] sm:$0xf]
    %v793 = vld [vmem:[%s1 + $0x474] sm:$0xf]
    %v794 = vld [vmem:[%s1 + $0x478] sm:$0xf]
    %v795 = vld [vmem:[%s1 + $0x47c] sm:$0xf]
    %v796 = vld [vmem:[%s1 + $0x480] sm:$0xf]
    %v797 = vld [vmem:[%s1 + $0x484] sm:$0xf]
    %v798 = vld [vmem:[%s1 + $0x488] sm:$0xf]
    %v799 = vld [vmem:[%s1 + $0x48c] sm:$0xf]
    %v800 = vld [vmem:[%s1 + $0x490] sm:$0xf]
    %v801 = vld [vmem:[%s1 + $0x494] sm:$0xf]
    %v802 = vld [vmem:[%s1 + $0x498] sm:$0xf]
    %v803 = vld [vmem:[%s1 + $0x49c] sm:$0xf]
    %v804 = vld [vmem:[%s1 + $0x4a0] sm:$0xf]
    %v805 = vld [vmem:[%s1 + $0x4a4] sm:$0xf]
    %v806 = vld [vmem:[%s1 + $0x4a8] sm:$0xf]
    %v807 = vld [vmem:[%s1 + $0x4ac] sm:$0xf]
    %v808 = vld [vmem:[%s1 + $0x4b0] sm:$0xf]
    %v809 = vld [vmem:[%s1 + $0x4b4] sm:$0xf]
    %v810 = vld [vmem:[%s1 + $0x4b8] sm:$0xf]
    %v811 = vld [vmem:[%s1 + $0x4bc] sm:$0xf]
    %v812 = vld [vmem:[%s1 + $0x4c0] sm:$0xf]
    %v813 = vld [vmem:[%s1 + $0x4c4] sm:$0xf]
    %v814 = vld [vmem:[%s1 + $0x4c8] sm:$0xf]
    %v815 = vld [vmem:[%s1 + $0x4cc] sm:$0xf]
    %v816 = vld [vmem:[%s1 + $0x4d0] sm:$0xf]
    %v817 = vld [vmem:[%s1 + $0x4d4] sm:$0xf]
    %v818 = vld [vmem:[%s1 + $0x4d8] sm:$0xf]
    %v819 = vld [vmem:[%s1 + $0x4dc] sm:$0xf]
    %v820 = vld [vmem:[%s1 + $0x4e0] sm:$0xf]
    %v821 = vld [vmem:[%s1 + $0x4e4] sm:$0xf]
    %v822 = vld [vmem:[%s1 + $0x4e8] sm:$0xf]
    %v823 = vld [vmem:[%s1 + $0x4ec] sm:$0xf]
    %v824 = vld [vmem:[%s1 + $0x4f0] sm:$0xf]
    %v825 = vld [vmem:[%s1 + $0x4f4] sm:$0xf]
    %v826 = vld [vmem:[%s1 + $0x4f8] sm:$0xf]
    %v827 = vld [vmem:[%s1 + $0x4fc] sm:$0xf]
    %v828 = vld [vmem:[%s1 + $0x500] sm:$0xf]
    %v829 = vld [vmem:[%s1 + $0x504] sm:$0xf]
    %v830 = vld [vmem:[%s1 + $0x508] sm:$0xf]
    %v831 = vld [vmem:[%s1 + $0x50c] sm:$0xf]
    %v832 = vld [vmem:[%s1 + $0x510] sm:$0xf]
    %v833 = vld [vmem:[%s1 + $0x514] sm:$0xf]
    %v834 = vld [vmem:[%s1 + $0x518] sm:$0xf]
    %v835 = vld [vmem:[%s1 + $0x51c] sm:$0xf]
    %v836 = vld [vmem:[%s1 + $0x520] sm:$0xf]
    %v837 = vld [vmem:[%s1 + $0x524] sm:$0xf]
    %v838 = vld [vmem:[%s1 + $0x528] sm:$0xf]
    %v839 = vld [vmem:[%s1 + $0x52c] sm:$0xf]
    %v840 = vld [vmem:[%s1 + $0x530] sm:$0xf]
    %v841 = vld [vmem:[%s1 + $0x534] sm:$0xf]
    %v842 = vld [vmem:[%s1 + $0x538] sm:$0xf]
    %v843 = vld [vmem:[%s1 + $0x53c] sm:$0xf]
    %v844 = vld [vmem:[%s1 + $0x540] sm:$0xf]
    %v845 = vld [vmem:[%s1 + $0x544] sm:$0xf]
    %v846 = vld [vmem:[%s1 + $0x548] sm:$0xf]
    %v847 = vld [vmem:[%s1 + $0x54c] sm:$0xf]
    %v848 = vld [vmem:[%s1 + $0x550] sm:$0xf]
    %v849 = vld [vmem:[%s1 + $0x554] sm:$0xf]
    %v850 = vld [vmem:[%s1 + $0x558] sm:$0xf]
    %v851 = vld [vmem:[%s1 + $0x55c] sm:$0xf]
    %v852 = vld [vmem:[%s1 + $0x560] sm:$0xf]
    %v853 = vld [vmem:[%s1 + $0x564] sm:$0xf]
    %v854 = vld [vmem:[%s1 + $0x568] sm:$0xf]
    %v855 = vld [vmem:[%s1 + $0x56c] sm:$0xf]
    %v856 = vld [vmem:[%s1 + $0x570] sm:$0xf]
    %v857 = vld [vmem:[%s1 + $0x574] sm:$0xf]
    %v858 = vld [vmem:[%s1 + $0x578] sm:$0xf]
    %v859 = vld [vmem:[%s1 + $0x57c] sm:$0xf]
    %v860 = vld [vmem:[%s1 + $0x580] sm:$0xf]
    %v861 = vld [vmem:[%s1 + $0x584] sm:$0xf]
    %v862 = vld [vmem:[%s1 + $0x588] sm:$0xf]
    %v863 = vld [vmem:[%s1 + $0x58c] sm:$0xf]
    %v864 = vld [vmem:[%s1 + $0x590] sm:$0xf]
    %v865 = vld [vmem:[%s1 + $0x594] sm:$0xf]
    %v866 = vld [vmem:[%s1 + $0x598] sm:$0xf]
    %v867 = vld [vmem:[%s1 + $0x59c] sm:$0xf]
    %v868 = vld [vmem:[%s1 + $0x5a0] sm:$0xf]
    %v869 = vld [vmem:[%s1 + $0x5a4] sm:$0xf]
    %v870 = vld [vmem:[%s1 + $0x5a8] sm:$0xf]
    %v871 = vld [vmem:[%s1 + $0x5ac] sm:$0xf]
    %v872 = vld [vmem:[%s1 + $0x5b0] sm:$0xf]
    %v873 = vld [vmem:[%s1 + $0x5b4] sm:$0xf]
    %v874 = vld [vmem:[%s1 + $0x5b8] sm:$0xf]
    %v875 = vld [vmem:[%s1 + $0x5bc] sm:$0xf]
    %v876 = vld [vmem:[%s1 + $0x5c0] sm:$0xf]
    %v877 = vld [vmem:[%s1 + $0x5c4] sm:$0xf]
    %v878 = vld [vmem:[%s1 + $0x5c8] sm:$0xf]
    %v879 = vld [vmem:[%s1 + $0x5cc] sm:$0xf]
    %v880 = vld [vmem:[%s1 + $0x5d0] sm:$0xf]
    %v881 = vld [vmem:[%s1 + $0x5d4] sm:$0xf]
    %v882 = vld [vmem:[%s1 + $0x5d8] sm:$0xf]
    %v883 = vld [vmem:[%s1 + $0x5dc] sm:$0xf]
    %v884 = vld [vmem:[%s1 + $0x5e0] sm:$0xf]
    %v885 = vld [vmem:[%s1 + $0x5e4] sm:$0xf]
    %v886 = vld [vmem:[%s1 + $0x5e8] sm:$0xf]
    %v887 = vld [vmem:[%s1 + $0x5ec] sm:$0xf]
    %v888 = vld [vmem:[%s1 + $0x5f0] sm:$0xf]
    %v889 = vld [vmem:[%s1 + $0x5f4] sm:$0xf]
    %v890 = vld [vmem:[%s1 + $0x5f8] sm:$0xf]
    %v891 = vld [vmem:[%s1 + $0x5fc] sm:$0xf]
    %v892 = vld [vmem:[%s1 + $0x600] sm:$0xf]
    %v893 = vld [vmem:[%s1 + $0x604] sm:$0xf]
    %v894 = vld [vmem:[%s1 + $0x608] sm:$0xf]
    %v895 = vld [vmem:[%s1 + $0x60c] sm:$0xf]
    %v896 = vld [vmem:[%s1 + $0x610] sm:$0xf]
    %v897 = vld [vmem:[%s1 + $0x614] sm:$0xf]
    %v898 = vld [vmem:[%s1 + $0x618] sm:$0xf]
    %v899 = vld [vmem:[%s1 + $0x61c] sm:$0xf]
    %v900 = vld [vmem:[%s1 + $0x620] sm:$0xf]
    %v901 = vld [vmem:[%s1 + $0x624] sm:$0xf]
    %v902 = vld [vmem:[%s1 + $0x628] sm:$0xf]
    %v903 = vld [vmem:[%s1 + $0x62c] sm:$0xf]
    %v904 = vld [vmem:[%s1 + $0x630] sm:$0xf]
    %v905 = vld [vmem:[%s1 + $0x634] sm:$0xf]
    %v906 = vld [vmem:[%s1 + $0x638] sm:$0xf]
    %v907 = vld [vmem:[%s1 + $0x63c] sm:$0xf]
    %v908 = vld [vmem:[%s1 + $0x640] sm:$0xf]
    %v909 = vld [vmem:[%s1 + $0x644] sm:$0xf]
    %v910 = vld [vmem:[%s1 + $0x648] sm:$0xf]
    %v911 = vld [vmem:[%s1 + $0x64c] sm:$0xf]
    %v912 = vld [vmem:[%s1 + $0x650] sm:$0xf]
    %v913 = vld [vmem:[%s1 + $0x654] sm:$0xf]
    %v914 = vld [vmem:[%s1 + $0x658] sm:$0xf]
    %v915 = vld [vmem:[%s1 + $0x65c] sm:$0xf]
    %v916 = vld [vmem:[%s1 + $0x660] sm:$0xf]
    %v917 = vld [vmem:[%s1 + $0x664] sm:$0xf]
    %v918 = vld [vmem:[%s1 + $0x668] sm:$0xf]
    %v919 = vld [vmem:[%s1 + $0x66c] sm:$0xf]
    %v920 = vld [vmem:[%s1 + $0x670] sm:$0xf]
    %v921 = vld [vmem:[%s1 + $0x674] sm:$0xf]
    %v922 = vld [vmem:[%s1 + $0x678] sm:$0xf]
    %v923 = vld [vmem:[%s1 + $0x67c] sm:$0xf]
    %v924 = vld [vmem:[%s1 + $0x680] sm:$0xf]
    %v925 = vld [vmem:[%s1 + $0x684] sm:$0xf]
    %v926 = vld [vmem:[%s1 + $0x688] sm:$0xf]
    %v927 = vld [vmem:[%s1 + $0x68c] sm:$0xf]
    %v928 = vld [vmem:[%s1 + $0x690] sm:$0xf]
    %v929 = vld [vmem:[%s1 + $0x694] sm:$0xf]
    %v930 = vld [vmem:[%s1 + $0x698] sm:$0xf]
    %v931 = vld [vmem:[%s1 + $0x69c] sm:$0xf]
    %v932 = vld [vmem:[%s1 + $0x6a0] sm:$0xf]
    %v933 = vld [vmem:[%s1 + $0x6a4] sm:$0xf]
    %v934 = vld [vmem:[%s1 + $0x6a8] sm:$0xf]
    %v935 = vld [vmem:[%s1 + $0x6ac] sm:$0xf]
    %v936 = vld [vmem:[%s1 + $0x6b0] sm:$0xf]
    %v937 = vld [vmem:[%s1 + $0x6b4] sm:$0xf]
    %v938 = vld [vmem:[%s1 + $0x6b8] sm:$0xf]
    %v939 = vld [vmem:[%s1 + $0x6bc] sm:$0xf]
    %v940 = vld [vmem:[%s1 + $0x6c0] sm:$0xf]
    %v941 = vld [vmem:[%s1 + $0x6c4] sm:$0xf]
    %v942 = vld [vmem:[%s1 + $0x6c8] sm:$0xf]
    %v943 = vld [vmem:[%s1 + $0x6cc] sm:$0xf]
    %v944 = vld [vmem:[%s1 + $0x6d0] sm:$0xf]
    %v945 = vld [vmem:[%s1 + $0x6d4] sm:$0xf]
    %v946 = vld [vmem:[%s1 + $0x6d8] sm:$0xf]
    %v947 = vld [vmem:[%s1 + $0x6dc] sm:$0xf]
    %v948 = vld [vmem:[%s1 + $0x6e0] sm:$0xf]
    %v949 = vld [vmem:[%s1 + $0x6e4] sm:$0xf]
    %v950 = vld [vmem:[%s1 + $0x6e8] sm:$0xf]
    %v951 = vld [vmem:[%s1 + $0x6ec] sm:$0xf]
    %v952 = vld [vmem:[%s1 + $0x6f0] sm:$0xf]
    %v953 = vld [vmem:[%s1 + $0x6f4] sm:$0xf]
    %v954 = vld [vmem:[%s1 + $0x6f8] sm:$0xf]
    %v955 = vld [vmem:[%s1 + $0x6fc] sm:$0xf]
    %v956 = vld [vmem:[%s1 + $0x700] sm:$0xf]
    %v957 = vld [vmem:[%s1 + $0x704] sm:$0xf]
    %v958 = vld [vmem:[%s1 + $0x708] sm:$0xf]
    %v959 = vld [vmem:[%s1 + $0x70c] sm:$0xf]
    %v960 = vld [vmem:[%s1 + $0x710] sm:$0xf]
    %v961 = vld [vmem:[%s1 + $0x714] sm:$0xf]
    %v962 = vld [vmem:[%s1 + $0x718] sm:$0xf]
    %v963 = vld [vmem:[%s1 + $0x71c] sm:$0xf]
    %v964 = vld [vmem:[%s1 + $0x720] sm:$0xf]
    %v965 = vld [vmem:[%s1 + $0x724] sm:$0xf]
    %v966 = vld [vmem:[%s1 + $0x728] sm:$0xf]
    %v967 = vld [vmem:[%s1 + $0x72c] sm:$0xf]
    %v968 = vld [vmem:[%s1 + $0x730] sm:$0xf]
    %v969 = vld [vmem:[%s1 + $0x734] sm:$0xf]
    %v970 = vld [vmem:[%s1 + $0x738] sm:$0xf]
    %v971 = vld [vmem:[%s1 + $0x73c] sm:$0xf]
    %v972 = vld [vmem:[%s1 + $0x740] sm:$0xf]
    %v973 = vld [vmem:[%s1 + $0x744] sm:$0xf]
    %v974 = vld [vmem:[%s1 + $0x748] sm:$0xf]
    %v975 = vld [vmem:[%s1 + $0x74c] sm:$0xf]
    %v976 = vld [vmem:[%s1 + $0x750] sm:$0xf]
    %v977 = vld [vmem:[%s1 + $0x754] sm:$0xf]
    %v978 = vld [vmem:[%s1 + $0x758] sm:$0xf]
    %v979 = vld [vmem:[%s1 + $0x75c] sm:$0xf]
    %v980 = vld [vmem:[%s1 + $0x760] sm:$0xf]
    %v981 = vld [vmem:[%s1 + $0x764] sm:$0xf]
    %v982 = vld [vmem:[%s1 + $0x768] sm:$0xf]
    %v983 = vld [vmem:[%s1 + $0x76c] sm:$0xf]
    %v984 = vld [vmem:[%s1 + $0x770] sm:$0xf]
    %v985 = vld [vmem:[%s1 + $0x774] sm:$0xf]
    %v986 = vld [vmem:[%s1 + $0x778] sm:$0xf]
    %v987 = vld [vmem:[%s1 + $0x77c] sm:$0xf]
    %v988 = vld [vmem:[%s1 + $0x780] sm:$0xf]
    %v989 = vld [vmem:[%s1 + $0x784] sm:$0xf]
    %v990 = vld [vmem:[%s1 + $0x788] sm:$0xf]
    %v991 = vld [vmem:[%s1 + $0x78c] sm:$0xf]
    %v992 = vld [vmem:[%s1 + $0x790] sm:$0xf]
    %v993 = vld [vmem:[%s1 + $0x794] sm:$0xf]
    %v994 = vld [vmem:[%s1 + $0x798] sm:$0xf]
    %v995 = vld [vmem:[%s1 + $0x79c] sm:$0xf]
    %v996 = vld [vmem:[%s1 + $0x7a0] sm:$0xf]
    %v997 = vld [vmem:[%s1 + $0x7a4] sm:$0xf]
    %v998 = vld [vmem:[%s1 + $0x7a8] sm:$0xf]
    %v999 = vld [vmem:[%s1 + $0x7ac] sm:$0xf]
    %v1000 = vld [vmem:[%s1 + $0x7b0] sm:$0xf]
    %v1001 = vld [vmem:[%s1 + $0x7b4] sm:$0xf]
    %v1002 = vld [vmem:[%s1 + $0x7b8] sm:$0xf]
    %v1003 = vld [vmem:[%s1 + $0x7bc] sm:$0xf]
    %v1004 = vld [vmem:[%s1 + $0x7c0] sm:$0xf]
    %v1005 = vld [vmem:[%s1 + $0x7c4] sm:$0xf]
    %v1006 = vld [vmem:[%s1 + $0x7c8] sm:$0xf]
    %v1007 = vld [vmem:[%s1 + $0x7cc] sm:$0xf]
    %v1008 = vld [vmem:[%s1 + $0x7d0] sm:$0xf]
    %v1009 = vld [vmem:[%s1 + $0x7d4] sm:$0xf]
    %v1010 = vld [vmem:[%s1 + $0x7d8] sm:$0xf]
    %v1011 = vld [vmem:[%s1 + $0x7dc] sm:$0xf]
    %v1012 = vld [vmem:[%s1 + $0x7e0] sm:$0xf]
    %v1013 = vld [vmem:[%s1 + $0x7e4] sm:$0xf]
    %v1014 = vld [vmem:[%s1 + $0x7e8] sm:$0xf]
    %v1015 = vld [vmem:[%s1 + $0x7ec] sm:$0xf]
    %v1016 = vld [vmem:[%s1 + $0x7f0] sm:$0xf]
    %v1017 = vld [vmem:[%s1 + $0x7f4] sm:$0xf]
    %v1018 = vld [vmem:[%s1 + $0x7f8] sm:$0xf]
    %v1019 = vld [vmem:[%s1 + $0x7fc] sm:$0xf]
    %v1020 = vld [vmem:[%s1 + $0x800] sm:$0xf]
    %v1021 = vld [vmem:[%s1 + $0x804] sm:$0xf]
    %v1022 = vld [vmem:[%s1 + $0x808] sm:$0xf]
    %v1023 = vld [vmem:[%s1 + $0x80c] sm:$0xf]
    %v1024 = vld [vmem:[%s1 + $0x810] sm:$0xf]
    %v1025 = vld [vmem:[%s1 + $0x814] sm:$0xf]
    %v1026 = vld [vmem:[%s1 + $0x818] sm:$0xf]
    %v1027 = vld [vmem:[%s1 + $0x81c] sm:$0xf]
    %v1028 = vld [vmem:[%s1 + $0x820] sm:$0xf]
    %v1029 = vld [vmem:[%s1 + $0x824] sm:$0xf]
    %v1030 = vld [vmem:[%s1 + $0x828] sm:$0xf]
    %v1031 = vld [vmem:[%s1 + $0x82c] sm:$0xf]
    %v1032 = vld [vmem:[%s1 + $0x830] sm:$0xf]
    %v1033 = vld [vmem:[%s1 + $0x834] sm:$0xf]
    %v1034 = vld [vmem:[%s1 + $0x838] sm:$0xf]
    %v1035 = vld [vmem:[%s1 + $0x83c] sm:$0xf]
    %v1036 = vld [vmem:[%s1 + $0x840] sm:$0xf]
    %v1037 = vld [vmem:[%s1 + $0x844] sm:$0xf]
    %v1038 = vld [vmem:[%s1 + $0x848] sm:$0xf]
    %v1039 = vld [vmem:[%s1 + $0x84c] sm:$0xf]
    %v1040 = vld [vmem:[%s1 + $0x850] sm:$0xf]
    %v1041 = vld [vmem:[%s1 + $0x854] sm:$0xf]
    %v1042 = vld [vmem:[%s1 + $0x858] sm:$0xf]
    %v1043 = vld [vmem:[%s1 + $0x85c] sm:$0xf]
    %v1044 = vld [vmem:[%s1 + $0x860] sm:$0xf]
    %v1045 = vld [vmem:[%s1 + $0x864] sm:$0xf]
    %v1046 = vld [vmem:[%s1 + $0x868] sm:$0xf]
    %v1047 = vld [vmem:[%s1 + $0x86c] sm:$0xf]
    %v1048 = vld [vmem:[%s1 + $0x870] sm:$0xf]
    %v1049 = vld [vmem:[%s1 + $0x874] sm:$0xf]
    %v1050 = vld [vmem:[%s1 + $0x878] sm:$0xf]
    %v1051 = vld [vmem:[%s1 + $0x87c] sm:$0xf]
    %v1052 = vld [vmem:[%s1 + $0x880] sm:$0xf]
    %v1053 = vld [vmem:[%s1 + $0x884] sm:$0xf]
    %v1054 = vld [vmem:[%s1 + $0x888] sm:$0xf]
    %v1055 = vld [vmem:[%s1 + $0x88c] sm:$0xf]
    %v1056 = vld [vmem:[%s1 + $0x890] sm:$0xf]
    %v1057 = vld [vmem:[%s1 + $0x894] sm:$0xf]
    %v1058 = vld [vmem:[%s1 + $0x898] sm:$0xf]
    %v1059 = vld [vmem:[%s1 + $0x89c] sm:$0xf]
    %v1060 = vld [vmem:[%s1 + $0x8a0] sm:$0xf]
    %v1061 = vld [vmem:[%s1 + $0x8a4] sm:$0xf]
    %v1062 = vld [vmem:[%s1 + $0x8a8] sm:$0xf]
    %v1063 = vld [vmem:[%s1 + $0x8ac] sm:$0xf]
    %v1064 = vld [vmem:[%s1 + $0x8b0] sm:$0xf]
    %v1065 = vld [vmem:[%s1 + $0x8b4] sm:$0xf]
    %v1066 = vld [vmem:[%s1 + $0x8b8] sm:$0xf]
    %v1067 = vld [vmem:[%s1 + $0x8bc] sm:$0xf]
    %v1068 = vld [vmem:[%s1 + $0x8c0] sm:$0xf]
    %v1069 = vld [vmem:[%s1 + $0x8c4] sm:$0xf]
    %v1070 = vld [vmem:[%s1 + $0x8c8] sm:$0xf]
    %v1071 = vld [vmem:[%s1 + $0x8cc] sm:$0xf]
    %v1072 = vld [vmem:[%s1 + $0x8d0] sm:$0xf]
    %v1073 = vld [vmem:[%s1 + $0x8d4] sm:$0xf]
    %v1074 = vld [vmem:[%s1 + $0x8d8] sm:$0xf]
    %v1075 = vld [vmem:[%s1 + $0x8dc] sm:$0xf]
    %v1076 = vld [vmem:[%s1 + $0x8e0] sm:$0xf]
    %v1077 = vld [vmem:[%s1 + $0x8e4] sm:$0xf]
    %v1078 = vld [vmem:[%s1 + $0x8e8] sm:$0xf]
    %v1079 = vld [vmem:[%s1 + $0x8ec] sm:$0xf]
    %v1080 = vld [vmem:[%s1 + $0x8f0] sm:$0xf]
    %v1081 = vld [vmem:[%s1 + $0x8f4] sm:$0xf]
    %v1082 = vld [vmem:[%s1 + $0x8f8] sm:$0xf]
    %v1083 = vld [vmem:[%s1 + $0x8fc] sm:$0xf]
    %v1084 = vld [vmem:[%s1 + $0x900] sm:$0xf]
    %v1085 = vld [vmem:[%s1 + $0x904] sm:$0xf]
    %v1086 = vld [vmem:[%s1 + $0x908] sm:$0xf]
    %v1087 = vld [vmem:[%s1 + $0x90c] sm:$0xf]
    %v1088 = vld [vmem:[%s1 + $0x910] sm:$0xf]
    %v1089 = vld [vmem:[%s1 + $0x914] sm:$0xf]
    %v1090 = vld [vmem:[%s1 + $0x918] sm:$0xf]
    %v1091 = vld [vmem:[%s1 + $0x91c] sm:$0xf]
    %v1092 = vld [vmem:[%s1 + $0x920] sm:$0xf]
    %v1093 = vld [vmem:[%s1 + $0x924] sm:$0xf]
    %v1094 = vld [vmem:[%s1 + $0x928] sm:$0xf]
    %v1095 = vld [vmem:[%s1 + $0x92c] sm:$0xf]
    %v1096 = vld [vmem:[%s1 + $0x930] sm:$0xf]
    %v1097 = vld [vmem:[%s1 + $0x934] sm:$0xf]
    %v1098 = vld [vmem:[%s1 + $0x938] sm:$0xf]
    %v1099 = vld [vmem:[%s1 + $0x93c] sm:$0xf]
    %v1100 = vld [vmem:[%s1 + $0x940] sm:$0xf]
    %v1101 = vld [vmem:[%s1 + $0x944] sm:$0xf]
    %v1102 = vld [vmem:[%s1 + $0x948] sm:$0xf]
    %v1103 = vld [vmem:[%s1 + $0x94c] sm:$0xf]
    %v1104 = vld [vmem:[%s1 + $0x950] sm:$0xf]
    %v1105 = vld [vmem:[%s1 + $0x954] sm:$0xf]
    %v1106 = vld [vmem:[%s1 + $0x958] sm:$0xf]
    %v1107 = vld [vmem:[%s1 + $0x95c] sm:$0xf]
    %v1108 = vld [vmem:[%s1 + $0x960] sm:$0xf]
    %v1109 = vld [vmem:[%s1 + $0x964] sm:$0xf]
    %v1110 = vld [vmem:[%s1 + $0x968] sm:$0xf]
    %v1111 = vld [vmem:[%s1 + $0x96c] sm:$0xf]
    %v1112 = vld [vmem:[%s1 + $0x970] sm:$0xf]
    %v1113 = vld [vmem:[%s1 + $0x974] sm:$0xf]
    %v1114 = vld [vmem:[%s1 + $0x978] sm:$0xf]
    %v1115 = vld [vmem:[%s1 + $0x97c] sm:$0xf]
    %v1116 = vld [vmem:[%s1 + $0x980] sm:$0xf]
    %v1117 = vld [vmem:[%s1 + $0x984] sm:$0xf]
    %v1118 = vld [vmem:[%s1 + $0x988] sm:$0xf]
    %v1119 = vld [vmem:[%s1 + $0x98c] sm:$0xf]
    %v1120 = vld [vmem:[%s1 + $0x990] sm:$0xf]
    %v1121 = vld [vmem:[%s1 + $0x994] sm:$0xf]
    %v1122 = vld [vmem:[%s1 + $0x998] sm:$0xf]
    %v1123 = vld [vmem:[%s1 + $0x99c] sm:$0xf]
    %v1124 = vld [vmem:[%s1 + $0x9a0] sm:$0xf]
    %v1125 = vld [vmem:[%s1 + $0x9a4] sm:$0xf]
    %v1126 = vld [vmem:[%s1 + $0x9a8] sm:$0xf]
    %v1127 = vld [vmem:[%s1 + $0x9ac] sm:$0xf]
    %v1128 = vld [vmem:[%s1 + $0x9b0] sm:$0xf]
    %v1129 = vld [vmem:[%s1 + $0x9b4] sm:$0xf]
    %v1130 = vld [vmem:[%s1 + $0x9b8] sm:$0xf]
    %v1131 = vld [vmem:[%s1 + $0x9bc] sm:$0xf]
    %v1132 = vld [vmem:[%s1 + $0x9c0] sm:$0xf]
    %v1133 = vld [vmem:[%s1 + $0x9c4] sm:$0xf]
    %v1134 = vld [vmem:[%s1 + $0x9c8] sm:$0xf]
    %v1135 = vld [vmem:[%s1 + $0x9cc] sm:$0xf]
    %v1136 = vld [vmem:[%s1 + $0x9d0] sm:$0xf]
    %v1137 = vld [vmem:[%s1 + $0x9d4] sm:$0xf]
    %v1138 = vld [vmem:[%s1 + $0x9d8] sm:$0xf]
    %v1139 = vld [vmem:[%s1 + $0x9dc] sm:$0xf]
    %v1140 = vld [vmem:[%s1 + $0x9e0] sm:$0xf]
    %v1141 = vld [vmem:[%s1 + $0x9e4] sm:$0xf]
    %v1142 = vld [vmem:[%s1 + $0x9e8] sm:$0xf]
    %v1143 = vld [vmem:[%s1 + $0x9ec] sm:$0xf]
    %v1144 = vld [vmem:[%s1 + $0x9f0] sm:$0xf]
    %v1145 = vld [vmem:[%s1 + $0x9f4] sm:$0xf]
    %v1146 = vld [vmem:[%s1 + $0x9f8] sm:$0xf]
    %v1147 = vld [vmem:[%s1 + $0x9fc] sm:$0xf]
    %v1148 = vld [vmem:[%s1 + $0xa00] sm:$0xf]
    %v1149 = vld [vmem:[%s1 + $0xa04] sm:$0xf]
    %v1150 = vld [vmem:[%s1 + $0xa08] sm:$0xf]
    %v1151 = vld [vmem:[%s1 + $0xa0c] sm:$0xf]
    %v1152 = vld [vmem:[%s1 + $0xa10] sm:$0xf]
    %v1153 = vld [vmem:[%s1 + $0xa14] sm:$0xf]
    %v1154 = vld [vmem:[%s1 + $0xa18] sm:$0xf]
    %v1155 = vld [vmem:[%s1 + $0xa1c] sm:$0xf]
    %v1156 = vld [vmem:[%s1 + $0xa20] sm:$0xf]
    %v1157 = vld [vmem:[%s1 + $0xa24] sm:$0xf]
    %v1158 = vld [vmem:[%s1 + $0xa28] sm:$0xf]
    %v1159 = vld [vmem:[%s1 + $0xa2c] sm:$0xf]
    %v1160 = vld [vmem:[%s1 + $0xa30] sm:$0xf]
    %v1161 = vld [vmem:[%s1 + $0xa34] sm:$0xf]
    %v1162 = vld [vmem:[%s1 + $0xa38] sm:$0xf]
    %v1163 = vld [vmem:[%s1 + $0xa3c] sm:$0xf]
    %v1164 = vld [vmem:[%s1 + $0xa40] sm:$0xf]
    %v1165 = vld [vmem:[%s1 + $0xa44] sm:$0xf]
    %v1166 = vld [vmem:[%s1 + $0xa48] sm:$0xf]
    %v1167 = vld [vmem:[%s1 + $0xa4c] sm:$0xf]
    %v1168 = vld [vmem:[%s1 + $0xa50] sm:$0xf]
    %v1169 = vld [vmem:[%s1 + $0xa54] sm:$0xf]
    %v1170 = vld [vmem:[%s1 + $0xa58] sm:$0xf]
    %v1171 = vld [vmem:[%s1 + $0xa5c] sm:$0xf]
    %v1172 = vld [vmem:[%s1 + $0xa60] sm:$0xf]
    %v1173 = vld [vmem:[%s1 + $0xa64] sm:$0xf]
    %v1174 = vld [vmem:[%s1 + $0xa68] sm:$0xf]
    %v1175 = vld [vmem:[%s1 + $0xa6c] sm:$0xf]
    %v1176 = vld [vmem:[%s1 + $0xa70] sm:$0xf]
    %v1177 = vld [vmem:[%s1 + $0xa74] sm:$0xf]
    %v1178 = vld [vmem:[%s1 + $0xa78] sm:$0xf]
    %v1179 = vld [vmem:[%s1 + $0xa7c] sm:$0xf]
    %v1180 = vld [vmem:[%s1 + $0xa80] sm:$0xf]
    %v1181 = vld [vmem:[%s1 + $0xa84] sm:$0xf]
    %v1182 = vld [vmem:[%s1 + $0xa88] sm:$0xf]
    %v1183 = vld [vmem:[%s1 + $0xa8c] sm:$0xf]
    %v1184 = vld [vmem:[%s1 + $0xa90] sm:$0xf]
    %v1185 = vld [vmem:[%s1 + $0xa94] sm:$0xf]
    %v1186 = vld [vmem:[%s1 + $0xa98] sm:$0xf]
    %v1187 = vld [vmem:[%s1 + $0xa9c] sm:$0xf]
    %v1188 = vld [vmem:[%s1 + $0xaa0] sm:$0xf]
    %v1189 = vld [vmem:[%s1 + $0xaa4] sm:$0xf]
    %v1190 = vld [vmem:[%s1 + $0xaa8] sm:$0xf]
    %v1191 = vld [vmem:[%s1 + $0xaac] sm:$0xf]
    %v1192 = vld [vmem:[%s1 + $0xab0] sm:$0xf]
    %v1193 = vld [vmem:[%s1 + $0xab4] sm:$0xf]
    %v1194 = vld [vmem:[%s1 + $0xab8] sm:$0xf]
    %v1195 = vld [vmem:[%s1 + $0xabc] sm:$0xf]
    %v1196 = vld [vmem:[%s1 + $0xac0] sm:$0xf]
    %v1197 = vld [vmem:[%s1 + $0xac4] sm:$0xf]
    %v1198 = vld [vmem:[%s1 + $0xac8] sm:$0xf]
    %v1199 = vld [vmem:[%s1 + $0xacc] sm:$0xf]
    %v1200 = vld [vmem:[%s1 + $0xad0] sm:$0xf]
    %v1201 = vld [vmem:[%s1 + $0xad4] sm:$0xf]
    %v1202 = vld [vmem:[%s1 + $0xad8] sm:$0xf]
    %v1203 = vld [vmem:[%s1 + $0xadc] sm:$0xf]
    %v1204 = vld [vmem:[%s1 + $0xae0] sm:$0xf]
    %v1205 = vld [vmem:[%s1 + $0xae4] sm:$0xf]
    %v1206 = vld [vmem:[%s1 + $0xae8] sm:$0xf]
    %v1207 = vld [vmem:[%s1 + $0xaec] sm:$0xf]
    %v1208 = vld [vmem:[%s1 + $0xaf0] sm:$0xf]
    %v1209 = vld [vmem:[%s1 + $0xaf4] sm:$0xf]
    %v1210 = vld [vmem:[%s1 + $0xaf8] sm:$0xf]
    %v1211 = vld [vmem:[%s1 + $0xafc] sm:$0xf]
    %v1212 = vld [vmem:[%s1 + $0xb00] sm:$0xf]
    %v1213 = vld [vmem:[%s1 + $0xb04] sm:$0xf]
    %v1214 = vld [vmem:[%s1 + $0xb08] sm:$0xf]
    %v1215 = vld [vmem:[%s1 + $0xb0c] sm:$0xf]
    %v1216 = vld [vmem:[%s1 + $0xb10] sm:$0xf]
    %v1217 = vld [vmem:[%s1 + $0xb14] sm:$0xf]
    %v1218 = vld [vmem:[%s1 + $0xb18] sm:$0xf]
    %v1219 = vld [vmem:[%s1 + $0xb1c] sm:$0xf]
    %v1220 = vld [vmem:[%s1 + $0xb20] sm:$0xf]
    %v1221 = vld [vmem:[%s1 + $0xb24] sm:$0xf]
    %v1222 = vld [vmem:[%s1 + $0xb28] sm:$0xf]
    %v1223 = vld [vmem:[%s1 + $0xb2c] sm:$0xf]
    %v1224 = vld [vmem:[%s1 + $0xb30] sm:$0xf]
    %v1225 = vld [vmem:[%s1 + $0xb34] sm:$0xf]
    %v1226 = vld [vmem:[%s1 + $0xb38] sm:$0xf]
    %v1227 = vld [vmem:[%s1 + $0xb3c] sm:$0xf]
    %v1228 = vld [vmem:[%s1 + $0xb40] sm:$0xf]
    %v1229 = vld [vmem:[%s1 + $0xb44] sm:$0xf]
    %v1230 = vld [vmem:[%s1 + $0xb48] sm:$0xf]
    %v1231 = vld [vmem:[%s1 + $0xb4c] sm:$0xf]
    %v1232 = vld [vmem:[%s1 + $0xb50] sm:$0xf]
    %v1233 = vld [vmem:[%s1 + $0xb54] sm:$0xf]
    %v1234 = vld [vmem:[%s1 + $0xb58] sm:$0xf]
    %v1235 = vld [vmem:[%s1 + $0xb5c] sm:$0xf]
    %v1236 = vld [vmem:[%s1 + $0xb60] sm:$0xf]
    %v1237 = vld [vmem:[%s1 + $0xb64] sm:$0xf]
    %v1238 = vld [vmem:[%s1 + $0xb68] sm:$0xf]
    %v1239 = vld [vmem:[%s1 + $0xb6c] sm:$0xf]
    %v1240 = vld [vmem:[%s1 + $0xb70] sm:$0xf]
    %v1241 = vld [vmem:[%s1 + $0xb74] sm:$0xf]
    %v1242 = vld [vmem:[%s1 + $0xb78] sm:$0xf]
    %v1243 = vld [vmem:[%s1 + $0xb7c] sm:$0xf]
    %v1244 = vld [vmem:[%s1 + $0xb80] sm:$0xf]
    %v1245 = vld [vmem:[%s1 + $0xb84] sm:$0xf]
    %v1246 = vld [vmem:[%s1 + $0xb88] sm:$0xf]
    %v1247 = vld [vmem:[%s1 + $0xb8c] sm:$0xf]
    %v1248 = vld [vmem:[%s1 + $0xb90] sm:$0xf]
    %v1249 = vld [vmem:[%s1 + $0xb94] sm:$0xf]
    %v1250 = vld [vmem:[%s1 + $0xb98] sm:$0xf]
    %v1251 = vld [vmem:[%s1 + $0xb9c] sm:$0xf]
    %v1252 = vld [vmem:[%s1 + $0xba0] sm:$0xf]
    %v1253 = vld [vmem:[%s1 + $0xba4] sm:$0xf]
    %v1254 = vld [vmem:[%s1 + $0xba8] sm:$0xf]
    %v1255 = vld [vmem:[%s1 + $0xbac] sm:$0xf]
    %v1256 = vld [vmem:[%s1 + $0xbb0] sm:$0xf]
    %v1257 = vld [vmem:[%s1 + $0xbb4] sm:$0xf]
    %v1258 = vld [vmem:[%s1 + $0xbb8] sm:$0xf]
    %v1259 = vld [vmem:[%s1 + $0xbbc] sm:$0xf]
    %v1260 = vld [vmem:[%s1 + $0xbc0] sm:$0xf]
    %v1261 = vld [vmem:[%s1 + $0xbc4] sm:$0xf]
    %v1262 = vld [vmem:[%s1 + $0xbc8] sm:$0xf]
    %v1263 = vld [vmem:[%s1 + $0xbcc] sm:$0xf]
    %v1264 = vld [vmem:[%s1 + $0xbd0] sm:$0xf]
    %v1265 = vld [vmem:[%s1 + $0xbd4] sm:$0xf]
    %v1266 = vld [vmem:[%s1 + $0xbd8] sm:$0xf]
    %v1267 = vld [vmem:[%s1 + $0xbdc] sm:$0xf]
    %v1268 = vld [vmem:[%s1 + $0xbe0] sm:$0xf]
    %v1269 = vld [vmem:[%s1 + $0xbe4] sm:$0xf]
    %v1270 = vld [vmem:[%s1 + $0xbe8] sm:$0xf]
    %v1271 = vld [vmem:[%s1 + $0xbec] sm:$0xf]
    %v1272 = vld [vmem:[%s1 + $0xbf0] sm:$0xf]
    %v1273 = vld [vmem:[%s1 + $0xbf4] sm:$0xf]
    %v1274 = vld [vmem:[%s1 + $0xbf8] sm:$0xf]
    %v1275 = vld [vmem:[%s1 + $0xbfc] sm:$0xf]
    %v1276 = vld [vmem:[%s1 + $0xc00] sm:$0xf]
    %v1277 = vld [vmem:[%s1 + $0xc04] sm:$0xf]
    %v1278 = vld [vmem:[%s1 + $0xc08] sm:$0xf]
    %v1279 = vld [vmem:[%s1 + $0xc0c] sm:$0xf]
    %v1280 = vld [vmem:[%s1 + $0xc10] sm:$0xf]
    %v1281 = vld [vmem:[%s1 + $0xc14] sm:$0xf]
    %v1282 = vld [vmem:[%s1 + $0xc18] sm:$0xf]
    %v1283 = vld [vmem:[%s1 + $0xc1c] sm:$0xf]
    %v1284 = vld [vmem:[%s1 + $0xc20] sm:$0xf]
    %v1285 = vld [vmem:[%s1 + $0xc24] sm:$0xf]
    %v1286 = vld [vmem:[%s1 + $0xc28] sm:$0xf]
    %v1287 = vld [vmem:[%s1 + $0xc2c] sm:$0xf]
    %v1288 = vld [vmem:[%s1 + $0xc30] sm:$0xf]
    %v1289 = vld [vmem:[%s1 + $0xc34] sm:$0xf]
    %v1290 = vld [vmem:[%s1 + $0xc38] sm:$0xf]
    %v1291 = vld [vmem:[%s1 + $0xc3c] sm:$0xf]
    %v1292 = vld [vmem:[%s1 + $0xc40] sm:$0xf]
    %v1293 = vld [vmem:[%s1 + $0xc44] sm:$0xf]
    %v1294 = vld [vmem:[%s1 + $0xc48] sm:$0xf]
    %v1295 = vld [vmem:[%s1 + $0xc4c] sm:$0xf]
    %v1296 = vld [vmem:[%s1 + $0xc50] sm:$0xf]
    %v1297 = vld [vmem:[%s1 + $0xc54] sm:$0xf]
    %v1298 = vld [vmem:[%s1 + $0xc58] sm:$0xf]
    %v1299 = vld [vmem:[%s1 + $0xc5c] sm:$0xf]
    %v1300 = vld [vmem:[%s1 + $0xc60] sm:$0xf]
    %v1301 = vld [vmem:[%s1 + $0xc64] sm:$0xf]
    %v1302 = vld [vmem:[%s1 + $0xc68] sm:$0xf]
    %v1303 = vld [vmem:[%s1 + $0xc6c] sm:$0xf]
    %v1304 = vld [vmem:[%s1 + $0xc70] sm:$0xf]
    %v1305 = vld [vmem:[%s1 + $0xc74] sm:$0xf]
    %v1306 = vld [vmem:[%s1 + $0xc78] sm:$0xf]
    %v1307 = vld [vmem:[%s1 + $0xc7c] sm:$0xf]
    %v1308 = vld [vmem:[%s1 + $0xc80] sm:$0xf]
    %v1309 = vld [vmem:[%s1 + $0xc84] sm:$0xf]
    %v1310 = vld [vmem:[%s1 + $0xc88] sm:$0xf]
    %v1311 = vld [vmem:[%s1 + $0xc8c] sm:$0xf]
    %v1312 = vld [vmem:[%s1 + $0xc90] sm:$0xf]
    %v1313 = vld [vmem:[%s1 + $0xc94] sm:$0xf]
    %v1314 = vld [vmem:[%s1 + $0xc98] sm:$0xf]
    %v1315 = vld [vmem:[%s1 + $0xc9c] sm:$0xf]
    %v1316 = vld [vmem:[%s1 + $0xca0] sm:$0xf]
    %v1317 = vld [vmem:[%s1 + $0xca4] sm:$0xf]
    %v1318 = vld [vmem:[%s1 + $0xca8] sm:$0xf]
    %v1319 = vld [vmem:[%s1 + $0xcac] sm:$0xf]
    %v1320 = vld [vmem:[%s1 + $0xcb0] sm:$0xf]
    %v1321 = vld [vmem:[%s1 + $0xcb4] sm:$0xf]
    %v1322 = vld [vmem:[%s1 + $0xcb8] sm:$0xf]
    %v1323 = vld [vmem:[%s1 + $0xcbc] sm:$0xf]
    %v1324 = vld [vmem:[%s1 + $0xcc0] sm:$0xf]
    %v1325 = vld [vmem:[%s1 + $0xcc4] sm:$0xf]
    %v1326 = vld [vmem:[%s1 + $0xcc8] sm:$0xf]
    %v1327 = vld [vmem:[%s1 + $0xccc] sm:$0xf]
    %v1328 = vld [vmem:[%s1 + $0xcd0] sm:$0xf]
    %v1329 = vld [vmem:[%s1 + $0xcd4] sm:$0xf]
    %v1330 = vld [vmem:[%s1 + $0xcd8] sm:$0xf]
    %v1331 = vld [vmem:[%s1 + $0xcdc] sm:$0xf]
    %v1332 = vld [vmem:[%s1 + $0xce0] sm:$0xf]
    %v1333 = vld [vmem:[%s1 + $0xce4] sm:$0xf]
    %v1334 = vld [vmem:[%s1 + $0xce8] sm:$0xf]
    %v1335 = vld [vmem:[%s1 + $0xcec] sm:$0xf]
    %v1336 = vld [vmem:[%s1 + $0xcf0] sm:$0xf]
    %v1337 = vld [vmem:[%s1 + $0xcf4] sm:$0xf]
    %v1338 = vld [vmem:[%s1 + $0xcf8] sm:$0xf]
    %v1339 = vld [vmem:[%s1 + $0xcfc] sm:$0xf]
    %v1340 = vld [vmem:[%s1 + $0xd00] sm:$0xf]
    %v1341 = vld [vmem:[%s1 + $0xd04] sm:$0xf]
    %v1342 = vld [vmem:[%s1 + $0xd08] sm:$0xf]
    %v1343 = vld [vmem:[%s1 + $0xd0c] sm:$0xf]
    %v1344 = vld [vmem:[%s1 + $0xd10] sm:$0xf]
    %v1345 = vld [vmem:[%s1 + $0xd14] sm:$0xf]
    %v1346 = vld [vmem:[%s1 + $0xd18] sm:$0xf]
    %v1347 = vld [vmem:[%s1 + $0xd1c] sm:$0xf]
    %v1348 = vld [vmem:[%s1 + $0xd20] sm:$0xf]
    %v1349 = vld [vmem:[%s1 + $0xd24] sm:$0xf]
    %v1350 = vld [vmem:[%s1 + $0xd28] sm:$0xf]
    %v1351 = vld [vmem:[%s1 + $0xd2c] sm:$0xf]
    %v1352 = vld [vmem:[%s1 + $0xd30] sm:$0xf]
    %v1353 = vld [vmem:[%s1 + $0xd34] sm:$0xf]
    %v1354 = vld [vmem:[%s1 + $0xd38] sm:$0xf]
    %v1355 = vld [vmem:[%s1 + $0xd3c] sm:$0xf]
    %v1356 = vld [vmem:[%s1 + $0xd40] sm:$0xf]
    %v1357 = vld [vmem:[%s1 + $0xd44] sm:$0xf]
    %v1358 = vld [vmem:[%s1 + $0xd48] sm:$0xf]
    %v1359 = vld [vmem:[%s1 + $0xd4c] sm:$0xf]
    %v1360 = vld [vmem:[%s1 + $0xd50] sm:$0xf]
    %v1361 = vld [vmem:[%s1 + $0xd54] sm:$0xf]
    %v1362 = vld [vmem:[%s1 + $0xd58] sm:$0xf]
    %v1363 = vld [vmem:[%s1 + $0xd5c] sm:$0xf]
    %v1364 = vld [vmem:[%s1 + $0xd60] sm:$0xf]
    %v1365 = vld [vmem:[%s1 + $0xd64] sm:$0xf]
    %v1366 = vld [vmem:[%s1 + $0xd68] sm:$0xf]
    %v1367 = vld [vmem:[%s1 + $0xd6c] sm:$0xf]
    %v1368 = vld [vmem:[%s1 + $0xd70] sm:$0xf]
    %v1369 = vld [vmem:[%s1 + $0xd74] sm:$0xf]
    %v1370 = vld [vmem:[%s1 + $0xd78] sm:$0xf]
    %v1371 = vld [vmem:[%s1 + $0xd7c] sm:$0xf]
    %v1372 = vld [vmem:[%s1 + $0xd80] sm:$0xf]
    %v1373 = vld [vmem:[%s1 + $0xd84] sm:$0xf]
    %v1374 = vld [vmem:[%s1 + $0xd88] sm:$0xf]
    %v1375 = vld [vmem:[%s1 + $0xd8c] sm:$0xf]
    %v1376 = vld [vmem:[%s1 + $0xd90] sm:$0xf]
    %v1377 = vld [vmem:[%s1 + $0xd94] sm:$0xf]
    %v1378 = vld [vmem:[%s1 + $0xd98] sm:$0xf]
    %v1379 = vld [vmem:[%s1 + $0xd9c] sm:$0xf]
    %v1380 = vld [vmem:[%s1 + $0xda0] sm:$0xf]
    %v1381 = vld [vmem:[%s1 + $0xda4] sm:$0xf]
    %v1382 = vld [vmem:[%s1 + $0xda8] sm:$0xf]
    %v1383 = vld [vmem:[%s1 + $0xdac] sm:$0xf]
    %v1384 = vld [vmem:[%s1 + $0xdb0] sm:$0xf]
    %v1385 = vld [vmem:[%s1 + $0xdb4] sm:$0xf]
    %v1386 = vld [vmem:[%s1 + $0xdb8] sm:$0xf]
    %v1387 = vld [vmem:[%s1 + $0xdbc] sm:$0xf]
    %v1388 = vld [vmem:[%s1 + $0xdc0] sm:$0xf]
    %v1389 = vld [vmem:[%s1 + $0xdc4] sm:$0xf]
    %v1390 = vld [vmem:[%s1 + $0xdc8] sm:$0xf]
    %v1391 = vld [vmem:[%s1 + $0xdcc] sm:$0xf]
    %v1392 = vld [vmem:[%s1 + $0xdd0] sm:$0xf]
    %v1393 = vld [vmem:[%s1 + $0xdd4] sm:$0xf]
    %v1394 = vld [vmem:[%s1 + $0xdd8] sm:$0xf]
    %v1395 = vld [vmem:[%s1 + $0xddc] sm:$0xf]
    %v1396 = vld [vmem:[%s1 + $0xde0] sm:$0xf]
    %v1397 = vld [vmem:[%s1 + $0xde4] sm:$0xf]
    %v1398 = vld [vmem:[%s1 + $0xde8] sm:$0xf]
    %v1399 = vld [vmem:[%s1 + $0xdec] sm:$0xf]
    %v1400 = vld [vmem:[%s1 + $0xdf0] sm:$0xf]
    %v1401 = vld [vmem:[%s1 + $0xdf4] sm:$0xf]
    %v1402 = vld [vmem:[%s1 + $0xdf8] sm:$0xf]
    %v1403 = vld [vmem:[%s1 + $0xdfc] sm:$0xf]
    %v1404 = vld [vmem:[%s1 + $0xe00] sm:$0xf]
    %v1405 = vld [vmem:[%s1 + $0xe04] sm:$0xf]
    %v1406 = vld [vmem:[%s1 + $0xe08] sm:$0xf]
    %v1407 = vld [vmem:[%s1 + $0xe0c] sm:$0xf]
    %v1408 = vld [vmem:[%s1 + $0xe10] sm:$0xf]
    %v1409 = vld [vmem:[%s1 + $0xe14] sm:$0xf]
    %v1410 = vld [vmem:[%s1 + $0xe18] sm:$0xf]
    %v1411 = vld [vmem:[%s1 + $0xe1c] sm:$0xf]
    %v1412 = vld [vmem:[%s1 + $0xe20] sm:$0xf]
    %v1413 = vld [vmem:[%s1 + $0xe24] sm:$0xf]
    %v1414 = vld [vmem:[%s1 + $0xe28] sm:$0xf]
    %v1415 = vld [vmem:[%s1 + $0xe2c] sm:$0xf]
    %v1416 = vld [vmem:[%s1 + $0xe30] sm:$0xf]
    %v1417 = vld [vmem:[%s1 + $0xe34] sm:$0xf]
    %v1418 = vld [vmem:[%s1 + $0xe38] sm:$0xf]
    %v1419 = vld [vmem:[%s1 + $0xe3c] sm:$0xf]
    %v1420 = vld [vmem:[%s1 + $0xe40] sm:$0xf]
    %v1421 = vld [vmem:[%s1 + $0xe44] sm:$0xf]
    %v1422 = vld [vmem:[%s1 + $0xe48] sm:$0xf]
    %v1423 = vld [vmem:[%s1 + $0xe4c] sm:$0xf]
    %v1424 = vld [vmem:[%s1 + $0xe50] sm:$0xf]
    %v1425 = vld [vmem:[%s1 + $0xe54] sm:$0xf]
    %v1426 = vld [vmem:[%s1 + $0xe58] sm:$0xf]
    %v1427 = vld [vmem:[%s1 + $0xe5c] sm:$0xf]
    %v1428 = vld [vmem:[%s1 + $0xe60] sm:$0xf]
    %v1429 = vld [vmem:[%s1 + $0xe64] sm:$0xf]
    %v1430 = vld [vmem:[%s1 + $0xe68] sm:$0xf]
    %v1431 = vld [vmem:[%s1 + $0xe6c] sm:$0xf]
    %v1432 = vld [vmem:[%s1 + $0xe70] sm:$0xf]
    %v1433 = vld [vmem:[%s1 + $0xe74] sm:$0xf]
    %v1434 = vld [vmem:[%s1 + $0xe78] sm:$0xf]
    %v1435 = vld [vmem:[%s1 + $0xe7c] sm:$0xf]
    %v1436 = vld [vmem:[%s1 + $0xe80] sm:$0xf]
    %v1437 = vld [vmem:[%s1 + $0xe84] sm:$0xf]
    %v1438 = vld [vmem:[%s1 + $0xe88] sm:$0xf]
    %v1439 = vld [vmem:[%s1 + $0xe8c] sm:$0xf]
    %v1440 = vld [vmem:[%s1 + $0xe90] sm:$0xf]
    %v1441 = vld [vmem:[%s1 + $0xe94] sm:$0xf]
    %v1442 = vld [vmem:[%s1 + $0xe98] sm:$0xf]
    %v1443 = vld [vmem:[%s1 + $0xe9c] sm:$0xf]
    %v1444 = vld [vmem:[%s1 + $0xea0] sm:$0xf]
    %v1445 = vld [vmem:[%s1 + $0xea4] sm:$0xf]
    %v1446 = vld [vmem:[%s1 + $0xea8] sm:$0xf]
    %v1447 = vld [vmem:[%s1 + $0xeac] sm:$0xf]
    %v1448 = vld [vmem:[%s1 + $0xeb0] sm:$0xf]
    %v1449 = vld [vmem:[%s1 + $0xeb4] sm:$0xf]
    %v1450 = vld [vmem:[%s1 + $0xeb8] sm:$0xf]
    %v1451 = vld [vmem:[%s1 + $0xebc] sm:$0xf]
    %v1452 = vld [vmem:[%s1 + $0xec0] sm:$0xf]
    %v1453 = vld [vmem:[%s1 + $0xec4] sm:$0xf]
    %v1454 = vld [vmem:[%s1 + $0xec8] sm:$0xf]
    %v1455 = vld [vmem:[%s1 + $0xecc] sm:$0xf]
    %v1456 = vld [vmem:[%s1 + $0xed0] sm:$0xf]
    %v1457 = vld [vmem:[%s1 + $0xed4] sm:$0xf]
    %v1458 = vld [vmem:[%s1 + $0xed8] sm:$0xf]
    %v1459 = vld [vmem:[%s1 + $0xedc] sm:$0xf]
    %v1460 = vld [vmem:[%s1 + $0xee0] sm:$0xf]
    %v1461 = vld [vmem:[%s1 + $0xee4] sm:$0xf]
    %v1462 = vld [vmem:[%s1 + $0xee8] sm:$0xf]
    %v1463 = vld [vmem:[%s1 + $0xeec] sm:$0xf]
    %v1464 = vld [vmem:[%s1 + $0xef0] sm:$0xf]
    %v1465 = vld [vmem:[%s1 + $0xef4] sm:$0xf]
    %v1466 = vld [vmem:[%s1 + $0xef8] sm:$0xf]
    %v1467 = vld [vmem:[%s1 + $0xefc] sm:$0xf]
    %v1468 = vld [vmem:[%s1 + $0xf00] sm:$0xf]
    %v1469 = vld [vmem:[%s1 + $0xf04] sm:$0xf]
    %v1470 = vld [vmem:[%s1 + $0xf08] sm:$0xf]
    %v1471 = vld [vmem:[%s1 + $0xf0c] sm:$0xf]
    %v1472 = vld [vmem:[%s1 + $0xf10] sm:$0xf]
    %v1473 = vld [vmem:[%s1 + $0xf14] sm:$0xf]
    %v1474 = vld [vmem:[%s1 + $0xf18] sm:$0xf]
    %v1475 = vld [vmem:[%s1 + $0xf1c] sm:$0xf]
    %v1476 = vld [vmem:[%s1 + $0xf20] sm:$0xf]
    %v1477 = vld [vmem:[%s1 + $0xf24] sm:$0xf]
    %v1478 = vld [vmem:[%s1 + $0xf28] sm:$0xf]
    %v1479 = vld [vmem:[%s1 + $0xf2c] sm:$0xf]
    %v1480 = vld [vmem:[%s1 + $0xf30] sm:$0xf]
    %v1481 = vld [vmem:[%s1 + $0xf34] sm:$0xf]
    %v1482 = vld [vmem:[%s1 + $0xf38] sm:$0xf]
    %v1483 = vld [vmem:[%s1 + $0xf3c] sm:$0xf]
    %v1484 = vld [vmem:[%s1 + $0xf40] sm:$0xf]
    %v1485 = vld [vmem:[%s1 + $0xf44] sm:$0xf]
    %v1486 = vld [vmem:[%s1 + $0xf48] sm:$0xf]
    %v1487 = vld [vmem:[%s1 + $0xf4c] sm:$0xf]
    %v1488 = vld [vmem:[%s1 + $0xf50] sm:$0xf]
    %v1489 = vld [vmem:[%s1 + $0xf54] sm:$0xf]
    %v1490 = vld [vmem:[%s1 + $0xf58] sm:$0xf]
    %v1491 = vld [vmem:[%s1 + $0xf5c] sm:$0xf]
    %v1492 = vld [vmem:[%s1 + $0xf60] sm:$0xf]
    %v1493 = vld [vmem:[%s1 + $0xf64] sm:$0xf]
    %v1494 = vld [vmem:[%s1 + $0xf68] sm:$0xf]
    %v1495 = vld [vmem:[%s1 + $0xf6c] sm:$0xf]
    %v1496 = vld [vmem:[%s1 + $0xf70] sm:$0xf]
    %v1497 = vld [vmem:[%s1 + $0xf74] sm:$0xf]
    %v1498 = vld [vmem:[%s1 + $0xf78] sm:$0xf]
    %v1499 = vld [vmem:[%s1 + $0xf7c] sm:$0xf]
    %v1500 = vld [vmem:[%s1 + $0xf80] sm:$0xf]
    %v1501 = vld [vmem:[%s1 + $0xf84] sm:$0xf]
    %v1502 = vld [vmem:[%s1 + $0xf88] sm:$0xf]
    %v1503 = vld [vmem:[%s1 + $0xf8c] sm:$0xf]
    %v1504 = vld [vmem:[%s1 + $0xf90] sm:$0xf]
    %v1505 = vld [vmem:[%s1 + $0xf94] sm:$0xf]
    %v1506 = vld [vmem:[%s1 + $0xf98] sm:$0xf]
    %v1507 = vld [vmem:[%s1 + $0xf9c] sm:$0xf]
    %v1508 = vld [vmem:[%s1 + $0xfa0] sm:$0xf]
    %v1509 = vld [vmem:[%s1 + $0xfa4] sm:$0xf]
    %v1510 = vld [vmem:[%s1 + $0xfa8] sm:$0xf]
    %v1511 = vld [vmem:[%s1 + $0xfac] sm:$0xf]
    %v1512 = vld [vmem:[%s1 + $0xfb0] sm:$0xf]
    %v1513 = vld [vmem:[%s1 + $0xfb4] sm:$0xf]
    %v1514 = vld [vmem:[%s1 + $0xfb8] sm:$0xf]
    %v1515 = vld [vmem:[%s1 + $0xfbc] sm:$0xf]
    %v1516 = vld [vmem:[%s1 + $0xfc0] sm:$0xf]
    %v1517 = vld [vmem:[%s1 + $0xfc4] sm:$0xf]
    %v1518 = vld [vmem:[%s1 + $0xfc8] sm:$0xf]
    %v1519 = vld [vmem:[%s1 + $0xfcc] sm:$0xf]
    %v1520 = vld [vmem:[%s1 + $0xfd0] sm:$0xf]
    %v1521 = vld [vmem:[%s1 + $0xfd4] sm:$0xf]
    %v1522 = vld [vmem:[%s1 + $0xfd8] sm:$0xf]
    %v1523 = vld [vmem:[%s1 + $0xfdc] sm:$0xf]
    %v1524 = vld [vmem:[%s1 + $0xfe0] sm:$0xf]
    %v1525 = vld [vmem:[%s1 + $0xfe4] sm:$0xf]
    %v1526 = vld [vmem:[%s1 + $0xfe8] sm:$0xf]
    %v1527 = vld [vmem:[%s1 + $0xfec] sm:$0xf]
    %v1528 = vld [vmem:[%s1 + $0xff0] sm:$0xf]
    %v1529 = vld [vmem:[%s1 + $0xff4] sm:$0xf]
    %v1530 = vld [vmem:[%s1 + $0xff8] sm:$0xf]
    %v1531 = vld [vmem:[%s1 + $0xffc] sm:$0xf]
    %v1532 = vld [vmem:[%s1 + $0x1000] sm:$0xf]
    %v1533 = vld [vmem:[%s1 + $0x1004] sm:$0xf]
    %v1534 = vld [vmem:[%s1 + $0x1008] sm:$0xf]
    %v1535 = vld [vmem:[%s1 + $0x100c] sm:$0xf]
    %v1536 = vld [vmem:[%s1 + $0x1010] sm:$0xf]
    %v1537 = vld [vmem:[%s1 + $0x1014] sm:$0xf]
    %v1538 = vld [vmem:[%s1 + $0x1018] sm:$0xf]
    %v1539 = vld [vmem:[%s1 + $0x101c] sm:$0xf]
    %v1540 = vld [vmem:[%s1 + $0x1020] sm:$0xf]
    %v1541 = vld [vmem:[%s1 + $0x1024] sm:$0xf]
    %v1542 = vld [vmem:[%s1 + $0x1028] sm:$0xf]
    %v1543 = vld [vmem:[%s1 + $0x102c] sm:$0xf]
    %v1544 = vld [vmem:[%s1 + $0x1030] sm:$0xf]
    %v1545 = vld [vmem:[%s1 + $0x1034] sm:$0xf]
    %v1546 = vld [vmem:[%s1 + $0x1038] sm:$0xf]
    %v1547 = vld [vmem:[%s1 + $0x103c] sm:$0xf]
    %v1548 = vld [vmem:[%s1 + $0x1040] sm:$0xf]
    %v1549 = vld [vmem:[%s1 + $0x1044] sm:$0xf]
    %v1550 = vld [vmem:[%s1 + $0x1048] sm:$0xf]
    %v1551 = vld [vmem:[%s1 + $0x104c] sm:$0xf]
    %v1552 = vld [vmem:[%s1 + $0x1050] sm:$0xf]
    %v1553 = vld [vmem:[%s1 + $0x1054] sm:$0xf]
    %v1554 = vld [vmem:[%s1 + $0x1058] sm:$0xf]
    %v1555 = vld [vmem:[%s1 + $0x105c] sm:$0xf]
    %v1556 = vld [vmem:[%s1 + $0x1060] sm:$0xf]
    %v1557 = vld [vmem:[%s1 + $0x1064] sm:$0xf]
    %v1558 = vld [vmem:[%s1 + $0x1068] sm:$0xf]
    %v1559 = vld [vmem:[%s1 + $0x106c] sm:$0xf]
    %v1560 = vld [vmem:[%s1 + $0x1070] sm:$0xf]
    %v1561 = vld [vmem:[%s1 + $0x1074] sm:$0xf]
    %v1562 = vld [vmem:[%s1 + $0x1078] sm:$0xf]
    %v1563 = vld [vmem:[%s1 + $0x107c] sm:$0xf]
    %v1564 = vld [vmem:[%s1 + $0x1080] sm:$0xf]
    %v1565 = vld [vmem:[%s1 + $0x1084] sm:$0xf]
    %v1566 = vld [vmem:[%s1 + $0x1088] sm:$0xf]
    %v1567 = vld [vmem:[%s1 + $0x108c] sm:$0xf]
    %v1568 = vld [vmem:[%s1 + $0x1090] sm:$0xf]
    %v1569 = vld [vmem:[%s1 + $0x1094] sm:$0xf]
    %v1570 = vld [vmem:[%s1 + $0x1098] sm:$0xf]
    %v1571 = vld [vmem:[%s1 + $0x109c] sm:$0xf]
    %v1572 = vld [vmem:[%s1 + $0x10a0] sm:$0xf]
    %v1573 = vld [vmem:[%s1 + $0x10a4] sm:$0xf]
    %v1574 = vld [vmem:[%s1 + $0x10a8] sm:$0xf]
    %v1575 = vld [vmem:[%s1 + $0x10ac] sm:$0xf]
    %v1576 = vld [vmem:[%s1 + $0x10b0] sm:$0xf]
    %v1577 = vld [vmem:[%s1 + $0x10b4] sm:$0xf]
    %v1578 = vld [vmem:[%s1 + $0x10b8] sm:$0xf]
    %v1579 = vld [vmem:[%s1 + $0x10bc] sm:$0xf]
    %v1580 = vld [vmem:[%s1 + $0x10c0] sm:$0xf]
    %v1581 = vld [vmem:[%s1 + $0x10c4] sm:$0xf]
    %v1582 = vld [vmem:[%s1 + $0x10c8] sm:$0xf]
    %v1583 = vld [vmem:[%s1 + $0x10cc] sm:$0xf]
    %v1584 = vld [vmem:[%s1 + $0x10d0] sm:$0xf]
    %v1585 = vld [vmem:[%s1 + $0x10d4] sm:$0xf]
    %v1586 = vld [vmem:[%s1 + $0x10d8] sm:$0xf]
    %v1587 = vld [vmem:[%s1 + $0x10dc] sm:$0xf]
    %v1588 = vld [vmem:[%s1 + $0x10e0] sm:$0xf]
    %v1589 = vld [vmem:[%s1 + $0x10e4] sm:$0xf]
    %v1590 = vld [vmem:[%s1 + $0x10e8] sm:$0xf]
    %v1591 = vld [vmem:[%s1 + $0x10ec] sm:$0xf]
    %v1592 = vld [vmem:[%s1 + $0x10f0] sm:$0xf]
    %v1593 = vld [vmem:[%s1 + $0x10f4] sm:$0xf]
    %v1594 = vld [vmem:[%s1 + $0x10f8] sm:$0xf]
    %v1595 = vld [vmem:[%s1 + $0x10fc] sm:$0xf]
    %v1596 = vld [vmem:[%s1 + $0x1100] sm:$0xf]
    %v1597 = vld [vmem:[%s1 + $0x1104] sm:$0xf]
    %v1598 = vld [vmem:[%s1 + $0x1108] sm:$0xf]
    %v1599 = vld [vmem:[%s1 + $0x110c] sm:$0xf]
    %v1600 = vld [vmem:[%s1 + $0x1110] sm:$0xf]
    %v1601 = vld [vmem:[%s1 + $0x1114] sm:$0xf]
    %v1602 = vld [vmem:[%s1 + $0x1118] sm:$0xf]
    %v1603 = vld [vmem:[%s1 + $0x111c] sm:$0xf]
    %v1604 = vld [vmem:[%s1 + $0x1120] sm:$0xf]
    %v1605 = vld [vmem:[%s1 + $0x1124] sm:$0xf]
    %v1606 = vld [vmem:[%s1 + $0x1128] sm:$0xf]
    %v1607 = vld [vmem:[%s1 + $0x112c] sm:$0xf]
    %v1608 = vld [vmem:[%s1 + $0x1130] sm:$0xf]
    %v1609 = vld [vmem:[%s1 + $0x1134] sm:$0xf]
    %v1610 = vld [vmem:[%s1 + $0x1138] sm:$0xf]
    %v1611 = vld [vmem:[%s1 + $0x113c] sm:$0xf]
    %v1612 = vld [vmem:[%s1 + $0x1140] sm:$0xf]
    %v1613 = vld [vmem:[%s1 + $0x1144] sm:$0xf]
    %v1614 = vld [vmem:[%s1 + $0x1148] sm:$0xf]
    %v1615 = vld [vmem:[%s1 + $0x114c] sm:$0xf]
    %v1616 = vld [vmem:[%s1 + $0x1150] sm:$0xf]
    %v1617 = vld [vmem:[%s1 + $0x1154] sm:$0xf]
    %v1618 = vld [vmem:[%s1 + $0x1158] sm:$0xf]
    %v1619 = vld [vmem:[%s1 + $0x115c] sm:$0xf]
    %v1620 = vld [vmem:[%s1 + $0x1160] sm:$0xf]
    %v1621 = vld [vmem:[%s1 + $0x1164] sm:$0xf]
    %v1622 = vld [vmem:[%s1 + $0x1168] sm:$0xf]
    %v1623 = vld [vmem:[%s1 + $0x116c] sm:$0xf]
    %v1624 = vld [vmem:[%s1 + $0x1170] sm:$0xf]
    %v1625 = vld [vmem:[%s1 + $0x1174] sm:$0xf]
    %v1626 = vld [vmem:[%s1 + $0x1178] sm:$0xf]
    %v1627 = vld [vmem:[%s1 + $0x117c] sm:$0xf]
    %v1628 = vld [vmem:[%s1 + $0x1180] sm:$0xf]
    %v1629 = vld [vmem:[%s1 + $0x1184] sm:$0xf]
    %v1630 = vld [vmem:[%s1 + $0x1188] sm:$0xf]
    %v1631 = vld [vmem:[%s1 + $0x118c] sm:$0xf]
    %v1632 = vld [vmem:[%s1 + $0x1190] sm:$0xf]
    %v1633 = vld [vmem:[%s1 + $0x1194] sm:$0xf]
    %v1634 = vld [vmem:[%s1 + $0x1198] sm:$0xf]
    %v1635 = vld [vmem:[%s1 + $0x119c] sm:$0xf]
    %v1636 = vld [vmem:[%s1 + $0x11a0] sm:$0xf]
    %v1637 = vld [vmem:[%s1 + $0x11a4] sm:$0xf]
    %v1638 = vld [vmem:[%s1 + $0x11a8] sm:$0xf]
    %v1639 = vld [vmem:[%s1 + $0x11ac] sm:$0xf]
    %v1640 = vld [vmem:[%s1 + $0x11b0] sm:$0xf]
    %v1641 = vld [vmem:[%s1 + $0x11b4] sm:$0xf]
    %v1642 = vld [vmem:[%s1 + $0x11b8] sm:$0xf]
    %v1643 = vld [vmem:[%s1 + $0x11bc] sm:$0xf]
    %v1644 = vld [vmem:[%s1 + $0x11c0] sm:$0xf]
    %v1645 = vld [vmem:[%s1 + $0x11c4] sm:$0xf]
    %v1646 = vld [vmem:[%s1 + $0x11c8] sm:$0xf]
    %v1647 = vld [vmem:[%s1 + $0x11cc] sm:$0xf]
    %v1648 = vld [vmem:[%s1 + $0x11d0] sm:$0xf]
    %v1649 = vld [vmem:[%s1 + $0x11d4] sm:$0xf]
    %v1650 = vld [vmem:[%s1 + $0x11d8] sm:$0xf]
    %v1651 = vld [vmem:[%s1 + $0x11dc] sm:$0xf]
    %v1652 = vld [vmem:[%s1 + $0x11e0] sm:$0xf]
    %v1653 = vld [vmem:[%s1 + $0x11e4] sm:$0xf]
    %v1654 = vld [vmem:[%s1 + $0x11e8] sm:$0xf]
    %v1655 = vld [vmem:[%s1 + $0x11ec] sm:$0xf]
    %v1656 = vld [vmem:[%s1 + $0x11f0] sm:$0xf]
    %v1657 = vld [vmem:[%s1 + $0x11f4] sm:$0xf]
    %v1658 = vld [vmem:[%s1 + $0x11f8] sm:$0xf]
    %v1659 = vld [vmem:[%s1 + $0x11fc] sm:$0xf]
    %v1660 = vld [vmem:[%s2] sm:$0x1]
    %v1662 = vlaneseq
    %v1663 = vshrl.u32 %v1662, 7
    %v1664 = vsub.s32 0, %v1663
    %v1665 = vrot.slane %v1660, %v1664
    %v2819 = vunpack.c.l.b16 %v508
    %v2820 = vunpack.c.l.b16 %v509
    %v2821 = vunpack.c.l.b16 %v510
    %v2822 = vunpack.c.l.b16 %v511
    %v2823 = vunpack.c.l.b16 %v512
    %v2824 = vunpack.c.l.b16 %v513
    %v2825 = vunpack.c.l.b16 %v514
    %v2826 = vunpack.c.l.b16 %v515
    %v2827 = vunpack.c.l.b16 %v516
    %v2828 = vunpack.c.l.b16 %v517
    %v2829 = vunpack.c.l.b16 %v518
    %v2830 = vunpack.c.l.b16 %v519
    %v2831 = vunpack.c.l.b16 %v520
    %v2832 = vunpack.c.l.b16 %v521
    %v2833 = vunpack.c.l.b16 %v522
    %v2834 = vunpack.c.l.b16 %v523
    %v2835 = vunpack.c.l.b16 %v524
    %v2836 = vunpack.c.l.b16 %v525
    %v2837 = vunpack.c.l.b16 %v526
    %v2838 = vunpack.c.l.b16 %v527
    %v2839 = vunpack.c.l.b16 %v528
    %v2840 = vunpack.c.l.b16 %v529
    %v2841 = vunpack.c.l.b16 %v530
    %v2842 = vunpack.c.l.b16 %v531
    %v2843 = vunpack.c.l.b16 %v532
    %v2844 = vunpack.c.l.b16 %v533
    %v2845 = vunpack.c.l.b16 %v534
    %v2846 = vunpack.c.l.b16 %v535
    %v2847 = vunpack.c.l.b16 %v536
    %v2848 = vunpack.c.l.b16 %v537
    %v2849 = vunpack.c.l.b16 %v538
    %v2850 = vunpack.c.l.b16 %v539
    %v2851 = vunpack.c.l.b16 %v540
    %v2852 = vunpack.c.l.b16 %v541
    %v2853 = vunpack.c.l.b16 %v542
    %v2854 = vunpack.c.l.b16 %v543
    %v2855 = vunpack.c.l.b16 %v544
    %v2856 = vunpack.c.l.b16 %v545
    %v2857 = vunpack.c.l.b16 %v546
    %v2858 = vunpack.c.l.b16 %v547
    %v2859 = vunpack.c.l.b16 %v548
    %v2860 = vunpack.c.l.b16 %v549
    %v2861 = vunpack.c.l.b16 %v550
    %v2862 = vunpack.c.l.b16 %v551
    %v2863 = vunpack.c.l.b16 %v552
    %v2864 = vunpack.c.l.b16 %v553
    %v2865 = vunpack.c.l.b16 %v554
    %v2866 = vunpack.c.l.b16 %v555
    %v2867 = vunpack.c.l.b16 %v556
    %v2868 = vunpack.c.l.b16 %v557
    %v2869 = vunpack.c.l.b16 %v558
    %v2870 = vunpack.c.l.b16 %v559
    %v2871 = vunpack.c.l.b16 %v560
    %v2872 = vunpack.c.l.b16 %v561
    %v2873 = vunpack.c.l.b16 %v562
    %v2874 = vunpack.c.l.b16 %v563
    %v2875 = vunpack.c.l.b16 %v564
    %v2876 = vunpack.c.l.b16 %v565
    %v2877 = vunpack.c.l.b16 %v566
    %v2878 = vunpack.c.l.b16 %v567
    %v2879 = vunpack.c.l.b16 %v568
    %v2880 = vunpack.c.l.b16 %v569
    %v2881 = vunpack.c.l.b16 %v570
    %v2882 = vunpack.c.l.b16 %v571
    %v2883 = vunpack.c.l.b16 %v572
    %v2884 = vunpack.c.l.b16 %v573
    %v2885 = vunpack.c.l.b16 %v574
    %v2886 = vunpack.c.l.b16 %v575
    %v2887 = vunpack.c.l.b16 %v576
    %v2888 = vunpack.c.l.b16 %v577
    %v2889 = vunpack.c.l.b16 %v578
    %v2890 = vunpack.c.l.b16 %v579
    %v2891 = vunpack.c.l.b16 %v580
    %v2892 = vunpack.c.l.b16 %v581
    %v2893 = vunpack.c.l.b16 %v582
    %v2894 = vunpack.c.l.b16 %v583
    %v2895 = vunpack.c.l.b16 %v584
    %v2896 = vunpack.c.l.b16 %v585
    %v2897 = vunpack.c.l.b16 %v586
    %v2898 = vunpack.c.l.b16 %v587
    %v2899 = vunpack.c.l.b16 %v588
    %v2900 = vunpack.c.l.b16 %v589
    %v2901 = vunpack.c.l.b16 %v590
    %v2902 = vunpack.c.l.b16 %v591
    %v2903 = vunpack.c.l.b16 %v592
    %v2904 = vunpack.c.l.b16 %v593
    %v2905 = vunpack.c.l.b16 %v594
    %v2906 = vunpack.c.l.b16 %v595
    %v2907 = vunpack.c.l.b16 %v596
    %v2908 = vunpack.c.l.b16 %v597
    %v2909 = vunpack.c.l.b16 %v598
    %v2910 = vunpack.c.l.b16 %v599
    %v2911 = vunpack.c.l.b16 %v600
    %v2912 = vunpack.c.l.b16 %v601
    %v2913 = vunpack.c.l.b16 %v602
    %v2914 = vunpack.c.l.b16 %v603
    %v2915 = vunpack.c.l.b16 %v604
    %v2916 = vunpack.c.l.b16 %v605
    %v2917 = vunpack.c.l.b16 %v606
    %v2918 = vunpack.c.l.b16 %v607
    %v2919 = vunpack.c.l.b16 %v608
    %v2920 = vunpack.c.l.b16 %v609
    %v2921 = vunpack.c.l.b16 %v610
    %v2922 = vunpack.c.l.b16 %v611
    %v2923 = vunpack.c.l.b16 %v612
    %v2924 = vunpack.c.l.b16 %v613
    %v2925 = vunpack.c.l.b16 %v614
    %v2926 = vunpack.c.l.b16 %v615
    %v2927 = vunpack.c.l.b16 %v616
    %v2928 = vunpack.c.l.b16 %v617
    %v2929 = vunpack.c.l.b16 %v618
    %v2930 = vunpack.c.l.b16 %v619
    %v2931 = vunpack.c.l.b16 %v620
    %v2932 = vunpack.c.l.b16 %v621
    %v2933 = vunpack.c.l.b16 %v622
    %v2934 = vunpack.c.l.b16 %v623
    %v2935 = vunpack.c.l.b16 %v624
    %v2936 = vunpack.c.l.b16 %v625
    %v2937 = vunpack.c.l.b16 %v626
    %v2938 = vunpack.c.l.b16 %v627
    %v2939 = vunpack.c.l.b16 %v628
    %v2940 = vunpack.c.l.b16 %v629
    %v2941 = vunpack.c.l.b16 %v630
    %v2942 = vunpack.c.l.b16 %v631
    %v2943 = vunpack.c.l.b16 %v632
    %v2944 = vunpack.c.l.b16 %v633
    %v2945 = vunpack.c.l.b16 %v634
    %v2946 = vunpack.c.l.b16 %v635
    %v2947 = vunpack.c.l.b16 %v636
    %v2948 = vunpack.c.l.b16 %v637
    %v2949 = vunpack.c.l.b16 %v638
    %v2950 = vunpack.c.l.b16 %v639
    %v2951 = vunpack.c.l.b16 %v640
    %v2952 = vunpack.c.l.b16 %v641
    %v2953 = vunpack.c.l.b16 %v642
    %v2954 = vunpack.c.l.b16 %v643
    %v2955 = vunpack.c.l.b16 %v644
    %v2956 = vunpack.c.l.b16 %v645
    %v2957 = vunpack.c.l.b16 %v646
    %v2958 = vunpack.c.l.b16 %v647
    %v2959 = vunpack.c.l.b16 %v648
    %v2960 = vunpack.c.l.b16 %v649
    %v2961 = vunpack.c.l.b16 %v650
    %v2962 = vunpack.c.l.b16 %v651
    %v2963 = vunpack.c.l.b16 %v652
    %v2964 = vunpack.c.l.b16 %v653
    %v2965 = vunpack.c.l.b16 %v654
    %v2966 = vunpack.c.l.b16 %v655
    %v2967 = vunpack.c.l.b16 %v656
    %v2968 = vunpack.c.l.b16 %v657
    %v2969 = vunpack.c.l.b16 %v658
    %v2970 = vunpack.c.l.b16 %v659
    %v2971 = vunpack.c.l.b16 %v660
    %v2972 = vunpack.c.l.b16 %v661
    %v2973 = vunpack.c.l.b16 %v662
    %v2974 = vunpack.c.l.b16 %v663
    %v2975 = vunpack.c.l.b16 %v664
    %v2976 = vunpack.c.l.b16 %v665
    %v2977 = vunpack.c.l.b16 %v666
    %v2978 = vunpack.c.l.b16 %v667
    %v2979 = vunpack.c.l.b16 %v668
    %v2980 = vunpack.c.l.b16 %v669
    %v2981 = vunpack.c.l.b16 %v670
    %v2982 = vunpack.c.l.b16 %v671
    %v2983 = vunpack.c.l.b16 %v672
    %v2984 = vunpack.c.l.b16 %v673
    %v2985 = vunpack.c.l.b16 %v674
    %v2986 = vunpack.c.l.b16 %v675
    %v2987 = vunpack.c.l.b16 %v676
    %v2988 = vunpack.c.l.b16 %v677
    %v2989 = vunpack.c.l.b16 %v678
    %v2990 = vunpack.c.l.b16 %v679
    %v2991 = vunpack.c.l.b16 %v680
    %v2992 = vunpack.c.l.b16 %v681
    %v2993 = vunpack.c.l.b16 %v682
    %v2994 = vunpack.c.l.b16 %v683
    %v2995 = vunpack.c.l.b16 %v684
    %v2996 = vunpack.c.l.b16 %v685
    %v2997 = vunpack.c.l.b16 %v686
    %v2998 = vunpack.c.l.b16 %v687
    %v2999 = vunpack.c.l.b16 %v688
    %v3000 = vunpack.c.l.b16 %v689
    %v3001 = vunpack.c.l.b16 %v690
    %v3002 = vunpack.c.l.b16 %v691
    %v3003 = vunpack.c.l.b16 %v692
    %v3004 = vunpack.c.l.b16 %v693
    %v3005 = vunpack.c.l.b16 %v694
    %v3006 = vunpack.c.l.b16 %v695
    %v3007 = vunpack.c.l.b16 %v696
    %v3008 = vunpack.c.l.b16 %v697
    %v3009 = vunpack.c.l.b16 %v698
    %v3010 = vunpack.c.l.b16 %v699
    %v3011 = vunpack.c.l.b16 %v700
    %v3012 = vunpack.c.l.b16 %v701
    %v3013 = vunpack.c.l.b16 %v702
    %v3014 = vunpack.c.l.b16 %v703
    %v3015 = vunpack.c.l.b16 %v704
    %v3016 = vunpack.c.l.b16 %v705
    %v3017 = vunpack.c.l.b16 %v706
    %v3018 = vunpack.c.l.b16 %v707
    %v3019 = vunpack.c.l.b16 %v708
    %v3020 = vunpack.c.l.b16 %v709
    %v3021 = vunpack.c.l.b16 %v710
    %v3022 = vunpack.c.l.b16 %v711
    %v3023 = vunpack.c.l.b16 %v712
    %v3024 = vunpack.c.l.b16 %v713
    %v3025 = vunpack.c.l.b16 %v714
    %v3026 = vunpack.c.l.b16 %v715
    %v3027 = vunpack.c.l.b16 %v716
    %v3028 = vunpack.c.l.b16 %v717
    %v3029 = vunpack.c.l.b16 %v718
    %v3030 = vunpack.c.l.b16 %v719
    %v3031 = vunpack.c.l.b16 %v720
    %v3032 = vunpack.c.l.b16 %v721
    %v3033 = vunpack.c.l.b16 %v722
    %v3034 = vunpack.c.l.b16 %v723
    %v3035 = vunpack.c.l.b16 %v724
    %v3036 = vunpack.c.l.b16 %v725
    %v3037 = vunpack.c.l.b16 %v726
    %v3038 = vunpack.c.l.b16 %v727
    %v3039 = vunpack.c.l.b16 %v728
    %v3040 = vunpack.c.l.b16 %v729
    %v3041 = vunpack.c.l.b16 %v730
    %v3042 = vunpack.c.l.b16 %v731
    %v3043 = vunpack.c.l.b16 %v732
    %v3044 = vunpack.c.l.b16 %v733
    %v3045 = vunpack.c.l.b16 %v734
    %v3046 = vunpack.c.l.b16 %v735
    %v3047 = vunpack.c.l.b16 %v736
    %v3048 = vunpack.c.l.b16 %v737
    %v3049 = vunpack.c.l.b16 %v738
    %v3050 = vunpack.c.l.b16 %v739
    %v3051 = vunpack.c.l.b16 %v740
    %v3052 = vunpack.c.l.b16 %v741
    %v3053 = vunpack.c.l.b16 %v742
    %v3054 = vunpack.c.l.b16 %v743
    %v3055 = vunpack.c.l.b16 %v744
    %v3056 = vunpack.c.l.b16 %v745
    %v3057 = vunpack.c.l.b16 %v746
    %v3058 = vunpack.c.l.b16 %v747
    %v3059 = vunpack.c.l.b16 %v748
    %v3060 = vunpack.c.l.b16 %v749
    %v3061 = vunpack.c.l.b16 %v750
    %v3062 = vunpack.c.l.b16 %v751
    %v3063 = vunpack.c.l.b16 %v752
    %v3064 = vunpack.c.l.b16 %v753
    %v3065 = vunpack.c.l.b16 %v754
    %v3066 = vunpack.c.l.b16 %v755
    %v3067 = vunpack.c.l.b16 %v756
    %v3068 = vunpack.c.l.b16 %v757
    %v3069 = vunpack.c.l.b16 %v758
    %v3070 = vunpack.c.l.b16 %v759
    %v3071 = vunpack.c.l.b16 %v760
    %v3072 = vunpack.c.l.b16 %v761
    %v3073 = vunpack.c.l.b16 %v762
    %v3074 = vunpack.c.l.b16 %v763
    %v3075 = vunpack.c.l.b16 %v764
    %v3076 = vunpack.c.l.b16 %v765
    %v3077 = vunpack.c.l.b16 %v766
    %v3078 = vunpack.c.l.b16 %v767
    %v3079 = vunpack.c.l.b16 %v768
    %v3080 = vunpack.c.l.b16 %v769
    %v3081 = vunpack.c.l.b16 %v770
    %v3082 = vunpack.c.l.b16 %v771
    %v3083 = vunpack.c.l.b16 %v772
    %v3084 = vunpack.c.l.b16 %v773
    %v3085 = vunpack.c.l.b16 %v774
    %v3086 = vunpack.c.l.b16 %v775
    %v3087 = vunpack.c.l.b16 %v776
    %v3088 = vunpack.c.l.b16 %v777
    %v3089 = vunpack.c.l.b16 %v778
    %v3090 = vunpack.c.l.b16 %v779
    %v3091 = vunpack.c.l.b16 %v780
    %v3092 = vunpack.c.l.b16 %v781
    %v3093 = vunpack.c.l.b16 %v782
    %v3094 = vunpack.c.l.b16 %v783
    %v3095 = vunpack.c.l.b16 %v784
    %v3096 = vunpack.c.l.b16 %v785
    %v3097 = vunpack.c.l.b16 %v786
    %v3098 = vunpack.c.l.b16 %v787
    %v3099 = vunpack.c.l.b16 %v788
    %v3100 = vunpack.c.l.b16 %v789
    %v3101 = vunpack.c.l.b16 %v790
    %v3102 = vunpack.c.l.b16 %v791
    %v3103 = vunpack.c.l.b16 %v792
    %v3104 = vunpack.c.l.b16 %v793
    %v3105 = vunpack.c.l.b16 %v794
    %v3106 = vunpack.c.l.b16 %v795
    %v3107 = vunpack.c.l.b16 %v796
    %v3108 = vunpack.c.l.b16 %v797
    %v3109 = vunpack.c.l.b16 %v798
    %v3110 = vunpack.c.l.b16 %v799
    %v3111 = vunpack.c.l.b16 %v800
    %v3112 = vunpack.c.l.b16 %v801
    %v3113 = vunpack.c.l.b16 %v802
    %v3114 = vunpack.c.l.b16 %v803
    %v3115 = vunpack.c.l.b16 %v804
    %v3116 = vunpack.c.l.b16 %v805
    %v3117 = vunpack.c.l.b16 %v806
    %v3118 = vunpack.c.l.b16 %v807
    %v3119 = vunpack.c.l.b16 %v808
    %v3120 = vunpack.c.l.b16 %v809
    %v3121 = vunpack.c.l.b16 %v810
    %v3122 = vunpack.c.l.b16 %v811
    %v3123 = vunpack.c.l.b16 %v812
    %v3124 = vunpack.c.l.b16 %v813
    %v3125 = vunpack.c.l.b16 %v814
    %v3126 = vunpack.c.l.b16 %v815
    %v3127 = vunpack.c.l.b16 %v816
    %v3128 = vunpack.c.l.b16 %v817
    %v3129 = vunpack.c.l.b16 %v818
    %v3130 = vunpack.c.l.b16 %v819
    %v3131 = vunpack.c.l.b16 %v820
    %v3132 = vunpack.c.l.b16 %v821
    %v3133 = vunpack.c.l.b16 %v822
    %v3134 = vunpack.c.l.b16 %v823
    %v3135 = vunpack.c.l.b16 %v824
    %v3136 = vunpack.c.l.b16 %v825
    %v3137 = vunpack.c.l.b16 %v826
    %v3138 = vunpack.c.l.b16 %v827
    %v3139 = vunpack.c.l.b16 %v828
    %v3140 = vunpack.c.l.b16 %v829
    %v3141 = vunpack.c.l.b16 %v830
    %v3142 = vunpack.c.l.b16 %v831
    %v3143 = vunpack.c.l.b16 %v832
    %v3144 = vunpack.c.l.b16 %v833
    %v3145 = vunpack.c.l.b16 %v834
    %v3146 = vunpack.c.l.b16 %v835
    %v3147 = vunpack.c.l.b16 %v836
    %v3148 = vunpack.c.l.b16 %v837
    %v3149 = vunpack.c.l.b16 %v838
    %v3150 = vunpack.c.l.b16 %v839
    %v3151 = vunpack.c.l.b16 %v840
    %v3152 = vunpack.c.l.b16 %v841
    %v3153 = vunpack.c.l.b16 %v842
    %v3154 = vunpack.c.l.b16 %v843
    %v3155 = vunpack.c.l.b16 %v844
    %v3156 = vunpack.c.l.b16 %v845
    %v3157 = vunpack.c.l.b16 %v846
    %v3158 = vunpack.c.l.b16 %v847
    %v3159 = vunpack.c.l.b16 %v848
    %v3160 = vunpack.c.l.b16 %v849
    %v3161 = vunpack.c.l.b16 %v850
    %v3162 = vunpack.c.l.b16 %v851
    %v3163 = vunpack.c.l.b16 %v852
    %v3164 = vunpack.c.l.b16 %v853
    %v3165 = vunpack.c.l.b16 %v854
    %v3166 = vunpack.c.l.b16 %v855
    %v3167 = vunpack.c.l.b16 %v856
    %v3168 = vunpack.c.l.b16 %v857
    %v3169 = vunpack.c.l.b16 %v858
    %v3170 = vunpack.c.l.b16 %v859
    %v3171 = vunpack.c.l.b16 %v860
    %v3172 = vunpack.c.l.b16 %v861
    %v3173 = vunpack.c.l.b16 %v862
    %v3174 = vunpack.c.l.b16 %v863
    %v3175 = vunpack.c.l.b16 %v864
    %v3176 = vunpack.c.l.b16 %v865
    %v3177 = vunpack.c.l.b16 %v866
    %v3178 = vunpack.c.l.b16 %v867
    %v3179 = vunpack.c.l.b16 %v868
    %v3180 = vunpack.c.l.b16 %v869
    %v3181 = vunpack.c.l.b16 %v870
    %v3182 = vunpack.c.l.b16 %v871
    %v3183 = vunpack.c.l.b16 %v872
    %v3184 = vunpack.c.l.b16 %v873
    %v3185 = vunpack.c.l.b16 %v874
    %v3186 = vunpack.c.l.b16 %v875
    %v3187 = vunpack.c.l.b16 %v876
    %v3188 = vunpack.c.l.b16 %v877
    %v3189 = vunpack.c.l.b16 %v878
    %v3190 = vunpack.c.l.b16 %v879
    %v3191 = vunpack.c.l.b16 %v880
    %v3192 = vunpack.c.l.b16 %v881
    %v3193 = vunpack.c.l.b16 %v882
    %v3194 = vunpack.c.l.b16 %v883
    %v3195 = vunpack.c.l.b16 %v884
    %v3196 = vunpack.c.l.b16 %v885
    %v3197 = vunpack.c.l.b16 %v886
    %v3198 = vunpack.c.l.b16 %v887
    %v3199 = vunpack.c.l.b16 %v888
    %v3200 = vunpack.c.l.b16 %v889
    %v3201 = vunpack.c.l.b16 %v890
    %v3202 = vunpack.c.l.b16 %v891
    %v3203 = vunpack.c.l.b16 %v892
    %v3204 = vunpack.c.l.b16 %v893
    %v3205 = vunpack.c.l.b16 %v894
    %v3206 = vunpack.c.l.b16 %v895
    %v3207 = vunpack.c.l.b16 %v896
    %v3208 = vunpack.c.l.b16 %v897
    %v3209 = vunpack.c.l.b16 %v898
    %v3210 = vunpack.c.l.b16 %v899
    %v3211 = vunpack.c.l.b16 %v900
    %v3212 = vunpack.c.l.b16 %v901
    %v3213 = vunpack.c.l.b16 %v902
    %v3214 = vunpack.c.l.b16 %v903
    %v3215 = vunpack.c.l.b16 %v904
    %v3216 = vunpack.c.l.b16 %v905
    %v3217 = vunpack.c.l.b16 %v906
    %v3218 = vunpack.c.l.b16 %v907
    %v3219 = vunpack.c.l.b16 %v908
    %v3220 = vunpack.c.l.b16 %v909
    %v3221 = vunpack.c.l.b16 %v910
    %v3222 = vunpack.c.l.b16 %v911
    %v3223 = vunpack.c.l.b16 %v912
    %v3224 = vunpack.c.l.b16 %v913
    %v3225 = vunpack.c.l.b16 %v914
    %v3226 = vunpack.c.l.b16 %v915
    %v3227 = vunpack.c.l.b16 %v916
    %v3228 = vunpack.c.l.b16 %v917
    %v3229 = vunpack.c.l.b16 %v918
    %v3230 = vunpack.c.l.b16 %v919
    %v3231 = vunpack.c.l.b16 %v920
    %v3232 = vunpack.c.l.b16 %v921
    %v3233 = vunpack.c.l.b16 %v922
    %v3234 = vunpack.c.l.b16 %v923
    %v3235 = vunpack.c.l.b16 %v924
    %v3236 = vunpack.c.l.b16 %v925
    %v3237 = vunpack.c.l.b16 %v926
    %v3238 = vunpack.c.l.b16 %v927
    %v3239 = vunpack.c.l.b16 %v928
    %v3240 = vunpack.c.l.b16 %v929
    %v3241 = vunpack.c.l.b16 %v930
    %v3242 = vunpack.c.l.b16 %v931
    %v3243 = vunpack.c.l.b16 %v932
    %v3244 = vunpack.c.l.b16 %v933
    %v3245 = vunpack.c.l.b16 %v934
    %v3246 = vunpack.c.l.b16 %v935
    %v3247 = vunpack.c.l.b16 %v936
    %v3248 = vunpack.c.l.b16 %v937
    %v3249 = vunpack.c.l.b16 %v938
    %v3250 = vunpack.c.l.b16 %v939
    %v3251 = vunpack.c.l.b16 %v940
    %v3252 = vunpack.c.l.b16 %v941
    %v3253 = vunpack.c.l.b16 %v942
    %v3254 = vunpack.c.l.b16 %v943
    %v3255 = vunpack.c.l.b16 %v944
    %v3256 = vunpack.c.l.b16 %v945
    %v3257 = vunpack.c.l.b16 %v946
    %v3258 = vunpack.c.l.b16 %v947
    %v3259 = vunpack.c.l.b16 %v948
    %v3260 = vunpack.c.l.b16 %v949
    %v3261 = vunpack.c.l.b16 %v950
    %v3262 = vunpack.c.l.b16 %v951
    %v3263 = vunpack.c.l.b16 %v952
    %v3264 = vunpack.c.l.b16 %v953
    %v3265 = vunpack.c.l.b16 %v954
    %v3266 = vunpack.c.l.b16 %v955
    %v3267 = vunpack.c.l.b16 %v956
    %v3268 = vunpack.c.l.b16 %v957
    %v3269 = vunpack.c.l.b16 %v958
    %v3270 = vunpack.c.l.b16 %v959
    %v3271 = vunpack.c.l.b16 %v960
    %v3272 = vunpack.c.l.b16 %v961
    %v3273 = vunpack.c.l.b16 %v962
    %v3274 = vunpack.c.l.b16 %v963
    %v3275 = vunpack.c.l.b16 %v964
    %v3276 = vunpack.c.l.b16 %v965
    %v3277 = vunpack.c.l.b16 %v966
    %v3278 = vunpack.c.l.b16 %v967
    %v3279 = vunpack.c.l.b16 %v968
    %v3280 = vunpack.c.l.b16 %v969
    %v3281 = vunpack.c.l.b16 %v970
    %v3282 = vunpack.c.l.b16 %v971
    %v3283 = vunpack.c.l.b16 %v972
    %v3284 = vunpack.c.l.b16 %v973
    %v3285 = vunpack.c.l.b16 %v974
    %v3286 = vunpack.c.l.b16 %v975
    %v3287 = vunpack.c.l.b16 %v976
    %v3288 = vunpack.c.l.b16 %v977
    %v3289 = vunpack.c.l.b16 %v978
    %v3290 = vunpack.c.l.b16 %v979
    %v3291 = vunpack.c.l.b16 %v980
    %v3292 = vunpack.c.l.b16 %v981
    %v3293 = vunpack.c.l.b16 %v982
    %v3294 = vunpack.c.l.b16 %v983
    %v3295 = vunpack.c.l.b16 %v984
    %v3296 = vunpack.c.l.b16 %v985
    %v3297 = vunpack.c.l.b16 %v986
    %v3298 = vunpack.c.l.b16 %v987
    %v3299 = vunpack.c.l.b16 %v988
    %v3300 = vunpack.c.l.b16 %v989
    %v3301 = vunpack.c.l.b16 %v990
    %v3302 = vunpack.c.l.b16 %v991
    %v3303 = vunpack.c.l.b16 %v992
    %v3304 = vunpack.c.l.b16 %v993
    %v3305 = vunpack.c.l.b16 %v994
    %v3306 = vunpack.c.l.b16 %v995
    %v3307 = vunpack.c.l.b16 %v996
    %v3308 = vunpack.c.l.b16 %v997
    %v3309 = vunpack.c.l.b16 %v998
    %v3310 = vunpack.c.l.b16 %v999
    %v3311 = vunpack.c.l.b16 %v1000
    %v3312 = vunpack.c.l.b16 %v1001
    %v3313 = vunpack.c.l.b16 %v1002
    %v3314 = vunpack.c.l.b16 %v1003
    %v3315 = vunpack.c.l.b16 %v1004
    %v3316 = vunpack.c.l.b16 %v1005
    %v3317 = vunpack.c.l.b16 %v1006
    %v3318 = vunpack.c.l.b16 %v1007
    %v3319 = vunpack.c.l.b16 %v1008
    %v3320 = vunpack.c.l.b16 %v1009
    %v3321 = vunpack.c.l.b16 %v1010
    %v3322 = vunpack.c.l.b16 %v1011
    %v3323 = vunpack.c.l.b16 %v1012
    %v3324 = vunpack.c.l.b16 %v1013
    %v3325 = vunpack.c.l.b16 %v1014
    %v3326 = vunpack.c.l.b16 %v1015
    %v3327 = vunpack.c.l.b16 %v1016
    %v3328 = vunpack.c.l.b16 %v1017
    %v3329 = vunpack.c.l.b16 %v1018
    %v3330 = vunpack.c.l.b16 %v1019
    %v3331 = vunpack.c.l.b16 %v1020
    %v3332 = vunpack.c.l.b16 %v1021
    %v3333 = vunpack.c.l.b16 %v1022
    %v3334 = vunpack.c.l.b16 %v1023
    %v3335 = vunpack.c.l.b16 %v1024
    %v3336 = vunpack.c.l.b16 %v1025
    %v3337 = vunpack.c.l.b16 %v1026
    %v3338 = vunpack.c.l.b16 %v1027
    %v3339 = vunpack.c.l.b16 %v1028
    %v3340 = vunpack.c.l.b16 %v1029
    %v3341 = vunpack.c.l.b16 %v1030
    %v3342 = vunpack.c.l.b16 %v1031
    %v3343 = vunpack.c.l.b16 %v1032
    %v3344 = vunpack.c.l.b16 %v1033
    %v3345 = vunpack.c.l.b16 %v1034
    %v3346 = vunpack.c.l.b16 %v1035
    %v3347 = vunpack.c.l.b16 %v1036
    %v3348 = vunpack.c.l.b16 %v1037
    %v3349 = vunpack.c.l.b16 %v1038
    %v3350 = vunpack.c.l.b16 %v1039
    %v3351 = vunpack.c.l.b16 %v1040
    %v3352 = vunpack.c.l.b16 %v1041
    %v3353 = vunpack.c.l.b16 %v1042
    %v3354 = vunpack.c.l.b16 %v1043
    %v3355 = vunpack.c.l.b16 %v1044
    %v3356 = vunpack.c.l.b16 %v1045
    %v3357 = vunpack.c.l.b16 %v1046
    %v3358 = vunpack.c.l.b16 %v1047
    %v3359 = vunpack.c.l.b16 %v1048
    %v3360 = vunpack.c.l.b16 %v1049
    %v3361 = vunpack.c.l.b16 %v1050
    %v3362 = vunpack.c.l.b16 %v1051
    %v3363 = vunpack.c.l.b16 %v1052
    %v3364 = vunpack.c.l.b16 %v1053
    %v3365 = vunpack.c.l.b16 %v1054
    %v3366 = vunpack.c.l.b16 %v1055
    %v3367 = vunpack.c.l.b16 %v1056
    %v3368 = vunpack.c.l.b16 %v1057
    %v3369 = vunpack.c.l.b16 %v1058
    %v3370 = vunpack.c.l.b16 %v1059
    %v3371 = vunpack.c.l.b16 %v1060
    %v3372 = vunpack.c.l.b16 %v1061
    %v3373 = vunpack.c.l.b16 %v1062
    %v3374 = vunpack.c.l.b16 %v1063
    %v3375 = vunpack.c.l.b16 %v1064
    %v3376 = vunpack.c.l.b16 %v1065
    %v3377 = vunpack.c.l.b16 %v1066
    %v3378 = vunpack.c.l.b16 %v1067
    %v3379 = vunpack.c.l.b16 %v1068
    %v3380 = vunpack.c.l.b16 %v1069
    %v3381 = vunpack.c.l.b16 %v1070
    %v3382 = vunpack.c.l.b16 %v1071
    %v3383 = vunpack.c.l.b16 %v1072
    %v3384 = vunpack.c.l.b16 %v1073
    %v3385 = vunpack.c.l.b16 %v1074
    %v3386 = vunpack.c.l.b16 %v1075
    %v3387 = vunpack.c.l.b16 %v1076
    %v3388 = vunpack.c.l.b16 %v1077
    %v3389 = vunpack.c.l.b16 %v1078
    %v3390 = vunpack.c.l.b16 %v1079
    %v3391 = vunpack.c.l.b16 %v1080
    %v3392 = vunpack.c.l.b16 %v1081
    %v3393 = vunpack.c.l.b16 %v1082
    %v3394 = vunpack.c.l.b16 %v1083
    %v3395 = vunpack.c.l.b16 %v1084
    %v3396 = vunpack.c.l.b16 %v1085
    %v3397 = vunpack.c.l.b16 %v1086
    %v3398 = vunpack.c.l.b16 %v1087
    %v3399 = vunpack.c.l.b16 %v1088
    %v3400 = vunpack.c.l.b16 %v1089
    %v3401 = vunpack.c.l.b16 %v1090
    %v3402 = vunpack.c.l.b16 %v1091
    %v3403 = vunpack.c.l.b16 %v1092
    %v3404 = vunpack.c.l.b16 %v1093
    %v3405 = vunpack.c.l.b16 %v1094
    %v3406 = vunpack.c.l.b16 %v1095
    %v3407 = vunpack.c.l.b16 %v1096
    %v3408 = vunpack.c.l.b16 %v1097
    %v3409 = vunpack.c.l.b16 %v1098
    %v3410 = vunpack.c.l.b16 %v1099
    %v3411 = vunpack.c.l.b16 %v1100
    %v3412 = vunpack.c.l.b16 %v1101
    %v3413 = vunpack.c.l.b16 %v1102
    %v3414 = vunpack.c.l.b16 %v1103
    %v3415 = vunpack.c.l.b16 %v1104
    %v3416 = vunpack.c.l.b16 %v1105
    %v3417 = vunpack.c.l.b16 %v1106
    %v3418 = vunpack.c.l.b16 %v1107
    %v3419 = vunpack.c.l.b16 %v1108
    %v3420 = vunpack.c.l.b16 %v1109
    %v3421 = vunpack.c.l.b16 %v1110
    %v3422 = vunpack.c.l.b16 %v1111
    %v3423 = vunpack.c.l.b16 %v1112
    %v3424 = vunpack.c.l.b16 %v1113
    %v3425 = vunpack.c.l.b16 %v1114
    %v3426 = vunpack.c.l.b16 %v1115
    %v3427 = vunpack.c.l.b16 %v1116
    %v3428 = vunpack.c.l.b16 %v1117
    %v3429 = vunpack.c.l.b16 %v1118
    %v3430 = vunpack.c.l.b16 %v1119
    %v3431 = vunpack.c.l.b16 %v1120
    %v3432 = vunpack.c.l.b16 %v1121
    %v3433 = vunpack.c.l.b16 %v1122
    %v3434 = vunpack.c.l.b16 %v1123
    %v3435 = vunpack.c.l.b16 %v1124
    %v3436 = vunpack.c.l.b16 %v1125
    %v3437 = vunpack.c.l.b16 %v1126
    %v3438 = vunpack.c.l.b16 %v1127
    %v3439 = vunpack.c.l.b16 %v1128
    %v3440 = vunpack.c.l.b16 %v1129
    %v3441 = vunpack.c.l.b16 %v1130
    %v3442 = vunpack.c.l.b16 %v1131
    %v3443 = vunpack.c.l.b16 %v1132
    %v3444 = vunpack.c.l.b16 %v1133
    %v3445 = vunpack.c.l.b16 %v1134
    %v3446 = vunpack.c.l.b16 %v1135
    %v3447 = vunpack.c.l.b16 %v1136
    %v3448 = vunpack.c.l.b16 %v1137
    %v3449 = vunpack.c.l.b16 %v1138
    %v3450 = vunpack.c.l.b16 %v1139
    %v3451 = vunpack.c.l.b16 %v1140
    %v3452 = vunpack.c.l.b16 %v1141
    %v3453 = vunpack.c.l.b16 %v1142
    %v3454 = vunpack.c.l.b16 %v1143
    %v3455 = vunpack.c.l.b16 %v1144
    %v3456 = vunpack.c.l.b16 %v1145
    %v3457 = vunpack.c.l.b16 %v1146
    %v3458 = vunpack.c.l.b16 %v1147
    %v3459 = vunpack.c.l.b16 %v1148
    %v3460 = vunpack.c.l.b16 %v1149
    %v3461 = vunpack.c.l.b16 %v1150
    %v3462 = vunpack.c.l.b16 %v1151
    %v3463 = vunpack.c.l.b16 %v1152
    %v3464 = vunpack.c.l.b16 %v1153
    %v3465 = vunpack.c.l.b16 %v1154
    %v3466 = vunpack.c.l.b16 %v1155
    %v3467 = vunpack.c.l.b16 %v1156
    %v3468 = vunpack.c.l.b16 %v1157
    %v3469 = vunpack.c.l.b16 %v1158
    %v3470 = vunpack.c.l.b16 %v1159
    %v3471 = vunpack.c.l.b16 %v1160
    %v3472 = vunpack.c.l.b16 %v1161
    %v3473 = vunpack.c.l.b16 %v1162
    %v3474 = vunpack.c.l.b16 %v1163
    %v3475 = vunpack.c.l.b16 %v1164
    %v3476 = vunpack.c.l.b16 %v1165
    %v3477 = vunpack.c.l.b16 %v1166
    %v3478 = vunpack.c.l.b16 %v1167
    %v3479 = vunpack.c.l.b16 %v1168
    %v3480 = vunpack.c.l.b16 %v1169
    %v3481 = vunpack.c.l.b16 %v1170
    %v3482 = vunpack.c.l.b16 %v1171
    %v3483 = vunpack.c.l.b16 %v1172
    %v3484 = vunpack.c.l.b16 %v1173
    %v3485 = vunpack.c.l.b16 %v1174
    %v3486 = vunpack.c.l.b16 %v1175
    %v3487 = vunpack.c.l.b16 %v1176
    %v3488 = vunpack.c.l.b16 %v1177
    %v3489 = vunpack.c.l.b16 %v1178
    %v3490 = vunpack.c.l.b16 %v1179
    %v3491 = vunpack.c.l.b16 %v1180
    %v3492 = vunpack.c.l.b16 %v1181
    %v3493 = vunpack.c.l.b16 %v1182
    %v3494 = vunpack.c.l.b16 %v1183
    %v3495 = vunpack.c.l.b16 %v1184
    %v3496 = vunpack.c.l.b16 %v1185
    %v3497 = vunpack.c.l.b16 %v1186
    %v3498 = vunpack.c.l.b16 %v1187
    %v3499 = vunpack.c.l.b16 %v1188
    %v3500 = vunpack.c.l.b16 %v1189
    %v3501 = vunpack.c.l.b16 %v1190
    %v3502 = vunpack.c.l.b16 %v1191
    %v3503 = vunpack.c.l.b16 %v1192
    %v3504 = vunpack.c.l.b16 %v1193
    %v3505 = vunpack.c.l.b16 %v1194
    %v3506 = vunpack.c.l.b16 %v1195
    %v3507 = vunpack.c.l.b16 %v1196
    %v3508 = vunpack.c.l.b16 %v1197
    %v3509 = vunpack.c.l.b16 %v1198
    %v3510 = vunpack.c.l.b16 %v1199
    %v3511 = vunpack.c.l.b16 %v1200
    %v3512 = vunpack.c.l.b16 %v1201
    %v3513 = vunpack.c.l.b16 %v1202
    %v3514 = vunpack.c.l.b16 %v1203
    %v3515 = vunpack.c.l.b16 %v1204
    %v3516 = vunpack.c.l.b16 %v1205
    %v3517 = vunpack.c.l.b16 %v1206
    %v3518 = vunpack.c.l.b16 %v1207
    %v3519 = vunpack.c.l.b16 %v1208
    %v3520 = vunpack.c.l.b16 %v1209
    %v3521 = vunpack.c.l.b16 %v1210
    %v3522 = vunpack.c.l.b16 %v1211
    %v3523 = vunpack.c.l.b16 %v1212
    %v3524 = vunpack.c.l.b16 %v1213
    %v3525 = vunpack.c.l.b16 %v1214
    %v3526 = vunpack.c.l.b16 %v1215
    %v3527 = vunpack.c.l.b16 %v1216
    %v3528 = vunpack.c.l.b16 %v1217
    %v3529 = vunpack.c.l.b16 %v1218
    %v3530 = vunpack.c.l.b16 %v1219
    %v3531 = vunpack.c.l.b16 %v1220
    %v3532 = vunpack.c.l.b16 %v1221
    %v3533 = vunpack.c.l.b16 %v1222
    %v3534 = vunpack.c.l.b16 %v1223
    %v3535 = vunpack.c.l.b16 %v1224
    %v3536 = vunpack.c.l.b16 %v1225
    %v3537 = vunpack.c.l.b16 %v1226
    %v3538 = vunpack.c.l.b16 %v1227
    %v3539 = vunpack.c.l.b16 %v1228
    %v3540 = vunpack.c.l.b16 %v1229
    %v3541 = vunpack.c.l.b16 %v1230
    %v3542 = vunpack.c.l.b16 %v1231
    %v3543 = vunpack.c.l.b16 %v1232
    %v3544 = vunpack.c.l.b16 %v1233
    %v3545 = vunpack.c.l.b16 %v1234
    %v3546 = vunpack.c.l.b16 %v1235
    %v3547 = vunpack.c.l.b16 %v1236
    %v3548 = vunpack.c.l.b16 %v1237
    %v3549 = vunpack.c.l.b16 %v1238
    %v3550 = vunpack.c.l.b16 %v1239
    %v3551 = vunpack.c.l.b16 %v1240
    %v3552 = vunpack.c.l.b16 %v1241
    %v3553 = vunpack.c.l.b16 %v1242
    %v3554 = vunpack.c.l.b16 %v1243
    %v3555 = vunpack.c.l.b16 %v1244
    %v3556 = vunpack.c.l.b16 %v1245
    %v3557 = vunpack.c.l.b16 %v1246
    %v3558 = vunpack.c.l.b16 %v1247
    %v3559 = vunpack.c.l.b16 %v1248
    %v3560 = vunpack.c.l.b16 %v1249
    %v3561 = vunpack.c.l.b16 %v1250
    %v3562 = vunpack.c.l.b16 %v1251
    %v3563 = vunpack.c.l.b16 %v1252
    %v3564 = vunpack.c.l.b16 %v1253
    %v3565 = vunpack.c.l.b16 %v1254
    %v3566 = vunpack.c.l.b16 %v1255
    %v3567 = vunpack.c.l.b16 %v1256
    %v3568 = vunpack.c.l.b16 %v1257
    %v3569 = vunpack.c.l.b16 %v1258
    %v3570 = vunpack.c.l.b16 %v1259
    %v3571 = vunpack.c.l.b16 %v1260
    %v3572 = vunpack.c.l.b16 %v1261
    %v3573 = vunpack.c.l.b16 %v1262
    %v3574 = vunpack.c.l.b16 %v1263
    %v3575 = vunpack.c.l.b16 %v1264
    %v3576 = vunpack.c.l.b16 %v1265
    %v3577 = vunpack.c.l.b16 %v1266
    %v3578 = vunpack.c.l.b16 %v1267
    %v3579 = vunpack.c.l.b16 %v1268
    %v3580 = vunpack.c.l.b16 %v1269
    %v3581 = vunpack.c.l.b16 %v1270
    %v3582 = vunpack.c.l.b16 %v1271
    %v3583 = vunpack.c.l.b16 %v1272
    %v3584 = vunpack.c.l.b16 %v1273
    %v3585 = vunpack.c.l.b16 %v1274
    %v3586 = vunpack.c.l.b16 %v1275
    %v3587 = vunpack.c.l.b16 %v1276
    %v3588 = vunpack.c.l.b16 %v1277
    %v3589 = vunpack.c.l.b16 %v1278
    %v3590 = vunpack.c.l.b16 %v1279
    %v3591 = vunpack.c.l.b16 %v1280
    %v3592 = vunpack.c.l.b16 %v1281
    %v3593 = vunpack.c.l.b16 %v1282
    %v3594 = vunpack.c.l.b16 %v1283
    %v3595 = vunpack.c.l.b16 %v1284
    %v3596 = vunpack.c.l.b16 %v1285
    %v3597 = vunpack.c.l.b16 %v1286
    %v3598 = vunpack.c.l.b16 %v1287
    %v3599 = vunpack.c.l.b16 %v1288
    %v3600 = vunpack.c.l.b16 %v1289
    %v3601 = vunpack.c.l.b16 %v1290
    %v3602 = vunpack.c.l.b16 %v1291
    %v3603 = vunpack.c.l.b16 %v1292
    %v3604 = vunpack.c.l.b16 %v1293
    %v3605 = vunpack.c.l.b16 %v1294
    %v3606 = vunpack.c.l.b16 %v1295
    %v3607 = vunpack.c.l.b16 %v1296
    %v3608 = vunpack.c.l.b16 %v1297
    %v3609 = vunpack.c.l.b16 %v1298
    %v3610 = vunpack.c.l.b16 %v1299
    %v3611 = vunpack.c.l.b16 %v1300
    %v3612 = vunpack.c.l.b16 %v1301
    %v3613 = vunpack.c.l.b16 %v1302
    %v3614 = vunpack.c.l.b16 %v1303
    %v3615 = vunpack.c.l.b16 %v1304
    %v3616 = vunpack.c.l.b16 %v1305
    %v3617 = vunpack.c.l.b16 %v1306
    %v3618 = vunpack.c.l.b16 %v1307
    %v3619 = vunpack.c.l.b16 %v1308
    %v3620 = vunpack.c.l.b16 %v1309
    %v3621 = vunpack.c.l.b16 %v1310
    %v3622 = vunpack.c.l.b16 %v1311
    %v3623 = vunpack.c.l.b16 %v1312
    %v3624 = vunpack.c.l.b16 %v1313
    %v3625 = vunpack.c.l.b16 %v1314
    %v3626 = vunpack.c.l.b16 %v1315
    %v3627 = vunpack.c.l.b16 %v1316
    %v3628 = vunpack.c.l.b16 %v1317
    %v3629 = vunpack.c.l.b16 %v1318
    %v3630 = vunpack.c.l.b16 %v1319
    %v3631 = vunpack.c.l.b16 %v1320
    %v3632 = vunpack.c.l.b16 %v1321
    %v3633 = vunpack.c.l.b16 %v1322
    %v3634 = vunpack.c.l.b16 %v1323
    %v3635 = vunpack.c.l.b16 %v1324
    %v3636 = vunpack.c.l.b16 %v1325
    %v3637 = vunpack.c.l.b16 %v1326
    %v3638 = vunpack.c.l.b16 %v1327
    %v3639 = vunpack.c.l.b16 %v1328
    %v3640 = vunpack.c.l.b16 %v1329
    %v3641 = vunpack.c.l.b16 %v1330
    %v3642 = vunpack.c.l.b16 %v1331
    %v3643 = vunpack.c.l.b16 %v1332
    %v3644 = vunpack.c.l.b16 %v1333
    %v3645 = vunpack.c.l.b16 %v1334
    %v3646 = vunpack.c.l.b16 %v1335
    %v3647 = vunpack.c.l.b16 %v1336
    %v3648 = vunpack.c.l.b16 %v1337
    %v3649 = vunpack.c.l.b16 %v1338
    %v3650 = vunpack.c.l.b16 %v1339
    %v3651 = vunpack.c.l.b16 %v1340
    %v3652 = vunpack.c.l.b16 %v1341
    %v3653 = vunpack.c.l.b16 %v1342
    %v3654 = vunpack.c.l.b16 %v1343
    %v3655 = vunpack.c.l.b16 %v1344
    %v3656 = vunpack.c.l.b16 %v1345
    %v3657 = vunpack.c.l.b16 %v1346
    %v3658 = vunpack.c.l.b16 %v1347
    %v3659 = vunpack.c.l.b16 %v1348
    %v3660 = vunpack.c.l.b16 %v1349
    %v3661 = vunpack.c.l.b16 %v1350
    %v3662 = vunpack.c.l.b16 %v1351
    %v3663 = vunpack.c.l.b16 %v1352
    %v3664 = vunpack.c.l.b16 %v1353
    %v3665 = vunpack.c.l.b16 %v1354
    %v3666 = vunpack.c.l.b16 %v1355
    %v3667 = vunpack.c.l.b16 %v1356
    %v3668 = vunpack.c.l.b16 %v1357
    %v3669 = vunpack.c.l.b16 %v1358
    %v3670 = vunpack.c.l.b16 %v1359
    %v3671 = vunpack.c.l.b16 %v1360
    %v3672 = vunpack.c.l.b16 %v1361
    %v3673 = vunpack.c.l.b16 %v1362
    %v3674 = vunpack.c.l.b16 %v1363
    %v3675 = vunpack.c.l.b16 %v1364
    %v3676 = vunpack.c.l.b16 %v1365
    %v3677 = vunpack.c.l.b16 %v1366
    %v3678 = vunpack.c.l.b16 %v1367
    %v3679 = vunpack.c.l.b16 %v1368
    %v3680 = vunpack.c.l.b16 %v1369
    %v3681 = vunpack.c.l.b16 %v1370
    %v3682 = vunpack.c.l.b16 %v1371
    %v3683 = vunpack.c.l.b16 %v1372
    %v3684 = vunpack.c.l.b16 %v1373
    %v3685 = vunpack.c.l.b16 %v1374
    %v3686 = vunpack.c.l.b16 %v1375
    %v3687 = vunpack.c.l.b16 %v1376
    %v3688 = vunpack.c.l.b16 %v1377
    %v3689 = vunpack.c.l.b16 %v1378
    %v3690 = vunpack.c.l.b16 %v1379
    %v3691 = vunpack.c.l.b16 %v1380
    %v3692 = vunpack.c.l.b16 %v1381
    %v3693 = vunpack.c.l.b16 %v1382
    %v3694 = vunpack.c.l.b16 %v1383
    %v3695 = vunpack.c.l.b16 %v1384
    %v3696 = vunpack.c.l.b16 %v1385
    %v3697 = vunpack.c.l.b16 %v1386
    %v3698 = vunpack.c.l.b16 %v1387
    %v3699 = vunpack.c.l.b16 %v1388
    %v3700 = vunpack.c.l.b16 %v1389
    %v3701 = vunpack.c.l.b16 %v1390
    %v3702 = vunpack.c.l.b16 %v1391
    %v3703 = vunpack.c.l.b16 %v1392
    %v3704 = vunpack.c.l.b16 %v1393
    %v3705 = vunpack.c.l.b16 %v1394
    %v3706 = vunpack.c.l.b16 %v1395
    %v3707 = vunpack.c.l.b16 %v1396
    %v3708 = vunpack.c.l.b16 %v1397
    %v3709 = vunpack.c.l.b16 %v1398
    %v3710 = vunpack.c.l.b16 %v1399
    %v3711 = vunpack.c.l.b16 %v1400
    %v3712 = vunpack.c.l.b16 %v1401
    %v3713 = vunpack.c.l.b16 %v1402
    %v3714 = vunpack.c.l.b16 %v1403
    %v3715 = vunpack.c.l.b16 %v1404
    %v3716 = vunpack.c.l.b16 %v1405
    %v3717 = vunpack.c.l.b16 %v1406
    %v3718 = vunpack.c.l.b16 %v1407
    %v3719 = vunpack.c.l.b16 %v1408
    %v3720 = vunpack.c.l.b16 %v1409
    %v3721 = vunpack.c.l.b16 %v1410
    %v3722 = vunpack.c.l.b16 %v1411
    %v3723 = vunpack.c.l.b16 %v1412
    %v3724 = vunpack.c.l.b16 %v1413
    %v3725 = vunpack.c.l.b16 %v1414
    %v3726 = vunpack.c.l.b16 %v1415
    %v3727 = vunpack.c.l.b16 %v1416
    %v3728 = vunpack.c.l.b16 %v1417
    %v3729 = vunpack.c.l.b16 %v1418
    %v3730 = vunpack.c.l.b16 %v1419
    %v3731 = vunpack.c.l.b16 %v1420
    %v3732 = vunpack.c.l.b16 %v1421
    %v3733 = vunpack.c.l.b16 %v1422
    %v3734 = vunpack.c.l.b16 %v1423
    %v3735 = vunpack.c.l.b16 %v1424
    %v3736 = vunpack.c.l.b16 %v1425
    %v3737 = vunpack.c.l.b16 %v1426
    %v3738 = vunpack.c.l.b16 %v1427
    %v3739 = vunpack.c.l.b16 %v1428
    %v3740 = vunpack.c.l.b16 %v1429
    %v3741 = vunpack.c.l.b16 %v1430
    %v3742 = vunpack.c.l.b16 %v1431
    %v3743 = vunpack.c.l.b16 %v1432
    %v3744 = vunpack.c.l.b16 %v1433
    %v3745 = vunpack.c.l.b16 %v1434
    %v3746 = vunpack.c.l.b16 %v1435
    %v3747 = vunpack.c.l.b16 %v1436
    %v3748 = vunpack.c.l.b16 %v1437
    %v3749 = vunpack.c.l.b16 %v1438
    %v3750 = vunpack.c.l.b16 %v1439
    %v3751 = vunpack.c.l.b16 %v1440
    %v3752 = vunpack.c.l.b16 %v1441
    %v3753 = vunpack.c.l.b16 %v1442
    %v3754 = vunpack.c.l.b16 %v1443
    %v3755 = vunpack.c.l.b16 %v1444
    %v3756 = vunpack.c.l.b16 %v1445
    %v3757 = vunpack.c.l.b16 %v1446
    %v3758 = vunpack.c.l.b16 %v1447
    %v3759 = vunpack.c.l.b16 %v1448
    %v3760 = vunpack.c.l.b16 %v1449
    %v3761 = vunpack.c.l.b16 %v1450
    %v3762 = vunpack.c.l.b16 %v1451
    %v3763 = vunpack.c.l.b16 %v1452
    %v3764 = vunpack.c.l.b16 %v1453
    %v3765 = vunpack.c.l.b16 %v1454
    %v3766 = vunpack.c.l.b16 %v1455
    %v3767 = vunpack.c.l.b16 %v1456
    %v3768 = vunpack.c.l.b16 %v1457
    %v3769 = vunpack.c.l.b16 %v1458
    %v3770 = vunpack.c.l.b16 %v1459
    %v3771 = vunpack.c.l.b16 %v1460
    %v3772 = vunpack.c.l.b16 %v1461
    %v3773 = vunpack.c.l.b16 %v1462
    %v3774 = vunpack.c.l.b16 %v1463
    %v3775 = vunpack.c.l.b16 %v1464
    %v3776 = vunpack.c.l.b16 %v1465
    %v3777 = vunpack.c.l.b16 %v1466
    %v3778 = vunpack.c.l.b16 %v1467
    %v3779 = vunpack.c.l.b16 %v1468
    %v3780 = vunpack.c.l.b16 %v1469
    %v3781 = vunpack.c.l.b16 %v1470
    %v3782 = vunpack.c.l.b16 %v1471
    %v3783 = vunpack.c.l.b16 %v1472
    %v3784 = vunpack.c.l.b16 %v1473
    %v3785 = vunpack.c.l.b16 %v1474
    %v3786 = vunpack.c.l.b16 %v1475
    %v3787 = vunpack.c.l.b16 %v1476
    %v3788 = vunpack.c.l.b16 %v1477
    %v3789 = vunpack.c.l.b16 %v1478
    %v3790 = vunpack.c.l.b16 %v1479
    %v3791 = vunpack.c.l.b16 %v1480
    %v3792 = vunpack.c.l.b16 %v1481
    %v3793 = vunpack.c.l.b16 %v1482
    %v3794 = vunpack.c.l.b16 %v1483
    %v3795 = vunpack.c.l.b16 %v1484
    %v3796 = vunpack.c.l.b16 %v1485
    %v3797 = vunpack.c.l.b16 %v1486
    %v3798 = vunpack.c.l.b16 %v1487
    %v3799 = vunpack.c.l.b16 %v1488
    %v3800 = vunpack.c.l.b16 %v1489
    %v3801 = vunpack.c.l.b16 %v1490
    %v3802 = vunpack.c.l.b16 %v1491
    %v3803 = vunpack.c.l.b16 %v1492
    %v3804 = vunpack.c.l.b16 %v1493
    %v3805 = vunpack.c.l.b16 %v1494
    %v3806 = vunpack.c.l.b16 %v1495
    %v3807 = vunpack.c.l.b16 %v1496
    %v3808 = vunpack.c.l.b16 %v1497
    %v3809 = vunpack.c.l.b16 %v1498
    %v3810 = vunpack.c.l.b16 %v1499
    %v3811 = vunpack.c.l.b16 %v1500
    %v3812 = vunpack.c.l.b16 %v1501
    %v3813 = vunpack.c.l.b16 %v1502
    %v3814 = vunpack.c.l.b16 %v1503
    %v3815 = vunpack.c.l.b16 %v1504
    %v3816 = vunpack.c.l.b16 %v1505
    %v3817 = vunpack.c.l.b16 %v1506
    %v3818 = vunpack.c.l.b16 %v1507
    %v3819 = vunpack.c.l.b16 %v1508
    %v3820 = vunpack.c.l.b16 %v1509
    %v3821 = vunpack.c.l.b16 %v1510
    %v3822 = vunpack.c.l.b16 %v1511
    %v3823 = vunpack.c.l.b16 %v1512
    %v3824 = vunpack.c.l.b16 %v1513
    %v3825 = vunpack.c.l.b16 %v1514
    %v3826 = vunpack.c.l.b16 %v1515
    %v3827 = vunpack.c.l.b16 %v1516
    %v3828 = vunpack.c.l.b16 %v1517
    %v3829 = vunpack.c.l.b16 %v1518
    %v3830 = vunpack.c.l.b16 %v1519
    %v3831 = vunpack.c.l.b16 %v1520
    %v3832 = vunpack.c.l.b16 %v1521
    %v3833 = vunpack.c.l.b16 %v1522
    %v3834 = vunpack.c.l.b16 %v1523
    %v3835 = vunpack.c.l.b16 %v1524
    %v3836 = vunpack.c.l.b16 %v1525
    %v3837 = vunpack.c.l.b16 %v1526
    %v3838 = vunpack.c.l.b16 %v1527
    %v3839 = vunpack.c.l.b16 %v1528
    %v3840 = vunpack.c.l.b16 %v1529
    %v3841 = vunpack.c.l.b16 %v1530
    %v3842 = vunpack.c.l.b16 %v1531
    %v3843 = vunpack.c.l.b16 %v1532
    %v3844 = vunpack.c.l.b16 %v1533
    %v3845 = vunpack.c.l.b16 %v1534
    %v3846 = vunpack.c.l.b16 %v1535
    %v3847 = vunpack.c.l.b16 %v1536
    %v3848 = vunpack.c.l.b16 %v1537
    %v3849 = vunpack.c.l.b16 %v1538
    %v3850 = vunpack.c.l.b16 %v1539
    %v3851 = vunpack.c.l.b16 %v1540
    %v3852 = vunpack.c.l.b16 %v1541
    %v3853 = vunpack.c.l.b16 %v1542
    %v3854 = vunpack.c.l.b16 %v1543
    %v3855 = vunpack.c.l.b16 %v1544
    %v3856 = vunpack.c.l.b16 %v1545
    %v3857 = vunpack.c.l.b16 %v1546
    %v3858 = vunpack.c.l.b16 %v1547
    %v3859 = vunpack.c.l.b16 %v1548
    %v3860 = vunpack.c.l.b16 %v1549
    %v3861 = vunpack.c.l.b16 %v1550
    %v3862 = vunpack.c.l.b16 %v1551
    %v3863 = vunpack.c.l.b16 %v1552
    %v3864 = vunpack.c.l.b16 %v1553
    %v3865 = vunpack.c.l.b16 %v1554
    %v3866 = vunpack.c.l.b16 %v1555
    %v3867 = vunpack.c.l.b16 %v1556
    %v3868 = vunpack.c.l.b16 %v1557
    %v3869 = vunpack.c.l.b16 %v1558
    %v3870 = vunpack.c.l.b16 %v1559
    %v3871 = vunpack.c.l.b16 %v1560
    %v3872 = vunpack.c.l.b16 %v1561
    %v3873 = vunpack.c.l.b16 %v1562
    %v3874 = vunpack.c.l.b16 %v1563
    %v3875 = vunpack.c.l.b16 %v1564
    %v3876 = vunpack.c.l.b16 %v1565
    %v3877 = vunpack.c.l.b16 %v1566
    %v3878 = vunpack.c.l.b16 %v1567
    %v3879 = vunpack.c.l.b16 %v1568
    %v3880 = vunpack.c.l.b16 %v1569
    %v3881 = vunpack.c.l.b16 %v1570
    %v3882 = vunpack.c.l.b16 %v1571
    %v3883 = vunpack.c.l.b16 %v1572
    %v3884 = vunpack.c.l.b16 %v1573
    %v3885 = vunpack.c.l.b16 %v1574
    %v3886 = vunpack.c.l.b16 %v1575
    %v3887 = vunpack.c.l.b16 %v1576
    %v3888 = vunpack.c.l.b16 %v1577
    %v3889 = vunpack.c.l.b16 %v1578
    %v3890 = vunpack.c.l.b16 %v1579
    %v3891 = vunpack.c.l.b16 %v1580
    %v3892 = vunpack.c.l.b16 %v1581
    %v3893 = vunpack.c.l.b16 %v1582
    %v3894 = vunpack.c.l.b16 %v1583
    %v3895 = vunpack.c.l.b16 %v1584
    %v3896 = vunpack.c.l.b16 %v1585
    %v3897 = vunpack.c.l.b16 %v1586
    %v3898 = vunpack.c.l.b16 %v1587
    %v3899 = vunpack.c.l.b16 %v1588
    %v3900 = vunpack.c.l.b16 %v1589
    %v3901 = vunpack.c.l.b16 %v1590
    %v3902 = vunpack.c.l.b16 %v1591
    %v3903 = vunpack.c.l.b16 %v1592
    %v3904 = vunpack.c.l.b16 %v1593
    %v3905 = vunpack.c.l.b16 %v1594
    %v3906 = vunpack.c.l.b16 %v1595
    %v3907 = vunpack.c.l.b16 %v1596
    %v3908 = vunpack.c.l.b16 %v1597
    %v3909 = vunpack.c.l.b16 %v1598
    %v3910 = vunpack.c.l.b16 %v1599
    %v3911 = vunpack.c.l.b16 %v1600
    %v3912 = vunpack.c.l.b16 %v1601
    %v3913 = vunpack.c.l.b16 %v1602
    %v3914 = vunpack.c.l.b16 %v1603
    %v3915 = vunpack.c.l.b16 %v1604
    %v3916 = vunpack.c.l.b16 %v1605
    %v3917 = vunpack.c.l.b16 %v1606
    %v3918 = vunpack.c.l.b16 %v1607
    %v3919 = vunpack.c.l.b16 %v1608
    %v3920 = vunpack.c.l.b16 %v1609
    %v3921 = vunpack.c.l.b16 %v1610
    %v3922 = vunpack.c.l.b16 %v1611
    %v3923 = vunpack.c.l.b16 %v1612
    %v3924 = vunpack.c.l.b16 %v1613
    %v3925 = vunpack.c.l.b16 %v1614
    %v3926 = vunpack.c.l.b16 %v1615
    %v3927 = vunpack.c.l.b16 %v1616
    %v3928 = vunpack.c.l.b16 %v1617
    %v3929 = vunpack.c.l.b16 %v1618
    %v3930 = vunpack.c.l.b16 %v1619
    %v3931 = vunpack.c.l.b16 %v1620
    %v3932 = vunpack.c.l.b16 %v1621
    %v3933 = vunpack.c.l.b16 %v1622
    %v3934 = vunpack.c.l.b16 %v1623
    %v3935 = vunpack.c.l.b16 %v1624
    %v3936 = vunpack.c.l.b16 %v1625
    %v3937 = vunpack.c.l.b16 %v1626
    %v3938 = vunpack.c.l.b16 %v1627
    %v3939 = vunpack.c.l.b16 %v1628
    %v3940 = vunpack.c.l.b16 %v1629
    %v3941 = vunpack.c.l.b16 %v1630
    %v3942 = vunpack.c.l.b16 %v1631
    %v3943 = vunpack.c.l.b16 %v1632
    %v3944 = vunpack.c.l.b16 %v1633
    %v3945 = vunpack.c.l.b16 %v1634
    %v3946 = vunpack.c.l.b16 %v1635
    %v3947 = vunpack.c.l.b16 %v1636
    %v3948 = vunpack.c.l.b16 %v1637
    %v3949 = vunpack.c.l.b16 %v1638
    %v3950 = vunpack.c.l.b16 %v1639
    %v3951 = vunpack.c.l.b16 %v1640
    %v3952 = vunpack.c.l.b16 %v1641
    %v3953 = vunpack.c.l.b16 %v1642
    %v3954 = vunpack.c.l.b16 %v1643
    %v3955 = vunpack.c.l.b16 %v1644
    %v3956 = vunpack.c.l.b16 %v1645
    %v3957 = vunpack.c.l.b16 %v1646
    %v3958 = vunpack.c.l.b16 %v1647
    %v3959 = vunpack.c.l.b16 %v1648
    %v3960 = vunpack.c.l.b16 %v1649
    %v3961 = vunpack.c.l.b16 %v1650
    %v3962 = vunpack.c.l.b16 %v1651
    %v3963 = vunpack.c.l.b16 %v1652
    %v3964 = vunpack.c.l.b16 %v1653
    %v3965 = vunpack.c.l.b16 %v1654
    %v3966 = vunpack.c.l.b16 %v1655
    %v3967 = vunpack.c.l.b16 %v1656
    %v3968 = vunpack.c.l.b16 %v1657
    %v3969 = vunpack.c.l.b16 %v1658
    %v3970 = vunpack.c.l.b16 %v1659
    %v3971 = vpack.c.b16 %v2820, %v2819
    %v3972 = vpack.c.b16 %v2822, %v2821
    %v3973 = vpack.c.b16 %v2824, %v2823
    %v3974 = vpack.c.b16 %v2826, %v2825
    %v3975 = vpack.c.b16 %v2828, %v2827
    %v3976 = vpack.c.b16 %v2830, %v2829
    %v3977 = vpack.c.b16 %v2832, %v2831
    %v3978 = vpack.c.b16 %v2834, %v2833
    %v3979 = vpack.c.b16 %v2836, %v2835
    %v3980 = vpack.c.b16 %v2838, %v2837
    %v3981 = vpack.c.b16 %v2840, %v2839
    %v3982 = vpack.c.b16 %v2842, %v2841
    %v3983 = vpack.c.b16 %v2844, %v2843
    %v3984 = vpack.c.b16 %v2846, %v2845
    %v3985 = vpack.c.b16 %v2848, %v2847
    %v3986 = vpack.c.b16 %v2850, %v2849
    %v3987 = vpack.c.b16 %v2852, %v2851
    %v3988 = vpack.c.b16 %v2854, %v2853
    %v3989 = vpack.c.b16 %v2856, %v2855
    %v3990 = vpack.c.b16 %v2858, %v2857
    %v3991 = vpack.c.b16 %v2860, %v2859
    %v3992 = vpack.c.b16 %v2862, %v2861
    %v3993 = vpack.c.b16 %v2864, %v2863
    %v3994 = vpack.c.b16 %v2866, %v2865
    %v3995 = vpack.c.b16 %v2868, %v2867
    %v3996 = vpack.c.b16 %v2870, %v2869
    %v3997 = vpack.c.b16 %v2872, %v2871
    %v3998 = vpack.c.b16 %v2874, %v2873
    %v3999 = vpack.c.b16 %v2876, %v2875
    %v4000 = vpack.c.b16 %v2878, %v2877
    %v4001 = vpack.c.b16 %v2880, %v2879
    %v4002 = vpack.c.b16 %v2882, %v2881
    %v4003 = vpack.c.b16 %v2884, %v2883
    %v4004 = vpack.c.b16 %v2886, %v2885
    %v4005 = vpack.c.b16 %v2888, %v2887
    %v4006 = vpack.c.b16 %v2890, %v2889
    %v4007 = vpack.c.b16 %v2892, %v2891
    %v4008 = vpack.c.b16 %v2894, %v2893
    %v4009 = vpack.c.b16 %v2896, %v2895
    %v4010 = vpack.c.b16 %v2898, %v2897
    %v4011 = vpack.c.b16 %v2900, %v2899
    %v4012 = vpack.c.b16 %v2902, %v2901
    %v4013 = vpack.c.b16 %v2904, %v2903
    %v4014 = vpack.c.b16 %v2906, %v2905
    %v4015 = vpack.c.b16 %v2908, %v2907
    %v4016 = vpack.c.b16 %v2910, %v2909
    %v4017 = vpack.c.b16 %v2912, %v2911
    %v4018 = vpack.c.b16 %v2914, %v2913
    %v4019 = vpack.c.b16 %v2916, %v2915
    %v4020 = vpack.c.b16 %v2918, %v2917
    %v4021 = vpack.c.b16 %v2920, %v2919
    %v4022 = vpack.c.b16 %v2922, %v2921
    %v4023 = vpack.c.b16 %v2924, %v2923
    %v4024 = vpack.c.b16 %v2926, %v2925
    %v4025 = vpack.c.b16 %v2928, %v2927
    %v4026 = vpack.c.b16 %v2930, %v2929
    %v4027 = vpack.c.b16 %v2932, %v2931
    %v4028 = vpack.c.b16 %v2934, %v2933
    %v4029 = vpack.c.b16 %v2936, %v2935
    %v4030 = vpack.c.b16 %v2938, %v2937
    %v4031 = vpack.c.b16 %v2940, %v2939
    %v4032 = vpack.c.b16 %v2942, %v2941
    %v4033 = vpack.c.b16 %v2944, %v2943
    %v4034 = vpack.c.b16 %v2946, %v2945
    %v4035 = vpack.c.b16 %v2948, %v2947
    %v4036 = vpack.c.b16 %v2950, %v2949
    %v4037 = vpack.c.b16 %v2952, %v2951
    %v4038 = vpack.c.b16 %v2954, %v2953
    %v4039 = vpack.c.b16 %v2956, %v2955
    %v4040 = vpack.c.b16 %v2958, %v2957
    %v4041 = vpack.c.b16 %v2960, %v2959
    %v4042 = vpack.c.b16 %v2962, %v2961
    %v4043 = vpack.c.b16 %v2964, %v2963
    %v4044 = vpack.c.b16 %v2966, %v2965
    %v4045 = vpack.c.b16 %v2968, %v2967
    %v4046 = vpack.c.b16 %v2970, %v2969
    %v4047 = vpack.c.b16 %v2972, %v2971
    %v4048 = vpack.c.b16 %v2974, %v2973
    %v4049 = vpack.c.b16 %v2976, %v2975
    %v4050 = vpack.c.b16 %v2978, %v2977
    %v4051 = vpack.c.b16 %v2980, %v2979
    %v4052 = vpack.c.b16 %v2982, %v2981
    %v4053 = vpack.c.b16 %v2984, %v2983
    %v4054 = vpack.c.b16 %v2986, %v2985
    %v4055 = vpack.c.b16 %v2988, %v2987
    %v4056 = vpack.c.b16 %v2990, %v2989
    %v4057 = vpack.c.b16 %v2992, %v2991
    %v4058 = vpack.c.b16 %v2994, %v2993
    %v4059 = vpack.c.b16 %v2996, %v2995
    %v4060 = vpack.c.b16 %v2998, %v2997
    %v4061 = vpack.c.b16 %v3000, %v2999
    %v4062 = vpack.c.b16 %v3002, %v3001
    %v4063 = vpack.c.b16 %v3004, %v3003
    %v4064 = vpack.c.b16 %v3006, %v3005
    %v4065 = vpack.c.b16 %v3008, %v3007
    %v4066 = vpack.c.b16 %v3010, %v3009
    %v4067 = vpack.c.b16 %v3012, %v3011
    %v4068 = vpack.c.b16 %v3014, %v3013
    %v4069 = vpack.c.b16 %v3016, %v3015
    %v4070 = vpack.c.b16 %v3018, %v3017
    %v4071 = vpack.c.b16 %v3020, %v3019
    %v4072 = vpack.c.b16 %v3022, %v3021
    %v4073 = vpack.c.b16 %v3024, %v3023
    %v4074 = vpack.c.b16 %v3026, %v3025
    %v4075 = vpack.c.b16 %v3028, %v3027
    %v4076 = vpack.c.b16 %v3030, %v3029
    %v4077 = vpack.c.b16 %v3032, %v3031
    %v4078 = vpack.c.b16 %v3034, %v3033
    %v4079 = vpack.c.b16 %v3036, %v3035
    %v4080 = vpack.c.b16 %v3038, %v3037
    %v4081 = vpack.c.b16 %v3040, %v3039
    %v4082 = vpack.c.b16 %v3042, %v3041
    %v4083 = vpack.c.b16 %v3044, %v3043
    %v4084 = vpack.c.b16 %v3046, %v3045
    %v4085 = vpack.c.b16 %v3048, %v3047
    %v4086 = vpack.c.b16 %v3050, %v3049
    %v4087 = vpack.c.b16 %v3052, %v3051
    %v4088 = vpack.c.b16 %v3054, %v3053
    %v4089 = vpack.c.b16 %v3056, %v3055
    %v4090 = vpack.c.b16 %v3058, %v3057
    %v4091 = vpack.c.b16 %v3060, %v3059
    %v4092 = vpack.c.b16 %v3062, %v3061
    %v4093 = vpack.c.b16 %v3064, %v3063
    %v4094 = vpack.c.b16 %v3066, %v3065
    %v4095 = vpack.c.b16 %v3068, %v3067
    %v4096 = vpack.c.b16 %v3070, %v3069
    %v4097 = vpack.c.b16 %v3072, %v3071
    %v4098 = vpack.c.b16 %v3074, %v3073
    %v4099 = vpack.c.b16 %v3076, %v3075
    %v4100 = vpack.c.b16 %v3078, %v3077
    %v4101 = vpack.c.b16 %v3080, %v3079
    %v4102 = vpack.c.b16 %v3082, %v3081
    %v4103 = vpack.c.b16 %v3084, %v3083
    %v4104 = vpack.c.b16 %v3086, %v3085
    %v4105 = vpack.c.b16 %v3088, %v3087
    %v4106 = vpack.c.b16 %v3090, %v3089
    %v4107 = vpack.c.b16 %v3092, %v3091
    %v4108 = vpack.c.b16 %v3094, %v3093
    %v4109 = vpack.c.b16 %v3096, %v3095
    %v4110 = vpack.c.b16 %v3098, %v3097
    %v4111 = vpack.c.b16 %v3100, %v3099
    %v4112 = vpack.c.b16 %v3102, %v3101
    %v4113 = vpack.c.b16 %v3104, %v3103
    %v4114 = vpack.c.b16 %v3106, %v3105
    %v4115 = vpack.c.b16 %v3108, %v3107
    %v4116 = vpack.c.b16 %v3110, %v3109
    %v4117 = vpack.c.b16 %v3112, %v3111
    %v4118 = vpack.c.b16 %v3114, %v3113
    %v4119 = vpack.c.b16 %v3116, %v3115
    %v4120 = vpack.c.b16 %v3118, %v3117
    %v4121 = vpack.c.b16 %v3120, %v3119
    %v4122 = vpack.c.b16 %v3122, %v3121
    %v4123 = vpack.c.b16 %v3124, %v3123
    %v4124 = vpack.c.b16 %v3126, %v3125
    %v4125 = vpack.c.b16 %v3128, %v3127
    %v4126 = vpack.c.b16 %v3130, %v3129
    %v4127 = vpack.c.b16 %v3132, %v3131
    %v4128 = vpack.c.b16 %v3134, %v3133
    %v4129 = vpack.c.b16 %v3136, %v3135
    %v4130 = vpack.c.b16 %v3138, %v3137
    %v4131 = vpack.c.b16 %v3140, %v3139
    %v4132 = vpack.c.b16 %v3142, %v3141
    %v4133 = vpack.c.b16 %v3144, %v3143
    %v4134 = vpack.c.b16 %v3146, %v3145
    %v4135 = vpack.c.b16 %v3148, %v3147
    %v4136 = vpack.c.b16 %v3150, %v3149
    %v4137 = vpack.c.b16 %v3152, %v3151
    %v4138 = vpack.c.b16 %v3154, %v3153
    %v4139 = vpack.c.b16 %v3156, %v3155
    %v4140 = vpack.c.b16 %v3158, %v3157
    %v4141 = vpack.c.b16 %v3160, %v3159
    %v4142 = vpack.c.b16 %v3162, %v3161
    %v4143 = vpack.c.b16 %v3164, %v3163
    %v4144 = vpack.c.b16 %v3166, %v3165
    %v4145 = vpack.c.b16 %v3168, %v3167
    %v4146 = vpack.c.b16 %v3170, %v3169
    %v4147 = vpack.c.b16 %v3172, %v3171
    %v4148 = vpack.c.b16 %v3174, %v3173
    %v4149 = vpack.c.b16 %v3176, %v3175
    %v4150 = vpack.c.b16 %v3178, %v3177
    %v4151 = vpack.c.b16 %v3180, %v3179
    %v4152 = vpack.c.b16 %v3182, %v3181
    %v4153 = vpack.c.b16 %v3184, %v3183
    %v4154 = vpack.c.b16 %v3186, %v3185
    %v4155 = vpack.c.b16 %v3188, %v3187
    %v4156 = vpack.c.b16 %v3190, %v3189
    %v4157 = vpack.c.b16 %v3192, %v3191
    %v4158 = vpack.c.b16 %v3194, %v3193
    %v4159 = vpack.c.b16 %v3196, %v3195
    %v4160 = vpack.c.b16 %v3198, %v3197
    %v4161 = vpack.c.b16 %v3200, %v3199
    %v4162 = vpack.c.b16 %v3202, %v3201
    %v4163 = vpack.c.b16 %v3204, %v3203
    %v4164 = vpack.c.b16 %v3206, %v3205
    %v4165 = vpack.c.b16 %v3208, %v3207
    %v4166 = vpack.c.b16 %v3210, %v3209
    %v4167 = vpack.c.b16 %v3212, %v3211
    %v4168 = vpack.c.b16 %v3214, %v3213
    %v4169 = vpack.c.b16 %v3216, %v3215
    %v4170 = vpack.c.b16 %v3218, %v3217
    %v4171 = vpack.c.b16 %v3220, %v3219
    %v4172 = vpack.c.b16 %v3222, %v3221
    %v4173 = vpack.c.b16 %v3224, %v3223
    %v4174 = vpack.c.b16 %v3226, %v3225
    %v4175 = vpack.c.b16 %v3228, %v3227
    %v4176 = vpack.c.b16 %v3230, %v3229
    %v4177 = vpack.c.b16 %v3232, %v3231
    %v4178 = vpack.c.b16 %v3234, %v3233
    %v4179 = vpack.c.b16 %v3236, %v3235
    %v4180 = vpack.c.b16 %v3238, %v3237
    %v4181 = vpack.c.b16 %v3240, %v3239
    %v4182 = vpack.c.b16 %v3242, %v3241
    %v4183 = vpack.c.b16 %v3244, %v3243
    %v4184 = vpack.c.b16 %v3246, %v3245
    %v4185 = vpack.c.b16 %v3248, %v3247
    %v4186 = vpack.c.b16 %v3250, %v3249
    %v4187 = vpack.c.b16 %v3252, %v3251
    %v4188 = vpack.c.b16 %v3254, %v3253
    %v4189 = vpack.c.b16 %v3256, %v3255
    %v4190 = vpack.c.b16 %v3258, %v3257
    %v4191 = vpack.c.b16 %v3260, %v3259
    %v4192 = vpack.c.b16 %v3262, %v3261
    %v4193 = vpack.c.b16 %v3264, %v3263
    %v4194 = vpack.c.b16 %v3266, %v3265
    %v4195 = vpack.c.b16 %v3268, %v3267
    %v4196 = vpack.c.b16 %v3270, %v3269
    %v4197 = vpack.c.b16 %v3272, %v3271
    %v4198 = vpack.c.b16 %v3274, %v3273
    %v4199 = vpack.c.b16 %v3276, %v3275
    %v4200 = vpack.c.b16 %v3278, %v3277
    %v4201 = vpack.c.b16 %v3280, %v3279
    %v4202 = vpack.c.b16 %v3282, %v3281
    %v4203 = vpack.c.b16 %v3284, %v3283
    %v4204 = vpack.c.b16 %v3286, %v3285
    %v4205 = vpack.c.b16 %v3288, %v3287
    %v4206 = vpack.c.b16 %v3290, %v3289
    %v4207 = vpack.c.b16 %v3292, %v3291
    %v4208 = vpack.c.b16 %v3294, %v3293
    %v4209 = vpack.c.b16 %v3296, %v3295
    %v4210 = vpack.c.b16 %v3298, %v3297
    %v4211 = vpack.c.b16 %v3300, %v3299
    %v4212 = vpack.c.b16 %v3302, %v3301
    %v4213 = vpack.c.b16 %v3304, %v3303
    %v4214 = vpack.c.b16 %v3306, %v3305
    %v4215 = vpack.c.b16 %v3308, %v3307
    %v4216 = vpack.c.b16 %v3310, %v3309
    %v4217 = vpack.c.b16 %v3312, %v3311
    %v4218 = vpack.c.b16 %v3314, %v3313
    %v4219 = vpack.c.b16 %v3316, %v3315
    %v4220 = vpack.c.b16 %v3318, %v3317
    %v4221 = vpack.c.b16 %v3320, %v3319
    %v4222 = vpack.c.b16 %v3322, %v3321
    %v4223 = vpack.c.b16 %v3324, %v3323
    %v4224 = vpack.c.b16 %v3326, %v3325
    %v4225 = vpack.c.b16 %v3328, %v3327
    %v4226 = vpack.c.b16 %v3330, %v3329
    %v4227 = vpack.c.b16 %v3332, %v3331
    %v4228 = vpack.c.b16 %v3334, %v3333
    %v4229 = vpack.c.b16 %v3336, %v3335
    %v4230 = vpack.c.b16 %v3338, %v3337
    %v4231 = vpack.c.b16 %v3340, %v3339
    %v4232 = vpack.c.b16 %v3342, %v3341
    %v4233 = vpack.c.b16 %v3344, %v3343
    %v4234 = vpack.c.b16 %v3346, %v3345
    %v4235 = vpack.c.b16 %v3348, %v3347
    %v4236 = vpack.c.b16 %v3350, %v3349
    %v4237 = vpack.c.b16 %v3352, %v3351
    %v4238 = vpack.c.b16 %v3354, %v3353
    %v4239 = vpack.c.b16 %v3356, %v3355
    %v4240 = vpack.c.b16 %v3358, %v3357
    %v4241 = vpack.c.b16 %v3360, %v3359
    %v4242 = vpack.c.b16 %v3362, %v3361
    %v4243 = vpack.c.b16 %v3364, %v3363
    %v4244 = vpack.c.b16 %v3366, %v3365
    %v4245 = vpack.c.b16 %v3368, %v3367
    %v4246 = vpack.c.b16 %v3370, %v3369
    %v4247 = vpack.c.b16 %v3372, %v3371
    %v4248 = vpack.c.b16 %v3374, %v3373
    %v4249 = vpack.c.b16 %v3376, %v3375
    %v4250 = vpack.c.b16 %v3378, %v3377
    %v4251 = vpack.c.b16 %v3380, %v3379
    %v4252 = vpack.c.b16 %v3382, %v3381
    %v4253 = vpack.c.b16 %v3384, %v3383
    %v4254 = vpack.c.b16 %v3386, %v3385
    %v4255 = vpack.c.b16 %v3388, %v3387
    %v4256 = vpack.c.b16 %v3390, %v3389
    %v4257 = vpack.c.b16 %v3392, %v3391
    %v4258 = vpack.c.b16 %v3394, %v3393
    %v4259 = vpack.c.b16 %v3396, %v3395
    %v4260 = vpack.c.b16 %v3398, %v3397
    %v4261 = vpack.c.b16 %v3400, %v3399
    %v4262 = vpack.c.b16 %v3402, %v3401
    %v4263 = vpack.c.b16 %v3404, %v3403
    %v4264 = vpack.c.b16 %v3406, %v3405
    %v4265 = vpack.c.b16 %v3408, %v3407
    %v4266 = vpack.c.b16 %v3410, %v3409
    %v4267 = vpack.c.b16 %v3412, %v3411
    %v4268 = vpack.c.b16 %v3414, %v3413
    %v4269 = vpack.c.b16 %v3416, %v3415
    %v4270 = vpack.c.b16 %v3418, %v3417
    %v4271 = vpack.c.b16 %v3420, %v3419
    %v4272 = vpack.c.b16 %v3422, %v3421
    %v4273 = vpack.c.b16 %v3424, %v3423
    %v4274 = vpack.c.b16 %v3426, %v3425
    %v4275 = vpack.c.b16 %v3428, %v3427
    %v4276 = vpack.c.b16 %v3430, %v3429
    %v4277 = vpack.c.b16 %v3432, %v3431
    %v4278 = vpack.c.b16 %v3434, %v3433
    %v4279 = vpack.c.b16 %v3436, %v3435
    %v4280 = vpack.c.b16 %v3438, %v3437
    %v4281 = vpack.c.b16 %v3440, %v3439
    %v4282 = vpack.c.b16 %v3442, %v3441
    %v4283 = vpack.c.b16 %v3444, %v3443
    %v4284 = vpack.c.b16 %v3446, %v3445
    %v4285 = vpack.c.b16 %v3448, %v3447
    %v4286 = vpack.c.b16 %v3450, %v3449
    %v4287 = vpack.c.b16 %v3452, %v3451
    %v4288 = vpack.c.b16 %v3454, %v3453
    %v4289 = vpack.c.b16 %v3456, %v3455
    %v4290 = vpack.c.b16 %v3458, %v3457
    %v4291 = vpack.c.b16 %v3460, %v3459
    %v4292 = vpack.c.b16 %v3462, %v3461
    %v4293 = vpack.c.b16 %v3464, %v3463
    %v4294 = vpack.c.b16 %v3466, %v3465
    %v4295 = vpack.c.b16 %v3468, %v3467
    %v4296 = vpack.c.b16 %v3470, %v3469
    %v4297 = vpack.c.b16 %v3472, %v3471
    %v4298 = vpack.c.b16 %v3474, %v3473
    %v4299 = vpack.c.b16 %v3476, %v3475
    %v4300 = vpack.c.b16 %v3478, %v3477
    %v4301 = vpack.c.b16 %v3480, %v3479
    %v4302 = vpack.c.b16 %v3482, %v3481
    %v4303 = vpack.c.b16 %v3484, %v3483
    %v4304 = vpack.c.b16 %v3486, %v3485
    %v4305 = vpack.c.b16 %v3488, %v3487
    %v4306 = vpack.c.b16 %v3490, %v3489
    %v4307 = vpack.c.b16 %v3492, %v3491
    %v4308 = vpack.c.b16 %v3494, %v3493
    %v4309 = vpack.c.b16 %v3496, %v3495
    %v4310 = vpack.c.b16 %v3498, %v3497
    %v4311 = vpack.c.b16 %v3500, %v3499
    %v4312 = vpack.c.b16 %v3502, %v3501
    %v4313 = vpack.c.b16 %v3504, %v3503
    %v4314 = vpack.c.b16 %v3506, %v3505
    %v4315 = vpack.c.b16 %v3508, %v3507
    %v4316 = vpack.c.b16 %v3510, %v3509
    %v4317 = vpack.c.b16 %v3512, %v3511
    %v4318 = vpack.c.b16 %v3514, %v3513
    %v4319 = vpack.c.b16 %v3516, %v3515
    %v4320 = vpack.c.b16 %v3518, %v3517
    %v4321 = vpack.c.b16 %v3520, %v3519
    %v4322 = vpack.c.b16 %v3522, %v3521
    %v4323 = vpack.c.b16 %v3524, %v3523
    %v4324 = vpack.c.b16 %v3526, %v3525
    %v4325 = vpack.c.b16 %v3528, %v3527
    %v4326 = vpack.c.b16 %v3530, %v3529
    %v4327 = vpack.c.b16 %v3532, %v3531
    %v4328 = vpack.c.b16 %v3534, %v3533
    %v4329 = vpack.c.b16 %v3536, %v3535
    %v4330 = vpack.c.b16 %v3538, %v3537
    %v4331 = vpack.c.b16 %v3540, %v3539
    %v4332 = vpack.c.b16 %v3542, %v3541
    %v4333 = vpack.c.b16 %v3544, %v3543
    %v4334 = vpack.c.b16 %v3546, %v3545
    %v4335 = vpack.c.b16 %v3548, %v3547
    %v4336 = vpack.c.b16 %v3550, %v3549
    %v4337 = vpack.c.b16 %v3552, %v3551
    %v4338 = vpack.c.b16 %v3554, %v3553
    %v4339 = vpack.c.b16 %v3556, %v3555
    %v4340 = vpack.c.b16 %v3558, %v3557
    %v4341 = vpack.c.b16 %v3560, %v3559
    %v4342 = vpack.c.b16 %v3562, %v3561
    %v4343 = vpack.c.b16 %v3564, %v3563
    %v4344 = vpack.c.b16 %v3566, %v3565
    %v4345 = vpack.c.b16 %v3568, %v3567
    %v4346 = vpack.c.b16 %v3570, %v3569
    %v4347 = vpack.c.b16 %v3572, %v3571
    %v4348 = vpack.c.b16 %v3574, %v3573
    %v4349 = vpack.c.b16 %v3576, %v3575
    %v4350 = vpack.c.b16 %v3578, %v3577
    %v4351 = vpack.c.b16 %v3580, %v3579
    %v4352 = vpack.c.b16 %v3582, %v3581
    %v4353 = vpack.c.b16 %v3584, %v3583
    %v4354 = vpack.c.b16 %v3586, %v3585
    %v4355 = vpack.c.b16 %v3588, %v3587
    %v4356 = vpack.c.b16 %v3590, %v3589
    %v4357 = vpack.c.b16 %v3592, %v3591
    %v4358 = vpack.c.b16 %v3594, %v3593
    %v4359 = vpack.c.b16 %v3596, %v3595
    %v4360 = vpack.c.b16 %v3598, %v3597
    %v4361 = vpack.c.b16 %v3600, %v3599
    %v4362 = vpack.c.b16 %v3602, %v3601
    %v4363 = vpack.c.b16 %v3604, %v3603
    %v4364 = vpack.c.b16 %v3606, %v3605
    %v4365 = vpack.c.b16 %v3608, %v3607
    %v4366 = vpack.c.b16 %v3610, %v3609
    %v4367 = vpack.c.b16 %v3612, %v3611
    %v4368 = vpack.c.b16 %v3614, %v3613
    %v4369 = vpack.c.b16 %v3616, %v3615
    %v4370 = vpack.c.b16 %v3618, %v3617
    %v4371 = vpack.c.b16 %v3620, %v3619
    %v4372 = vpack.c.b16 %v3622, %v3621
    %v4373 = vpack.c.b16 %v3624, %v3623
    %v4374 = vpack.c.b16 %v3626, %v3625
    %v4375 = vpack.c.b16 %v3628, %v3627
    %v4376 = vpack.c.b16 %v3630, %v3629
    %v4377 = vpack.c.b16 %v3632, %v3631
    %v4378 = vpack.c.b16 %v3634, %v3633
    %v4379 = vpack.c.b16 %v3636, %v3635
    %v4380 = vpack.c.b16 %v3638, %v3637
    %v4381 = vpack.c.b16 %v3640, %v3639
    %v4382 = vpack.c.b16 %v3642, %v3641
    %v4383 = vpack.c.b16 %v3644, %v3643
    %v4384 = vpack.c.b16 %v3646, %v3645
    %v4385 = vpack.c.b16 %v3648, %v3647
    %v4386 = vpack.c.b16 %v3650, %v3649
    %v4387 = vpack.c.b16 %v3652, %v3651
    %v4388 = vpack.c.b16 %v3654, %v3653
    %v4389 = vpack.c.b16 %v3656, %v3655
    %v4390 = vpack.c.b16 %v3658, %v3657
    %v4391 = vpack.c.b16 %v3660, %v3659
    %v4392 = vpack.c.b16 %v3662, %v3661
    %v4393 = vpack.c.b16 %v3664, %v3663
    %v4394 = vpack.c.b16 %v3666, %v3665
    %v4395 = vpack.c.b16 %v3668, %v3667
    %v4396 = vpack.c.b16 %v3670, %v3669
    %v4397 = vpack.c.b16 %v3672, %v3671
    %v4398 = vpack.c.b16 %v3674, %v3673
    %v4399 = vpack.c.b16 %v3676, %v3675
    %v4400 = vpack.c.b16 %v3678, %v3677
    %v4401 = vpack.c.b16 %v3680, %v3679
    %v4402 = vpack.c.b16 %v3682, %v3681
    %v4403 = vpack.c.b16 %v3684, %v3683
    %v4404 = vpack.c.b16 %v3686, %v3685
    %v4405 = vpack.c.b16 %v3688, %v3687
    %v4406 = vpack.c.b16 %v3690, %v3689
    %v4407 = vpack.c.b16 %v3692, %v3691
    %v4408 = vpack.c.b16 %v3694, %v3693
    %v4409 = vpack.c.b16 %v3696, %v3695
    %v4410 = vpack.c.b16 %v3698, %v3697
    %v4411 = vpack.c.b16 %v3700, %v3699
    %v4412 = vpack.c.b16 %v3702, %v3701
    %v4413 = vpack.c.b16 %v3704, %v3703
    %v4414 = vpack.c.b16 %v3706, %v3705
    %v4415 = vpack.c.b16 %v3708, %v3707
    %v4416 = vpack.c.b16 %v3710, %v3709
    %v4417 = vpack.c.b16 %v3712, %v3711
    %v4418 = vpack.c.b16 %v3714, %v3713
    %v4419 = vpack.c.b16 %v3716, %v3715
    %v4420 = vpack.c.b16 %v3718, %v3717
    %v4421 = vpack.c.b16 %v3720, %v3719
    %v4422 = vpack.c.b16 %v3722, %v3721
    %v4423 = vpack.c.b16 %v3724, %v3723
    %v4424 = vpack.c.b16 %v3726, %v3725
    %v4425 = vpack.c.b16 %v3728, %v3727
    %v4426 = vpack.c.b16 %v3730, %v3729
    %v4427 = vpack.c.b16 %v3732, %v3731
    %v4428 = vpack.c.b16 %v3734, %v3733
    %v4429 = vpack.c.b16 %v3736, %v3735
    %v4430 = vpack.c.b16 %v3738, %v3737
    %v4431 = vpack.c.b16 %v3740, %v3739
    %v4432 = vpack.c.b16 %v3742, %v3741
    %v4433 = vpack.c.b16 %v3744, %v3743
    %v4434 = vpack.c.b16 %v3746, %v3745
    %v4435 = vpack.c.b16 %v3748, %v3747
    %v4436 = vpack.c.b16 %v3750, %v3749
    %v4437 = vpack.c.b16 %v3752, %v3751
    %v4438 = vpack.c.b16 %v3754, %v3753
    %v4439 = vpack.c.b16 %v3756, %v3755
    %v4440 = vpack.c.b16 %v3758, %v3757
    %v4441 = vpack.c.b16 %v3760, %v3759
    %v4442 = vpack.c.b16 %v3762, %v3761
    %v4443 = vpack.c.b16 %v3764, %v3763
    %v4444 = vpack.c.b16 %v3766, %v3765
    %v4445 = vpack.c.b16 %v3768, %v3767
    %v4446 = vpack.c.b16 %v3770, %v3769
    %v4447 = vpack.c.b16 %v3772, %v3771
    %v4448 = vpack.c.b16 %v3774, %v3773
    %v4449 = vpack.c.b16 %v3776, %v3775
    %v4450 = vpack.c.b16 %v3778, %v3777
    %v4451 = vpack.c.b16 %v3780, %v3779
    %v4452 = vpack.c.b16 %v3782, %v3781
    %v4453 = vpack.c.b16 %v3784, %v3783
    %v4454 = vpack.c.b16 %v3786, %v3785
    %v4455 = vpack.c.b16 %v3788, %v3787
    %v4456 = vpack.c.b16 %v3790, %v3789
    %v4457 = vpack.c.b16 %v3792, %v3791
    %v4458 = vpack.c.b16 %v3794, %v3793
    %v4459 = vpack.c.b16 %v3796, %v3795
    %v4460 = vpack.c.b16 %v3798, %v3797
    %v4461 = vpack.c.b16 %v3800, %v3799
    %v4462 = vpack.c.b16 %v3802, %v3801
    %v4463 = vpack.c.b16 %v3804, %v3803
    %v4464 = vpack.c.b16 %v3806, %v3805
    %v4465 = vpack.c.b16 %v3808, %v3807
    %v4466 = vpack.c.b16 %v3810, %v3809
    %v4467 = vpack.c.b16 %v3812, %v3811
    %v4468 = vpack.c.b16 %v3814, %v3813
    %v4469 = vpack.c.b16 %v3816, %v3815
    %v4470 = vpack.c.b16 %v3818, %v3817
    %v4471 = vpack.c.b16 %v3820, %v3819
    %v4472 = vpack.c.b16 %v3822, %v3821
    %v4473 = vpack.c.b16 %v3824, %v3823
    %v4474 = vpack.c.b16 %v3826, %v3825
    %v4475 = vpack.c.b16 %v3828, %v3827
    %v4476 = vpack.c.b16 %v3830, %v3829
    %v4477 = vpack.c.b16 %v3832, %v3831
    %v4478 = vpack.c.b16 %v3834, %v3833
    %v4479 = vpack.c.b16 %v3836, %v3835
    %v4480 = vpack.c.b16 %v3838, %v3837
    %v4481 = vpack.c.b16 %v3840, %v3839
    %v4482 = vpack.c.b16 %v3842, %v3841
    %v4483 = vpack.c.b16 %v3844, %v3843
    %v4484 = vpack.c.b16 %v3846, %v3845
    %v4485 = vpack.c.b16 %v3848, %v3847
    %v4486 = vpack.c.b16 %v3850, %v3849
    %v4487 = vpack.c.b16 %v3852, %v3851
    %v4488 = vpack.c.b16 %v3854, %v3853
    %v4489 = vpack.c.b16 %v3856, %v3855
    %v4490 = vpack.c.b16 %v3858, %v3857
    %v4491 = vpack.c.b16 %v3860, %v3859
    %v4492 = vpack.c.b16 %v3862, %v3861
    %v4493 = vpack.c.b16 %v3864, %v3863
    %v4494 = vpack.c.b16 %v3866, %v3865
    %v4495 = vpack.c.b16 %v3868, %v3867
    %v4496 = vpack.c.b16 %v3870, %v3869
    %v4497 = vpack.c.b16 %v3872, %v3871
    %v4498 = vpack.c.b16 %v3874, %v3873
    %v4499 = vpack.c.b16 %v3876, %v3875
    %v4500 = vpack.c.b16 %v3878, %v3877
    %v4501 = vpack.c.b16 %v3880, %v3879
    %v4502 = vpack.c.b16 %v3882, %v3881
    %v4503 = vpack.c.b16 %v3884, %v3883
    %v4504 = vpack.c.b16 %v3886, %v3885
    %v4505 = vpack.c.b16 %v3888, %v3887
    %v4506 = vpack.c.b16 %v3890, %v3889
    %v4507 = vpack.c.b16 %v3892, %v3891
    %v4508 = vpack.c.b16 %v3894, %v3893
    %v4509 = vpack.c.b16 %v3896, %v3895
    %v4510 = vpack.c.b16 %v3898, %v3897
    %v4511 = vpack.c.b16 %v3900, %v3899
    %v4512 = vpack.c.b16 %v3902, %v3901
    %v4513 = vpack.c.b16 %v3904, %v3903
    %v4514 = vpack.c.b16 %v3906, %v3905
    %v4515 = vpack.c.b16 %v3908, %v3907
    %v4516 = vpack.c.b16 %v3910, %v3909
    %v4517 = vpack.c.b16 %v3912, %v3911
    %v4518 = vpack.c.b16 %v3914, %v3913
    %v4519 = vpack.c.b16 %v3916, %v3915
    %v4520 = vpack.c.b16 %v3918, %v3917
    %v4521 = vpack.c.b16 %v3920, %v3919
    %v4522 = vpack.c.b16 %v3922, %v3921
    %v4523 = vpack.c.b16 %v3924, %v3923
    %v4524 = vpack.c.b16 %v3926, %v3925
    %v4525 = vpack.c.b16 %v3928, %v3927
    %v4526 = vpack.c.b16 %v3930, %v3929
    %v4527 = vpack.c.b16 %v3932, %v3931
    %v4528 = vpack.c.b16 %v3934, %v3933
    %v4529 = vpack.c.b16 %v3936, %v3935
    %v4530 = vpack.c.b16 %v3938, %v3937
    %v4531 = vpack.c.b16 %v3940, %v3939
    %v4532 = vpack.c.b16 %v3942, %v3941
    %v4533 = vpack.c.b16 %v3944, %v3943
    %v4534 = vpack.c.b16 %v3946, %v3945
    %v4535 = vpack.c.b16 %v3948, %v3947
    %v4536 = vpack.c.b16 %v3950, %v3949
    %v4537 = vpack.c.b16 %v3952, %v3951
    %v4538 = vpack.c.b16 %v3954, %v3953
    %v4539 = vpack.c.b16 %v3956, %v3955
    %v4540 = vpack.c.b16 %v3958, %v3957
    %v4541 = vpack.c.b16 %v3960, %v3959
    %v4542 = vpack.c.b16 %v3962, %v3961
    %v4543 = vpack.c.b16 %v3964, %v3963
    %v4544 = vpack.c.b16 %v3966, %v3965
    %v4545 = vpack.c.b16 %v3968, %v3967
    %v4546 = vpack.c.b16 %v3970, %v3969
    %5123 = vmatprep.subr.bf16.mxu0 0
    %5124 = vmatpush1.bf16.msra.mxu0 %v3971
    %5125 = vmatprep.subr.bf16.mxu0 0
    %5126 = vmatpush1.bf16.msra.mxu0 %v3972
    %5127 = vmatprep.subr.bf16.mxu0 0
    %5128 = vmatpush1.bf16.msra.mxu0 %v3973
    %5129 = vmatprep.subr.bf16.mxu0 0
    %5130 = vmatpush1.bf16.msra.mxu0 %v3974
    %5131 = vmatprep.subr.bf16.mxu0 0
    %5132 = vmatpush1.bf16.msra.mxu0 %v3975
    %5133 = vmatprep.subr.bf16.mxu0 0
    %5134 = vmatpush1.bf16.msra.mxu0 %v3976
    %5135 = vmatprep.subr.bf16.mxu0 0
    %5136 = vmatpush1.bf16.msra.mxu0 %v3977
    %5137 = vmatprep.subr.bf16.mxu0 0
    %5138 = vmatpush1.bf16.msra.mxu0 %v3978
    %5139 = vmatprep.subr.bf16.mxu0 0
    %5140 = vmatpush1.bf16.msra.mxu0 %v3979
    %5141 = vmatprep.subr.bf16.mxu0 0
    %5142 = vmatpush1.bf16.msra.mxu0 %v3980
    %5143 = vmatprep.subr.bf16.mxu0 0
    %5144 = vmatpush1.bf16.msra.mxu0 %v3981
    %5145 = vmatprep.subr.bf16.mxu0 0
    %5146 = vmatpush1.bf16.msra.mxu0 %v3982
    %5147 = vmatprep.subr.bf16.mxu0 0
    %5148 = vmatpush1.bf16.msra.mxu0 %v3983
    %5149 = vmatprep.subr.bf16.mxu0 0
    %5150 = vmatpush1.bf16.msra.mxu0 %v3984
    %5151 = vmatprep.subr.bf16.mxu0 0
    %5152 = vmatpush1.bf16.msra.mxu0 %v3985
    %5153 = vmatprep.subr.bf16.mxu0 0
    %5154 = vmatpush1.bf16.msra.mxu0 %v3986
    %5155 = vmatprep.mubr.bf16.mxu0 %v437
    %5156 = vmatmul.mubr.bf16.gmra.mrb[0].mxu0 %v436
    %v5157 = vpop.f32.mrb[0].mxu0
    %v5158 = vadd.f32 %v1665, %v5157
    %v5159 = vpop.f32.mrb[0].mxu0
    %v5160 = vpop.f32.mrb[0].mxu0
    %v5161 = vpop.f32.mrb[0].mxu0
    %5162 = vdwg.mxu0
    %5163 = vmatprep.subr.bf16.mxu0 0
    %5164 = vmatpush1.bf16.msra.mxu0 %v3987
    %5165 = vmatprep.subr.bf16.mxu0 0
    %5166 = vmatpush1.bf16.msra.mxu0 %v3988
    %5167 = vmatprep.subr.bf16.mxu0 0
    %5168 = vmatpush1.bf16.msra.mxu0 %v3989
    %5169 = vmatprep.subr.bf16.mxu0 0
    %5170 = vmatpush1.bf16.msra.mxu0 %v3990
    %5171 = vmatprep.subr.bf16.mxu0 0
    %5172 = vmatpush1.bf16.msra.mxu0 %v3991
    %5173 = vmatprep.subr.bf16.mxu0 0
    %5174 = vmatpush1.bf16.msra.mxu0 %v3992
    %5175 = vmatprep.subr.bf16.mxu0 0
    %5176 = vmatpush1.bf16.msra.mxu0 %v3993
    %5177 = vmatprep.subr.bf16.mxu0 0
    %5178 = vmatpush1.bf16.msra.mxu0 %v3994
    %5179 = vmatprep.subr.bf16.mxu0 0
    %5180 = vmatpush1.bf16.msra.mxu0 %v3995
    %5181 = vmatprep.subr.bf16.mxu0 0
    %5182 = vmatpush1.bf16.msra.mxu0 %v3996
    %5183 = vmatprep.subr.bf16.mxu0 0
    %5184 = vmatpush1.bf16.msra.mxu0 %v3997
    %5185 = vmatprep.subr.bf16.mxu0 0
    %5186 = vmatpush1.bf16.msra.mxu0 %v3998
    %5187 = vmatprep.subr.bf16.mxu0 0
    %5188 = vmatpush1.bf16.msra.mxu0 %v3999
    %5189 = vmatprep.subr.bf16.mxu0 0
    %5190 = vmatpush1.bf16.msra.mxu0 %v4000
    %5191 = vmatprep.subr.bf16.mxu0 0
    %5192 = vmatpush1.bf16.msra.mxu0 %v4001
    %5193 = vmatprep.subr.bf16.mxu0 0
    %5194 = vmatpush1.bf16.msra.mxu0 %v4002
    %5195 = vmatprep.mubr.bf16.mxu0 %v439
    %5196 = vmatmul.mubr.bf16.gmra.mrb[0].mxu0 %v438
    %v5197 = vpop.f32.mrb[0].mxu0
    %v5198 = vadd.f32 %v5158, %v5197
    %v5199 = vpop.f32.mrb[0].mxu0
    %v5200 = vpop.f32.mrb[0].mxu0
    %v5201 = vpop.f32.mrb[0].mxu0
    %5202 = vdwg.mxu0
    %5203 = vmatprep.subr.bf16.mxu0 0
    %5204 = vmatpush1.bf16.msra.mxu0 %v4003
    %5205 = vmatprep.subr.bf16.mxu0 0
    %5206 = vmatpush1.bf16.msra.mxu0 %v4004
    %5207 = vmatprep.subr.bf16.mxu0 0
    %5208 = vmatpush1.bf16.msra.mxu0 %v4005
    %5209 = vmatprep.subr.bf16.mxu0 0
    %5210 = vmatpush1.bf16.msra.mxu0 %v4006
    %5211 = vmatprep.subr.bf16.mxu0 0
    %5212 = vmatpush1.bf16.msra.mxu0 %v4007
    %5213 = vmatprep.subr.bf16.mxu0 0
    %5214 = vmatpush1.bf16.msra.mxu0 %v4008
    %5215 = vmatprep.subr.bf16.mxu0 0
    %5216 = vmatpush1.bf16.msra.mxu0 %v4009
    %5217 = vmatprep.subr.bf16.mxu0 0
    %5218 = vmatpush1.bf16.msra.mxu0 %v4010
    %5219 = vmatprep.subr.bf16.mxu0 0
    %5220 = vmatpush1.bf16.msra.mxu0 %v4011
    %5221 = vmatprep.subr.bf16.mxu0 0
    %5222 = vmatpush1.bf16.msra.mxu0 %v4012
    %5223 = vmatprep.subr.bf16.mxu0 0
    %5224 = vmatpush1.bf16.msra.mxu0 %v4013
    %5225 = vmatprep.subr.bf16.mxu0 0
    %5226 = vmatpush1.bf16.msra.mxu0 %v4014
    %5227 = vmatprep.subr.bf16.mxu0 0
    %5228 = vmatpush1.bf16.msra.mxu0 %v4015
    %5229 = vmatprep.subr.bf16.mxu0 0
    %5230 = vmatpush1.bf16.msra.mxu0 %v4016
    %5231 = vmatprep.subr.bf16.mxu0 0
    %5232 = vmatpush1.bf16.msra.mxu0 %v4017
    %5233 = vmatprep.subr.bf16.mxu0 0
    %5234 = vmatpush1.bf16.msra.mxu0 %v4018
    %5235 = vmatprep.mubr.bf16.mxu0 %v441
    %5236 = vmatmul.mubr.bf16.gmra.mrb[0].mxu0 %v440
    %v5237 = vpop.f32.mrb[0].mxu0
    %v5238 = vadd.f32 %v5198, %v5237
    %v5239 = vpop.f32.mrb[0].mxu0
    %v5240 = vpop.f32.mrb[0].mxu0
    %v5241 = vpop.f32.mrb[0].mxu0
    %5242 = vdwg.mxu0
    %5243 = vmatprep.subr.bf16.mxu0 0
    %5244 = vmatpush1.bf16.msra.mxu0 %v4019
    %5245 = vmatprep.subr.bf16.mxu0 0
    %5246 = vmatpush1.bf16.msra.mxu0 %v4020
    %5247 = vmatprep.subr.bf16.mxu0 0
    %5248 = vmatpush1.bf16.msra.mxu0 %v4021
    %5249 = vmatprep.subr.bf16.mxu0 0
    %5250 = vmatpush1.bf16.msra.mxu0 %v4022
    %5251 = vmatprep.subr.bf16.mxu0 0
    %5252 = vmatpush1.bf16.msra.mxu0 %v4023
    %5253 = vmatprep.subr.bf16.mxu0 0
    %5254 = vmatpush1.bf16.msra.mxu0 %v4024
    %5255 = vmatprep.subr.bf16.mxu0 0
    %5256 = vmatpush1.bf16.msra.mxu0 %v4025
    %5257 = vmatprep.subr.bf16.mxu0 0
    %5258 = vmatpush1.bf16.msra.mxu0 %v4026
    %5259 = vmatprep.subr.bf16.mxu0 0
    %5260 = vmatpush1.bf16.msra.mxu0 %v4027
    %5261 = vmatprep.subr.bf16.mxu0 0
    %5262 = vmatpush1.bf16.msra.mxu0 %v4028
    %5263 = vmatprep.subr.bf16.mxu0 0
    %5264 = vmatpush1.bf16.msra.mxu0 %v4029
    %5265 = vmatprep.subr.bf16.mxu0 0
    %5266 = vmatpush1.bf16.msra.mxu0 %v4030
    %5267 = vmatprep.subr.bf16.mxu0 0
    %5268 = vmatpush1.bf16.msra.mxu0 %v4031
    %5269 = vmatprep.subr.bf16.mxu0 0
    %5270 = vmatpush1.bf16.msra.mxu0 %v4032
    %5271 = vmatprep.subr.bf16.mxu0 0
    %5272 = vmatpush1.bf16.msra.mxu0 %v4033
    %5273 = vmatprep.subr.bf16.mxu0 0
    %5274 = vmatpush1.bf16.msra.mxu0 %v4034
    %5275 = vmatprep.mubr.bf16.mxu0 %v443
    %5276 = vmatmul.mubr.bf16.gmra.mrb[0].mxu0 %v442
    %v5277 = vpop.f32.mrb[0].mxu0
    %v5278 = vadd.f32 %v5238, %v5277
    %v5279 = vpop.f32.mrb[0].mxu0
    %v5280 = vpop.f32.mrb[0].mxu0
    %v5281 = vpop.f32.mrb[0].mxu0
    %5282 = vdwg.mxu0
    %5283 = vmatprep.subr.bf16.mxu0 0
    %5284 = vmatpush1.bf16.msra.mxu0 %v4035
    %5285 = vmatprep.subr.bf16.mxu0 0
    %5286 = vmatpush1.bf16.msra.mxu0 %v4036
    %5287 = vmatprep.subr.bf16.mxu0 0
    %5288 = vmatpush1.bf16.msra.mxu0 %v4037
    %5289 = vmatprep.subr.bf16.mxu0 0
    %5290 = vmatpush1.bf16.msra.mxu0 %v4038
    %5291 = vmatprep.subr.bf16.mxu0 0
    %5292 = vmatpush1.bf16.msra.mxu0 %v4039
    %5293 = vmatprep.subr.bf16.mxu0 0
    %5294 = vmatpush1.bf16.msra.mxu0 %v4040
    %5295 = vmatprep.subr.bf16.mxu0 0
    %5296 = vmatpush1.bf16.msra.mxu0 %v4041
    %5297 = vmatprep.subr.bf16.mxu0 0
    %5298 = vmatpush1.bf16.msra.mxu0 %v4042
    %5299 = vmatprep.subr.bf16.mxu0 0
    %5300 = vmatpush1.bf16.msra.mxu0 %v4043
    %5301 = vmatprep.subr.bf16.mxu0 0
    %5302 = vmatpush1.bf16.msra.mxu0 %v4044
    %5303 = vmatprep.subr.bf16.mxu0 0
    %5304 = vmatpush1.bf16.msra.mxu0 %v4045
    %5305 = vmatprep.subr.bf16.mxu0 0
    %5306 = vmatpush1.bf16.msra.mxu0 %v4046
    %5307 = vmatprep.subr.bf16.mxu0 0
    %5308 = vmatpush1.bf16.msra.mxu0 %v4047
    %5309 = vmatprep.subr.bf16.mxu0 0
    %5310 = vmatpush1.bf16.msra.mxu0 %v4048
    %5311 = vmatprep.subr.bf16.mxu0 0
    %5312 = vmatpush1.bf16.msra.mxu0 %v4049
    %5313 = vmatprep.subr.bf16.mxu0 0
    %5314 = vmatpush1.bf16.msra.mxu0 %v4050
    %5315 = vmatprep.mubr.bf16.mxu0 %v445
    %5316 = vmatmul.mubr.bf16.gmra.mrb[0].mxu0 %v444
    %v5317 = vpop.f32.mrb[0].mxu0
    %v5318 = vadd.f32 %v5278, %v5317
    %v5319 = vpop.f32.mrb[0].mxu0
    %v5320 = vpop.f32.mrb[0].mxu0
    %v5321 = vpop.f32.mrb[0].mxu0
    %5322 = vdwg.mxu0
    %5323 = vmatprep.subr.bf16.mxu0 0
    %5324 = vmatpush1.bf16.msra.mxu0 %v4051
    %5325 = vmatprep.subr.bf16.mxu0 0
    %5326 = vmatpush1.bf16.msra.mxu0 %v4052
    %5327 = vmatprep.subr.bf16.mxu0 0
    %5328 = vmatpush1.bf16.msra.mxu0 %v4053
    %5329 = vmatprep.subr.bf16.mxu0 0
    %5330 = vmatpush1.bf16.msra.mxu0 %v4054
    %5331 = vmatprep.subr.bf16.mxu0 0
    %5332 = vmatpush1.bf16.msra.mxu0 %v4055
    %5333 = vmatprep.subr.bf16.mxu0 0
    %5334 = vmatpush1.bf16.msra.mxu0 %v4056
    %5335 = vmatprep.subr.bf16.mxu0 0
    %5336 = vmatpush1.bf16.msra.mxu0 %v4057
    %5337 = vmatprep.subr.bf16.mxu0 0
    %5338 = vmatpush1.bf16.msra.mxu0 %v4058
    %5339 = vmatprep.subr.bf16.mxu0 0
    %5340 = vmatpush1.bf16.msra.mxu0 %v4059
    %5341 = vmatprep.subr.bf16.mxu0 0
    %5342 = vmatpush1.bf16.msra.mxu0 %v4060
    %5343 = vmatprep.subr.bf16.mxu0 0
    %5344 = vmatpush1.bf16.msra.mxu0 %v4061
    %5345 = vmatprep.subr.bf16.mxu0 0
    %5346 = vmatpush1.bf16.msra.mxu0 %v4062
    %5347 = vmatprep.subr.bf16.mxu0 0
    %5348 = vmatpush1.bf16.msra.mxu0 %v4063
    %5349 = vmatprep.subr.bf16.mxu0 0
    %5350 = vmatpush1.bf16.msra.mxu0 %v4064
    %5351 = vmatprep.subr.bf16.mxu0 0
    %5352 = vmatpush1.bf16.msra.mxu0 %v4065
    %5353 = vmatprep.subr.bf16.mxu0 0
    %5354 = vmatpush1.bf16.msra.mxu0 %v4066
    %5355 = vmatprep.mubr.bf16.mxu0 %v447
    %5356 = vmatmul.mubr.bf16.gmra.mrb[0].mxu0 %v446
    %v5357 = vpop.f32.mrb[0].mxu0
    %v5358 = vadd.f32 %v5318, %v5357
    %v5359 = vpop.f32.mrb[0].mxu0
    %v5360 = vpop.f32.mrb[0].mxu0
    %v5361 = vpop.f32.mrb[0].mxu0
    %5362 = vdwg.mxu0
    %5363 = vmatprep.subr.bf16.mxu0 0
    %5364 = vmatpush1.bf16.msra.mxu0 %v4067
    %5365 = vmatprep.subr.bf16.mxu0 0
    %5366 = vmatpush1.bf16.msra.mxu0 %v4068
    %5367 = vmatprep.subr.bf16.mxu0 0
    %5368 = vmatpush1.bf16.msra.mxu0 %v4069
    %5369 = vmatprep.subr.bf16.mxu0 0
    %5370 = vmatpush1.bf16.msra.mxu0 %v4070
    %5371 = vmatprep.subr.bf16.mxu0 0
    %5372 = vmatpush1.bf16.msra.mxu0 %v4071
    %5373 = vmatprep.subr.bf16.mxu0 0
    %5374 = vmatpush1.bf16.msra.mxu0 %v4072
    %5375 = vmatprep.subr.bf16.mxu0 0
    %5376 = vmatpush1.bf16.msra.mxu0 %v4073
    %5377 = vmatprep.subr.bf16.mxu0 0
    %5378 = vmatpush1.bf16.msra.mxu0 %v4074
    %5379 = vmatprep.subr.bf16.mxu0 0
    %5380 = vmatpush1.bf16.msra.mxu0 %v4075
    %5381 = vmatprep.subr.bf16.mxu0 0
    %5382 = vmatpush1.bf16.msra.mxu0 %v4076
    %5383 = vmatprep.subr.bf16.mxu0 0
    %5384 = vmatpush1.bf16.msra.mxu0 %v4077
    %5385 = vmatprep.subr.bf16.mxu0 0
    %5386 = vmatpush1.bf16.msra.mxu0 %v4078
    %5387 = vmatprep.subr.bf16.mxu0 0
    %5388 = vmatpush1.bf16.msra.mxu0 %v4079
    %5389 = vmatprep.subr.bf16.mxu0 0
    %5390 = vmatpush1.bf16.msra.mxu0 %v4080
    %5391 = vmatprep.subr.bf16.mxu0 0
    %5392 = vmatpush1.bf16.msra.mxu0 %v4081
    %5393 = vmatprep.subr.bf16.mxu0 0
    %5394 = vmatpush1.bf16.msra.mxu0 %v4082
    %5395 = vmatprep.mubr.bf16.mxu0 %v449
    %5396 = vmatmul.mubr.bf16.gmra.mrb[0].mxu0 %v448
    %v5397 = vpop.f32.mrb[0].mxu0
    %v5398 = vadd.f32 %v5358, %v5397
    %v5399 = vpop.f32.mrb[0].mxu0
    %v5400 = vpop.f32.mrb[0].mxu0
    %v5401 = vpop.f32.mrb[0].mxu0
    %5402 = vdwg.mxu0
    %5403 = vmatprep.subr.bf16.mxu0 0
    %5404 = vmatpush1.bf16.msra.mxu0 %v4083
    %5405 = vmatprep.subr.bf16.mxu0 0
    %5406 = vmatpush1.bf16.msra.mxu0 %v4084
    %5407 = vmatprep.subr.bf16.mxu0 0
    %5408 = vmatpush1.bf16.msra.mxu0 %v4085
    %5409 = vmatprep.subr.bf16.mxu0 0
    %5410 = vmatpush1.bf16.msra.mxu0 %v4086
    %5411 = vmatprep.subr.bf16.mxu0 0
    %5412 = vmatpush1.bf16.msra.mxu0 %v4087
    %5413 = vmatprep.subr.bf16.mxu0 0
    %5414 = vmatpush1.bf16.msra.mxu0 %v4088
    %5415 = vmatprep.subr.bf16.mxu0 0
    %5416 = vmatpush1.bf16.msra.mxu0 %v4089
    %5417 = vmatprep.subr.bf16.mxu0 0
    %5418 = vmatpush1.bf16.msra.mxu0 %v4090
    %5419 = vmatprep.subr.bf16.mxu0 0
    %5420 = vmatpush1.bf16.msra.mxu0 %v4091
    %5421 = vmatprep.subr.bf16.mxu0 0
    %5422 = vmatpush1.bf16.msra.mxu0 %v4092
    %5423 = vmatprep.subr.bf16.mxu0 0
    %5424 = vmatpush1.bf16.msra.mxu0 %v4093
    %5425 = vmatprep.subr.bf16.mxu0 0
    %5426 = vmatpush1.bf16.msra.mxu0 %v4094
    %5427 = vmatprep.subr.bf16.mxu0 0
    %5428 = vmatpush1.bf16.msra.mxu0 %v4095
    %5429 = vmatprep.subr.bf16.mxu0 0
    %5430 = vmatpush1.bf16.msra.mxu0 %v4096
    %5431 = vmatprep.subr.bf16.mxu0 0
    %5432 = vmatpush1.bf16.msra.mxu0 %v4097
    %5433 = vmatprep.subr.bf16.mxu0 0
    %5434 = vmatpush1.bf16.msra.mxu0 %v4098
    %5435 = vmatprep.mubr.bf16.mxu0 %v451
    %5436 = vmatmul.mubr.bf16.gmra.mrb[0].mxu0 %v450
    %v5437 = vpop.f32.mrb[0].mxu0
    %v5438 = vadd.f32 %v5398, %v5437
    %v5439 = vpop.f32.mrb[0].mxu0
    %v5440 = vpop.f32.mrb[0].mxu0
    %v5441 = vpop.f32.mrb[0].mxu0
    %5442 = vdwg.mxu0
    %5443 = vmatprep.subr.bf16.mxu0 0
    %5444 = vmatpush1.bf16.msra.mxu0 %v4099
    %5445 = vmatprep.subr.bf16.mxu0 0
    %5446 = vmatpush1.bf16.msra.mxu0 %v4100
    %5447 = vmatprep.subr.bf16.mxu0 0
    %5448 = vmatpush1.bf16.msra.mxu0 %v4101
    %5449 = vmatprep.subr.bf16.mxu0 0
    %5450 = vmatpush1.bf16.msra.mxu0 %v4102
    %5451 = vmatprep.subr.bf16.mxu0 0
    %5452 = vmatpush1.bf16.msra.mxu0 %v4103
    %5453 = vmatprep.subr.bf16.mxu0 0
    %5454 = vmatpush1.bf16.msra.mxu0 %v4104
    %5455 = vmatprep.subr.bf16.mxu0 0
    %5456 = vmatpush1.bf16.msra.mxu0 %v4105
    %5457 = vmatprep.subr.bf16.mxu0 0
    %5458 = vmatpush1.bf16.msra.mxu0 %v4106
    %5459 = vmatprep.subr.bf16.mxu0 0
    %5460 = vmatpush1.bf16.msra.mxu0 %v4107
    %5461 = vmatprep.subr.bf16.mxu0 0
    %5462 = vmatpush1.bf16.msra.mxu0 %v4108
    %5463 = vmatprep.subr.bf16.mxu0 0
    %5464 = vmatpush1.bf16.msra.mxu0 %v4109
    %5465 = vmatprep.subr.bf16.mxu0 0
    %5466 = vmatpush1.bf16.msra.mxu0 %v4110
    %5467 = vmatprep.subr.bf16.mxu0 0
    %5468 = vmatpush1.bf16.msra.mxu0 %v4111
    %5469 = vmatprep.subr.bf16.mxu0 0
    %5470 = vmatpush1.bf16.msra.mxu0 %v4112
    %5471 = vmatprep.subr.bf16.mxu0 0
    %5472 = vmatpush1.bf16.msra.mxu0 %v4113
    %5473 = vmatprep.subr.bf16.mxu0 0
    %5474 = vmatpush1.bf16.msra.mxu0 %v4114
    %5475 = vmatprep.mubr.bf16.mxu0 %v453
    %5476 = vmatmul.mubr.bf16.gmra.mrb[0].mxu0 %v452
    %v5477 = vpop.f32.mrb[0].mxu0
    %v5478 = vadd.f32 %v5438, %v5477
    %v5479 = vpop.f32.mrb[0].mxu0
    %v5480 = vpop.f32.mrb[0].mxu0
    %v5481 = vpop.f32.mrb[0].mxu0
    %5482 = vdwg.mxu0
    %5483 = vmatprep.subr.bf16.mxu0 0
    %5484 = vmatpush1.bf16.msra.mxu0 %v4115
    %5485 = vmatprep.subr.bf16.mxu0 0
    %5486 = vmatpush1.bf16.msra.mxu0 %v4116
    %5487 = vmatprep.subr.bf16.mxu0 0
    %5488 = vmatpush1.bf16.msra.mxu0 %v4117
    %5489 = vmatprep.subr.bf16.mxu0 0
    %5490 = vmatpush1.bf16.msra.mxu0 %v4118
    %5491 = vmatprep.subr.bf16.mxu0 0
    %5492 = vmatpush1.bf16.msra.mxu0 %v4119
    %5493 = vmatprep.subr.bf16.mxu0 0
    %5494 = vmatpush1.bf16.msra.mxu0 %v4120
    %5495 = vmatprep.subr.bf16.mxu0 0
    %5496 = vmatpush1.bf16.msra.mxu0 %v4121
    %5497 = vmatprep.subr.bf16.mxu0 0
    %5498 = vmatpush1.bf16.msra.mxu0 %v4122
    %5499 = vmatprep.subr.bf16.mxu0 0
    %5500 = vmatpush1.bf16.msra.mxu0 %v4123
    %5501 = vmatprep.subr.bf16.mxu0 0
    %5502 = vmatpush1.bf16.msra.mxu0 %v4124
    %5503 = vmatprep.subr.bf16.mxu0 0
    %5504 = vmatpush1.bf16.msra.mxu0 %v4125
    %5505 = vmatprep.subr.bf16.mxu0 0
    %5506 = vmatpush1.bf16.msra.mxu0 %v4126
    %5507 = vmatprep.subr.bf16.mxu0 0
    %5508 = vmatpush1.bf16.msra.mxu0 %v4127
    %5509 = vmatprep.subr.bf16.mxu0 0
    %5510 = vmatpush1.bf16.msra.mxu0 %v4128
    %5511 = vmatprep.subr.bf16.mxu0 0
    %5512 = vmatpush1.bf16.msra.mxu0 %v4129
    %5513 = vmatprep.subr.bf16.mxu0 0
    %5514 = vmatpush1.bf16.msra.mxu0 %v4130
    %5515 = vmatprep.mubr.bf16.mxu0 %v455
    %5516 = vmatmul.mubr.bf16.gmra.mrb[0].mxu0 %v454
    %v5517 = vpop.f32.mrb[0].mxu0
    %v5518 = vadd.f32 %v5478, %v5517
    %v5519 = vpop.f32.mrb[0].mxu0
    %v5520 = vpop.f32.mrb[0].mxu0
    %v5521 = vpop.f32.mrb[0].mxu0
    %5522 = vdwg.mxu0
    %5523 = vmatprep.subr.bf16.mxu0 0
    %5524 = vmatpush1.bf16.msra.mxu0 %v4131
    %5525 = vmatprep.subr.bf16.mxu0 0
    %5526 = vmatpush1.bf16.msra.mxu0 %v4132
    %5527 = vmatprep.subr.bf16.mxu0 0
    %5528 = vmatpush1.bf16.msra.mxu0 %v4133
    %5529 = vmatprep.subr.bf16.mxu0 0
    %5530 = vmatpush1.bf16.msra.mxu0 %v4134
    %5531 = vmatprep.subr.bf16.mxu0 0
    %5532 = vmatpush1.bf16.msra.mxu0 %v4135
    %5533 = vmatprep.subr.bf16.mxu0 0
    %5534 = vmatpush1.bf16.msra.mxu0 %v4136
    %5535 = vmatprep.subr.bf16.mxu0 0
    %5536 = vmatpush1.bf16.msra.mxu0 %v4137
    %5537 = vmatprep.subr.bf16.mxu0 0
    %5538 = vmatpush1.bf16.msra.mxu0 %v4138
    %5539 = vmatprep.subr.bf16.mxu0 0
    %5540 = vmatpush1.bf16.msra.mxu0 %v4139
    %5541 = vmatprep.subr.bf16.mxu0 0
    %5542 = vmatpush1.bf16.msra.mxu0 %v4140
    %5543 = vmatprep.subr.bf16.mxu0 0
    %5544 = vmatpush1.bf16.msra.mxu0 %v4141
    %5545 = vmatprep.subr.bf16.mxu0 0
    %5546 = vmatpush1.bf16.msra.mxu0 %v4142
    %5547 = vmatprep.subr.bf16.mxu0 0
    %5548 = vmatpush1.bf16.msra.mxu0 %v4143
    %5549 = vmatprep.subr.bf16.mxu0 0
    %5550 = vmatpush1.bf16.msra.mxu0 %v4144
    %5551 = vmatprep.subr.bf16.mxu0 0
    %5552 = vmatpush1.bf16.msra.mxu0 %v4145
    %5553 = vmatprep.subr.bf16.mxu0 0
    %5554 = vmatpush1.bf16.msra.mxu0 %v4146
    %5555 = vmatprep.mubr.bf16.mxu0 %v457
    %5556 = vmatmul.mubr.bf16.gmra.mrb[0].mxu0 %v456
    %v5557 = vpop.f32.mrb[0].mxu0
    %v5558 = vadd.f32 %v5518, %v5557
    %v5559 = vpop.f32.mrb[0].mxu0
    %v5560 = vpop.f32.mrb[0].mxu0
    %v5561 = vpop.f32.mrb[0].mxu0
    %5562 = vdwg.mxu0
    %5563 = vmatprep.subr.bf16.mxu0 0
    %5564 = vmatpush1.bf16.msra.mxu0 %v4147
    %5565 = vmatprep.subr.bf16.mxu0 0
    %5566 = vmatpush1.bf16.msra.mxu0 %v4148
    %5567 = vmatprep.subr.bf16.mxu0 0
    %5568 = vmatpush1.bf16.msra.mxu0 %v4149
    %5569 = vmatprep.subr.bf16.mxu0 0
    %5570 = vmatpush1.bf16.msra.mxu0 %v4150
    %5571 = vmatprep.subr.bf16.mxu0 0
    %5572 = vmatpush1.bf16.msra.mxu0 %v4151
    %5573 = vmatprep.subr.bf16.mxu0 0
    %5574 = vmatpush1.bf16.msra.mxu0 %v4152
    %5575 = vmatprep.subr.bf16.mxu0 0
    %5576 = vmatpush1.bf16.msra.mxu0 %v4153
    %5577 = vmatprep.subr.bf16.mxu0 0
    %5578 = vmatpush1.bf16.msra.mxu0 %v4154
    %5579 = vmatprep.subr.bf16.mxu0 0
    %5580 = vmatpush1.bf16.msra.mxu0 %v4155
    %5581 = vmatprep.subr.bf16.mxu0 0
    %5582 = vmatpush1.bf16.msra.mxu0 %v4156
    %5583 = vmatprep.subr.bf16.mxu0 0
    %5584 = vmatpush1.bf16.msra.mxu0 %v4157
    %5585 = vmatprep.subr.bf16.mxu0 0
    %5586 = vmatpush1.bf16.msra.mxu0 %v4158
    %5587 = vmatprep.subr.bf16.mxu0 0
    %5588 = vmatpush1.bf16.msra.mxu0 %v4159
    %5589 = vmatprep.subr.bf16.mxu0 0
    %5590 = vmatpush1.bf16.msra.mxu0 %v4160
    %5591 = vmatprep.subr.bf16.mxu0 0
    %5592 = vmatpush1.bf16.msra.mxu0 %v4161
    %5593 = vmatprep.subr.bf16.mxu0 0
    %5594 = vmatpush1.bf16.msra.mxu0 %v4162
    %5595 = vmatprep.mubr.bf16.mxu0 %v459
    %5596 = vmatmul.mubr.bf16.gmra.mrb[0].mxu0 %v458
    %v5597 = vpop.f32.mrb[0].mxu0
    %v5598 = vadd.f32 %v5558, %v5597
    %v5599 = vpop.f32.mrb[0].mxu0
    %v5600 = vpop.f32.mrb[0].mxu0
    %v5601 = vpop.f32.mrb[0].mxu0
    %5602 = vdwg.mxu0
    %5603 = vmatprep.subr.bf16.mxu0 0
    %5604 = vmatpush1.bf16.msra.mxu0 %v4163
    %5605 = vmatprep.subr.bf16.mxu0 0
    %5606 = vmatpush1.bf16.msra.mxu0 %v4164
    %5607 = vmatprep.subr.bf16.mxu0 0
    %5608 = vmatpush1.bf16.msra.mxu0 %v4165
    %5609 = vmatprep.subr.bf16.mxu0 0
    %5610 = vmatpush1.bf16.msra.mxu0 %v4166
    %5611 = vmatprep.subr.bf16.mxu0 0
    %5612 = vmatpush1.bf16.msra.mxu0 %v4167
    %5613 = vmatprep.subr.bf16.mxu0 0
    %5614 = vmatpush1.bf16.msra.mxu0 %v4168
    %5615 = vmatprep.subr.bf16.mxu0 0
    %5616 = vmatpush1.bf16.msra.mxu0 %v4169
    %5617 = vmatprep.subr.bf16.mxu0 0
    %5618 = vmatpush1.bf16.msra.mxu0 %v4170
    %5619 = vmatprep.subr.bf16.mxu0 0
    %5620 = vmatpush1.bf16.msra.mxu0 %v4171
    %5621 = vmatprep.subr.bf16.mxu0 0
    %5622 = vmatpush1.bf16.msra.mxu0 %v4172
    %5623 = vmatprep.subr.bf16.mxu0 0
    %5624 = vmatpush1.bf16.msra.mxu0 %v4173
    %5625 = vmatprep.subr.bf16.mxu0 0
    %5626 = vmatpush1.bf16.msra.mxu0 %v4174
    %5627 = vmatprep.subr.bf16.mxu0 0
    %5628 = vmatpush1.bf16.msra.mxu0 %v4175
    %5629 = vmatprep.subr.bf16.mxu0 0
    %5630 = vmatpush1.bf16.msra.mxu0 %v4176
    %5631 = vmatprep.subr.bf16.mxu0 0
    %5632 = vmatpush1.bf16.msra.mxu0 %v4177
    %5633 = vmatprep.subr.bf16.mxu0 0
    %5634 = vmatpush1.bf16.msra.mxu0 %v4178
    %5635 = vmatprep.mubr.bf16.mxu0 %v461
    %5636 = vmatmul.mubr.bf16.gmra.mrb[0].mxu0 %v460
    %v5637 = vpop.f32.mrb[0].mxu0
    %v5638 = vadd.f32 %v5598, %v5637
    %v5639 = vpop.f32.mrb[0].mxu0
    %v5640 = vpop.f32.mrb[0].mxu0
    %v5641 = vpop.f32.mrb[0].mxu0
    %5642 = vdwg.mxu0
    %5643 = vmatprep.subr.bf16.mxu0 0
    %5644 = vmatpush1.bf16.msra.mxu0 %v4179
    %5645 = vmatprep.subr.bf16.mxu0 0
    %5646 = vmatpush1.bf16.msra.mxu0 %v4180
    %5647 = vmatprep.subr.bf16.mxu0 0
    %5648 = vmatpush1.bf16.msra.mxu0 %v4181
    %5649 = vmatprep.subr.bf16.mxu0 0
    %5650 = vmatpush1.bf16.msra.mxu0 %v4182
    %5651 = vmatprep.subr.bf16.mxu0 0
    %5652 = vmatpush1.bf16.msra.mxu0 %v4183
    %5653 = vmatprep.subr.bf16.mxu0 0
    %5654 = vmatpush1.bf16.msra.mxu0 %v4184
    %5655 = vmatprep.subr.bf16.mxu0 0
    %5656 = vmatpush1.bf16.msra.mxu0 %v4185
    %5657 = vmatprep.subr.bf16.mxu0 0
    %5658 = vmatpush1.bf16.msra.mxu0 %v4186
    %5659 = vmatprep.subr.bf16.mxu0 0
    %5660 = vmatpush1.bf16.msra.mxu0 %v4187
    %5661 = vmatprep.subr.bf16.mxu0 0
    %5662 = vmatpush1.bf16.msra.mxu0 %v4188
    %5663 = vmatprep.subr.bf16.mxu0 0
    %5664 = vmatpush1.bf16.msra.mxu0 %v4189
    %5665 = vmatprep.subr.bf16.mxu0 0
    %5666 = vmatpush1.bf16.msra.mxu0 %v4190
    %5667 = vmatprep.subr.bf16.mxu0 0
    %5668 = vmatpush1.bf16.msra.mxu0 %v4191
    %5669 = vmatprep.subr.bf16.mxu0 0
    %5670 = vmatpush1.bf16.msra.mxu0 %v4192
    %5671 = vmatprep.subr.bf16.mxu0 0
    %5672 = vmatpush1.bf16.msra.mxu0 %v4193
    %5673 = vmatprep.subr.bf16.mxu0 0
    %5674 = vmatpush1.bf16.msra.mxu0 %v4194
    %5675 = vmatprep.mubr.bf16.mxu0 %v463
    %5676 = vmatmul.mubr.bf16.gmra.mrb[0].mxu0 %v462
    %v5677 = vpop.f32.mrb[0].mxu0
    %v5678 = vadd.f32 %v5638, %v5677
    %v5679 = vpop.f32.mrb[0].mxu0
    %v5680 = vpop.f32.mrb[0].mxu0
    %v5681 = vpop.f32.mrb[0].mxu0
    %5682 = vdwg.mxu0
    %5683 = vmatprep.subr.bf16.mxu0 0
    %5684 = vmatpush1.bf16.msra.mxu0 %v4195
    %5685 = vmatprep.subr.bf16.mxu0 0
    %5686 = vmatpush1.bf16.msra.mxu0 %v4196
    %5687 = vmatprep.subr.bf16.mxu0 0
    %5688 = vmatpush1.bf16.msra.mxu0 %v4197
    %5689 = vmatprep.subr.bf16.mxu0 0
    %5690 = vmatpush1.bf16.msra.mxu0 %v4198
    %5691 = vmatprep.subr.bf16.mxu0 0
    %5692 = vmatpush1.bf16.msra.mxu0 %v4199
    %5693 = vmatprep.subr.bf16.mxu0 0
    %5694 = vmatpush1.bf16.msra.mxu0 %v4200
    %5695 = vmatprep.subr.bf16.mxu0 0
    %5696 = vmatpush1.bf16.msra.mxu0 %v4201
    %5697 = vmatprep.subr.bf16.mxu0 0
    %5698 = vmatpush1.bf16.msra.mxu0 %v4202
    %5699 = vmatprep.subr.bf16.mxu0 0
    %5700 = vmatpush1.bf16.msra.mxu0 %v4203
    %5701 = vmatprep.subr.bf16.mxu0 0
    %5702 = vmatpush1.bf16.msra.mxu0 %v4204
    %5703 = vmatprep.subr.bf16.mxu0 0
    %5704 = vmatpush1.bf16.msra.mxu0 %v4205
    %5705 = vmatprep.subr.bf16.mxu0 0
    %5706 = vmatpush1.bf16.msra.mxu0 %v4206
    %5707 = vmatprep.subr.bf16.mxu0 0
    %5708 = vmatpush1.bf16.msra.mxu0 %v4207
    %5709 = vmatprep.subr.bf16.mxu0 0
    %5710 = vmatpush1.bf16.msra.mxu0 %v4208
    %5711 = vmatprep.subr.bf16.mxu0 0
    %5712 = vmatpush1.bf16.msra.mxu0 %v4209
    %5713 = vmatprep.subr.bf16.mxu0 0
    %5714 = vmatpush1.bf16.msra.mxu0 %v4210
    %5715 = vmatprep.mubr.bf16.mxu0 %v465
    %5716 = vmatmul.mubr.bf16.gmra.mrb[0].mxu0 %v464
    %v5717 = vpop.f32.mrb[0].mxu0
    %v5718 = vadd.f32 %v5678, %v5717
    %v5719 = vpop.f32.mrb[0].mxu0
    %v5720 = vpop.f32.mrb[0].mxu0
    %v5721 = vpop.f32.mrb[0].mxu0
    %5722 = vdwg.mxu0
    %5723 = vmatprep.subr.bf16.mxu0 0
    %5724 = vmatpush1.bf16.msra.mxu0 %v4211
    %5725 = vmatprep.subr.bf16.mxu0 0
    %5726 = vmatpush1.bf16.msra.mxu0 %v4212
    %5727 = vmatprep.subr.bf16.mxu0 0
    %5728 = vmatpush1.bf16.msra.mxu0 %v4213
    %5729 = vmatprep.subr.bf16.mxu0 0
    %5730 = vmatpush1.bf16.msra.mxu0 %v4214
    %5731 = vmatprep.subr.bf16.mxu0 0
    %5732 = vmatpush1.bf16.msra.mxu0 %v4215
    %5733 = vmatprep.subr.bf16.mxu0 0
    %5734 = vmatpush1.bf16.msra.mxu0 %v4216
    %5735 = vmatprep.subr.bf16.mxu0 0
    %5736 = vmatpush1.bf16.msra.mxu0 %v4217
    %5737 = vmatprep.subr.bf16.mxu0 0
    %5738 = vmatpush1.bf16.msra.mxu0 %v4218
    %5739 = vmatprep.subr.bf16.mxu0 0
    %5740 = vmatpush1.bf16.msra.mxu0 %v4219
    %5741 = vmatprep.subr.bf16.mxu0 0
    %5742 = vmatpush1.bf16.msra.mxu0 %v4220
    %5743 = vmatprep.subr.bf16.mxu0 0
    %5744 = vmatpush1.bf16.msra.mxu0 %v4221
    %5745 = vmatprep.subr.bf16.mxu0 0
    %5746 = vmatpush1.bf16.msra.mxu0 %v4222
    %5747 = vmatprep.subr.bf16.mxu0 0
    %5748 = vmatpush1.bf16.msra.mxu0 %v4223
    %5749 = vmatprep.subr.bf16.mxu0 0
    %5750 = vmatpush1.bf16.msra.mxu0 %v4224
    %5751 = vmatprep.subr.bf16.mxu0 0
    %5752 = vmatpush1.bf16.msra.mxu0 %v4225
    %5753 = vmatprep.subr.bf16.mxu0 0
    %5754 = vmatpush1.bf16.msra.mxu0 %v4226
    %5755 = vmatprep.mubr.bf16.mxu0 %v467
    %5756 = vmatmul.mubr.bf16.gmra.mrb[0].mxu0 %v466
    %v5757 = vpop.f32.mrb[0].mxu0
    %v5758 = vadd.f32 %v5718, %v5757
    %v5759 = vpop.f32.mrb[0].mxu0
    %v5760 = vpop.f32.mrb[0].mxu0
    %v5761 = vpop.f32.mrb[0].mxu0
    %5762 = vdwg.mxu0
    %5763 = vmatprep.subr.bf16.mxu0 0
    %5764 = vmatpush1.bf16.msra.mxu0 %v4227
    %5765 = vmatprep.subr.bf16.mxu0 0
    %5766 = vmatpush1.bf16.msra.mxu0 %v4228
    %5767 = vmatprep.subr.bf16.mxu0 0
    %5768 = vmatpush1.bf16.msra.mxu0 %v4229
    %5769 = vmatprep.subr.bf16.mxu0 0
    %5770 = vmatpush1.bf16.msra.mxu0 %v4230
    %5771 = vmatprep.subr.bf16.mxu0 0
    %5772 = vmatpush1.bf16.msra.mxu0 %v4231
    %5773 = vmatprep.subr.bf16.mxu0 0
    %5774 = vmatpush1.bf16.msra.mxu0 %v4232
    %5775 = vmatprep.subr.bf16.mxu0 0
    %5776 = vmatpush1.bf16.msra.mxu0 %v4233
    %5777 = vmatprep.subr.bf16.mxu0 0
    %5778 = vmatpush1.bf16.msra.mxu0 %v4234
    %5779 = vmatprep.subr.bf16.mxu0 0
    %5780 = vmatpush1.bf16.msra.mxu0 %v4235
    %5781 = vmatprep.subr.bf16.mxu0 0
    %5782 = vmatpush1.bf16.msra.mxu0 %v4236
    %5783 = vmatprep.subr.bf16.mxu0 0
    %5784 = vmatpush1.bf16.msra.mxu0 %v4237
    %5785 = vmatprep.subr.bf16.mxu0 0
    %5786 = vmatpush1.bf16.msra.mxu0 %v4238
    %5787 = vmatprep.subr.bf16.mxu0 0
    %5788 = vmatpush1.bf16.msra.mxu0 %v4239
    %5789 = vmatprep.subr.bf16.mxu0 0
    %5790 = vmatpush1.bf16.msra.mxu0 %v4240
    %5791 = vmatprep.subr.bf16.mxu0 0
    %5792 = vmatpush1.bf16.msra.mxu0 %v4241
    %5793 = vmatprep.subr.bf16.mxu0 0
    %5794 = vmatpush1.bf16.msra.mxu0 %v4242
    %5795 = vmatprep.mubr.bf16.mxu0 %v469
    %5796 = vmatmul.mubr.bf16.gmra.mrb[0].mxu0 %v468
    %v5797 = vpop.f32.mrb[0].mxu0
    %v5798 = vadd.f32 %v5758, %v5797
    %v5799 = vpop.f32.mrb[0].mxu0
    %v5800 = vpop.f32.mrb[0].mxu0
    %v5801 = vpop.f32.mrb[0].mxu0
    %5802 = vdwg.mxu0
    %5803 = vmatprep.subr.bf16.mxu0 0
    %5804 = vmatpush1.bf16.msra.mxu0 %v4243
    %5805 = vmatprep.subr.bf16.mxu0 0
    %5806 = vmatpush1.bf16.msra.mxu0 %v4244
    %5807 = vmatprep.subr.bf16.mxu0 0
    %5808 = vmatpush1.bf16.msra.mxu0 %v4245
    %5809 = vmatprep.subr.bf16.mxu0 0
    %5810 = vmatpush1.bf16.msra.mxu0 %v4246
    %5811 = vmatprep.subr.bf16.mxu0 0
    %5812 = vmatpush1.bf16.msra.mxu0 %v4247
    %5813 = vmatprep.subr.bf16.mxu0 0
    %5814 = vmatpush1.bf16.msra.mxu0 %v4248
    %5815 = vmatprep.subr.bf16.mxu0 0
    %5816 = vmatpush1.bf16.msra.mxu0 %v4249
    %5817 = vmatprep.subr.bf16.mxu0 0
    %5818 = vmatpush1.bf16.msra.mxu0 %v4250
    %5819 = vmatprep.subr.bf16.mxu0 0
    %5820 = vmatpush1.bf16.msra.mxu0 %v4251
    %5821 = vmatprep.subr.bf16.mxu0 0
    %5822 = vmatpush1.bf16.msra.mxu0 %v4252
    %5823 = vmatprep.subr.bf16.mxu0 0
    %5824 = vmatpush1.bf16.msra.mxu0 %v4253
    %5825 = vmatprep.subr.bf16.mxu0 0
    %5826 = vmatpush1.bf16.msra.mxu0 %v4254
    %5827 = vmatprep.subr.bf16.mxu0 0
    %5828 = vmatpush1.bf16.msra.mxu0 %v4255
    %5829 = vmatprep.subr.bf16.mxu0 0
    %5830 = vmatpush1.bf16.msra.mxu0 %v4256
    %5831 = vmatprep.subr.bf16.mxu0 0
    %5832 = vmatpush1.bf16.msra.mxu0 %v4257
    %5833 = vmatprep.subr.bf16.mxu0 0
    %5834 = vmatpush1.bf16.msra.mxu0 %v4258
    %5835 = vmatprep.mubr.bf16.mxu0 %v471
    %5836 = vmatmul.mubr.bf16.gmra.mrb[0].mxu0 %v470
    %v5837 = vpop.f32.mrb[0].mxu0
    %v5838 = vadd.f32 %v5798, %v5837
    %v5839 = vpop.f32.mrb[0].mxu0
    %v5840 = vpop.f32.mrb[0].mxu0
    %v5841 = vpop.f32.mrb[0].mxu0
    %5842 = vdwg.mxu0
    %5843 = vmatprep.subr.bf16.mxu0 0
    %5844 = vmatpush1.bf16.msra.mxu0 %v4259
    %5845 = vmatprep.subr.bf16.mxu0 0
    %5846 = vmatpush1.bf16.msra.mxu0 %v4260
    %5847 = vmatprep.subr.bf16.mxu0 0
    %5848 = vmatpush1.bf16.msra.mxu0 %v4261
    %5849 = vmatprep.subr.bf16.mxu0 0
    %5850 = vmatpush1.bf16.msra.mxu0 %v4262
    %5851 = vmatprep.subr.bf16.mxu0 0
    %5852 = vmatpush1.bf16.msra.mxu0 %v4263
    %5853 = vmatprep.subr.bf16.mxu0 0
    %5854 = vmatpush1.bf16.msra.mxu0 %v4264
    %5855 = vmatprep.subr.bf16.mxu0 0
    %5856 = vmatpush1.bf16.msra.mxu0 %v4265
    %5857 = vmatprep.subr.bf16.mxu0 0
    %5858 = vmatpush1.bf16.msra.mxu0 %v4266
    %5859 = vmatprep.subr.bf16.mxu0 0
    %5860 = vmatpush1.bf16.msra.mxu0 %v4267
    %5861 = vmatprep.subr.bf16.mxu0 0
    %5862 = vmatpush1.bf16.msra.mxu0 %v4268
    %5863 = vmatprep.subr.bf16.mxu0 0
    %5864 = vmatpush1.bf16.msra.mxu0 %v4269
    %5865 = vmatprep.subr.bf16.mxu0 0
    %5866 = vmatpush1.bf16.msra.mxu0 %v4270
    %5867 = vmatprep.subr.bf16.mxu0 0
    %5868 = vmatpush1.bf16.msra.mxu0 %v4271
    %5869 = vmatprep.subr.bf16.mxu0 0
    %5870 = vmatpush1.bf16.msra.mxu0 %v4272
    %5871 = vmatprep.subr.bf16.mxu0 0
    %5872 = vmatpush1.bf16.msra.mxu0 %v4273
    %5873 = vmatprep.subr.bf16.mxu0 0
    %5874 = vmatpush1.bf16.msra.mxu0 %v4274
    %5875 = vmatprep.mubr.bf16.mxu0 %v473
    %5876 = vmatmul.mubr.bf16.gmra.mrb[0].mxu0 %v472
    %v5877 = vpop.f32.mrb[0].mxu0
    %v5878 = vadd.f32 %v5838, %v5877
    %v5879 = vpop.f32.mrb[0].mxu0
    %v5880 = vpop.f32.mrb[0].mxu0
    %v5881 = vpop.f32.mrb[0].mxu0
    %5882 = vdwg.mxu0
    %5883 = vmatprep.subr.bf16.mxu0 0
    %5884 = vmatpush1.bf16.msra.mxu0 %v4275
    %5885 = vmatprep.subr.bf16.mxu0 0
    %5886 = vmatpush1.bf16.msra.mxu0 %v4276
    %5887 = vmatprep.subr.bf16.mxu0 0
    %5888 = vmatpush1.bf16.msra.mxu0 %v4277
    %5889 = vmatprep.subr.bf16.mxu0 0
    %5890 = vmatpush1.bf16.msra.mxu0 %v4278
    %5891 = vmatprep.subr.bf16.mxu0 0
    %5892 = vmatpush1.bf16.msra.mxu0 %v4279
    %5893 = vmatprep.subr.bf16.mxu0 0
    %5894 = vmatpush1.bf16.msra.mxu0 %v4280
    %5895 = vmatprep.subr.bf16.mxu0 0
    %5896 = vmatpush1.bf16.msra.mxu0 %v4281
    %5897 = vmatprep.subr.bf16.mxu0 0
    %5898 = vmatpush1.bf16.msra.mxu0 %v4282
    %5899 = vmatprep.subr.bf16.mxu0 0
    %5900 = vmatpush1.bf16.msra.mxu0 %v4283
    %5901 = vmatprep.subr.bf16.mxu0 0
    %5902 = vmatpush1.bf16.msra.mxu0 %v4284
    %5903 = vmatprep.subr.bf16.mxu0 0
    %5904 = vmatpush1.bf16.msra.mxu0 %v4285
    %5905 = vmatprep.subr.bf16.mxu0 0
    %5906 = vmatpush1.bf16.msra.mxu0 %v4286
    %5907 = vmatprep.subr.bf16.mxu0 0
    %5908 = vmatpush1.bf16.msra.mxu0 %v4287
    %5909 = vmatprep.subr.bf16.mxu0 0
    %5910 = vmatpush1.bf16.msra.mxu0 %v4288
    %5911 = vmatprep.subr.bf16.mxu0 0
    %5912 = vmatpush1.bf16.msra.mxu0 %v4289
    %5913 = vmatprep.subr.bf16.mxu0 0
    %5914 = vmatpush1.bf16.msra.mxu0 %v4290
    %5915 = vmatprep.mubr.bf16.mxu0 %v475
    %5916 = vmatmul.mubr.bf16.gmra.mrb[0].mxu0 %v474
    %v5917 = vpop.f32.mrb[0].mxu0
    %v5918 = vadd.f32 %v5878, %v5917
    %v5919 = vpop.f32.mrb[0].mxu0
    %v5920 = vpop.f32.mrb[0].mxu0
    %v5921 = vpop.f32.mrb[0].mxu0
    %5922 = vdwg.mxu0
    %5923 = vmatprep.subr.bf16.mxu0 0
    %5924 = vmatpush1.bf16.msra.mxu0 %v4291
    %5925 = vmatprep.subr.bf16.mxu0 0
    %5926 = vmatpush1.bf16.msra.mxu0 %v4292
    %5927 = vmatprep.subr.bf16.mxu0 0
    %5928 = vmatpush1.bf16.msra.mxu0 %v4293
    %5929 = vmatprep.subr.bf16.mxu0 0
    %5930 = vmatpush1.bf16.msra.mxu0 %v4294
    %5931 = vmatprep.subr.bf16.mxu0 0
    %5932 = vmatpush1.bf16.msra.mxu0 %v4295
    %5933 = vmatprep.subr.bf16.mxu0 0
    %5934 = vmatpush1.bf16.msra.mxu0 %v4296
    %5935 = vmatprep.subr.bf16.mxu0 0
    %5936 = vmatpush1.bf16.msra.mxu0 %v4297
    %5937 = vmatprep.subr.bf16.mxu0 0
    %5938 = vmatpush1.bf16.msra.mxu0 %v4298
    %5939 = vmatprep.subr.bf16.mxu0 0
    %5940 = vmatpush1.bf16.msra.mxu0 %v4299
    %5941 = vmatprep.subr.bf16.mxu0 0
    %5942 = vmatpush1.bf16.msra.mxu0 %v4300
    %5943 = vmatprep.subr.bf16.mxu0 0
    %5944 = vmatpush1.bf16.msra.mxu0 %v4301
    %5945 = vmatprep.subr.bf16.mxu0 0
    %5946 = vmatpush1.bf16.msra.mxu0 %v4302
    %5947 = vmatprep.subr.bf16.mxu0 0
    %5948 = vmatpush1.bf16.msra.mxu0 %v4303
    %5949 = vmatprep.subr.bf16.mxu0 0
    %5950 = vmatpush1.bf16.msra.mxu0 %v4304
    %5951 = vmatprep.subr.bf16.mxu0 0
    %5952 = vmatpush1.bf16.msra.mxu0 %v4305
    %5953 = vmatprep.subr.bf16.mxu0 0
    %5954 = vmatpush1.bf16.msra.mxu0 %v4306
    %5955 = vmatprep.mubr.bf16.mxu0 %v477
    %5956 = vmatmul.mubr.bf16.gmra.mrb[0].mxu0 %v476
    %v5957 = vpop.f32.mrb[0].mxu0
    %v5958 = vadd.f32 %v5918, %v5957
    %v5959 = vpop.f32.mrb[0].mxu0
    %v5960 = vpop.f32.mrb[0].mxu0
    %v5961 = vpop.f32.mrb[0].mxu0
    %5962 = vdwg.mxu0
    %5963 = vmatprep.subr.bf16.mxu0 0
    %5964 = vmatpush1.bf16.msra.mxu0 %v4307
    %5965 = vmatprep.subr.bf16.mxu0 0
    %5966 = vmatpush1.bf16.msra.mxu0 %v4308
    %5967 = vmatprep.subr.bf16.mxu0 0
    %5968 = vmatpush1.bf16.msra.mxu0 %v4309
    %5969 = vmatprep.subr.bf16.mxu0 0
    %5970 = vmatpush1.bf16.msra.mxu0 %v4310
    %5971 = vmatprep.subr.bf16.mxu0 0
    %5972 = vmatpush1.bf16.msra.mxu0 %v4311
    %5973 = vmatprep.subr.bf16.mxu0 0
    %5974 = vmatpush1.bf16.msra.mxu0 %v4312
    %5975 = vmatprep.subr.bf16.mxu0 0
    %5976 = vmatpush1.bf16.msra.mxu0 %v4313
    %5977 = vmatprep.subr.bf16.mxu0 0
    %5978 = vmatpush1.bf16.msra.mxu0 %v4314
    %5979 = vmatprep.subr.bf16.mxu0 0
    %5980 = vmatpush1.bf16.msra.mxu0 %v4315
    %5981 = vmatprep.subr.bf16.mxu0 0
    %5982 = vmatpush1.bf16.msra.mxu0 %v4316
    %5983 = vmatprep.subr.bf16.mxu0 0
    %5984 = vmatpush1.bf16.msra.mxu0 %v4317
    %5985 = vmatprep.subr.bf16.mxu0 0
    %5986 = vmatpush1.bf16.msra.mxu0 %v4318
    %5987 = vmatprep.subr.bf16.mxu0 0
    %5988 = vmatpush1.bf16.msra.mxu0 %v4319
    %5989 = vmatprep.subr.bf16.mxu0 0
    %5990 = vmatpush1.bf16.msra.mxu0 %v4320
    %5991 = vmatprep.subr.bf16.mxu0 0
    %5992 = vmatpush1.bf16.msra.mxu0 %v4321
    %5993 = vmatprep.subr.bf16.mxu0 0
    %5994 = vmatpush1.bf16.msra.mxu0 %v4322
    %5995 = vmatprep.mubr.bf16.mxu0 %v479
    %5996 = vmatmul.mubr.bf16.gmra.mrb[0].mxu0 %v478
    %v5997 = vpop.f32.mrb[0].mxu0
    %v5998 = vadd.f32 %v5958, %v5997
    %v5999 = vpop.f32.mrb[0].mxu0
    %v6000 = vpop.f32.mrb[0].mxu0
    %v6001 = vpop.f32.mrb[0].mxu0
    %6002 = vdwg.mxu0
    %6003 = vmatprep.subr.bf16.mxu0 0
    %6004 = vmatpush1.bf16.msra.mxu0 %v4323
    %6005 = vmatprep.subr.bf16.mxu0 0
    %6006 = vmatpush1.bf16.msra.mxu0 %v4324
    %6007 = vmatprep.subr.bf16.mxu0 0
    %6008 = vmatpush1.bf16.msra.mxu0 %v4325
    %6009 = vmatprep.subr.bf16.mxu0 0
    %6010 = vmatpush1.bf16.msra.mxu0 %v4326
    %6011 = vmatprep.subr.bf16.mxu0 0
    %6012 = vmatpush1.bf16.msra.mxu0 %v4327
    %6013 = vmatprep.subr.bf16.mxu0 0
    %6014 = vmatpush1.bf16.msra.mxu0 %v4328
    %6015 = vmatprep.subr.bf16.mxu0 0
    %6016 = vmatpush1.bf16.msra.mxu0 %v4329
    %6017 = vmatprep.subr.bf16.mxu0 0
    %6018 = vmatpush1.bf16.msra.mxu0 %v4330
    %6019 = vmatprep.subr.bf16.mxu0 0
    %6020 = vmatpush1.bf16.msra.mxu0 %v4331
    %6021 = vmatprep.subr.bf16.mxu0 0
    %6022 = vmatpush1.bf16.msra.mxu0 %v4332
    %6023 = vmatprep.subr.bf16.mxu0 0
    %6024 = vmatpush1.bf16.msra.mxu0 %v4333
    %6025 = vmatprep.subr.bf16.mxu0 0
    %6026 = vmatpush1.bf16.msra.mxu0 %v4334
    %6027 = vmatprep.subr.bf16.mxu0 0
    %6028 = vmatpush1.bf16.msra.mxu0 %v4335
    %6029 = vmatprep.subr.bf16.mxu0 0
    %6030 = vmatpush1.bf16.msra.mxu0 %v4336
    %6031 = vmatprep.subr.bf16.mxu0 0
    %6032 = vmatpush1.bf16.msra.mxu0 %v4337
    %6033 = vmatprep.subr.bf16.mxu0 0
    %6034 = vmatpush1.bf16.msra.mxu0 %v4338
    %6035 = vmatprep.mubr.bf16.mxu0 %v481
    %6036 = vmatmul.mubr.bf16.gmra.mrb[0].mxu0 %v480
    %v6037 = vpop.f32.mrb[0].mxu0
    %v6038 = vadd.f32 %v5998, %v6037
    %v6039 = vpop.f32.mrb[0].mxu0
    %v6040 = vpop.f32.mrb[0].mxu0
    %v6041 = vpop.f32.mrb[0].mxu0
    %6042 = vdwg.mxu0
    %6043 = vmatprep.subr.bf16.mxu0 0
    %6044 = vmatpush1.bf16.msra.mxu0 %v4339
    %6045 = vmatprep.subr.bf16.mxu0 0
    %6046 = vmatpush1.bf16.msra.mxu0 %v4340
    %6047 = vmatprep.subr.bf16.mxu0 0
    %6048 = vmatpush1.bf16.msra.mxu0 %v4341
    %6049 = vmatprep.subr.bf16.mxu0 0
    %6050 = vmatpush1.bf16.msra.mxu0 %v4342
    %6051 = vmatprep.subr.bf16.mxu0 0
    %6052 = vmatpush1.bf16.msra.mxu0 %v4343
    %6053 = vmatprep.subr.bf16.mxu0 0
    %6054 = vmatpush1.bf16.msra.mxu0 %v4344
    %6055 = vmatprep.subr.bf16.mxu0 0
    %6056 = vmatpush1.bf16.msra.mxu0 %v4345
    %6057 = vmatprep.subr.bf16.mxu0 0
    %6058 = vmatpush1.bf16.msra.mxu0 %v4346
    %6059 = vmatprep.subr.bf16.mxu0 0
    %6060 = vmatpush1.bf16.msra.mxu0 %v4347
    %6061 = vmatprep.subr.bf16.mxu0 0
    %6062 = vmatpush1.bf16.msra.mxu0 %v4348
    %6063 = vmatprep.subr.bf16.mxu0 0
    %6064 = vmatpush1.bf16.msra.mxu0 %v4349
    %6065 = vmatprep.subr.bf16.mxu0 0
    %6066 = vmatpush1.bf16.msra.mxu0 %v4350
    %6067 = vmatprep.subr.bf16.mxu0 0
    %6068 = vmatpush1.bf16.msra.mxu0 %v4351
    %6069 = vmatprep.subr.bf16.mxu0 0
    %6070 = vmatpush1.bf16.msra.mxu0 %v4352
    %6071 = vmatprep.subr.bf16.mxu0 0
    %6072 = vmatpush1.bf16.msra.mxu0 %v4353
    %6073 = vmatprep.subr.bf16.mxu0 0
    %6074 = vmatpush1.bf16.msra.mxu0 %v4354
    %6075 = vmatprep.mubr.bf16.mxu0 %v483
    %6076 = vmatmul.mubr.bf16.gmra.mrb[0].mxu0 %v482
    %v6077 = vpop.f32.mrb[0].mxu0
    %v6078 = vadd.f32 %v6038, %v6077
    %v6079 = vpop.f32.mrb[0].mxu0
    %v6080 = vpop.f32.mrb[0].mxu0
    %v6081 = vpop.f32.mrb[0].mxu0
    %6082 = vdwg.mxu0
    %6083 = vmatprep.subr.bf16.mxu0 0
    %6084 = vmatpush1.bf16.msra.mxu0 %v4355
    %6085 = vmatprep.subr.bf16.mxu0 0
    %6086 = vmatpush1.bf16.msra.mxu0 %v4356
    %6087 = vmatprep.subr.bf16.mxu0 0
    %6088 = vmatpush1.bf16.msra.mxu0 %v4357
    %6089 = vmatprep.subr.bf16.mxu0 0
    %6090 = vmatpush1.bf16.msra.mxu0 %v4358
    %6091 = vmatprep.subr.bf16.mxu0 0
    %6092 = vmatpush1.bf16.msra.mxu0 %v4359
    %6093 = vmatprep.subr.bf16.mxu0 0
    %6094 = vmatpush1.bf16.msra.mxu0 %v4360
    %6095 = vmatprep.subr.bf16.mxu0 0
    %6096 = vmatpush1.bf16.msra.mxu0 %v4361
    %6097 = vmatprep.subr.bf16.mxu0 0
    %6098 = vmatpush1.bf16.msra.mxu0 %v4362
    %6099 = vmatprep.subr.bf16.mxu0 0
    %6100 = vmatpush1.bf16.msra.mxu0 %v4363
    %6101 = vmatprep.subr.bf16.mxu0 0
    %6102 = vmatpush1.bf16.msra.mxu0 %v4364
    %6103 = vmatprep.subr.bf16.mxu0 0
    %6104 = vmatpush1.bf16.msra.mxu0 %v4365
    %6105 = vmatprep.subr.bf16.mxu0 0
    %6106 = vmatpush1.bf16.msra.mxu0 %v4366
    %6107 = vmatprep.subr.bf16.mxu0 0
    %6108 = vmatpush1.bf16.msra.mxu0 %v4367
    %6109 = vmatprep.subr.bf16.mxu0 0
    %6110 = vmatpush1.bf16.msra.mxu0 %v4368
    %6111 = vmatprep.subr.bf16.mxu0 0
    %6112 = vmatpush1.bf16.msra.mxu0 %v4369
    %6113 = vmatprep.subr.bf16.mxu0 0
    %6114 = vmatpush1.bf16.msra.mxu0 %v4370
    %6115 = vmatprep.mubr.bf16.mxu0 %v485
    %6116 = vmatmul.mubr.bf16.gmra.mrb[0].mxu0 %v484
    %v6117 = vpop.f32.mrb[0].mxu0
    %v6118 = vadd.f32 %v6078, %v6117
    %v6119 = vpop.f32.mrb[0].mxu0
    %v6120 = vpop.f32.mrb[0].mxu0
    %v6121 = vpop.f32.mrb[0].mxu0
    %6122 = vdwg.mxu0
    %6123 = vmatprep.subr.bf16.mxu0 0
    %6124 = vmatpush1.bf16.msra.mxu0 %v4371
    %6125 = vmatprep.subr.bf16.mxu0 0
    %6126 = vmatpush1.bf16.msra.mxu0 %v4372
    %6127 = vmatprep.subr.bf16.mxu0 0
    %6128 = vmatpush1.bf16.msra.mxu0 %v4373
    %6129 = vmatprep.subr.bf16.mxu0 0
    %6130 = vmatpush1.bf16.msra.mxu0 %v4374
    %6131 = vmatprep.subr.bf16.mxu0 0
    %6132 = vmatpush1.bf16.msra.mxu0 %v4375
    %6133 = vmatprep.subr.bf16.mxu0 0
    %6134 = vmatpush1.bf16.msra.mxu0 %v4376
    %6135 = vmatprep.subr.bf16.mxu0 0
    %6136 = vmatpush1.bf16.msra.mxu0 %v4377
    %6137 = vmatprep.subr.bf16.mxu0 0
    %6138 = vmatpush1.bf16.msra.mxu0 %v4378
    %6139 = vmatprep.subr.bf16.mxu0 0
    %6140 = vmatpush1.bf16.msra.mxu0 %v4379
    %6141 = vmatprep.subr.bf16.mxu0 0
    %6142 = vmatpush1.bf16.msra.mxu0 %v4380
    %6143 = vmatprep.subr.bf16.mxu0 0
    %6144 = vmatpush1.bf16.msra.mxu0 %v4381
    %6145 = vmatprep.subr.bf16.mxu0 0
    %6146 = vmatpush1.bf16.msra.mxu0 %v4382
    %6147 = vmatprep.subr.bf16.mxu0 0
    %6148 = vmatpush1.bf16.msra.mxu0 %v4383
    %6149 = vmatprep.subr.bf16.mxu0 0
    %6150 = vmatpush1.bf16.msra.mxu0 %v4384
    %6151 = vmatprep.subr.bf16.mxu0 0
    %6152 = vmatpush1.bf16.msra.mxu0 %v4385
    %6153 = vmatprep.subr.bf16.mxu0 0
    %6154 = vmatpush1.bf16.msra.mxu0 %v4386
    %6155 = vmatprep.mubr.bf16.mxu0 %v487
    %6156 = vmatmul.mubr.bf16.gmra.mrb[0].mxu0 %v486
    %v6157 = vpop.f32.mrb[0].mxu0
    %v6158 = vadd.f32 %v6118, %v6157
    %v6159 = vpop.f32.mrb[0].mxu0
    %v6160 = vpop.f32.mrb[0].mxu0
    %v6161 = vpop.f32.mrb[0].mxu0
    %6162 = vdwg.mxu0
    %6163 = vmatprep.subr.bf16.mxu0 0
    %6164 = vmatpush1.bf16.msra.mxu0 %v4387
    %6165 = vmatprep.subr.bf16.mxu0 0
    %6166 = vmatpush1.bf16.msra.mxu0 %v4388
    %6167 = vmatprep.subr.bf16.mxu0 0
    %6168 = vmatpush1.bf16.msra.mxu0 %v4389
    %6169 = vmatprep.subr.bf16.mxu0 0
    %6170 = vmatpush1.bf16.msra.mxu0 %v4390
    %6171 = vmatprep.subr.bf16.mxu0 0
    %6172 = vmatpush1.bf16.msra.mxu0 %v4391
    %6173 = vmatprep.subr.bf16.mxu0 0
    %6174 = vmatpush1.bf16.msra.mxu0 %v4392
    %6175 = vmatprep.subr.bf16.mxu0 0
    %6176 = vmatpush1.bf16.msra.mxu0 %v4393
    %6177 = vmatprep.subr.bf16.mxu0 0
    %6178 = vmatpush1.bf16.msra.mxu0 %v4394
    %6179 = vmatprep.subr.bf16.mxu0 0
    %6180 = vmatpush1.bf16.msra.mxu0 %v4395
    %6181 = vmatprep.subr.bf16.mxu0 0
    %6182 = vmatpush1.bf16.msra.mxu0 %v4396
    %6183 = vmatprep.subr.bf16.mxu0 0
    %6184 = vmatpush1.bf16.msra.mxu0 %v4397
    %6185 = vmatprep.subr.bf16.mxu0 0
    %6186 = vmatpush1.bf16.msra.mxu0 %v4398
    %6187 = vmatprep.subr.bf16.mxu0 0
    %6188 = vmatpush1.bf16.msra.mxu0 %v4399
    %6189 = vmatprep.subr.bf16.mxu0 0
    %6190 = vmatpush1.bf16.msra.mxu0 %v4400
    %6191 = vmatprep.subr.bf16.mxu0 0
    %6192 = vmatpush1.bf16.msra.mxu0 %v4401
    %6193 = vmatprep.subr.bf16.mxu0 0
    %6194 = vmatpush1.bf16.msra.mxu0 %v4402
    %6195 = vmatprep.mubr.bf16.mxu0 %v489
    %6196 = vmatmul.mubr.bf16.gmra.mrb[0].mxu0 %v488
    %v6197 = vpop.f32.mrb[0].mxu0
    %v6198 = vadd.f32 %v6158, %v6197
    %v6199 = vpop.f32.mrb[0].mxu0
    %v6200 = vpop.f32.mrb[0].mxu0
    %v6201 = vpop.f32.mrb[0].mxu0
    %6202 = vdwg.mxu0
    %6203 = vmatprep.subr.bf16.mxu0 0
    %6204 = vmatpush1.bf16.msra.mxu0 %v4403
    %6205 = vmatprep.subr.bf16.mxu0 0
    %6206 = vmatpush1.bf16.msra.mxu0 %v4404
    %6207 = vmatprep.subr.bf16.mxu0 0
    %6208 = vmatpush1.bf16.msra.mxu0 %v4405
    %6209 = vmatprep.subr.bf16.mxu0 0
    %6210 = vmatpush1.bf16.msra.mxu0 %v4406
    %6211 = vmatprep.subr.bf16.mxu0 0
    %6212 = vmatpush1.bf16.msra.mxu0 %v4407
    %6213 = vmatprep.subr.bf16.mxu0 0
    %6214 = vmatpush1.bf16.msra.mxu0 %v4408
    %6215 = vmatprep.subr.bf16.mxu0 0
    %6216 = vmatpush1.bf16.msra.mxu0 %v4409
    %6217 = vmatprep.subr.bf16.mxu0 0
    %6218 = vmatpush1.bf16.msra.mxu0 %v4410
    %6219 = vmatprep.subr.bf16.mxu0 0
    %6220 = vmatpush1.bf16.msra.mxu0 %v4411
    %6221 = vmatprep.subr.bf16.mxu0 0
    %6222 = vmatpush1.bf16.msra.mxu0 %v4412
    %6223 = vmatprep.subr.bf16.mxu0 0
    %6224 = vmatpush1.bf16.msra.mxu0 %v4413
    %6225 = vmatprep.subr.bf16.mxu0 0
    %6226 = vmatpush1.bf16.msra.mxu0 %v4414
    %6227 = vmatprep.subr.bf16.mxu0 0
    %6228 = vmatpush1.bf16.msra.mxu0 %v4415
    %6229 = vmatprep.subr.bf16.mxu0 0
    %6230 = vmatpush1.bf16.msra.mxu0 %v4416
    %6231 = vmatprep.subr.bf16.mxu0 0
    %6232 = vmatpush1.bf16.msra.mxu0 %v4417
    %6233 = vmatprep.subr.bf16.mxu0 0
    %6234 = vmatpush1.bf16.msra.mxu0 %v4418
    %6235 = vmatprep.mubr.bf16.mxu0 %v491
    %6236 = vmatmul.mubr.bf16.gmra.mrb[0].mxu0 %v490
    %v6237 = vpop.f32.mrb[0].mxu0
    %v6238 = vadd.f32 %v6198, %v6237
    %v6239 = vpop.f32.mrb[0].mxu0
    %v6240 = vpop.f32.mrb[0].mxu0
    %v6241 = vpop.f32.mrb[0].mxu0
    %6242 = vdwg.mxu0
    %6243 = vmatprep.subr.bf16.mxu0 0
    %6244 = vmatpush1.bf16.msra.mxu0 %v4419
    %6245 = vmatprep.subr.bf16.mxu0 0
    %6246 = vmatpush1.bf16.msra.mxu0 %v4420
    %6247 = vmatprep.subr.bf16.mxu0 0
    %6248 = vmatpush1.bf16.msra.mxu0 %v4421
    %6249 = vmatprep.subr.bf16.mxu0 0
    %6250 = vmatpush1.bf16.msra.mxu0 %v4422
    %6251 = vmatprep.subr.bf16.mxu0 0
    %6252 = vmatpush1.bf16.msra.mxu0 %v4423
    %6253 = vmatprep.subr.bf16.mxu0 0
    %6254 = vmatpush1.bf16.msra.mxu0 %v4424
    %6255 = vmatprep.subr.bf16.mxu0 0
    %6256 = vmatpush1.bf16.msra.mxu0 %v4425
    %6257 = vmatprep.subr.bf16.mxu0 0
    %6258 = vmatpush1.bf16.msra.mxu0 %v4426
    %6259 = vmatprep.subr.bf16.mxu0 0
    %6260 = vmatpush1.bf16.msra.mxu0 %v4427
    %6261 = vmatprep.subr.bf16.mxu0 0
    %6262 = vmatpush1.bf16.msra.mxu0 %v4428
    %6263 = vmatprep.subr.bf16.mxu0 0
    %6264 = vmatpush1.bf16.msra.mxu0 %v4429
    %6265 = vmatprep.subr.bf16.mxu0 0
    %6266 = vmatpush1.bf16.msra.mxu0 %v4430
    %6267 = vmatprep.subr.bf16.mxu0 0
    %6268 = vmatpush1.bf16.msra.mxu0 %v4431
    %6269 = vmatprep.subr.bf16.mxu0 0
    %6270 = vmatpush1.bf16.msra.mxu0 %v4432
    %6271 = vmatprep.subr.bf16.mxu0 0
    %6272 = vmatpush1.bf16.msra.mxu0 %v4433
    %6273 = vmatprep.subr.bf16.mxu0 0
    %6274 = vmatpush1.bf16.msra.mxu0 %v4434
    %6275 = vmatprep.mubr.bf16.mxu0 %v493
    %6276 = vmatmul.mubr.bf16.gmra.mrb[0].mxu0 %v492
    %v6277 = vpop.f32.mrb[0].mxu0
    %v6278 = vadd.f32 %v6238, %v6277
    %v6279 = vpop.f32.mrb[0].mxu0
    %v6280 = vpop.f32.mrb[0].mxu0
    %v6281 = vpop.f32.mrb[0].mxu0
    %6282 = vdwg.mxu0
    %6283 = vmatprep.subr.bf16.mxu0 0
    %6284 = vmatpush1.bf16.msra.mxu0 %v4435
    %6285 = vmatprep.subr.bf16.mxu0 0
    %6286 = vmatpush1.bf16.msra.mxu0 %v4436
    %6287 = vmatprep.subr.bf16.mxu0 0
    %6288 = vmatpush1.bf16.msra.mxu0 %v4437
    %6289 = vmatprep.subr.bf16.mxu0 0
    %6290 = vmatpush1.bf16.msra.mxu0 %v4438
    %6291 = vmatprep.subr.bf16.mxu0 0
    %6292 = vmatpush1.bf16.msra.mxu0 %v4439
    %6293 = vmatprep.subr.bf16.mxu0 0
    %6294 = vmatpush1.bf16.msra.mxu0 %v4440
    %6295 = vmatprep.subr.bf16.mxu0 0
    %6296 = vmatpush1.bf16.msra.mxu0 %v4441
    %6297 = vmatprep.subr.bf16.mxu0 0
    %6298 = vmatpush1.bf16.msra.mxu0 %v4442
    %6299 = vmatprep.subr.bf16.mxu0 0
    %6300 = vmatpush1.bf16.msra.mxu0 %v4443
    %6301 = vmatprep.subr.bf16.mxu0 0
    %6302 = vmatpush1.bf16.msra.mxu0 %v4444
    %6303 = vmatprep.subr.bf16.mxu0 0
    %6304 = vmatpush1.bf16.msra.mxu0 %v4445
    %6305 = vmatprep.subr.bf16.mxu0 0
    %6306 = vmatpush1.bf16.msra.mxu0 %v4446
    %6307 = vmatprep.subr.bf16.mxu0 0
    %6308 = vmatpush1.bf16.msra.mxu0 %v4447
    %6309 = vmatprep.subr.bf16.mxu0 0
    %6310 = vmatpush1.bf16.msra.mxu0 %v4448
    %6311 = vmatprep.subr.bf16.mxu0 0
    %6312 = vmatpush1.bf16.msra.mxu0 %v4449
    %6313 = vmatprep.subr.bf16.mxu0 0
    %6314 = vmatpush1.bf16.msra.mxu0 %v4450
    %6315 = vmatprep.mubr.bf16.mxu0 %v495
    %6316 = vmatmul.mubr.bf16.gmra.mrb[0].mxu0 %v494
    %v6317 = vpop.f32.mrb[0].mxu0
    %v6318 = vadd.f32 %v6278, %v6317
    %v6319 = vpop.f32.mrb[0].mxu0
    %v6320 = vpop.f32.mrb[0].mxu0
    %v6321 = vpop.f32.mrb[0].mxu0
    %6322 = vdwg.mxu0
    %6323 = vmatprep.subr.bf16.mxu0 0
    %6324 = vmatpush1.bf16.msra.mxu0 %v4451
    %6325 = vmatprep.subr.bf16.mxu0 0
    %6326 = vmatpush1.bf16.msra.mxu0 %v4452
    %6327 = vmatprep.subr.bf16.mxu0 0
    %6328 = vmatpush1.bf16.msra.mxu0 %v4453
    %6329 = vmatprep.subr.bf16.mxu0 0
    %6330 = vmatpush1.bf16.msra.mxu0 %v4454
    %6331 = vmatprep.subr.bf16.mxu0 0
    %6332 = vmatpush1.bf16.msra.mxu0 %v4455
    %6333 = vmatprep.subr.bf16.mxu0 0
    %6334 = vmatpush1.bf16.msra.mxu0 %v4456
    %6335 = vmatprep.subr.bf16.mxu0 0
    %6336 = vmatpush1.bf16.msra.mxu0 %v4457
    %6337 = vmatprep.subr.bf16.mxu0 0
    %6338 = vmatpush1.bf16.msra.mxu0 %v4458
    %6339 = vmatprep.subr.bf16.mxu0 0
    %6340 = vmatpush1.bf16.msra.mxu0 %v4459
    %6341 = vmatprep.subr.bf16.mxu0 0
    %6342 = vmatpush1.bf16.msra.mxu0 %v4460
    %6343 = vmatprep.subr.bf16.mxu0 0
    %6344 = vmatpush1.bf16.msra.mxu0 %v4461
    %6345 = vmatprep.subr.bf16.mxu0 0
    %6346 = vmatpush1.bf16.msra.mxu0 %v4462
    %6347 = vmatprep.subr.bf16.mxu0 0
    %6348 = vmatpush1.bf16.msra.mxu0 %v4463
    %6349 = vmatprep.subr.bf16.mxu0 0
    %6350 = vmatpush1.bf16.msra.mxu0 %v4464
    %6351 = vmatprep.subr.bf16.mxu0 0
    %6352 = vmatpush1.bf16.msra.mxu0 %v4465
    %6353 = vmatprep.subr.bf16.mxu0 0
    %6354 = vmatpush1.bf16.msra.mxu0 %v4466
    %6355 = vmatprep.mubr.bf16.mxu0 %v497
    %6356 = vmatmul.mubr.bf16.gmra.mrb[0].mxu0 %v496
    %v6357 = vpop.f32.mrb[0].mxu0
    %v6358 = vadd.f32 %v6318, %v6357
    %v6359 = vpop.f32.mrb[0].mxu0
    %v6360 = vpop.f32.mrb[0].mxu0
    %v6361 = vpop.f32.mrb[0].mxu0
    %6362 = vdwg.mxu0
    %6363 = vmatprep.subr.bf16.mxu0 0
    %6364 = vmatpush1.bf16.msra.mxu0 %v4467
    %6365 = vmatprep.subr.bf16.mxu0 0
    %6366 = vmatpush1.bf16.msra.mxu0 %v4468
    %6367 = vmatprep.subr.bf16.mxu0 0
    %6368 = vmatpush1.bf16.msra.mxu0 %v4469
    %6369 = vmatprep.subr.bf16.mxu0 0
    %6370 = vmatpush1.bf16.msra.mxu0 %v4470
    %6371 = vmatprep.subr.bf16.mxu0 0
    %6372 = vmatpush1.bf16.msra.mxu0 %v4471
    %6373 = vmatprep.subr.bf16.mxu0 0
    %6374 = vmatpush1.bf16.msra.mxu0 %v4472
    %6375 = vmatprep.subr.bf16.mxu0 0
    %6376 = vmatpush1.bf16.msra.mxu0 %v4473
    %6377 = vmatprep.subr.bf16.mxu0 0
    %6378 = vmatpush1.bf16.msra.mxu0 %v4474
    %6379 = vmatprep.subr.bf16.mxu0 0
    %6380 = vmatpush1.bf16.msra.mxu0 %v4475
    %6381 = vmatprep.subr.bf16.mxu0 0
    %6382 = vmatpush1.bf16.msra.mxu0 %v4476
    %6383 = vmatprep.subr.bf16.mxu0 0
    %6384 = vmatpush1.bf16.msra.mxu0 %v4477
    %6385 = vmatprep.subr.bf16.mxu0 0
    %6386 = vmatpush1.bf16.msra.mxu0 %v4478
    %6387 = vmatprep.subr.bf16.mxu0 0
    %6388 = vmatpush1.bf16.msra.mxu0 %v4479
    %6389 = vmatprep.subr.bf16.mxu0 0
    %6390 = vmatpush1.bf16.msra.mxu0 %v4480
    %6391 = vmatprep.subr.bf16.mxu0 0
    %6392 = vmatpush1.bf16.msra.mxu0 %v4481
    %6393 = vmatprep.subr.bf16.mxu0 0
    %6394 = vmatpush1.bf16.msra.mxu0 %v4482
    %6395 = vmatprep.mubr.bf16.mxu0 %v499
    %6396 = vmatmul.mubr.bf16.gmra.mrb[0].mxu0 %v498
    %v6397 = vpop.f32.mrb[0].mxu0
    %v6398 = vadd.f32 %v6358, %v6397
    %v6399 = vpop.f32.mrb[0].mxu0
    %v6400 = vpop.f32.mrb[0].mxu0
    %v6401 = vpop.f32.mrb[0].mxu0
    %6402 = vdwg.mxu0
    %6403 = vmatprep.subr.bf16.mxu0 0
    %6404 = vmatpush1.bf16.msra.mxu0 %v4483
    %6405 = vmatprep.subr.bf16.mxu0 0
    %6406 = vmatpush1.bf16.msra.mxu0 %v4484
    %6407 = vmatprep.subr.bf16.mxu0 0
    %6408 = vmatpush1.bf16.msra.mxu0 %v4485
    %6409 = vmatprep.subr.bf16.mxu0 0
    %6410 = vmatpush1.bf16.msra.mxu0 %v4486
    %6411 = vmatprep.subr.bf16.mxu0 0
    %6412 = vmatpush1.bf16.msra.mxu0 %v4487
    %6413 = vmatprep.subr.bf16.mxu0 0
    %6414 = vmatpush1.bf16.msra.mxu0 %v4488
    %6415 = vmatprep.subr.bf16.mxu0 0
    %6416 = vmatpush1.bf16.msra.mxu0 %v4489
    %6417 = vmatprep.subr.bf16.mxu0 0
    %6418 = vmatpush1.bf16.msra.mxu0 %v4490
    %6419 = vmatprep.subr.bf16.mxu0 0
    %6420 = vmatpush1.bf16.msra.mxu0 %v4491
    %6421 = vmatprep.subr.bf16.mxu0 0
    %6422 = vmatpush1.bf16.msra.mxu0 %v4492
    %6423 = vmatprep.subr.bf16.mxu0 0
    %6424 = vmatpush1.bf16.msra.mxu0 %v4493
    %6425 = vmatprep.subr.bf16.mxu0 0
    %6426 = vmatpush1.bf16.msra.mxu0 %v4494
    %6427 = vmatprep.subr.bf16.mxu0 0
    %6428 = vmatpush1.bf16.msra.mxu0 %v4495
    %6429 = vmatprep.subr.bf16.mxu0 0
    %6430 = vmatpush1.bf16.msra.mxu0 %v4496
    %6431 = vmatprep.subr.bf16.mxu0 0
    %6432 = vmatpush1.bf16.msra.mxu0 %v4497
    %6433 = vmatprep.subr.bf16.mxu0 0
    %6434 = vmatpush1.bf16.msra.mxu0 %v4498
    %6435 = vmatprep.mubr.bf16.mxu0 %v501
    %6436 = vmatmul.mubr.bf16.gmra.mrb[0].mxu0 %v500
    %v6437 = vpop.f32.mrb[0].mxu0
    %v6438 = vadd.f32 %v6398, %v6437
    %v6439 = vpop.f32.mrb[0].mxu0
    %v6440 = vpop.f32.mrb[0].mxu0
    %v6441 = vpop.f32.mrb[0].mxu0
    %6442 = vdwg.mxu0
    %6443 = vmatprep.subr.bf16.mxu0 0
    %6444 = vmatpush1.bf16.msra.mxu0 %v4499
    %6445 = vmatprep.subr.bf16.mxu0 0
    %6446 = vmatpush1.bf16.msra.mxu0 %v4500
    %6447 = vmatprep.subr.bf16.mxu0 0
    %6448 = vmatpush1.bf16.msra.mxu0 %v4501
    %6449 = vmatprep.subr.bf16.mxu0 0
    %6450 = vmatpush1.bf16.msra.mxu0 %v4502
    %6451 = vmatprep.subr.bf16.mxu0 0
    %6452 = vmatpush1.bf16.msra.mxu0 %v4503
    %6453 = vmatprep.subr.bf16.mxu0 0
    %6454 = vmatpush1.bf16.msra.mxu0 %v4504
    %6455 = vmatprep.subr.bf16.mxu0 0
    %6456 = vmatpush1.bf16.msra.mxu0 %v4505
    %6457 = vmatprep.subr.bf16.mxu0 0
    %6458 = vmatpush1.bf16.msra.mxu0 %v4506
    %6459 = vmatprep.subr.bf16.mxu0 0
    %6460 = vmatpush1.bf16.msra.mxu0 %v4507
    %6461 = vmatprep.subr.bf16.mxu0 0
    %6462 = vmatpush1.bf16.msra.mxu0 %v4508
    %6463 = vmatprep.subr.bf16.mxu0 0
    %6464 = vmatpush1.bf16.msra.mxu0 %v4509
    %6465 = vmatprep.subr.bf16.mxu0 0
    %6466 = vmatpush1.bf16.msra.mxu0 %v4510
    %6467 = vmatprep.subr.bf16.mxu0 0
    %6468 = vmatpush1.bf16.msra.mxu0 %v4511
    %6469 = vmatprep.subr.bf16.mxu0 0
    %6470 = vmatpush1.bf16.msra.mxu0 %v4512
    %6471 = vmatprep.subr.bf16.mxu0 0
    %6472 = vmatpush1.bf16.msra.mxu0 %v4513
    %6473 = vmatprep.subr.bf16.mxu0 0
    %6474 = vmatpush1.bf16.msra.mxu0 %v4514
    %6475 = vmatprep.mubr.bf16.mxu0 %v503
    %6476 = vmatmul.mubr.bf16.gmra.mrb[0].mxu0 %v502
    %v6477 = vpop.f32.mrb[0].mxu0
    %v6478 = vadd.f32 %v6438, %v6477
    %v6479 = vpop.f32.mrb[0].mxu0
    %v6480 = vpop.f32.mrb[0].mxu0
    %v6481 = vpop.f32.mrb[0].mxu0
    %6482 = vdwg.mxu0
    %6483 = vmatprep.subr.bf16.mxu0 0
    %6484 = vmatpush1.bf16.msra.mxu0 %v4515
    %6485 = vmatprep.subr.bf16.mxu0 0
    %6486 = vmatpush1.bf16.msra.mxu0 %v4516
    %6487 = vmatprep.subr.bf16.mxu0 0
    %6488 = vmatpush1.bf16.msra.mxu0 %v4517
    %6489 = vmatprep.subr.bf16.mxu0 0
    %6490 = vmatpush1.bf16.msra.mxu0 %v4518
    %6491 = vmatprep.subr.bf16.mxu0 0
    %6492 = vmatpush1.bf16.msra.mxu0 %v4519
    %6493 = vmatprep.subr.bf16.mxu0 0
    %6494 = vmatpush1.bf16.msra.mxu0 %v4520
    %6495 = vmatprep.subr.bf16.mxu0 0
    %6496 = vmatpush1.bf16.msra.mxu0 %v4521
    %6497 = vmatprep.subr.bf16.mxu0 0
    %6498 = vmatpush1.bf16.msra.mxu0 %v4522
    %6499 = vmatprep.subr.bf16.mxu0 0
    %6500 = vmatpush1.bf16.msra.mxu0 %v4523
    %6501 = vmatprep.subr.bf16.mxu0 0
    %6502 = vmatpush1.bf16.msra.mxu0 %v4524
    %6503 = vmatprep.subr.bf16.mxu0 0
    %6504 = vmatpush1.bf16.msra.mxu0 %v4525
    %6505 = vmatprep.subr.bf16.mxu0 0
    %6506 = vmatpush1.bf16.msra.mxu0 %v4526
    %6507 = vmatprep.subr.bf16.mxu0 0
    %6508 = vmatpush1.bf16.msra.mxu0 %v4527
    %6509 = vmatprep.subr.bf16.mxu0 0
    %6510 = vmatpush1.bf16.msra.mxu0 %v4528
    %6511 = vmatprep.subr.bf16.mxu0 0
    %6512 = vmatpush1.bf16.msra.mxu0 %v4529
    %6513 = vmatprep.subr.bf16.mxu0 0
    %6514 = vmatpush1.bf16.msra.mxu0 %v4530
    %6515 = vmatprep.mubr.bf16.mxu0 %v505
    %6516 = vmatmul.mubr.bf16.gmra.mrb[0].mxu0 %v504
    %v6517 = vpop.f32.mrb[0].mxu0
    %v6518 = vadd.f32 %v6478, %v6517
    %v6519 = vpop.f32.mrb[0].mxu0
    %v6520 = vpop.f32.mrb[0].mxu0
    %v6521 = vpop.f32.mrb[0].mxu0
    %6522 = vdwg.mxu0
    %6523 = vmatprep.subr.bf16.mxu0 0
    %6524 = vmatpush1.bf16.msra.mxu0 %v4531
    %6525 = vmatprep.subr.bf16.mxu0 0
    %6526 = vmatpush1.bf16.msra.mxu0 %v4532
    %6527 = vmatprep.subr.bf16.mxu0 0
    %6528 = vmatpush1.bf16.msra.mxu0 %v4533
    %6529 = vmatprep.subr.bf16.mxu0 0
    %6530 = vmatpush1.bf16.msra.mxu0 %v4534
    %6531 = vmatprep.subr.bf16.mxu0 0
    %6532 = vmatpush1.bf16.msra.mxu0 %v4535
    %6533 = vmatprep.subr.bf16.mxu0 0
    %6534 = vmatpush1.bf16.msra.mxu0 %v4536
    %6535 = vmatprep.subr.bf16.mxu0 0
    %6536 = vmatpush1.bf16.msra.mxu0 %v4537
    %6537 = vmatprep.subr.bf16.mxu0 0
    %6538 = vmatpush1.bf16.msra.mxu0 %v4538
    %6539 = vmatprep.subr.bf16.mxu0 0
    %6540 = vmatpush1.bf16.msra.mxu0 %v4539
    %6541 = vmatprep.subr.bf16.mxu0 0
    %6542 = vmatpush1.bf16.msra.mxu0 %v4540
    %6543 = vmatprep.subr.bf16.mxu0 0
    %6544 = vmatpush1.bf16.msra.mxu0 %v4541
    %6545 = vmatprep.subr.bf16.mxu0 0
    %6546 = vmatpush1.bf16.msra.mxu0 %v4542
    %6547 = vmatprep.subr.bf16.mxu0 0
    %6548 = vmatpush1.bf16.msra.mxu0 %v4543
    %6549 = vmatprep.subr.bf16.mxu0 0
    %6550 = vmatpush1.bf16.msra.mxu0 %v4544
    %6551 = vmatprep.subr.bf16.mxu0 0
    %6552 = vmatpush1.bf16.msra.mxu0 %v4545
    %6553 = vmatprep.subr.bf16.mxu0 0
    %6554 = vmatpush1.bf16.msra.mxu0 %v4546
    %6555 = vmatprep.mubr.bf16.mxu0 %v507
    %6556 = vmatmul.mubr.bf16.gmra.mrb[0].mxu0 %v506
    %v6557 = vpop.f32.mrb[0].mxu0
    %v6558 = vadd.f32 %v6518, %v6557
    %v6559 = vpop.f32.mrb[0].mxu0
    %v6560 = vpop.f32.mrb[0].mxu0
    %v6561 = vpop.f32.mrb[0].mxu0
    %6562 = vdwg.mxu0
    %v6563 = vmax.f32 %v6558, 0.0
    %v6564 = vpack.c.bf16 %v6563, %v6563
    %v6565 = vld [vmem:[%s3] sm:$0xf]
    %v6566 = vld [vmem:[%s3 + $0x4] sm:$0xf]
    %v6567 = vld [vmem:[%s3 + $0x8] sm:$0xf]
    %v6568 = vld [vmem:[%s3 + $0xc] sm:$0xf]
    %v6569 = vld [vmem:[%s3 + $0x10] sm:$0xf]
    %v6570 = vld [vmem:[%s3 + $0x14] sm:$0xf]
    %v6571 = vld [vmem:[%s3 + $0x18] sm:$0xf]
    %v6572 = vld [vmem:[%s3 + $0x1c] sm:$0xf]
    %v6573 = vld [vmem:[%s3 + $0x20] sm:$0xf]
    %v6574 = vld [vmem:[%s3 + $0x24] sm:$0xf]
    %v6575 = vld [vmem:[%s3 + $0x28] sm:$0xf]
    %v6576 = vld [vmem:[%s3 + $0x2c] sm:$0xf]
    %v6577 = vld [vmem:[%s3 + $0x30] sm:$0xf]
    %v6578 = vld [vmem:[%s3 + $0x34] sm:$0xf]
    %v6579 = vld [vmem:[%s3 + $0x38] sm:$0xf]
    %v6580 = vld [vmem:[%s3 + $0x3c] sm:$0xf]
    %v6581 = vld [vmem:[%s4] sm:$0x1]
    %v6583 = vlaneseq
    %v6584 = vshrl.u32 %v6583, 7
    %v6585 = vsub.s32 0, %v6584
    %v6586 = vrot.slane %v6581, %v6585
    %v6604 = vunpack.c.l.b16 %v6565
    %v6605 = vunpack.c.l.b16 %v6566
    %v6606 = vunpack.c.l.b16 %v6567
    %v6607 = vunpack.c.l.b16 %v6568
    %v6608 = vunpack.c.l.b16 %v6569
    %v6609 = vunpack.c.l.b16 %v6570
    %v6610 = vunpack.c.l.b16 %v6571
    %v6611 = vunpack.c.l.b16 %v6572
    %v6612 = vunpack.c.l.b16 %v6573
    %v6613 = vunpack.c.l.b16 %v6574
    %v6614 = vunpack.c.l.b16 %v6575
    %v6615 = vunpack.c.l.b16 %v6576
    %v6616 = vunpack.c.l.b16 %v6577
    %v6617 = vunpack.c.l.b16 %v6578
    %v6618 = vunpack.c.l.b16 %v6579
    %v6619 = vunpack.c.l.b16 %v6580
    %v6620 = vpack.c.b16 %v6605, %v6604
    %v6621 = vpack.c.b16 %v6607, %v6606
    %v6622 = vpack.c.b16 %v6609, %v6608
    %v6623 = vpack.c.b16 %v6611, %v6610
    %v6624 = vpack.c.b16 %v6613, %v6612
    %v6625 = vpack.c.b16 %v6615, %v6614
    %v6626 = vpack.c.b16 %v6617, %v6616
    %v6627 = vpack.c.b16 %v6619, %v6618
    %6636 = vmatprep.subr.bf16.mxu0 0
    %6637 = vmatpush1.bf16.msra.mxu0 %v6620
    %6638 = vmatprep.subr.bf16.mxu0 0
    %6639 = vmatpush1.bf16.msra.mxu0 %v6621
    %6640 = vmatprep.subr.bf16.mxu0 0
    %6641 = vmatpush1.bf16.msra.mxu0 %v6622
    %6642 = vmatprep.subr.bf16.mxu0 0
    %6643 = vmatpush1.bf16.msra.mxu0 %v6623
    %6644 = vmatprep.subr.bf16.mxu0 0
    %6645 = vmatpush1.bf16.msra.mxu0 %v6624
    %6646 = vmatprep.subr.bf16.mxu0 0
    %6647 = vmatpush1.bf16.msra.mxu0 %v6625
    %6648 = vmatprep.subr.bf16.mxu0 0
    %6649 = vmatpush1.bf16.msra.mxu0 %v6626
    %6650 = vmatprep.subr.bf16.mxu0 0
    %6651 = vmatpush1.bf16.msra.mxu0 %v6627
    %6652 = vmatprep.subr.bf16.mxu0 0
    %6653 = vmatpush1.bf16.msra.mxu0 0
    %6654 = vmatprep.subr.bf16.mxu0 0
    %6655 = vmatpush1.bf16.msra.mxu0 0
    %6656 = vmatprep.subr.bf16.mxu0 0
    %6657 = vmatpush1.bf16.msra.mxu0 0
    %6658 = vmatprep.subr.bf16.mxu0 0
    %6659 = vmatpush1.bf16.msra.mxu0 0
    %6660 = vmatprep.subr.bf16.mxu0 0
    %6661 = vmatpush1.bf16.msra.mxu0 0
    %6662 = vmatprep.subr.bf16.mxu0 0
    %6663 = vmatpush1.bf16.msra.mxu0 0
    %6664 = vmatprep.subr.bf16.mxu0 0
    %6665 = vmatpush1.bf16.msra.mxu0 0
    %6666 = vmatprep.subr.bf16.mxu0 0
    %6667 = vmatpush1.bf16.msra.mxu0 0
    %6668 = vmatprep.mubr.bf16.mxu0 0
    %6669 = vmatmul.mubr.bf16.gmra.mrb[0].mxu0 %v6564
    %v6670 = vpop.f32.mrb[0].mxu0
    %v6671 = vadd.f32 %v6586, %v6670
    %v6672 = vpop.f32.mrb[0].mxu0
    %v6673 = vpop.f32.mrb[0].mxu0
    %v6674 = vpop.f32.mrb[0].mxu0
    %6675 = vdwg.mxu0
    %vm6676 = vcmask 74752
    %v6677 = vsel %vm6676, %v6671, -inf
    %6678 = vmax.xlane.f32.xlu0 %v6677
    %v6679 = vpop.xlane.xlu0 %6678
    %v6680 = vsub.f32 %v6671, %v6679
    %v6681 = vmul.f32 %v6680, 1.442695
    %v6682 = vpow.pop %v6681
    %v6683 = vsel %vm6676, %v6682, 0.0
    %6684 = vadd.xlane.f32.xlu0 %v6683
    %v6685 = vpop.xlane.xlu0 %6684
    %v6686 = vlog2.pop %v6685
    %v6687 = vmul.f32 %v6686, 0.6931472
    %v6688 = vsub.f32 %v6680, %v6687
    %6689 = vst.msk [vmem:[#allocation2] sm:$0x3] %vm6676, %v6688
    // Predicated region
    $region22: #{net_forward.5} parent=1 // pred_check
      _
    $region23: #{net_forward.5} parent=1 // pred_check_branch
      %6691 = sbr.rel (0) target = $region25
    $region24: #{net_forward.5} parent=1 // pred_region
      %s6693 = ssub.s32 32, 32
      %6694 = vsyncadd [#allocation3], %s6693
      %s6696 = sshll.u32 [#allocation2], 4
      %s6697 = int_to_ptr.vmem [resolvable:$true] %s6696
      %6699 = dma.vmem_to_hbm [thread:$0]  %s6697, 32, %s5, [#allocation3]
    $region25: #{net_forward.5} parent=1 // pred_fallthru
      _
    // Predicated region
    $region26: #{net_forward.5} parent=1 // pred_check
      _
    $region27: #{net_forward.5} parent=1 // pred_check_branch
      %6701 = sbr.rel (0) target = $region29
    $region28: #{net_forward.5} parent=1 // pred_region
      %6702 = dma.done [#allocation3], 32
    $region29: #{net_forward.5} parent=1 // pred_fallthru
      _
    %6703 = vsyncpa [#allocation3], 1

</llo_original>
